<compile_context>
chip_gen: v7x
topology: tpu7x:2x2x1
jax: 0.10.0
libtpu: 0.0.40
codegen_flags: <defaults>
</compile_context>

<pallas_src>
import jax
import jax.numpy as jnp
import numpy as np
from jax import lax
from jax.experimental import pallas as pl
from jax.experimental.pallas import tpu as pltpu

EPS = 1e-5


# ----------------------------------------------------------------------------
# Weight packing (one-time, "load-time" transform of the PyTorch parameters)
# ----------------------------------------------------------------------------
def _band_conv3x3(w_hwio, W):
    """(3, 3, Cin, Cout) -> (3, W*Cin, W*Cout).

    One banded matrix per kh tap:  B_kh[(w+kw-1)*Cin+ci, w*Cout+co] = w[kh, kw, ci, co],
    with out-of-range columns dropped (== zero padding along W)."""
    mats = []
    for kh in range(3):
        b = 0.0
        for kw in range(3):
            e = jnp.eye(W, W, k=1 - kw, dtype=w_hwio.dtype)   # E[j, w] = 1 iff j == w + kw - 1
            b = b + jnp.kron(e, w_hwio[kh, kw])
        mats.append(b)
    return jnp.stack(mats, axis=0)


def pack_params(params, W):
    Cin = params["w1"].shape[-2]
    Cout = params["w1"].shape[-1]
    eye_c = jnp.eye(Cout, dtype=jnp.float32)
    # stack the 3 kh bands along K -> one big-K MXU operand per conv
    w1b = _band_conv3x3(params["w1"], W)                                  # (3, W*Cin,  W*Cout)
    w2b = _band_conv3x3(params["w2"], W)                                  # (3, W*Cout, W*Cout)
    return {
        "w1s": w1b.reshape(3 * W * Cin, W * Cout).astype(jnp.bfloat16),
        "w2s": w2b.reshape(3 * W * Cout, W * Cout).astype(jnp.bfloat16),
        # block-diagonal 1x1 downsample conv — bf16 (only ever an MXU operand)
        "wdsb": jnp.kron(jnp.eye(W, dtype=jnp.float32),
                         params["wds"]).astype(jnp.bfloat16),             # (W*Cin, W*Cout)
        # 0/1 selector matrices: (w,c)-lane layout  <->  per-channel vectors
        "S":  jnp.tile(eye_c, (W, 1)),     # (W*Cout, Cout)  reduce over w
        "St": jnp.tile(eye_c, (1, W)),     # (Cout, W*Cout)  broadcast over w
        "g1": params["g1"], "b1": params["b1"],
        "g2": params["g2"], "b2": params["b2"],
        "gds": params["gds"], "bds": params["bds"],
        "wfc1t": params["wfc1"].T,         # (Cred, Cout) — row-sliced on the VPU path
        "wfc2":  params["wfc2"],           # (Cred, Cout)
    }


# ----------------------------------------------------------------------------
# Fused Pallas kernel
# ----------------------------------------------------------------------------
def _residual_block_kernel(x_ref,
                           w1s_ref, g1_ref, b1_ref,
                           w2s_ref, g2_ref, b2_ref,
                           wfc1t_ref, wfc2_ref,
                           wdsb_ref, gds_ref, bds_ref,
                           s_ref, st_ref,
                           out_ref):
    """All activations use the lane-dense (N*H, W*C) layout (lanes = (w, c), c minor)."""
    N, H, WCi = x_ref.shape
    WCo, Cout = s_ref.shape
    W = WCo // Cout
    NH = N * H
    inv_r = 1.0 / (N * H * W)      # BN sample count per channel
    inv_hw = 1.0 / (H * W)

    S = s_ref[...]                 # (W*Cout, Cout)  f32
    St = st_ref[...]               # (Cout, W*Cout)  f32

    def batchnorm(acc, g, b):
        # training-mode BatchNorm2d, biased variance; single pass sum / sum-of-squares.
        # (E[x^2]-E[x]^2 is fine at these magnitudes; use Welford/two-pass when re-tiling.)
        sums = jnp.concatenate(
            [jnp.sum(acc, axis=0, keepdims=True),
             jnp.sum(acc * acc, axis=0, keepdims=True)], axis=0)               # (2, W*C)
        sums_c = jnp.dot(sums, S, preferred_element_type=jnp.float32)          # (2, C)
        m_c = sums_c[0:1, :] * inv_r
        v_c = sums_c[1:2, :] * inv_r - m_c * m_c
        scale_c = g * lax.rsqrt(v_c + EPS)
        bias_c = b - m_c * scale_c
        sb_wc = jnp.dot(jnp.concatenate([scale_c, bias_c], axis=0), St,
                        preferred_element_type=jnp.float32)                    # (2, W*C)
        return acc * sb_wc[0:1, :] + sb_wc[1:2, :]

    def band_operand(v3d):
        # (N, H, WC) -> (N*H, 3*WC) bf16: [rows h-1 | rows h | rows h+1] with zero H-padding,
        # built as per-image sublane shifts (no halo scratch, no HBM/VMEM round trip).
        WC = v3d.shape[2]
        z = jnp.zeros((N, 1, WC), jnp.float32)
        up = jnp.concatenate([z, v3d[:, :H - 1, :]], axis=1)    # kh = 0 tap (row h-1)
        dn = jnp.concatenate([v3d[:, 1:, :], z], axis=1)        # kh = 2 tap (row h+1)
        a = jnp.concatenate([up.reshape(NH, WC),
                             v3d.reshape(NH, WC),
                             dn.reshape(NH, WC)], axis=1)
        return a.astype(jnp.bfloat16)

    x3d = x_ref[...]                                            # (N, H, W*Cin) f32

    # ---- conv1: ONE banded matmul (K = 3*W*Cin), bf16 operands, f32 accumulate ----
    acc1 = jnp.dot(band_operand(x3d), w1s_ref[...],
                   preferred_element_type=jnp.float32)          # (N*H, W*Cout)
    y1 = jnp.maximum(batchnorm(acc1, g1_ref[...], b1_ref[...]), 0.0)

    # ---- conv2: ONE banded matmul (K = 3*W*Cout), bf16 operands, f32 accumulate ----
    acc2 = jnp.dot(band_operand(y1.reshape(N, H, WCo)), w2s_ref[...],
                   preferred_element_type=jnp.float32)
    y2 = batchnorm(acc2, g2_ref[...], b2_ref[...])

    # ---- SE: global avg pool -> fc1 -> ReLU -> fc2 -> sigmoid -> per-channel scale ----
    y2_3d = y2.reshape(N, H, WCo)
    pool_c = jnp.dot(jnp.sum(y2_3d, axis=1), S,
                     preferred_element_type=jnp.float32) * inv_hw              # (N, Cout)
    # fc1/fc2 on the VPU (Cred lanes are too few for useful MXU work)
    Cred = wfc1t_ref.shape[0]
    logits = jnp.zeros((N, Cout), jnp.float32)
    for r in range(Cred):
        h_r = jnp.maximum(
            jnp.sum(pool_c * wfc1t_ref[r:r + 1, :], axis=1, keepdims=True), 0.0)   # (N, 1)
        logits = logits + h_r * wfc2_ref[r:r + 1, :]                               # (N, Cout)
    se = jax.nn.sigmoid(logits)                                                    # (N, Cout)
    se_wc = jnp.dot(se, St, preferred_element_type=jnp.float32)                    # (N, W*Cout)
    y2 = (y2_3d * se_wc[:, None, :]).reshape(NH, WCo)

    # ---- downsample: block-diagonal 1x1 conv (bf16 MXU) + BN on the original input ----
    idn = jnp.dot(x3d.reshape(NH, WCi).astype(jnp.bfloat16), wdsb_ref[...],
                  preferred_element_type=jnp.float32)
    idn = batchnorm(idn, gds_ref[...], bds_ref[...])

    # ---- residual add + ReLU; fully lane-dense (N*H, W*Cout) store ----
    out_ref[...] = jnp.maximum(y2 + idn, 0.0)


# ----------------------------------------------------------------------------
# Wrapper
# ----------------------------------------------------------------------------
def residual_block_forward(x_nchw, packed):
    N, Cin, H, W = x_nchw.shape
    Cout = packed["g1"].shape[-1]

    # NCHW -> lane-dense (N, H, W*Cin) rows; H-padding is folded into the kernel.
    x = jnp.transpose(x_nchw, (0, 2, 3, 1)).astype(jnp.float32).reshape(N, H, W * Cin)

    vm = pl.BlockSpec(memory_space=pltpu.MemorySpace.VMEM)
    out2d = pl.pallas_call(
        _residual_block_kernel,
        out_shape=jax.ShapeDtypeStruct((N * H, W * Cout), jnp.float32),
        in_specs=[vm] * 14,
        out_specs=vm,
    )(x,
      packed["w1s"], packed["g1"], packed["b1"],
      packed["w2s"], packed["g2"], packed["b2"],
      packed["wfc1t"], packed["wfc2"],
      packed["wdsb"], packed["gds"], packed["bds"],
      packed["S"], packed["St"])

    out = out2d.reshape(N, H, W, Cout)
    return jnp.transpose(out, (0, 3, 1, 2))                             # back to NCHW


# ----------------------------------------------------------------------------
# Pure-JAX (XLA, f32 HIGHEST) reference with identical semantics
# ----------------------------------------------------------------------------
def reference_forward(x_nchw, params):
    hp = lax.Precision.HIGHEST
    x = jnp.transpose(x_nchw, (0, 2, 3, 1)).astype(jnp.float32)

    def conv3x3(a, w):
        return lax.conv_general_dilated(
            a, w, (1, 1), ((1, 1), (1, 1)),
            dimension_numbers=("NHWC", "HWIO", "NHWC"), precision=hp)

    def bn(y, g, b):
        m = jnp.mean(y, axis=(0, 1, 2))
        v = jnp.mean((y - m) ** 2, axis=(0, 1, 2))
        return (y - m) / jnp.sqrt(v + EPS) * g[0] + b[0]

    y = jax.nn.relu(bn(conv3x3(x, params["w1"]), params["g1"], params["b1"]))
    y = bn(conv3x3(y, params["w2"]), params["g2"], params["b2"])
    se = jnp.mean(y, axis=(1, 2))
    se = jax.nn.relu(jnp.dot(se, params["wfc1"], precision=hp))
    se = jax.nn.sigmoid(jnp.dot(se, params["wfc2"], precision=hp))
    y = y * se[:, None, None, :]
    idn = bn(jnp.einsum("nhwc,cd->nhwd", x, params["wds"], precision=hp),
             params["gds"], params["bds"])
    return jnp.transpose(jax.nn.relu(y + idn), (0, 3, 1, 2))


if __name__ == "__main__":
    N, Cin, Cout, H, W = 2, 16, 32, 16, 16
    Cred = Cout // 16   # SEBlock reduction=16

    ks = jax.random.split(jax.random.PRNGKey(0), 10)
    params = {
        "w1":   0.1 * jax.random.normal(ks[0], (3, 3, Cin, Cout), jnp.float32),   # HWIO
        "g1":   1.0 + 0.1 * jax.random.normal(ks[1], (1, Cout), jnp.float32),
        "b1":   0.1 * jax.random.normal(ks[2], (1, Cout), jnp.float32),
        "w2":   0.1 * jax.random.normal(ks[3], (3, 3, Cout, Cout), jnp.float32),
        "g2":   1.0 + 0.1 * jax.random.normal(ks[4], (1, Cout), jnp.float32),
        "b2":   0.1 * jax.random.normal(ks[5], (1, Cout), jnp.float32),
        "wfc1": 0.2 * jax.random.normal(ks[6], (Cout, Cred), jnp.float32),         # (in, out)
        "wfc2": 0.2 * jax.random.normal(ks[7], (Cred, Cout), jnp.float32),
        "wds":  0.1 * jax.random.normal(ks[8], (Cin, Cout), jnp.float32),
        "gds":  jnp.ones((1, Cout), jnp.float32),
        "bds":  jnp.zeros((1, Cout), jnp.float32),
    }
    x_nchw = jax.random.normal(ks[9], (N, Cin, H, W), jnp.float32)

    packed = pack_params(params, W)                      # one-time weight packing
    out = jax.jit(residual_block_forward)(x_nchw, packed)
    out = jax.block_until_ready(out)

    ref = reference_forward(x_nchw, params)
    # bf16 MXU operands for the convs + downsample vs. an all-f32 reference -> looser atol.
    np.testing.assert_allclose(np.asarray(out), np.asarray(ref), rtol=2e-2, atol=3e-2)

    print("KERNEL_OK")
</pallas_src>

<mosaic_0001>
module attributes {stable_mosaic.version = 11 : i64} {
  func.func @_residual_block_kernel(%arg0: memref<2x16x256xf32, #tpu.memory_space<vmem>>, %arg1: memref<768x512xbf16, #tpu.memory_space<vmem>>, %arg2: memref<1x32xf32, #tpu.memory_space<vmem>>, %arg3: memref<1x32xf32, #tpu.memory_space<vmem>>, %arg4: memref<1536x512xbf16, #tpu.memory_space<vmem>>, %arg5: memref<1x32xf32, #tpu.memory_space<vmem>>, %arg6: memref<1x32xf32, #tpu.memory_space<vmem>>, %arg7: memref<2x32xf32, #tpu.memory_space<vmem>>, %arg8: memref<2x32xf32, #tpu.memory_space<vmem>>, %arg9: memref<256x512xbf16, #tpu.memory_space<vmem>>, %arg10: memref<1x32xf32, #tpu.memory_space<vmem>>, %arg11: memref<1x32xf32, #tpu.memory_space<vmem>>, %arg12: memref<512x32xf32, #tpu.memory_space<vmem>>, %arg13: memref<32x512xf32, #tpu.memory_space<vmem>>, %arg14: memref<32x512xf32, #tpu.memory_space<vmem>>) attributes {dimension_semantics = [], scalar_prefetch = 0 : i64, scratch_operands = 0 : i64, tpu.core_type = #tpu.core_type<tc>} {
    %c0 = arith.constant 0 : index
    %c0_0 = arith.constant 0 : index
    %0 = vector.load %arg12[%c0, %c0_0] : memref<512x32xf32, #tpu.memory_space<vmem>>, vector<512x32xf32>
    %c0_1 = arith.constant 0 : index
    %c0_2 = arith.constant 0 : index
    %1 = vector.load %arg13[%c0_1, %c0_2] : memref<32x512xf32, #tpu.memory_space<vmem>>, vector<32x512xf32>
    %c0_3 = arith.constant 0 : index
    %c0_4 = arith.constant 0 : index
    %c0_5 = arith.constant 0 : index
    %2 = vector.load %arg0[%c0_3, %c0_4, %c0_5] : memref<2x16x256xf32, #tpu.memory_space<vmem>>, vector<2x16x256xf32>
    %cst = arith.constant 0.000000e+00 : f32
    %3 = vector.broadcast %cst : f32 to vector<2x1x256xf32>
    %4 = vector.extract_strided_slice %2 {offsets = [0, 0, 0], sizes = [2, 15, 256], strides = [1, 1, 1]} : vector<2x16x256xf32> to vector<2x15x256xf32>
    %5 = tpu.concatenate %3, %4 in 1 : vector<2x1x256xf32>, vector<2x15x256xf32> -> vector<2x16x256xf32>
    %6 = vector.extract_strided_slice %2 {offsets = [0, 1, 0], sizes = [2, 15, 256], strides = [1, 1, 1]} : vector<2x16x256xf32> to vector<2x15x256xf32>
    %7 = tpu.concatenate %6, %3 in 1 : vector<2x15x256xf32>, vector<2x1x256xf32> -> vector<2x16x256xf32>
    %8 = vector.shape_cast %5 : vector<2x16x256xf32> to vector<32x256xf32>
    %9 = vector.shape_cast %2 : vector<2x16x256xf32> to vector<32x256xf32>
    %10 = vector.shape_cast %7 : vector<2x16x256xf32> to vector<32x256xf32>
    %11 = tpu.concatenate %8, %9, %10 in 1 : vector<32x256xf32>, vector<32x256xf32>, vector<32x256xf32> -> vector<32x768xf32>
    %12 = arith.truncf %11 : vector<32x768xf32> to vector<32x768xbf16>
    %c0_6 = arith.constant 0 : index
    %c0_7 = arith.constant 0 : index
    %13 = vector.load %arg1[%c0_6, %c0_7] : memref<768x512xbf16, #tpu.memory_space<vmem>>, vector<768x512xbf16>
    %cst_8 = arith.constant dense<0.000000e+00> : vector<32x512xf32>
    %14 = tpu.matmul %12, %13, %cst_8 {dimension_numbers = #tpu.dot_dimension_numbers<[1], [0], [0], [1], [0, 0, 1, 1], [], []>} : vector<32x768xbf16>, vector<768x512xbf16>, vector<32x512xf32> -> vector<32x512xf32>
    %c0_9 = arith.constant 0 : index
    %c0_10 = arith.constant 0 : index
    %15 = vector.load %arg2[%c0_9, %c0_10] : memref<1x32xf32, #tpu.memory_space<vmem>>, vector<1x32xf32>
    %c0_11 = arith.constant 0 : index
    %c0_12 = arith.constant 0 : index
    %16 = vector.load %arg3[%c0_11, %c0_12] : memref<1x32xf32, #tpu.memory_space<vmem>>, vector<1x32xf32>
    %cst_13 = arith.constant dense<0.000000e+00> : vector<512xf32>
    %17 = vector.multi_reduction <add>, %14, %cst_13 [0] : vector<32x512xf32> to vector<512xf32>
    %18 = vector.shape_cast %17 : vector<512xf32> to vector<1x512xf32>
    %19 = arith.mulf %14, %14 : vector<32x512xf32>
    %cst_14 = arith.constant dense<0.000000e+00> : vector<512xf32>
    %20 = vector.multi_reduction <add>, %19, %cst_14 [0] : vector<32x512xf32> to vector<512xf32>
    %21 = vector.shape_cast %20 : vector<512xf32> to vector<1x512xf32>
    %22 = tpu.concatenate %18, %21 in 0 : vector<1x512xf32>, vector<1x512xf32> -> vector<2x512xf32>
    %cst_15 = arith.constant dense<0.000000e+00> : vector<2x32xf32>
    %23 = tpu.matmul %22, %0, %cst_15 {dimension_numbers = #tpu.dot_dimension_numbers<[1], [0], [0], [1], [0, 0, 1, 1], [], []>} : vector<2x512xf32>, vector<512x32xf32>, vector<2x32xf32> -> vector<2x32xf32>
    %24 = vector.extract_strided_slice %23 {offsets = [0, 0], sizes = [1, 32], strides = [1, 1]} : vector<2x32xf32> to vector<1x32xf32>
    %cst_16 = arith.constant 0.001953125 : f32
    %25 = vector.broadcast %cst_16 : f32 to vector<1x32xf32>
    %26 = arith.mulf %24, %25 : vector<1x32xf32>
    %27 = vector.extract_strided_slice %23 {offsets = [1, 0], sizes = [1, 32], strides = [1, 1]} : vector<2x32xf32> to vector<1x32xf32>
    %cst_17 = arith.constant 0.001953125 : f32
    %28 = vector.broadcast %cst_17 : f32 to vector<1x32xf32>
    %29 = arith.mulf %27, %28 : vector<1x32xf32>
    %30 = arith.mulf %26, %26 : vector<1x32xf32>
    %31 = arith.subf %29, %30 : vector<1x32xf32>
    %cst_18 = arith.constant 9.99999974E-6 : f32
    %32 = vector.broadcast %cst_18 : f32 to vector<1x32xf32>
    %33 = arith.addf %31, %32 : vector<1x32xf32>
    %34 = math.rsqrt %33 : vector<1x32xf32>
    %35 = arith.mulf %15, %34 : vector<1x32xf32>
    %36 = arith.mulf %26, %35 : vector<1x32xf32>
    %37 = arith.subf %16, %36 : vector<1x32xf32>
    %38 = tpu.concatenate %35, %37 in 0 : vector<1x32xf32>, vector<1x32xf32> -> vector<2x32xf32>
    %cst_19 = arith.constant dense<0.000000e+00> : vector<2x512xf32>
    %39 = tpu.matmul %38, %1, %cst_19 {dimension_numbers = #tpu.dot_dimension_numbers<[1], [0], [0], [1], [0, 0, 1, 1], [], []>} : vector<2x32xf32>, vector<32x512xf32>, vector<2x512xf32> -> vector<2x512xf32>
    %40 = vector.extract_strided_slice %39 {offsets = [0, 0], sizes = [1, 512], strides = [1, 1]} : vector<2x512xf32> to vector<1x512xf32>
    %41 = vector.broadcast %40 : vector<1x512xf32> to vector<32x512xf32>
    %42 = arith.mulf %14, %41 : vector<32x512xf32>
    %43 = vector.extract_strided_slice %39 {offsets = [1, 0], sizes = [1, 512], strides = [1, 1]} : vector<2x512xf32> to vector<1x512xf32>
    %44 = vector.broadcast %43 : vector<1x512xf32> to vector<32x512xf32>
    %45 = arith.addf %42, %44 : vector<32x512xf32>
    %cst_20 = arith.constant 0.000000e+00 : f32
    %46 = vector.broadcast %cst_20 : f32 to vector<32x512xf32>
    %47 = arith.maximumf %45, %46 : vector<32x512xf32>
    %48 = vector.shape_cast %47 : vector<32x512xf32> to vector<2x16x512xf32>
    %cst_21 = arith.constant 0.000000e+00 : f32
    %49 = vector.broadcast %cst_21 : f32 to vector<2x1x512xf32>
    %50 = vector.extract_strided_slice %48 {offsets = [0, 0, 0], sizes = [2, 15, 512], strides = [1, 1, 1]} : vector<2x16x512xf32> to vector<2x15x512xf32>
    %51 = tpu.concatenate %49, %50 in 1 : vector<2x1x512xf32>, vector<2x15x512xf32> -> vector<2x16x512xf32>
    %52 = vector.extract_strided_slice %48 {offsets = [0, 1, 0], sizes = [2, 15, 512], strides = [1, 1, 1]} : vector<2x16x512xf32> to vector<2x15x512xf32>
    %53 = tpu.concatenate %52, %49 in 1 : vector<2x15x512xf32>, vector<2x1x512xf32> -> vector<2x16x512xf32>
    %54 = vector.shape_cast %51 : vector<2x16x512xf32> to vector<32x512xf32>
    %55 = vector.shape_cast %48 : vector<2x16x512xf32> to vector<32x512xf32>
    %56 = vector.shape_cast %53 : vector<2x16x512xf32> to vector<32x512xf32>
    %57 = tpu.concatenate %54, %55, %56 in 1 : vector<32x512xf32>, vector<32x512xf32>, vector<32x512xf32> -> vector<32x1536xf32>
    %58 = arith.truncf %57 : vector<32x1536xf32> to vector<32x1536xbf16>
    %c0_22 = arith.constant 0 : index
    %c0_23 = arith.constant 0 : index
    %59 = vector.load %arg4[%c0_22, %c0_23] : memref<1536x512xbf16, #tpu.memory_space<vmem>>, vector<1536x512xbf16>
    %cst_24 = arith.constant dense<0.000000e+00> : vector<32x512xf32>
    %60 = tpu.matmul %58, %59, %cst_24 {dimension_numbers = #tpu.dot_dimension_numbers<[1], [0], [0], [1], [0, 0, 1, 1], [], []>} : vector<32x1536xbf16>, vector<1536x512xbf16>, vector<32x512xf32> -> vector<32x512xf32>
    %c0_25 = arith.constant 0 : index
    %c0_26 = arith.constant 0 : index
    %61 = vector.load %arg5[%c0_25, %c0_26] : memref<1x32xf32, #tpu.memory_space<vmem>>, vector<1x32xf32>
    %c0_27 = arith.constant 0 : index
    %c0_28 = arith.constant 0 : index
    %62 = vector.load %arg6[%c0_27, %c0_28] : memref<1x32xf32, #tpu.memory_space<vmem>>, vector<1x32xf32>
    %cst_29 = arith.constant dense<0.000000e+00> : vector<512xf32>
    %63 = vector.multi_reduction <add>, %60, %cst_29 [0] : vector<32x512xf32> to vector<512xf32>
    %64 = vector.shape_cast %63 : vector<512xf32> to vector<1x512xf32>
    %65 = arith.mulf %60, %60 : vector<32x512xf32>
    %cst_30 = arith.constant dense<0.000000e+00> : vector<512xf32>
    %66 = vector.multi_reduction <add>, %65, %cst_30 [0] : vector<32x512xf32> to vector<512xf32>
    %67 = vector.shape_cast %66 : vector<512xf32> to vector<1x512xf32>
    %68 = tpu.concatenate %64, %67 in 0 : vector<1x512xf32>, vector<1x512xf32> -> vector<2x512xf32>
    %cst_31 = arith.constant dense<0.000000e+00> : vector<2x32xf32>
    %69 = tpu.matmul %68, %0, %cst_31 {dimension_numbers = #tpu.dot_dimension_numbers<[1], [0], [0], [1], [0, 0, 1, 1], [], []>} : vector<2x512xf32>, vector<512x32xf32>, vector<2x32xf32> -> vector<2x32xf32>
    %70 = vector.extract_strided_slice %69 {offsets = [0, 0], sizes = [1, 32], strides = [1, 1]} : vector<2x32xf32> to vector<1x32xf32>
    %cst_32 = arith.constant 0.001953125 : f32
    %71 = vector.broadcast %cst_32 : f32 to vector<1x32xf32>
    %72 = arith.mulf %70, %71 : vector<1x32xf32>
    %73 = vector.extract_strided_slice %69 {offsets = [1, 0], sizes = [1, 32], strides = [1, 1]} : vector<2x32xf32> to vector<1x32xf32>
    %cst_33 = arith.constant 0.001953125 : f32
    %74 = vector.broadcast %cst_33 : f32 to vector<1x32xf32>
    %75 = arith.mulf %73, %74 : vector<1x32xf32>
    %76 = arith.mulf %72, %72 : vector<1x32xf32>
    %77 = arith.subf %75, %76 : vector<1x32xf32>
    %cst_34 = arith.constant 9.99999974E-6 : f32
    %78 = vector.broadcast %cst_34 : f32 to vector<1x32xf32>
    %79 = arith.addf %77, %78 : vector<1x32xf32>
    %80 = math.rsqrt %79 : vector<1x32xf32>
    %81 = arith.mulf %61, %80 : vector<1x32xf32>
    %82 = arith.mulf %72, %81 : vector<1x32xf32>
    %83 = arith.subf %62, %82 : vector<1x32xf32>
    %84 = tpu.concatenate %81, %83 in 0 : vector<1x32xf32>, vector<1x32xf32> -> vector<2x32xf32>
    %cst_35 = arith.constant dense<0.000000e+00> : vector<2x512xf32>
    %85 = tpu.matmul %84, %1, %cst_35 {dimension_numbers = #tpu.dot_dimension_numbers<[1], [0], [0], [1], [0, 0, 1, 1], [], []>} : vector<2x32xf32>, vector<32x512xf32>, vector<2x512xf32> -> vector<2x512xf32>
    %86 = vector.extract_strided_slice %85 {offsets = [0, 0], sizes = [1, 512], strides = [1, 1]} : vector<2x512xf32> to vector<1x512xf32>
    %87 = vector.broadcast %86 : vector<1x512xf32> to vector<32x512xf32>
    %88 = arith.mulf %60, %87 : vector<32x512xf32>
    %89 = vector.extract_strided_slice %85 {offsets = [1, 0], sizes = [1, 512], strides = [1, 1]} : vector<2x512xf32> to vector<1x512xf32>
    %90 = vector.broadcast %89 : vector<1x512xf32> to vector<32x512xf32>
    %91 = arith.addf %88, %90 : vector<32x512xf32>
    %92 = vector.shape_cast %91 : vector<32x512xf32> to vector<2x16x512xf32>
    %cst_36 = arith.constant dense<0.000000e+00> : vector<2x512xf32>
    %93 = vector.multi_reduction <add>, %92, %cst_36 [1] : vector<2x16x512xf32> to vector<2x512xf32>
    %cst_37 = arith.constant dense<0.000000e+00> : vector<2x32xf32>
    %94 = tpu.matmul %93, %0, %cst_37 {dimension_numbers = #tpu.dot_dimension_numbers<[1], [0], [0], [1], [0, 0, 1, 1], [], []>} : vector<2x512xf32>, vector<512x32xf32>, vector<2x32xf32> -> vector<2x32xf32>
    %cst_38 = arith.constant 3.906250e-03 : f32
    %95 = vector.broadcast %cst_38 : f32 to vector<2x32xf32>
    %96 = arith.mulf %94, %95 : vector<2x32xf32>
    %cst_39 = arith.constant 0.000000e+00 : f32
    %97 = vector.broadcast %cst_39 : f32 to vector<2x32xf32>
    %c0_40 = arith.constant 0 : index
    %c0_41 = arith.constant 0 : index
    %98 = vector.load %arg7[%c0_40, %c0_41] : memref<2x32xf32, #tpu.memory_space<vmem>>, vector<1x32xf32>
    %99 = vector.broadcast %98 : vector<1x32xf32> to vector<2x32xf32>
    %100 = arith.mulf %96, %99 : vector<2x32xf32>
    %cst_42 = arith.constant dense<0.000000e+00> : vector<2xf32>
    %101 = vector.multi_reduction <add>, %100, %cst_42 [1] : vector<2x32xf32> to vector<2xf32>
    %102 = vector.shape_cast %101 : vector<2xf32> to vector<2x1xf32>
    %cst_43 = arith.constant 0.000000e+00 : f32
    %103 = vector.broadcast %cst_43 : f32 to vector<2x1xf32>
    %104 = arith.maximumf %102, %103 : vector<2x1xf32>
    %c0_44 = arith.constant 0 : index
    %c0_45 = arith.constant 0 : index
    %105 = vector.load %arg8[%c0_44, %c0_45] : memref<2x32xf32, #tpu.memory_space<vmem>>, vector<1x32xf32>
    %106 = vector.broadcast %104 : vector<2x1xf32> to vector<2x32xf32>
    %107 = vector.broadcast %105 : vector<1x32xf32> to vector<2x32xf32>
    %108 = arith.mulf %106, %107 : vector<2x32xf32>
    %109 = arith.addf %97, %108 : vector<2x32xf32>
    %c1 = arith.constant 1 : index
    %c0_46 = arith.constant 0 : index
    %110 = vector.load %arg7[%c1, %c0_46] : memref<2x32xf32, #tpu.memory_space<vmem>>, vector<1x32xf32>
    %111 = vector.broadcast %110 : vector<1x32xf32> to vector<2x32xf32>
    %112 = arith.mulf %96, %111 : vector<2x32xf32>
    %cst_47 = arith.constant dense<0.000000e+00> : vector<2xf32>
    %113 = vector.multi_reduction <add>, %112, %cst_47 [1] : vector<2x32xf32> to vector<2xf32>
    %114 = vector.shape_cast %113 : vector<2xf32> to vector<2x1xf32>
    %cst_48 = arith.constant 0.000000e+00 : f32
    %115 = vector.broadcast %cst_48 : f32 to vector<2x1xf32>
    %116 = arith.maximumf %114, %115 : vector<2x1xf32>
    %c1_49 = arith.constant 1 : index
    %c0_50 = arith.constant 0 : index
    %117 = vector.load %arg8[%c1_49, %c0_50] : memref<2x32xf32, #tpu.memory_space<vmem>>, vector<1x32xf32>
    %118 = vector.broadcast %116 : vector<2x1xf32> to vector<2x32xf32>
    %119 = vector.broadcast %117 : vector<1x32xf32> to vector<2x32xf32>
    %120 = arith.mulf %118, %119 : vector<2x32xf32>
    %121 = arith.addf %109, %120 : vector<2x32xf32>
    %122 = arith.negf %121 : vector<2x32xf32>
    %123 = math.exp %122 : vector<2x32xf32>
    %cst_51 = arith.constant 1.000000e+00 : f32
    %124 = vector.broadcast %cst_51 : f32 to vector<2x32xf32>
    %125 = arith.addf %124, %123 : vector<2x32xf32>
    %126 = arith.divf %124, %125 : vector<2x32xf32>
    %cst_52 = arith.constant dense<0.000000e+00> : vector<2x512xf32>
    %127 = tpu.matmul %126, %1, %cst_52 {dimension_numbers = #tpu.dot_dimension_numbers<[1], [0], [0], [1], [0, 0, 1, 1], [], []>} : vector<2x32xf32>, vector<32x512xf32>, vector<2x512xf32> -> vector<2x512xf32>
    %128 = vector.shape_cast %127 : vector<2x512xf32> to vector<2x1x512xf32>
    %129 = vector.broadcast %128 : vector<2x1x512xf32> to vector<2x16x512xf32>
    %130 = arith.mulf %92, %129 : vector<2x16x512xf32>
    %131 = vector.shape_cast %130 : vector<2x16x512xf32> to vector<32x512xf32>
    %132 = vector.shape_cast %2 : vector<2x16x256xf32> to vector<32x256xf32>
    %133 = arith.truncf %132 : vector<32x256xf32> to vector<32x256xbf16>
    %c0_53 = arith.constant 0 : index
    %c0_54 = arith.constant 0 : index
    %134 = vector.load %arg9[%c0_53, %c0_54] : memref<256x512xbf16, #tpu.memory_space<vmem>>, vector<256x512xbf16>
    %cst_55 = arith.constant dense<0.000000e+00> : vector<32x512xf32>
    %135 = tpu.matmul %133, %134, %cst_55 {dimension_numbers = #tpu.dot_dimension_numbers<[1], [0], [0], [1], [0, 0, 1, 1], [], []>} : vector<32x256xbf16>, vector<256x512xbf16>, vector<32x512xf32> -> vector<32x512xf32>
    %c0_56 = arith.constant 0 : index
    %c0_57 = arith.constant 0 : index
    %136 = vector.load %arg10[%c0_56, %c0_57] : memref<1x32xf32, #tpu.memory_space<vmem>>, vector<1x32xf32>
    %c0_58 = arith.constant 0 : index
    %c0_59 = arith.constant 0 : index
    %137 = vector.load %arg11[%c0_58, %c0_59] : memref<1x32xf32, #tpu.memory_space<vmem>>, vector<1x32xf32>
    %cst_60 = arith.constant dense<0.000000e+00> : vector<512xf32>
    %138 = vector.multi_reduction <add>, %135, %cst_60 [0] : vector<32x512xf32> to vector<512xf32>
    %139 = vector.shape_cast %138 : vector<512xf32> to vector<1x512xf32>
    %140 = arith.mulf %135, %135 : vector<32x512xf32>
    %cst_61 = arith.constant dense<0.000000e+00> : vector<512xf32>
    %141 = vector.multi_reduction <add>, %140, %cst_61 [0] : vector<32x512xf32> to vector<512xf32>
    %142 = vector.shape_cast %141 : vector<512xf32> to vector<1x512xf32>
    %143 = tpu.concatenate %139, %142 in 0 : vector<1x512xf32>, vector<1x512xf32> -> vector<2x512xf32>
    %cst_62 = arith.constant dense<0.000000e+00> : vector<2x32xf32>
    %144 = tpu.matmul %143, %0, %cst_62 {dimension_numbers = #tpu.dot_dimension_numbers<[1], [0], [0], [1], [0, 0, 1, 1], [], []>} : vector<2x512xf32>, vector<512x32xf32>, vector<2x32xf32> -> vector<2x32xf32>
    %145 = vector.extract_strided_slice %144 {offsets = [0, 0], sizes = [1, 32], strides = [1, 1]} : vector<2x32xf32> to vector<1x32xf32>
    %cst_63 = arith.constant 0.001953125 : f32
    %146 = vector.broadcast %cst_63 : f32 to vector<1x32xf32>
    %147 = arith.mulf %145, %146 : vector<1x32xf32>
    %148 = vector.extract_strided_slice %144 {offsets = [1, 0], sizes = [1, 32], strides = [1, 1]} : vector<2x32xf32> to vector<1x32xf32>
    %cst_64 = arith.constant 0.001953125 : f32
    %149 = vector.broadcast %cst_64 : f32 to vector<1x32xf32>
    %150 = arith.mulf %148, %149 : vector<1x32xf32>
    %151 = arith.mulf %147, %147 : vector<1x32xf32>
    %152 = arith.subf %150, %151 : vector<1x32xf32>
    %cst_65 = arith.constant 9.99999974E-6 : f32
    %153 = vector.broadcast %cst_65 : f32 to vector<1x32xf32>
    %154 = arith.addf %152, %153 : vector<1x32xf32>
    %155 = math.rsqrt %154 : vector<1x32xf32>
    %156 = arith.mulf %136, %155 : vector<1x32xf32>
    %157 = arith.mulf %147, %156 : vector<1x32xf32>
    %158 = arith.subf %137, %157 : vector<1x32xf32>
    %159 = tpu.concatenate %156, %158 in 0 : vector<1x32xf32>, vector<1x32xf32> -> vector<2x32xf32>
    %cst_66 = arith.constant dense<0.000000e+00> : vector<2x512xf32>
    %160 = tpu.matmul %159, %1, %cst_66 {dimension_numbers = #tpu.dot_dimension_numbers<[1], [0], [0], [1], [0, 0, 1, 1], [], []>} : vector<2x32xf32>, vector<32x512xf32>, vector<2x512xf32> -> vector<2x512xf32>
    %161 = vector.extract_strided_slice %160 {offsets = [0, 0], sizes = [1, 512], strides = [1, 1]} : vector<2x512xf32> to vector<1x512xf32>
    %162 = vector.broadcast %161 : vector<1x512xf32> to vector<32x512xf32>
    %163 = arith.mulf %135, %162 : vector<32x512xf32>
    %164 = vector.extract_strided_slice %160 {offsets = [1, 0], sizes = [1, 512], strides = [1, 1]} : vector<2x512xf32> to vector<1x512xf32>
    %165 = vector.broadcast %164 : vector<1x512xf32> to vector<32x512xf32>
    %166 = arith.addf %163, %165 : vector<32x512xf32>
    %167 = arith.addf %131, %166 : vector<32x512xf32>
    %cst_67 = arith.constant 0.000000e+00 : f32
    %168 = vector.broadcast %cst_67 : f32 to vector<32x512xf32>
    %169 = arith.maximumf %167, %168 : vector<32x512xf32>
    %c0_68 = arith.constant 0 : index
    %c0_69 = arith.constant 0 : index
    %170 = vector.load %arg14[%c0_68, %c0_69] : memref<32x512xf32, #tpu.memory_space<vmem>>, vector<32x512xf32>
    tpu.vector_store %arg14[%c0_68, %c0_69], %169 {strides = array<i32>} : memref<32x512xf32, #tpu.memory_space<vmem>>, vector<32x512xf32>,
    return
  }
}

</mosaic_0001>

<llo_original>
// kernel: residual_block_forward.1
$region0: #{residual_block_forward.1}
  #allocation0 [shape = 'u32[]', space=smem, size = 0x4, offset = 0x4, fixed_abs, tag = 'smem constant byte address 0x4 - core index']
  #allocation1 [shape = 'u32[144,128]{1,0:T(1,128)}', space=vmem, size = 0x12000, scoped, tag = 'internal scratch']
  %s0 = inlined_call_operand.vmem [shape: f32[2,16,256], index: 0, kind: input, shape index: {}]
  %s1 = inlined_call_operand.vmem [shape: bf16[768,512], index: 1, kind: input, shape index: {}]
  %s2 = inlined_call_operand.hbm [shape: f32[1,32], index: 2, kind: input, shape index: {}]
  %s3 = inlined_call_operand.hbm [shape: f32[1,32], index: 3, kind: input, shape index: {}]
  %s4 = inlined_call_operand.hbm [shape: bf16[1536,512], index: 4, kind: input, shape index: {}]
  %s5 = inlined_call_operand.hbm [shape: f32[1,32], index: 5, kind: input, shape index: {}]
  %s6 = inlined_call_operand.hbm [shape: f32[1,32], index: 6, kind: input, shape index: {}]
  %s7 = inlined_call_operand.hbm [shape: f32[2,32], index: 7, kind: input, shape index: {}]
  %s8 = inlined_call_operand.hbm [shape: f32[2,32], index: 8, kind: input, shape index: {}]
  %s9 = inlined_call_operand.hbm [shape: bf16[256,512], index: 9, kind: input, shape index: {}]
  %s10 = inlined_call_operand.hbm [shape: f32[1,32], index: 10, kind: input, shape index: {}]
  %s11 = inlined_call_operand.hbm [shape: f32[1,32], index: 11, kind: input, shape index: {}]
  %s12 = inlined_call_operand.vmem [shape: f32[512,32], index: 12, kind: input, shape index: {}]
  %s13 = inlined_call_operand.hbm [shape: f32[32,512], index: 13, kind: input, shape index: {}]
  %s14 = inlined_call_operand.vmem [shape: f32[32,512], index: 14, kind: output, shape index: {}]
  %s15 = sld [smem:[#allocation0]]
  $region110: #{residual_block_forward.1} parent=0
    _
  %s17 = ssub.s32 1, %s15
  %s18 = scalar_select 0, %s17, %s15
  $region1: #{residual_block_forward.1} parent=0
    #allocation2 [shape = 'u8[512]{0}', space=vmem, size = 0x400, scoped, tag = 'input window, operand 2, single buffered']
    #allocation3 [shape = 's32[1]{0}', space=sflag, size = 0x4, scoped, tag = 'scoped memory for residual_block_forward.1']
    #allocation4 [shape = 'u8[512]{0}', space=vmem, size = 0x400, scoped, tag = 'input window, operand 3, single buffered']
    #allocation5 [shape = 's32[1]{0}', space=sflag, size = 0x4, scoped, tag = 'scoped memory for residual_block_forward.1']
    #allocation6 [shape = 'u8[1572864]{0}', space=vmem, size = 0x180000, scoped, tag = 'input window, operand 4, single buffered']
    #allocation7 [shape = 'u8[512]{0}', space=vmem, size = 0x400, scoped, tag = 'input window, operand 5, single buffered']
    #allocation8 [shape = 's32[1]{0}', space=sflag, size = 0x4, scoped, tag = 'scoped memory for residual_block_forward.1']
    #allocation9 [shape = 'u8[512]{0}', space=vmem, size = 0x400, scoped, tag = 'input window, operand 6, single buffered']
    #allocation10 [shape = 'u8[1024]{0}', space=vmem, size = 0x400, scoped, tag = 'input window, operand 7, single buffered']
    #allocation11 [shape = 's32[1]{0}', space=sflag, size = 0x4, scoped, tag = 'scoped memory for residual_block_forward.1']
    #allocation12 [shape = 'u8[1024]{0}', space=vmem, size = 0x400, scoped, tag = 'input window, operand 8, single buffered']
    #allocation13 [shape = 'u8[262144]{0}', space=vmem, size = 0x40000, scoped, tag = 'input window, operand 9, single buffered']
    #allocation14 [shape = 's32[1]{0}', space=sflag, size = 0x4, scoped, tag = 'scoped memory for residual_block_forward.1']
    #allocation15 [shape = 'u8[512]{0}', space=vmem, size = 0x400, scoped, tag = 'input window, operand 10, single buffered']
    #allocation16 [shape = 'u8[512]{0}', space=vmem, size = 0x400, scoped, tag = 'input window, operand 11, single buffered']
    #allocation17 [shape = 's32[1]{0}', space=sflag, size = 0x4, scoped, tag = 'scoped memory for residual_block_forward.1']
    #allocation18 [shape = 'u8[65536]{0}', space=vmem, size = 0x10000, scoped, tag = 'input window, operand 13, single buffered']
    %19 = vsyncpa [#allocation3], 0
    %20 = vsyncpa [#allocation5], 0
    %21 = vsyncpa [#allocation8], 0
    %22 = vsyncpa [#allocation11], 0
    %23 = vsyncpa [#allocation14], 0
    %24 = vsyncpa [#allocation17], 0
    // Predicated region
    $region2: #{residual_block_forward.1} parent=1 // pred_check
      _
    $region3: #{residual_block_forward.1} parent=1 // pred_check_branch
      %26 = sbr.rel (0) target = $region5
    $region4: #{residual_block_forward.1} parent=1 // pred_region
      _
    $region5: #{residual_block_forward.1} parent=1 // pred_fallthru
      _
    // Predicated region
    $region6: #{residual_block_forward.1} parent=1 // pred_check
      _
    $region7: #{residual_block_forward.1} parent=1 // pred_check_branch
      %28 = sbr.rel (0) target = $region9
    $region8: #{residual_block_forward.1} parent=1 // pred_region
      _
    $region9: #{residual_block_forward.1} parent=1 // pred_fallthru
      _
    // Predicated region
    $region10: #{residual_block_forward.1} parent=1 // pred_check
      _
    $region11: #{residual_block_forward.1} parent=1 // pred_check_branch
      %30 = sbr.rel (0) target = $region13
    $region12: #{residual_block_forward.1} parent=1 // pred_region
      %s32 = ssub.s32 16, 16
      %33 = vsyncadd [#allocation3], %s32
      %s35 = sshll.u32 [#allocation2], 4
      %s36 = int_to_ptr.vmem [resolvable:$true] %s35
      %38 = dma.hbm_to_vmem [thread:$0]  %s2, 16, %s36, [#allocation3]
    $region13: #{residual_block_forward.1} parent=1 // pred_fallthru
      _
    // Predicated region
    $region14: #{residual_block_forward.1} parent=1 // pred_check
      _
    $region15: #{residual_block_forward.1} parent=1 // pred_check_branch
      %40 = sbr.rel (0) target = $region17
    $region16: #{residual_block_forward.1} parent=1 // pred_region
      %s42 = ssub.s32 16, 16
      %43 = vsyncadd [#allocation5], %s42
      %s45 = sshll.u32 [#allocation4], 4
      %s46 = int_to_ptr.vmem [resolvable:$true] %s45
      %48 = dma.hbm_to_vmem [thread:$0]  %s3, 16, %s46, [#allocation5]
    $region17: #{residual_block_forward.1} parent=1 // pred_fallthru
      _
    // Predicated region
    $region18: #{residual_block_forward.1} parent=1 // pred_check
      _
    $region19: #{residual_block_forward.1} parent=1 // pred_check_branch
      %50 = sbr.rel (0) target = $region21
    $region20: #{residual_block_forward.1} parent=1 // pred_region
      %s52 = ssub.s32 49152, 49152
      %53 = vsyncadd [#allocation5], %s52
      %s54 = sshll.u32 [#allocation6], 4
      %s55 = int_to_ptr.vmem [resolvable:$true] %s54
      %60 = dma.hbm_to_vmem [thread:$0]  %s4, 49152, %s55, [#allocation5], 256, 256, 16
    $region21: #{residual_block_forward.1} parent=1 // pred_fallthru
      _
    // Predicated region
    $region22: #{residual_block_forward.1} parent=1 // pred_check
      _
    $region23: #{residual_block_forward.1} parent=1 // pred_check_branch
      %62 = sbr.rel (0) target = $region25
    $region24: #{residual_block_forward.1} parent=1 // pred_region
      %s64 = ssub.s32 16, 16
      %65 = vsyncadd [#allocation8], %s64
      %s67 = sshll.u32 [#allocation7], 4
      %s68 = int_to_ptr.vmem [resolvable:$true] %s67
      %70 = dma.hbm_to_vmem [thread:$0]  %s5, 16, %s68, [#allocation8]
    $region25: #{residual_block_forward.1} parent=1 // pred_fallthru
      _
    // Predicated region
    $region26: #{residual_block_forward.1} parent=1 // pred_check
      _
    $region27: #{residual_block_forward.1} parent=1 // pred_check_branch
      %72 = sbr.rel (0) target = $region29
    $region28: #{residual_block_forward.1} parent=1 // pred_region
      %s74 = ssub.s32 16, 16
      %75 = vsyncadd [#allocation8], %s74
      %s77 = sshll.u32 [#allocation9], 4
      %s78 = int_to_ptr.vmem [resolvable:$true] %s77
      %80 = dma.hbm_to_vmem [thread:$0]  %s6, 16, %s78, [#allocation8]
    $region29: #{residual_block_forward.1} parent=1 // pred_fallthru
      _
    // Predicated region
    $region30: #{residual_block_forward.1} parent=1 // pred_check
      _
    $region31: #{residual_block_forward.1} parent=1 // pred_check_branch
      %82 = sbr.rel (0) target = $region33
    $region32: #{residual_block_forward.1} parent=1 // pred_region
      %s84 = ssub.s32 32, 32
      %85 = vsyncadd [#allocation11], %s84
      %s87 = sshll.u32 [#allocation10], 4
      %s88 = int_to_ptr.vmem [resolvable:$true] %s87
      %90 = dma.hbm_to_vmem [thread:$0]  %s7, 32, %s88, [#allocation11]
    $region33: #{residual_block_forward.1} parent=1 // pred_fallthru
      _
    // Predicated region
    $region34: #{residual_block_forward.1} parent=1 // pred_check
      _
    $region35: #{residual_block_forward.1} parent=1 // pred_check_branch
      %92 = sbr.rel (0) target = $region37
    $region36: #{residual_block_forward.1} parent=1 // pred_region
      %s94 = ssub.s32 32, 32
      %95 = vsyncadd [#allocation11], %s94
      %s97 = sshll.u32 [#allocation12], 4
      %s98 = int_to_ptr.vmem [resolvable:$true] %s97
      %100 = dma.hbm_to_vmem [thread:$0]  %s8, 32, %s98, [#allocation11]
    $region37: #{residual_block_forward.1} parent=1 // pred_fallthru
      _
    // Predicated region
    $region38: #{residual_block_forward.1} parent=1 // pred_check
      _
    $region39: #{residual_block_forward.1} parent=1 // pred_check_branch
      %102 = sbr.rel (0) target = $region41
    $region40: #{residual_block_forward.1} parent=1 // pred_region
      %s104 = ssub.s32 8192, 8192
      %105 = vsyncadd [#allocation14], %s104
      %s106 = sshll.u32 [#allocation13], 4
      %s107 = int_to_ptr.vmem [resolvable:$true] %s106
      %112 = dma.hbm_to_vmem [thread:$0]  %s9, 8192, %s107, [#allocation14], 256, 256, 16
    $region41: #{residual_block_forward.1} parent=1 // pred_fallthru
      _
    // Predicated region
    $region42: #{residual_block_forward.1} parent=1 // pred_check
      _
    $region43: #{residual_block_forward.1} parent=1 // pred_check_branch
      %114 = sbr.rel (0) target = $region45
    $region44: #{residual_block_forward.1} parent=1 // pred_region
      %s116 = ssub.s32 16, 16
      %117 = vsyncadd [#allocation14], %s116
      %s119 = sshll.u32 [#allocation15], 4
      %s120 = int_to_ptr.vmem [resolvable:$true] %s119
      %122 = dma.hbm_to_vmem [thread:$0]  %s10, 16, %s120, [#allocation14]
    $region45: #{residual_block_forward.1} parent=1 // pred_fallthru
      _
    // Predicated region
    $region46: #{residual_block_forward.1} parent=1 // pred_check
      _
    $region47: #{residual_block_forward.1} parent=1 // pred_check_branch
      %124 = sbr.rel (0) target = $region49
    $region48: #{residual_block_forward.1} parent=1 // pred_region
      %s126 = ssub.s32 16, 16
      %127 = vsyncadd [#allocation17], %s126
      %s129 = sshll.u32 [#allocation16], 4
      %s130 = int_to_ptr.vmem [resolvable:$true] %s129
      %132 = dma.hbm_to_vmem [thread:$0]  %s11, 16, %s130, [#allocation17]
    $region49: #{residual_block_forward.1} parent=1 // pred_fallthru
      _
    // Predicated region
    $region50: #{residual_block_forward.1} parent=1 // pred_check
      _
    $region51: #{residual_block_forward.1} parent=1 // pred_check_branch
      %134 = sbr.rel (0) target = $region53
    $region52: #{residual_block_forward.1} parent=1 // pred_region
      _
    $region53: #{residual_block_forward.1} parent=1 // pred_fallthru
      _
    // Predicated region
    $region54: #{residual_block_forward.1} parent=1 // pred_check
      _
    $region55: #{residual_block_forward.1} parent=1 // pred_check_branch
      %136 = sbr.rel (0) target = $region57
    $region56: #{residual_block_forward.1} parent=1 // pred_region
      %s138 = ssub.s32 2048, 2048
      %139 = vsyncadd [#allocation17], %s138
      %s140 = sshll.u32 [#allocation18], 4
      %s141 = int_to_ptr.vmem [resolvable:$true] %s140
      %146 = dma.hbm_to_vmem [thread:$0]  %s13, 2048, %s141, [#allocation17], 512, 512, 32
    $region57: #{residual_block_forward.1} parent=1 // pred_fallthru
      _
    // Predicated region
    $region58: #{residual_block_forward.1} parent=1 // pred_check
      _
    $region59: #{residual_block_forward.1} parent=1 // pred_check_branch
      %148 = sbr.rel (0) target = $region61
    $region60: #{residual_block_forward.1} parent=1 // pred_region
      %149 = dma.done [#allocation3], 16
    $region61: #{residual_block_forward.1} parent=1 // pred_fallthru
      _
    // Predicated region
    $region62: #{residual_block_forward.1} parent=1 // pred_check
      _
    $region63: #{residual_block_forward.1} parent=1 // pred_check_branch
      %151 = sbr.rel (0) target = $region65
    $region64: #{residual_block_forward.1} parent=1 // pred_region
      %152 = dma.done [#allocation5], 16
    $region65: #{residual_block_forward.1} parent=1 // pred_fallthru
      _
    // Predicated region
    $region66: #{residual_block_forward.1} parent=1 // pred_check
      _
    $region67: #{residual_block_forward.1} parent=1 // pred_check_branch
      %154 = sbr.rel (0) target = $region69
    $region68: #{residual_block_forward.1} parent=1 // pred_region
      %155 = dma.done [#allocation5], 49152
    $region69: #{residual_block_forward.1} parent=1 // pred_fallthru
      _
    // Predicated region
    $region70: #{residual_block_forward.1} parent=1 // pred_check
      _
    $region71: #{residual_block_forward.1} parent=1 // pred_check_branch
      %157 = sbr.rel (0) target = $region73
    $region72: #{residual_block_forward.1} parent=1 // pred_region
      %158 = dma.done [#allocation8], 16
    $region73: #{residual_block_forward.1} parent=1 // pred_fallthru
      _
    // Predicated region
    $region74: #{residual_block_forward.1} parent=1 // pred_check
      _
    $region75: #{residual_block_forward.1} parent=1 // pred_check_branch
      %160 = sbr.rel (0) target = $region77
    $region76: #{residual_block_forward.1} parent=1 // pred_region
      %161 = dma.done [#allocation8], 16
    $region77: #{residual_block_forward.1} parent=1 // pred_fallthru
      _
    // Predicated region
    $region78: #{residual_block_forward.1} parent=1 // pred_check
      _
    $region79: #{residual_block_forward.1} parent=1 // pred_check_branch
      %163 = sbr.rel (0) target = $region81
    $region80: #{residual_block_forward.1} parent=1 // pred_region
      %164 = dma.done [#allocation11], 32
    $region81: #{residual_block_forward.1} parent=1 // pred_fallthru
      _
    // Predicated region
    $region82: #{residual_block_forward.1} parent=1 // pred_check
      _
    $region83: #{residual_block_forward.1} parent=1 // pred_check_branch
      %166 = sbr.rel (0) target = $region85
    $region84: #{residual_block_forward.1} parent=1 // pred_region
      %167 = dma.done [#allocation11], 32
    $region85: #{residual_block_forward.1} parent=1 // pred_fallthru
      _
    // Predicated region
    $region86: #{residual_block_forward.1} parent=1 // pred_check
      _
    $region87: #{residual_block_forward.1} parent=1 // pred_check_branch
      %169 = sbr.rel (0) target = $region89
    $region88: #{residual_block_forward.1} parent=1 // pred_region
      %170 = dma.done [#allocation14], 8192
    $region89: #{residual_block_forward.1} parent=1 // pred_fallthru
      _
    // Predicated region
    $region90: #{residual_block_forward.1} parent=1 // pred_check
      _
    $region91: #{residual_block_forward.1} parent=1 // pred_check_branch
      %172 = sbr.rel (0) target = $region93
    $region92: #{residual_block_forward.1} parent=1 // pred_region
      %173 = dma.done [#allocation14], 16
    $region93: #{residual_block_forward.1} parent=1 // pred_fallthru
      _
    // Predicated region
    $region94: #{residual_block_forward.1} parent=1 // pred_check
      _
    $region95: #{residual_block_forward.1} parent=1 // pred_check_branch
      %175 = sbr.rel (0) target = $region97
    $region96: #{residual_block_forward.1} parent=1 // pred_region
      %176 = dma.done [#allocation17], 16
    $region97: #{residual_block_forward.1} parent=1 // pred_fallthru
      _
    // Predicated region
    $region98: #{residual_block_forward.1} parent=1 // pred_check
      _
    $region99: #{residual_block_forward.1} parent=1 // pred_check_branch
      %178 = sbr.rel (0) target = $region101
    $region100: #{residual_block_forward.1} parent=1 // pred_region
      %179 = dma.done [#allocation17], 2048
    $region101: #{residual_block_forward.1} parent=1 // pred_fallthru
      _
    %v180 = vld [vmem:[%s12] sm:$0xff]
    %v181 = vld [vmem:[%s12 + $0x8] sm:$0xff]
    %v182 = vld [vmem:[%s12 + $0x10] sm:$0xff]
    %v183 = vld [vmem:[%s12 + $0x18] sm:$0xff]
    %v184 = vld [vmem:[%s12 + $0x20] sm:$0xff]
    %v185 = vld [vmem:[%s12 + $0x28] sm:$0xff]
    %v186 = vld [vmem:[%s12 + $0x30] sm:$0xff]
    %v187 = vld [vmem:[%s12 + $0x38] sm:$0xff]
    %v188 = vld [vmem:[%s12 + $0x40] sm:$0xff]
    %v189 = vld [vmem:[%s12 + $0x48] sm:$0xff]
    %v190 = vld [vmem:[%s12 + $0x50] sm:$0xff]
    %v191 = vld [vmem:[%s12 + $0x58] sm:$0xff]
    %v192 = vld [vmem:[%s12 + $0x60] sm:$0xff]
    %v193 = vld [vmem:[%s12 + $0x68] sm:$0xff]
    %v194 = vld [vmem:[%s12 + $0x70] sm:$0xff]
    %v195 = vld [vmem:[%s12 + $0x78] sm:$0xff]
    %v196 = vld [vmem:[%s12 + $0x80] sm:$0xff]
    %v197 = vld [vmem:[%s12 + $0x88] sm:$0xff]
    %v198 = vld [vmem:[%s12 + $0x90] sm:$0xff]
    %v199 = vld [vmem:[%s12 + $0x98] sm:$0xff]
    %v200 = vld [vmem:[%s12 + $0xa0] sm:$0xff]
    %v201 = vld [vmem:[%s12 + $0xa8] sm:$0xff]
    %v202 = vld [vmem:[%s12 + $0xb0] sm:$0xff]
    %v203 = vld [vmem:[%s12 + $0xb8] sm:$0xff]
    %v204 = vld [vmem:[%s12 + $0xc0] sm:$0xff]
    %v205 = vld [vmem:[%s12 + $0xc8] sm:$0xff]
    %v206 = vld [vmem:[%s12 + $0xd0] sm:$0xff]
    %v207 = vld [vmem:[%s12 + $0xd8] sm:$0xff]
    %v208 = vld [vmem:[%s12 + $0xe0] sm:$0xff]
    %v209 = vld [vmem:[%s12 + $0xe8] sm:$0xff]
    %v210 = vld [vmem:[%s12 + $0xf0] sm:$0xff]
    %v211 = vld [vmem:[%s12 + $0xf8] sm:$0xff]
    %v212 = vld [vmem:[%s12 + $0x100] sm:$0xff]
    %v213 = vld [vmem:[%s12 + $0x108] sm:$0xff]
    %v214 = vld [vmem:[%s12 + $0x110] sm:$0xff]
    %v215 = vld [vmem:[%s12 + $0x118] sm:$0xff]
    %v216 = vld [vmem:[%s12 + $0x120] sm:$0xff]
    %v217 = vld [vmem:[%s12 + $0x128] sm:$0xff]
    %v218 = vld [vmem:[%s12 + $0x130] sm:$0xff]
    %v219 = vld [vmem:[%s12 + $0x138] sm:$0xff]
    %v220 = vld [vmem:[%s12 + $0x140] sm:$0xff]
    %v221 = vld [vmem:[%s12 + $0x148] sm:$0xff]
    %v222 = vld [vmem:[%s12 + $0x150] sm:$0xff]
    %v223 = vld [vmem:[%s12 + $0x158] sm:$0xff]
    %v224 = vld [vmem:[%s12 + $0x160] sm:$0xff]
    %v225 = vld [vmem:[%s12 + $0x168] sm:$0xff]
    %v226 = vld [vmem:[%s12 + $0x170] sm:$0xff]
    %v227 = vld [vmem:[%s12 + $0x178] sm:$0xff]
    %v228 = vld [vmem:[%s12 + $0x180] sm:$0xff]
    %v229 = vld [vmem:[%s12 + $0x188] sm:$0xff]
    %v230 = vld [vmem:[%s12 + $0x190] sm:$0xff]
    %v231 = vld [vmem:[%s12 + $0x198] sm:$0xff]
    %v232 = vld [vmem:[%s12 + $0x1a0] sm:$0xff]
    %v233 = vld [vmem:[%s12 + $0x1a8] sm:$0xff]
    %v234 = vld [vmem:[%s12 + $0x1b0] sm:$0xff]
    %v235 = vld [vmem:[%s12 + $0x1b8] sm:$0xff]
    %v236 = vld [vmem:[%s12 + $0x1c0] sm:$0xff]
    %v237 = vld [vmem:[%s12 + $0x1c8] sm:$0xff]
    %v238 = vld [vmem:[%s12 + $0x1d0] sm:$0xff]
    %v239 = vld [vmem:[%s12 + $0x1d8] sm:$0xff]
    %v240 = vld [vmem:[%s12 + $0x1e0] sm:$0xff]
    %v241 = vld [vmem:[%s12 + $0x1e8] sm:$0xff]
    %v242 = vld [vmem:[%s12 + $0x1f0] sm:$0xff]
    %v243 = vld [vmem:[%s12 + $0x1f8] sm:$0xff]
    %v244 = vld [vmem:[#allocation18] sm:$0xff]
    %v245 = vld [vmem:[#allocation18 + $0x8] sm:$0xff]
    %v246 = vld [vmem:[#allocation18 + $0x10] sm:$0xff]
    %v247 = vld [vmem:[#allocation18 + $0x18] sm:$0xff]
    %v248 = vld [vmem:[#allocation18 + $0x20] sm:$0xff]
    %v249 = vld [vmem:[#allocation18 + $0x28] sm:$0xff]
    %v250 = vld [vmem:[#allocation18 + $0x30] sm:$0xff]
    %v251 = vld [vmem:[#allocation18 + $0x38] sm:$0xff]
    %v252 = vld [vmem:[#allocation18 + $0x40] sm:$0xff]
    %v253 = vld [vmem:[#allocation18 + $0x48] sm:$0xff]
    %v254 = vld [vmem:[#allocation18 + $0x50] sm:$0xff]
    %v255 = vld [vmem:[#allocation18 + $0x58] sm:$0xff]
    %v256 = vld [vmem:[#allocation18 + $0x60] sm:$0xff]
    %v257 = vld [vmem:[#allocation18 + $0x68] sm:$0xff]
    %v258 = vld [vmem:[#allocation18 + $0x70] sm:$0xff]
    %v259 = vld [vmem:[#allocation18 + $0x78] sm:$0xff]
    %v260 = vld [vmem:[%s0] sm:$0xff]
    %v261 = vld [vmem:[%s0 + $0x8] sm:$0xff]
    %v262 = vld [vmem:[%s0 + $0x10] sm:$0xff]
    %v263 = vld [vmem:[%s0 + $0x18] sm:$0xff]
    %v264 = vld [vmem:[%s0 + $0x20] sm:$0xff]
    %v265 = vld [vmem:[%s0 + $0x28] sm:$0xff]
    %v266 = vld [vmem:[%s0 + $0x30] sm:$0xff]
    %v267 = vld [vmem:[%s0 + $0x38] sm:$0xff]
    %vm276 = vcmask 1040384
    %v277 = vrot.slane %v260, 7
    %v278 = vrot.slane %v261, 7
    %v279 = vrot.slane %v262, 7
    %v280 = vsel %vm276, %v277, %v279
    %v281 = vrot.slane %v263, 7
    %v282 = vsel %vm276, %v278, %v281
    %v283 = vrot.slane %v264, 7
    %v284 = vrot.slane %v265, 7
    %v285 = vrot.slane %v266, 7
    %v286 = vsel %vm276, %v283, %v285
    %v287 = vrot.slane %v267, 7
    %v288 = vsel %vm276, %v284, %v287
    %v297 = vsel %vm276, 0.0, %v277
    %v298 = vsel %vm276, 0.0, %v278
    %v299 = vsel %vm276, 0.0, %v283
    %v300 = vsel %vm276, 0.0, %v284
    %vm301 = vcmask 1046528
    %v302 = vrot.slane %v260, 1
    %v303 = vrot.slane %v262, 1
    %v304 = vsel %vm301, %v302, %v303
    %v305 = vrot.slane %v261, 1
    %v306 = vrot.slane %v263, 1
    %v307 = vsel %vm301, %v305, %v306
    %v308 = vrot.slane %v264, 1
    %v309 = vrot.slane %v266, 1
    %v310 = vsel %vm301, %v308, %v309
    %v311 = vrot.slane %v265, 1
    %v312 = vrot.slane %v267, 1
    %v313 = vsel %vm301, %v311, %v312
    %v322 = vsel %vm301, %v303, 0.0
    %v323 = vsel %vm301, %v306, 0.0
    %v324 = vsel %vm301, %v309, 0.0
    %v325 = vsel %vm301, %v312, 0.0
    %v326 = vpack.c.bf16 %v280, %v297
    %v327 = vpack.c.bf16 %v282, %v298
    %v328 = vpack.c.bf16 %v262, %v260
    %v329 = vpack.c.bf16 %v263, %v261
    %v330 = vpack.c.bf16 %v322, %v304
    %v331 = vpack.c.bf16 %v323, %v307
    %v332 = vpack.c.bf16 %v286, %v299
    %v333 = vpack.c.bf16 %v288, %v300
    %v334 = vpack.c.bf16 %v266, %v264
    %v335 = vpack.c.bf16 %v267, %v265
    %v336 = vpack.c.bf16 %v324, %v310
    %v337 = vpack.c.bf16 %v325, %v313
    %v338 = vld [vmem:[%s1] sm:$0xff]
    %v339 = vld [vmem:[%s1 + $0x8] sm:$0xff]
    %v340 = vld [vmem:[%s1 + $0x10] sm:$0xff]
    %v341 = vld [vmem:[%s1 + $0x18] sm:$0xff]
    %v342 = vld [vmem:[%s1 + $0x20] sm:$0xff]
    %v343 = vld [vmem:[%s1 + $0x28] sm:$0xff]
    %v344 = vld [vmem:[%s1 + $0x30] sm:$0xff]
    %v345 = vld [vmem:[%s1 + $0x38] sm:$0xff]
    %v346 = vld [vmem:[%s1 + $0x40] sm:$0xff]
    %v347 = vld [vmem:[%s1 + $0x48] sm:$0xff]
    %v348 = vld [vmem:[%s1 + $0x50] sm:$0xff]
    %v349 = vld [vmem:[%s1 + $0x58] sm:$0xff]
    %v350 = vld [vmem:[%s1 + $0x60] sm:$0xff]
    %v351 = vld [vmem:[%s1 + $0x68] sm:$0xff]
    %v352 = vld [vmem:[%s1 + $0x70] sm:$0xff]
    %v353 = vld [vmem:[%s1 + $0x78] sm:$0xff]
    %v354 = vld [vmem:[%s1 + $0x80] sm:$0xff]
    %v355 = vld [vmem:[%s1 + $0x88] sm:$0xff]
    %v356 = vld [vmem:[%s1 + $0x90] sm:$0xff]
    %v357 = vld [vmem:[%s1 + $0x98] sm:$0xff]
    %v358 = vld [vmem:[%s1 + $0xa0] sm:$0xff]
    %v359 = vld [vmem:[%s1 + $0xa8] sm:$0xff]
    %v360 = vld [vmem:[%s1 + $0xb0] sm:$0xff]
    %v361 = vld [vmem:[%s1 + $0xb8] sm:$0xff]
    %v362 = vld [vmem:[%s1 + $0xc0] sm:$0xff]
    %v363 = vld [vmem:[%s1 + $0xc8] sm:$0xff]
    %v364 = vld [vmem:[%s1 + $0xd0] sm:$0xff]
    %v365 = vld [vmem:[%s1 + $0xd8] sm:$0xff]
    %v366 = vld [vmem:[%s1 + $0xe0] sm:$0xff]
    %v367 = vld [vmem:[%s1 + $0xe8] sm:$0xff]
    %v368 = vld [vmem:[%s1 + $0xf0] sm:$0xff]
    %v369 = vld [vmem:[%s1 + $0xf8] sm:$0xff]
    %v370 = vld [vmem:[%s1 + $0x100] sm:$0xff]
    %v371 = vld [vmem:[%s1 + $0x108] sm:$0xff]
    %v372 = vld [vmem:[%s1 + $0x110] sm:$0xff]
    %v373 = vld [vmem:[%s1 + $0x118] sm:$0xff]
    %v374 = vld [vmem:[%s1 + $0x120] sm:$0xff]
    %v375 = vld [vmem:[%s1 + $0x128] sm:$0xff]
    %v376 = vld [vmem:[%s1 + $0x130] sm:$0xff]
    %v377 = vld [vmem:[%s1 + $0x138] sm:$0xff]
    %v378 = vld [vmem:[%s1 + $0x140] sm:$0xff]
    %v379 = vld [vmem:[%s1 + $0x148] sm:$0xff]
    %v380 = vld [vmem:[%s1 + $0x150] sm:$0xff]
    %v381 = vld [vmem:[%s1 + $0x158] sm:$0xff]
    %v382 = vld [vmem:[%s1 + $0x160] sm:$0xff]
    %v383 = vld [vmem:[%s1 + $0x168] sm:$0xff]
    %v384 = vld [vmem:[%s1 + $0x170] sm:$0xff]
    %v385 = vld [vmem:[%s1 + $0x178] sm:$0xff]
    %v386 = vld [vmem:[%s1 + $0x180] sm:$0xff]
    %v387 = vld [vmem:[%s1 + $0x188] sm:$0xff]
    %v388 = vld [vmem:[%s1 + $0x190] sm:$0xff]
    %v389 = vld [vmem:[%s1 + $0x198] sm:$0xff]
    %v390 = vld [vmem:[%s1 + $0x1a0] sm:$0xff]
    %v391 = vld [vmem:[%s1 + $0x1a8] sm:$0xff]
    %v392 = vld [vmem:[%s1 + $0x1b0] sm:$0xff]
    %v393 = vld [vmem:[%s1 + $0x1b8] sm:$0xff]
    %v394 = vld [vmem:[%s1 + $0x1c0] sm:$0xff]
    %v395 = vld [vmem:[%s1 + $0x1c8] sm:$0xff]
    %v396 = vld [vmem:[%s1 + $0x1d0] sm:$0xff]
    %v397 = vld [vmem:[%s1 + $0x1d8] sm:$0xff]
    %v398 = vld [vmem:[%s1 + $0x1e0] sm:$0xff]
    %v399 = vld [vmem:[%s1 + $0x1e8] sm:$0xff]
    %v400 = vld [vmem:[%s1 + $0x1f0] sm:$0xff]
    %v401 = vld [vmem:[%s1 + $0x1f8] sm:$0xff]
    %v402 = vld [vmem:[%s1 + $0x200] sm:$0xff]
    %v403 = vld [vmem:[%s1 + $0x208] sm:$0xff]
    %v404 = vld [vmem:[%s1 + $0x210] sm:$0xff]
    %v405 = vld [vmem:[%s1 + $0x218] sm:$0xff]
    %v406 = vld [vmem:[%s1 + $0x220] sm:$0xff]
    %v407 = vld [vmem:[%s1 + $0x228] sm:$0xff]
    %v408 = vld [vmem:[%s1 + $0x230] sm:$0xff]
    %v409 = vld [vmem:[%s1 + $0x238] sm:$0xff]
    %v410 = vld [vmem:[%s1 + $0x240] sm:$0xff]
    %v411 = vld [vmem:[%s1 + $0x248] sm:$0xff]
    %v412 = vld [vmem:[%s1 + $0x250] sm:$0xff]
    %v413 = vld [vmem:[%s1 + $0x258] sm:$0xff]
    %v414 = vld [vmem:[%s1 + $0x260] sm:$0xff]
    %v415 = vld [vmem:[%s1 + $0x268] sm:$0xff]
    %v416 = vld [vmem:[%s1 + $0x270] sm:$0xff]
    %v417 = vld [vmem:[%s1 + $0x278] sm:$0xff]
    %v418 = vld [vmem:[%s1 + $0x280] sm:$0xff]
    %v419 = vld [vmem:[%s1 + $0x288] sm:$0xff]
    %v420 = vld [vmem:[%s1 + $0x290] sm:$0xff]
    %v421 = vld [vmem:[%s1 + $0x298] sm:$0xff]
    %v422 = vld [vmem:[%s1 + $0x2a0] sm:$0xff]
    %v423 = vld [vmem:[%s1 + $0x2a8] sm:$0xff]
    %v424 = vld [vmem:[%s1 + $0x2b0] sm:$0xff]
    %v425 = vld [vmem:[%s1 + $0x2b8] sm:$0xff]
    %v426 = vld [vmem:[%s1 + $0x2c0] sm:$0xff]
    %v427 = vld [vmem:[%s1 + $0x2c8] sm:$0xff]
    %v428 = vld [vmem:[%s1 + $0x2d0] sm:$0xff]
    %v429 = vld [vmem:[%s1 + $0x2d8] sm:$0xff]
    %v430 = vld [vmem:[%s1 + $0x2e0] sm:$0xff]
    %v431 = vld [vmem:[%s1 + $0x2e8] sm:$0xff]
    %v432 = vld [vmem:[%s1 + $0x2f0] sm:$0xff]
    %v433 = vld [vmem:[%s1 + $0x2f8] sm:$0xff]
    %v434 = vld [vmem:[%s1 + $0x300] sm:$0xff]
    %v435 = vld [vmem:[%s1 + $0x308] sm:$0xff]
    %v436 = vld [vmem:[%s1 + $0x310] sm:$0xff]
    %v437 = vld [vmem:[%s1 + $0x318] sm:$0xff]
    %v438 = vld [vmem:[%s1 + $0x320] sm:$0xff]
    %v439 = vld [vmem:[%s1 + $0x328] sm:$0xff]
    %v440 = vld [vmem:[%s1 + $0x330] sm:$0xff]
    %v441 = vld [vmem:[%s1 + $0x338] sm:$0xff]
    %v442 = vld [vmem:[%s1 + $0x340] sm:$0xff]
    %v443 = vld [vmem:[%s1 + $0x348] sm:$0xff]
    %v444 = vld [vmem:[%s1 + $0x350] sm:$0xff]
    %v445 = vld [vmem:[%s1 + $0x358] sm:$0xff]
    %v446 = vld [vmem:[%s1 + $0x360] sm:$0xff]
    %v447 = vld [vmem:[%s1 + $0x368] sm:$0xff]
    %v448 = vld [vmem:[%s1 + $0x370] sm:$0xff]
    %v449 = vld [vmem:[%s1 + $0x378] sm:$0xff]
    %v450 = vld [vmem:[%s1 + $0x380] sm:$0xff]
    %v451 = vld [vmem:[%s1 + $0x388] sm:$0xff]
    %v452 = vld [vmem:[%s1 + $0x390] sm:$0xff]
    %v453 = vld [vmem:[%s1 + $0x398] sm:$0xff]
    %v454 = vld [vmem:[%s1 + $0x3a0] sm:$0xff]
    %v455 = vld [vmem:[%s1 + $0x3a8] sm:$0xff]
    %v456 = vld [vmem:[%s1 + $0x3b0] sm:$0xff]
    %v457 = vld [vmem:[%s1 + $0x3b8] sm:$0xff]
    %v458 = vld [vmem:[%s1 + $0x3c0] sm:$0xff]
    %v459 = vld [vmem:[%s1 + $0x3c8] sm:$0xff]
    %v460 = vld [vmem:[%s1 + $0x3d0] sm:$0xff]
    %v461 = vld [vmem:[%s1 + $0x3d8] sm:$0xff]
    %v462 = vld [vmem:[%s1 + $0x3e0] sm:$0xff]
    %v463 = vld [vmem:[%s1 + $0x3e8] sm:$0xff]
    %v464 = vld [vmem:[%s1 + $0x3f0] sm:$0xff]
    %v465 = vld [vmem:[%s1 + $0x3f8] sm:$0xff]
    %v466 = vld [vmem:[%s1 + $0x400] sm:$0xff]
    %v467 = vld [vmem:[%s1 + $0x408] sm:$0xff]
    %v468 = vld [vmem:[%s1 + $0x410] sm:$0xff]
    %v469 = vld [vmem:[%s1 + $0x418] sm:$0xff]
    %v470 = vld [vmem:[%s1 + $0x420] sm:$0xff]
    %v471 = vld [vmem:[%s1 + $0x428] sm:$0xff]
    %v472 = vld [vmem:[%s1 + $0x430] sm:$0xff]
    %v473 = vld [vmem:[%s1 + $0x438] sm:$0xff]
    %v474 = vld [vmem:[%s1 + $0x440] sm:$0xff]
    %v475 = vld [vmem:[%s1 + $0x448] sm:$0xff]
    %v476 = vld [vmem:[%s1 + $0x450] sm:$0xff]
    %v477 = vld [vmem:[%s1 + $0x458] sm:$0xff]
    %v478 = vld [vmem:[%s1 + $0x460] sm:$0xff]
    %v479 = vld [vmem:[%s1 + $0x468] sm:$0xff]
    %v480 = vld [vmem:[%s1 + $0x470] sm:$0xff]
    %v481 = vld [vmem:[%s1 + $0x478] sm:$0xff]
    %v482 = vld [vmem:[%s1 + $0x480] sm:$0xff]
    %v483 = vld [vmem:[%s1 + $0x488] sm:$0xff]
    %v484 = vld [vmem:[%s1 + $0x490] sm:$0xff]
    %v485 = vld [vmem:[%s1 + $0x498] sm:$0xff]
    %v486 = vld [vmem:[%s1 + $0x4a0] sm:$0xff]
    %v487 = vld [vmem:[%s1 + $0x4a8] sm:$0xff]
    %v488 = vld [vmem:[%s1 + $0x4b0] sm:$0xff]
    %v489 = vld [vmem:[%s1 + $0x4b8] sm:$0xff]
    %v490 = vld [vmem:[%s1 + $0x4c0] sm:$0xff]
    %v491 = vld [vmem:[%s1 + $0x4c8] sm:$0xff]
    %v492 = vld [vmem:[%s1 + $0x4d0] sm:$0xff]
    %v493 = vld [vmem:[%s1 + $0x4d8] sm:$0xff]
    %v494 = vld [vmem:[%s1 + $0x4e0] sm:$0xff]
    %v495 = vld [vmem:[%s1 + $0x4e8] sm:$0xff]
    %v496 = vld [vmem:[%s1 + $0x4f0] sm:$0xff]
    %v497 = vld [vmem:[%s1 + $0x4f8] sm:$0xff]
    %v498 = vld [vmem:[%s1 + $0x500] sm:$0xff]
    %v499 = vld [vmem:[%s1 + $0x508] sm:$0xff]
    %v500 = vld [vmem:[%s1 + $0x510] sm:$0xff]
    %v501 = vld [vmem:[%s1 + $0x518] sm:$0xff]
    %v502 = vld [vmem:[%s1 + $0x520] sm:$0xff]
    %v503 = vld [vmem:[%s1 + $0x528] sm:$0xff]
    %v504 = vld [vmem:[%s1 + $0x530] sm:$0xff]
    %v505 = vld [vmem:[%s1 + $0x538] sm:$0xff]
    %v506 = vld [vmem:[%s1 + $0x540] sm:$0xff]
    %v507 = vld [vmem:[%s1 + $0x548] sm:$0xff]
    %v508 = vld [vmem:[%s1 + $0x550] sm:$0xff]
    %v509 = vld [vmem:[%s1 + $0x558] sm:$0xff]
    %v510 = vld [vmem:[%s1 + $0x560] sm:$0xff]
    %v511 = vld [vmem:[%s1 + $0x568] sm:$0xff]
    %v512 = vld [vmem:[%s1 + $0x570] sm:$0xff]
    %v513 = vld [vmem:[%s1 + $0x578] sm:$0xff]
    %v514 = vld [vmem:[%s1 + $0x580] sm:$0xff]
    %v515 = vld [vmem:[%s1 + $0x588] sm:$0xff]
    %v516 = vld [vmem:[%s1 + $0x590] sm:$0xff]
    %v517 = vld [vmem:[%s1 + $0x598] sm:$0xff]
    %v518 = vld [vmem:[%s1 + $0x5a0] sm:$0xff]
    %v519 = vld [vmem:[%s1 + $0x5a8] sm:$0xff]
    %v520 = vld [vmem:[%s1 + $0x5b0] sm:$0xff]
    %v521 = vld [vmem:[%s1 + $0x5b8] sm:$0xff]
    %v522 = vld [vmem:[%s1 + $0x5c0] sm:$0xff]
    %v523 = vld [vmem:[%s1 + $0x5c8] sm:$0xff]
    %v524 = vld [vmem:[%s1 + $0x5d0] sm:$0xff]
    %v525 = vld [vmem:[%s1 + $0x5d8] sm:$0xff]
    %v526 = vld [vmem:[%s1 + $0x5e0] sm:$0xff]
    %v527 = vld [vmem:[%s1 + $0x5e8] sm:$0xff]
    %v528 = vld [vmem:[%s1 + $0x5f0] sm:$0xff]
    %v529 = vld [vmem:[%s1 + $0x5f8] sm:$0xff]
    %v722 = vunpack.c.l.b16 %v338
    %v723 = vunpack.c.h.b16 %v338
    %v724 = vunpack.c.l.b16 %v339
    %v725 = vunpack.c.h.b16 %v339
    %v726 = vunpack.c.l.b16 %v340
    %v727 = vunpack.c.h.b16 %v340
    %v728 = vunpack.c.l.b16 %v341
    %v729 = vunpack.c.h.b16 %v341
    %v730 = vunpack.c.l.b16 %v342
    %v731 = vunpack.c.h.b16 %v342
    %v732 = vunpack.c.l.b16 %v343
    %v733 = vunpack.c.h.b16 %v343
    %v734 = vunpack.c.l.b16 %v344
    %v735 = vunpack.c.h.b16 %v344
    %v736 = vunpack.c.l.b16 %v345
    %v737 = vunpack.c.h.b16 %v345
    %v738 = vunpack.c.l.b16 %v346
    %v739 = vunpack.c.h.b16 %v346
    %v740 = vunpack.c.l.b16 %v347
    %v741 = vunpack.c.h.b16 %v347
    %v742 = vunpack.c.l.b16 %v348
    %v743 = vunpack.c.h.b16 %v348
    %v744 = vunpack.c.l.b16 %v349
    %v745 = vunpack.c.h.b16 %v349
    %v746 = vunpack.c.l.b16 %v350
    %v747 = vunpack.c.h.b16 %v350
    %v748 = vunpack.c.l.b16 %v351
    %v749 = vunpack.c.h.b16 %v351
    %v750 = vunpack.c.l.b16 %v352
    %v751 = vunpack.c.h.b16 %v352
    %v752 = vunpack.c.l.b16 %v353
    %v753 = vunpack.c.h.b16 %v353
    %v754 = vunpack.c.l.b16 %v354
    %v755 = vunpack.c.h.b16 %v354
    %v756 = vunpack.c.l.b16 %v355
    %v757 = vunpack.c.h.b16 %v355
    %v758 = vunpack.c.l.b16 %v356
    %v759 = vunpack.c.h.b16 %v356
    %v760 = vunpack.c.l.b16 %v357
    %v761 = vunpack.c.h.b16 %v357
    %v762 = vunpack.c.l.b16 %v358
    %v763 = vunpack.c.h.b16 %v358
    %v764 = vunpack.c.l.b16 %v359
    %v765 = vunpack.c.h.b16 %v359
    %v766 = vunpack.c.l.b16 %v360
    %v767 = vunpack.c.h.b16 %v360
    %v768 = vunpack.c.l.b16 %v361
    %v769 = vunpack.c.h.b16 %v361
    %v770 = vunpack.c.l.b16 %v362
    %v771 = vunpack.c.h.b16 %v362
    %v772 = vunpack.c.l.b16 %v363
    %v773 = vunpack.c.h.b16 %v363
    %v774 = vunpack.c.l.b16 %v364
    %v775 = vunpack.c.h.b16 %v364
    %v776 = vunpack.c.l.b16 %v365
    %v777 = vunpack.c.h.b16 %v365
    %v778 = vunpack.c.l.b16 %v366
    %v779 = vunpack.c.h.b16 %v366
    %v780 = vunpack.c.l.b16 %v367
    %v781 = vunpack.c.h.b16 %v367
    %v782 = vunpack.c.l.b16 %v368
    %v783 = vunpack.c.h.b16 %v368
    %v784 = vunpack.c.l.b16 %v369
    %v785 = vunpack.c.h.b16 %v369
    %v786 = vunpack.c.l.b16 %v370
    %v787 = vunpack.c.h.b16 %v370
    %v788 = vunpack.c.l.b16 %v371
    %v789 = vunpack.c.h.b16 %v371
    %v790 = vunpack.c.l.b16 %v372
    %v791 = vunpack.c.h.b16 %v372
    %v792 = vunpack.c.l.b16 %v373
    %v793 = vunpack.c.h.b16 %v373
    %v794 = vunpack.c.l.b16 %v374
    %v795 = vunpack.c.h.b16 %v374
    %v796 = vunpack.c.l.b16 %v375
    %v797 = vunpack.c.h.b16 %v375
    %v798 = vunpack.c.l.b16 %v376
    %v799 = vunpack.c.h.b16 %v376
    %v800 = vunpack.c.l.b16 %v377
    %v801 = vunpack.c.h.b16 %v377
    %v802 = vunpack.c.l.b16 %v378
    %v803 = vunpack.c.h.b16 %v378
    %v804 = vunpack.c.l.b16 %v379
    %v805 = vunpack.c.h.b16 %v379
    %v806 = vunpack.c.l.b16 %v380
    %v807 = vunpack.c.h.b16 %v380
    %v808 = vunpack.c.l.b16 %v381
    %v809 = vunpack.c.h.b16 %v381
    %v810 = vunpack.c.l.b16 %v382
    %v811 = vunpack.c.h.b16 %v382
    %v812 = vunpack.c.l.b16 %v383
    %v813 = vunpack.c.h.b16 %v383
    %v814 = vunpack.c.l.b16 %v384
    %v815 = vunpack.c.h.b16 %v384
    %v816 = vunpack.c.l.b16 %v385
    %v817 = vunpack.c.h.b16 %v385
    %v818 = vunpack.c.l.b16 %v386
    %v819 = vunpack.c.h.b16 %v386
    %v820 = vunpack.c.l.b16 %v387
    %v821 = vunpack.c.h.b16 %v387
    %v822 = vunpack.c.l.b16 %v388
    %v823 = vunpack.c.h.b16 %v388
    %v824 = vunpack.c.l.b16 %v389
    %v825 = vunpack.c.h.b16 %v389
    %v826 = vunpack.c.l.b16 %v390
    %v827 = vunpack.c.h.b16 %v390
    %v828 = vunpack.c.l.b16 %v391
    %v829 = vunpack.c.h.b16 %v391
    %v830 = vunpack.c.l.b16 %v392
    %v831 = vunpack.c.h.b16 %v392
    %v832 = vunpack.c.l.b16 %v393
    %v833 = vunpack.c.h.b16 %v393
    %v834 = vunpack.c.l.b16 %v394
    %v835 = vunpack.c.h.b16 %v394
    %v836 = vunpack.c.l.b16 %v395
    %v837 = vunpack.c.h.b16 %v395
    %v838 = vunpack.c.l.b16 %v396
    %v839 = vunpack.c.h.b16 %v396
    %v840 = vunpack.c.l.b16 %v397
    %v841 = vunpack.c.h.b16 %v397
    %v842 = vunpack.c.l.b16 %v398
    %v843 = vunpack.c.h.b16 %v398
    %v844 = vunpack.c.l.b16 %v399
    %v845 = vunpack.c.h.b16 %v399
    %v846 = vunpack.c.l.b16 %v400
    %v847 = vunpack.c.h.b16 %v400
    %v848 = vunpack.c.l.b16 %v401
    %v849 = vunpack.c.h.b16 %v401
    %v850 = vunpack.c.l.b16 %v402
    %v851 = vunpack.c.h.b16 %v402
    %v852 = vunpack.c.l.b16 %v403
    %v853 = vunpack.c.h.b16 %v403
    %v854 = vunpack.c.l.b16 %v404
    %v855 = vunpack.c.h.b16 %v404
    %v856 = vunpack.c.l.b16 %v405
    %v857 = vunpack.c.h.b16 %v405
    %v858 = vunpack.c.l.b16 %v406
    %v859 = vunpack.c.h.b16 %v406
    %v860 = vunpack.c.l.b16 %v407
    %v861 = vunpack.c.h.b16 %v407
    %v862 = vunpack.c.l.b16 %v408
    %v863 = vunpack.c.h.b16 %v408
    %v864 = vunpack.c.l.b16 %v409
    %v865 = vunpack.c.h.b16 %v409
    %v866 = vunpack.c.l.b16 %v410
    %v867 = vunpack.c.h.b16 %v410
    %v868 = vunpack.c.l.b16 %v411
    %v869 = vunpack.c.h.b16 %v411
    %v870 = vunpack.c.l.b16 %v412
    %v871 = vunpack.c.h.b16 %v412
    %v872 = vunpack.c.l.b16 %v413
    %v873 = vunpack.c.h.b16 %v413
    %v874 = vunpack.c.l.b16 %v414
    %v875 = vunpack.c.h.b16 %v414
    %v876 = vunpack.c.l.b16 %v415
    %v877 = vunpack.c.h.b16 %v415
    %v878 = vunpack.c.l.b16 %v416
    %v879 = vunpack.c.h.b16 %v416
    %v880 = vunpack.c.l.b16 %v417
    %v881 = vunpack.c.h.b16 %v417
    %v882 = vunpack.c.l.b16 %v418
    %v883 = vunpack.c.h.b16 %v418
    %v884 = vunpack.c.l.b16 %v419
    %v885 = vunpack.c.h.b16 %v419
    %v886 = vunpack.c.l.b16 %v420
    %v887 = vunpack.c.h.b16 %v420
    %v888 = vunpack.c.l.b16 %v421
    %v889 = vunpack.c.h.b16 %v421
    %v890 = vunpack.c.l.b16 %v422
    %v891 = vunpack.c.h.b16 %v422
    %v892 = vunpack.c.l.b16 %v423
    %v893 = vunpack.c.h.b16 %v423
    %v894 = vunpack.c.l.b16 %v424
    %v895 = vunpack.c.h.b16 %v424
    %v896 = vunpack.c.l.b16 %v425
    %v897 = vunpack.c.h.b16 %v425
    %v898 = vunpack.c.l.b16 %v426
    %v899 = vunpack.c.h.b16 %v426
    %v900 = vunpack.c.l.b16 %v427
    %v901 = vunpack.c.h.b16 %v427
    %v902 = vunpack.c.l.b16 %v428
    %v903 = vunpack.c.h.b16 %v428
    %v904 = vunpack.c.l.b16 %v429
    %v905 = vunpack.c.h.b16 %v429
    %v906 = vunpack.c.l.b16 %v430
    %v907 = vunpack.c.h.b16 %v430
    %v908 = vunpack.c.l.b16 %v431
    %v909 = vunpack.c.h.b16 %v431
    %v910 = vunpack.c.l.b16 %v432
    %v911 = vunpack.c.h.b16 %v432
    %v912 = vunpack.c.l.b16 %v433
    %v913 = vunpack.c.h.b16 %v433
    %v914 = vunpack.c.l.b16 %v434
    %v915 = vunpack.c.h.b16 %v434
    %v916 = vunpack.c.l.b16 %v435
    %v917 = vunpack.c.h.b16 %v435
    %v918 = vunpack.c.l.b16 %v436
    %v919 = vunpack.c.h.b16 %v436
    %v920 = vunpack.c.l.b16 %v437
    %v921 = vunpack.c.h.b16 %v437
    %v922 = vunpack.c.l.b16 %v438
    %v923 = vunpack.c.h.b16 %v438
    %v924 = vunpack.c.l.b16 %v439
    %v925 = vunpack.c.h.b16 %v439
    %v926 = vunpack.c.l.b16 %v440
    %v927 = vunpack.c.h.b16 %v440
    %v928 = vunpack.c.l.b16 %v441
    %v929 = vunpack.c.h.b16 %v441
    %v930 = vunpack.c.l.b16 %v442
    %v931 = vunpack.c.h.b16 %v442
    %v932 = vunpack.c.l.b16 %v443
    %v933 = vunpack.c.h.b16 %v443
    %v934 = vunpack.c.l.b16 %v444
    %v935 = vunpack.c.h.b16 %v444
    %v936 = vunpack.c.l.b16 %v445
    %v937 = vunpack.c.h.b16 %v445
    %v938 = vunpack.c.l.b16 %v446
    %v939 = vunpack.c.h.b16 %v446
    %v940 = vunpack.c.l.b16 %v447
    %v941 = vunpack.c.h.b16 %v447
    %v942 = vunpack.c.l.b16 %v448
    %v943 = vunpack.c.h.b16 %v448
    %v944 = vunpack.c.l.b16 %v449
    %v945 = vunpack.c.h.b16 %v449
    %v946 = vunpack.c.l.b16 %v450
    %v947 = vunpack.c.h.b16 %v450
    %v948 = vunpack.c.l.b16 %v451
    %v949 = vunpack.c.h.b16 %v451
    %v950 = vunpack.c.l.b16 %v452
    %v951 = vunpack.c.h.b16 %v452
    %v952 = vunpack.c.l.b16 %v453
    %v953 = vunpack.c.h.b16 %v453
    %v954 = vunpack.c.l.b16 %v454
    %v955 = vunpack.c.h.b16 %v454
    %v956 = vunpack.c.l.b16 %v455
    %v957 = vunpack.c.h.b16 %v455
    %v958 = vunpack.c.l.b16 %v456
    %v959 = vunpack.c.h.b16 %v456
    %v960 = vunpack.c.l.b16 %v457
    %v961 = vunpack.c.h.b16 %v457
    %v962 = vunpack.c.l.b16 %v458
    %v963 = vunpack.c.h.b16 %v458
    %v964 = vunpack.c.l.b16 %v459
    %v965 = vunpack.c.h.b16 %v459
    %v966 = vunpack.c.l.b16 %v460
    %v967 = vunpack.c.h.b16 %v460
    %v968 = vunpack.c.l.b16 %v461
    %v969 = vunpack.c.h.b16 %v461
    %v970 = vunpack.c.l.b16 %v462
    %v971 = vunpack.c.h.b16 %v462
    %v972 = vunpack.c.l.b16 %v463
    %v973 = vunpack.c.h.b16 %v463
    %v974 = vunpack.c.l.b16 %v464
    %v975 = vunpack.c.h.b16 %v464
    %v976 = vunpack.c.l.b16 %v465
    %v977 = vunpack.c.h.b16 %v465
    %v978 = vunpack.c.l.b16 %v466
    %v979 = vunpack.c.h.b16 %v466
    %v980 = vunpack.c.l.b16 %v467
    %v981 = vunpack.c.h.b16 %v467
    %v982 = vunpack.c.l.b16 %v468
    %v983 = vunpack.c.h.b16 %v468
    %v984 = vunpack.c.l.b16 %v469
    %v985 = vunpack.c.h.b16 %v469
    %v986 = vunpack.c.l.b16 %v470
    %v987 = vunpack.c.h.b16 %v470
    %v988 = vunpack.c.l.b16 %v471
    %v989 = vunpack.c.h.b16 %v471
    %v990 = vunpack.c.l.b16 %v472
    %v991 = vunpack.c.h.b16 %v472
    %v992 = vunpack.c.l.b16 %v473
    %v993 = vunpack.c.h.b16 %v473
    %v994 = vunpack.c.l.b16 %v474
    %v995 = vunpack.c.h.b16 %v474
    %v996 = vunpack.c.l.b16 %v475
    %v997 = vunpack.c.h.b16 %v475
    %v998 = vunpack.c.l.b16 %v476
    %v999 = vunpack.c.h.b16 %v476
    %v1000 = vunpack.c.l.b16 %v477
    %v1001 = vunpack.c.h.b16 %v477
    %v1002 = vunpack.c.l.b16 %v478
    %v1003 = vunpack.c.h.b16 %v478
    %v1004 = vunpack.c.l.b16 %v479
    %v1005 = vunpack.c.h.b16 %v479
    %v1006 = vunpack.c.l.b16 %v480
    %v1007 = vunpack.c.h.b16 %v480
    %v1008 = vunpack.c.l.b16 %v481
    %v1009 = vunpack.c.h.b16 %v481
    %v1010 = vunpack.c.l.b16 %v482
    %v1011 = vunpack.c.h.b16 %v482
    %v1012 = vunpack.c.l.b16 %v483
    %v1013 = vunpack.c.h.b16 %v483
    %v1014 = vunpack.c.l.b16 %v484
    %v1015 = vunpack.c.h.b16 %v484
    %v1016 = vunpack.c.l.b16 %v485
    %v1017 = vunpack.c.h.b16 %v485
    %v1018 = vunpack.c.l.b16 %v486
    %v1019 = vunpack.c.h.b16 %v486
    %v1020 = vunpack.c.l.b16 %v487
    %v1021 = vunpack.c.h.b16 %v487
    %v1022 = vunpack.c.l.b16 %v488
    %v1023 = vunpack.c.h.b16 %v488
    %v1024 = vunpack.c.l.b16 %v489
    %v1025 = vunpack.c.h.b16 %v489
    %v1026 = vunpack.c.l.b16 %v490
    %v1027 = vunpack.c.h.b16 %v490
    %v1028 = vunpack.c.l.b16 %v491
    %v1029 = vunpack.c.h.b16 %v491
    %v1030 = vunpack.c.l.b16 %v492
    %v1031 = vunpack.c.h.b16 %v492
    %v1032 = vunpack.c.l.b16 %v493
    %v1033 = vunpack.c.h.b16 %v493
    %v1034 = vunpack.c.l.b16 %v494
    %v1035 = vunpack.c.h.b16 %v494
    %v1036 = vunpack.c.l.b16 %v495
    %v1037 = vunpack.c.h.b16 %v495
    %v1038 = vunpack.c.l.b16 %v496
    %v1039 = vunpack.c.h.b16 %v496
    %v1040 = vunpack.c.l.b16 %v497
    %v1041 = vunpack.c.h.b16 %v497
    %v1042 = vunpack.c.l.b16 %v498
    %v1043 = vunpack.c.h.b16 %v498
    %v1044 = vunpack.c.l.b16 %v499
    %v1045 = vunpack.c.h.b16 %v499
    %v1046 = vunpack.c.l.b16 %v500
    %v1047 = vunpack.c.h.b16 %v500
    %v1048 = vunpack.c.l.b16 %v501
    %v1049 = vunpack.c.h.b16 %v501
    %v1050 = vunpack.c.l.b16 %v502
    %v1051 = vunpack.c.h.b16 %v502
    %v1052 = vunpack.c.l.b16 %v503
    %v1053 = vunpack.c.h.b16 %v503
    %v1054 = vunpack.c.l.b16 %v504
    %v1055 = vunpack.c.h.b16 %v504
    %v1056 = vunpack.c.l.b16 %v505
    %v1057 = vunpack.c.h.b16 %v505
    %v1058 = vunpack.c.l.b16 %v506
    %v1059 = vunpack.c.h.b16 %v506
    %v1060 = vunpack.c.l.b16 %v507
    %v1061 = vunpack.c.h.b16 %v507
    %v1062 = vunpack.c.l.b16 %v508
    %v1063 = vunpack.c.h.b16 %v508
    %v1064 = vunpack.c.l.b16 %v509
    %v1065 = vunpack.c.h.b16 %v509
    %v1066 = vunpack.c.l.b16 %v510
    %v1067 = vunpack.c.h.b16 %v510
    %v1068 = vunpack.c.l.b16 %v511
    %v1069 = vunpack.c.h.b16 %v511
    %v1070 = vunpack.c.l.b16 %v512
    %v1071 = vunpack.c.h.b16 %v512
    %v1072 = vunpack.c.l.b16 %v513
    %v1073 = vunpack.c.h.b16 %v513
    %v1074 = vunpack.c.l.b16 %v514
    %v1075 = vunpack.c.h.b16 %v514
    %v1076 = vunpack.c.l.b16 %v515
    %v1077 = vunpack.c.h.b16 %v515
    %v1078 = vunpack.c.l.b16 %v516
    %v1079 = vunpack.c.h.b16 %v516
    %v1080 = vunpack.c.l.b16 %v517
    %v1081 = vunpack.c.h.b16 %v517
    %v1082 = vunpack.c.l.b16 %v518
    %v1083 = vunpack.c.h.b16 %v518
    %v1084 = vunpack.c.l.b16 %v519
    %v1085 = vunpack.c.h.b16 %v519
    %v1086 = vunpack.c.l.b16 %v520
    %v1087 = vunpack.c.h.b16 %v520
    %v1088 = vunpack.c.l.b16 %v521
    %v1089 = vunpack.c.h.b16 %v521
    %v1090 = vunpack.c.l.b16 %v522
    %v1091 = vunpack.c.h.b16 %v522
    %v1092 = vunpack.c.l.b16 %v523
    %v1093 = vunpack.c.h.b16 %v523
    %v1094 = vunpack.c.l.b16 %v524
    %v1095 = vunpack.c.h.b16 %v524
    %v1096 = vunpack.c.l.b16 %v525
    %v1097 = vunpack.c.h.b16 %v525
    %v1098 = vunpack.c.l.b16 %v526
    %v1099 = vunpack.c.h.b16 %v526
    %v1100 = vunpack.c.l.b16 %v527
    %v1101 = vunpack.c.h.b16 %v527
    %v1102 = vunpack.c.l.b16 %v528
    %v1103 = vunpack.c.h.b16 %v528
    %v1104 = vunpack.c.l.b16 %v529
    %v1105 = vunpack.c.h.b16 %v529
    %v1106 = vpack.c.b16 %v726, %v722
    %v1107 = vpack.c.b16 %v727, %v723
    %v1108 = vpack.c.b16 %v728, %v724
    %v1109 = vpack.c.b16 %v729, %v725
    %v1110 = vpack.c.b16 %v734, %v730
    %v1111 = vpack.c.b16 %v735, %v731
    %v1112 = vpack.c.b16 %v736, %v732
    %v1113 = vpack.c.b16 %v737, %v733
    %v1114 = vpack.c.b16 %v742, %v738
    %v1115 = vpack.c.b16 %v743, %v739
    %v1116 = vpack.c.b16 %v744, %v740
    %v1117 = vpack.c.b16 %v745, %v741
    %v1118 = vpack.c.b16 %v750, %v746
    %v1119 = vpack.c.b16 %v751, %v747
    %v1120 = vpack.c.b16 %v752, %v748
    %v1121 = vpack.c.b16 %v753, %v749
    %v1122 = vpack.c.b16 %v758, %v754
    %v1123 = vpack.c.b16 %v759, %v755
    %v1124 = vpack.c.b16 %v760, %v756
    %v1125 = vpack.c.b16 %v761, %v757
    %v1126 = vpack.c.b16 %v766, %v762
    %v1127 = vpack.c.b16 %v767, %v763
    %v1128 = vpack.c.b16 %v768, %v764
    %v1129 = vpack.c.b16 %v769, %v765
    %v1130 = vpack.c.b16 %v774, %v770
    %v1131 = vpack.c.b16 %v775, %v771
    %v1132 = vpack.c.b16 %v776, %v772
    %v1133 = vpack.c.b16 %v777, %v773
    %v1134 = vpack.c.b16 %v782, %v778
    %v1135 = vpack.c.b16 %v783, %v779
    %v1136 = vpack.c.b16 %v784, %v780
    %v1137 = vpack.c.b16 %v785, %v781
    %v1138 = vpack.c.b16 %v790, %v786
    %v1139 = vpack.c.b16 %v791, %v787
    %v1140 = vpack.c.b16 %v792, %v788
    %v1141 = vpack.c.b16 %v793, %v789
    %v1142 = vpack.c.b16 %v798, %v794
    %v1143 = vpack.c.b16 %v799, %v795
    %v1144 = vpack.c.b16 %v800, %v796
    %v1145 = vpack.c.b16 %v801, %v797
    %v1146 = vpack.c.b16 %v806, %v802
    %v1147 = vpack.c.b16 %v807, %v803
    %v1148 = vpack.c.b16 %v808, %v804
    %v1149 = vpack.c.b16 %v809, %v805
    %v1150 = vpack.c.b16 %v814, %v810
    %v1151 = vpack.c.b16 %v815, %v811
    %v1152 = vpack.c.b16 %v816, %v812
    %v1153 = vpack.c.b16 %v817, %v813
    %v1154 = vpack.c.b16 %v822, %v818
    %v1155 = vpack.c.b16 %v823, %v819
    %v1156 = vpack.c.b16 %v824, %v820
    %v1157 = vpack.c.b16 %v825, %v821
    %v1158 = vpack.c.b16 %v830, %v826
    %v1159 = vpack.c.b16 %v831, %v827
    %v1160 = vpack.c.b16 %v832, %v828
    %v1161 = vpack.c.b16 %v833, %v829
    %v1162 = vpack.c.b16 %v838, %v834
    %v1163 = vpack.c.b16 %v839, %v835
    %v1164 = vpack.c.b16 %v840, %v836
    %v1165 = vpack.c.b16 %v841, %v837
    %v1166 = vpack.c.b16 %v846, %v842
    %v1167 = vpack.c.b16 %v847, %v843
    %v1168 = vpack.c.b16 %v848, %v844
    %v1169 = vpack.c.b16 %v849, %v845
    %v1170 = vpack.c.b16 %v854, %v850
    %v1171 = vpack.c.b16 %v855, %v851
    %v1172 = vpack.c.b16 %v856, %v852
    %v1173 = vpack.c.b16 %v857, %v853
    %v1174 = vpack.c.b16 %v862, %v858
    %v1175 = vpack.c.b16 %v863, %v859
    %v1176 = vpack.c.b16 %v864, %v860
    %v1177 = vpack.c.b16 %v865, %v861
    %v1178 = vpack.c.b16 %v870, %v866
    %v1179 = vpack.c.b16 %v871, %v867
    %v1180 = vpack.c.b16 %v872, %v868
    %v1181 = vpack.c.b16 %v873, %v869
    %v1182 = vpack.c.b16 %v878, %v874
    %v1183 = vpack.c.b16 %v879, %v875
    %v1184 = vpack.c.b16 %v880, %v876
    %v1185 = vpack.c.b16 %v881, %v877
    %v1186 = vpack.c.b16 %v886, %v882
    %v1187 = vpack.c.b16 %v887, %v883
    %v1188 = vpack.c.b16 %v888, %v884
    %v1189 = vpack.c.b16 %v889, %v885
    %v1190 = vpack.c.b16 %v894, %v890
    %v1191 = vpack.c.b16 %v895, %v891
    %v1192 = vpack.c.b16 %v896, %v892
    %v1193 = vpack.c.b16 %v897, %v893
    %v1194 = vpack.c.b16 %v902, %v898
    %v1195 = vpack.c.b16 %v903, %v899
    %v1196 = vpack.c.b16 %v904, %v900
    %v1197 = vpack.c.b16 %v905, %v901
    %v1198 = vpack.c.b16 %v910, %v906
    %v1199 = vpack.c.b16 %v911, %v907
    %v1200 = vpack.c.b16 %v912, %v908
    %v1201 = vpack.c.b16 %v913, %v909
    %v1202 = vpack.c.b16 %v918, %v914
    %v1203 = vpack.c.b16 %v919, %v915
    %v1204 = vpack.c.b16 %v920, %v916
    %v1205 = vpack.c.b16 %v921, %v917
    %v1206 = vpack.c.b16 %v926, %v922
    %v1207 = vpack.c.b16 %v927, %v923
    %v1208 = vpack.c.b16 %v928, %v924
    %v1209 = vpack.c.b16 %v929, %v925
    %v1210 = vpack.c.b16 %v934, %v930
    %v1211 = vpack.c.b16 %v935, %v931
    %v1212 = vpack.c.b16 %v936, %v932
    %v1213 = vpack.c.b16 %v937, %v933
    %v1214 = vpack.c.b16 %v942, %v938
    %v1215 = vpack.c.b16 %v943, %v939
    %v1216 = vpack.c.b16 %v944, %v940
    %v1217 = vpack.c.b16 %v945, %v941
    %v1218 = vpack.c.b16 %v950, %v946
    %v1219 = vpack.c.b16 %v951, %v947
    %v1220 = vpack.c.b16 %v952, %v948
    %v1221 = vpack.c.b16 %v953, %v949
    %v1222 = vpack.c.b16 %v958, %v954
    %v1223 = vpack.c.b16 %v959, %v955
    %v1224 = vpack.c.b16 %v960, %v956
    %v1225 = vpack.c.b16 %v961, %v957
    %v1226 = vpack.c.b16 %v966, %v962
    %v1227 = vpack.c.b16 %v967, %v963
    %v1228 = vpack.c.b16 %v968, %v964
    %v1229 = vpack.c.b16 %v969, %v965
    %v1230 = vpack.c.b16 %v974, %v970
    %v1231 = vpack.c.b16 %v975, %v971
    %v1232 = vpack.c.b16 %v976, %v972
    %v1233 = vpack.c.b16 %v977, %v973
    %v1234 = vpack.c.b16 %v982, %v978
    %v1235 = vpack.c.b16 %v983, %v979
    %v1236 = vpack.c.b16 %v984, %v980
    %v1237 = vpack.c.b16 %v985, %v981
    %v1238 = vpack.c.b16 %v990, %v986
    %v1239 = vpack.c.b16 %v991, %v987
    %v1240 = vpack.c.b16 %v992, %v988
    %v1241 = vpack.c.b16 %v993, %v989
    %v1242 = vpack.c.b16 %v998, %v994
    %v1243 = vpack.c.b16 %v999, %v995
    %v1244 = vpack.c.b16 %v1000, %v996
    %v1245 = vpack.c.b16 %v1001, %v997
    %v1246 = vpack.c.b16 %v1006, %v1002
    %v1247 = vpack.c.b16 %v1007, %v1003
    %v1248 = vpack.c.b16 %v1008, %v1004
    %v1249 = vpack.c.b16 %v1009, %v1005
    %v1250 = vpack.c.b16 %v1014, %v1010
    %v1251 = vpack.c.b16 %v1015, %v1011
    %v1252 = vpack.c.b16 %v1016, %v1012
    %v1253 = vpack.c.b16 %v1017, %v1013
    %v1254 = vpack.c.b16 %v1022, %v1018
    %v1255 = vpack.c.b16 %v1023, %v1019
    %v1256 = vpack.c.b16 %v1024, %v1020
    %v1257 = vpack.c.b16 %v1025, %v1021
    %v1258 = vpack.c.b16 %v1030, %v1026
    %v1259 = vpack.c.b16 %v1031, %v1027
    %v1260 = vpack.c.b16 %v1032, %v1028
    %v1261 = vpack.c.b16 %v1033, %v1029
    %v1262 = vpack.c.b16 %v1038, %v1034
    %v1263 = vpack.c.b16 %v1039, %v1035
    %v1264 = vpack.c.b16 %v1040, %v1036
    %v1265 = vpack.c.b16 %v1041, %v1037
    %v1266 = vpack.c.b16 %v1046, %v1042
    %v1267 = vpack.c.b16 %v1047, %v1043
    %v1268 = vpack.c.b16 %v1048, %v1044
    %v1269 = vpack.c.b16 %v1049, %v1045
    %v1270 = vpack.c.b16 %v1054, %v1050
    %v1271 = vpack.c.b16 %v1055, %v1051
    %v1272 = vpack.c.b16 %v1056, %v1052
    %v1273 = vpack.c.b16 %v1057, %v1053
    %v1274 = vpack.c.b16 %v1062, %v1058
    %v1275 = vpack.c.b16 %v1063, %v1059
    %v1276 = vpack.c.b16 %v1064, %v1060
    %v1277 = vpack.c.b16 %v1065, %v1061
    %v1278 = vpack.c.b16 %v1070, %v1066
    %v1279 = vpack.c.b16 %v1071, %v1067
    %v1280 = vpack.c.b16 %v1072, %v1068
    %v1281 = vpack.c.b16 %v1073, %v1069
    %v1282 = vpack.c.b16 %v1078, %v1074
    %v1283 = vpack.c.b16 %v1079, %v1075
    %v1284 = vpack.c.b16 %v1080, %v1076
    %v1285 = vpack.c.b16 %v1081, %v1077
    %v1286 = vpack.c.b16 %v1086, %v1082
    %v1287 = vpack.c.b16 %v1087, %v1083
    %v1288 = vpack.c.b16 %v1088, %v1084
    %v1289 = vpack.c.b16 %v1089, %v1085
    %v1290 = vpack.c.b16 %v1094, %v1090
    %v1291 = vpack.c.b16 %v1095, %v1091
    %v1292 = vpack.c.b16 %v1096, %v1092
    %v1293 = vpack.c.b16 %v1097, %v1093
    %v1294 = vpack.c.b16 %v1102, %v1098
    %v1295 = vpack.c.b16 %v1103, %v1099
    %v1296 = vpack.c.b16 %v1104, %v1100
    %v1297 = vpack.c.b16 %v1105, %v1101
    %1490 = vmatprep.subr.bf16.mxu0 %v1107
    %1491 = vmatpush1.bf16.msra.mxu0 %v1106
    %1492 = vmatprep.subr.bf16.mxu0 %v1111
    %1493 = vmatpush1.bf16.msra.mxu0 %v1110
    %1494 = vmatprep.subr.bf16.mxu0 %v1115
    %1495 = vmatpush1.bf16.msra.mxu0 %v1114
    %1496 = vmatprep.subr.bf16.mxu0 %v1119
    %1497 = vmatpush1.bf16.msra.mxu0 %v1118
    %1498 = vmatprep.subr.bf16.mxu0 %v1123
    %1499 = vmatpush1.bf16.msra.mxu0 %v1122
    %1500 = vmatprep.subr.bf16.mxu0 %v1127
    %1501 = vmatpush1.bf16.msra.mxu0 %v1126
    %1502 = vmatprep.subr.bf16.mxu0 %v1131
    %1503 = vmatpush1.bf16.msra.mxu0 %v1130
    %1504 = vmatprep.subr.bf16.mxu0 %v1135
    %1505 = vmatpush1.bf16.msra.mxu0 %v1134
    %1506 = vmatprep.subr.bf16.mxu0 %v1139
    %1507 = vmatpush1.bf16.msra.mxu0 %v1138
    %1508 = vmatprep.subr.bf16.mxu0 %v1143
    %1509 = vmatpush1.bf16.msra.mxu0 %v1142
    %1510 = vmatprep.subr.bf16.mxu0 %v1147
    %1511 = vmatpush1.bf16.msra.mxu0 %v1146
    %1512 = vmatprep.subr.bf16.mxu0 %v1151
    %1513 = vmatpush1.bf16.msra.mxu0 %v1150
    %1514 = vmatprep.subr.bf16.mxu0 %v1155
    %1515 = vmatpush1.bf16.msra.mxu0 %v1154
    %1516 = vmatprep.subr.bf16.mxu0 %v1159
    %1517 = vmatpush1.bf16.msra.mxu0 %v1158
    %1518 = vmatprep.subr.bf16.mxu0 %v1163
    %1519 = vmatpush1.bf16.msra.mxu0 %v1162
    %1520 = vmatprep.subr.bf16.mxu0 %v1167
    %1521 = vmatpush1.bf16.msra.mxu0 %v1166
    %1522 = vmatprep.mubr.bf16.mxu0 %v327
    %1523 = vmatmul.mubr.bf16.gmra.mrb[0].mxu0 %v326
    %v1524 = vpop.f32.mrb[0].mxu0
    %v1525 = vadd.f32 0.0, %v1524
    %v1526 = vpop.f32.mrb[0].mxu0
    %v1527 = vadd.f32 0.0, %v1526
    %v1528 = vpop.f32.mrb[0].mxu0
    %v1529 = vadd.f32 0.0, %v1528
    %v1530 = vpop.f32.mrb[0].mxu0
    %v1531 = vadd.f32 0.0, %v1530
    %1532 = vmatprep.mubr.bf16.mxu0 %v333
    %1533 = vmatmul.mubr.bf16.gmra.mrb[0].mxu0 %v332
    %v1534 = vpop.f32.mrb[0].mxu0
    %v1535 = vadd.f32 0.0, %v1534
    %v1536 = vpop.f32.mrb[0].mxu0
    %v1537 = vadd.f32 0.0, %v1536
    %v1538 = vpop.f32.mrb[0].mxu0
    %v1539 = vadd.f32 0.0, %v1538
    %v1540 = vpop.f32.mrb[0].mxu0
    %v1541 = vadd.f32 0.0, %v1540
    %1542 = vdwg.mxu0
    %1543 = vmatprep.subr.bf16.mxu0 %v1171
    %1544 = vmatpush1.bf16.msra.mxu0 %v1170
    %1545 = vmatprep.subr.bf16.mxu0 %v1175
    %1546 = vmatpush1.bf16.msra.mxu0 %v1174
    %1547 = vmatprep.subr.bf16.mxu0 %v1179
    %1548 = vmatpush1.bf16.msra.mxu0 %v1178
    %1549 = vmatprep.subr.bf16.mxu0 %v1183
    %1550 = vmatpush1.bf16.msra.mxu0 %v1182
    %1551 = vmatprep.subr.bf16.mxu0 %v1187
    %1552 = vmatpush1.bf16.msra.mxu0 %v1186
    %1553 = vmatprep.subr.bf16.mxu0 %v1191
    %1554 = vmatpush1.bf16.msra.mxu0 %v1190
    %1555 = vmatprep.subr.bf16.mxu0 %v1195
    %1556 = vmatpush1.bf16.msra.mxu0 %v1194
    %1557 = vmatprep.subr.bf16.mxu0 %v1199
    %1558 = vmatpush1.bf16.msra.mxu0 %v1198
    %1559 = vmatprep.subr.bf16.mxu0 %v1203
    %1560 = vmatpush1.bf16.msra.mxu0 %v1202
    %1561 = vmatprep.subr.bf16.mxu0 %v1207
    %1562 = vmatpush1.bf16.msra.mxu0 %v1206
    %1563 = vmatprep.subr.bf16.mxu0 %v1211
    %1564 = vmatpush1.bf16.msra.mxu0 %v1210
    %1565 = vmatprep.subr.bf16.mxu0 %v1215
    %1566 = vmatpush1.bf16.msra.mxu0 %v1214
    %1567 = vmatprep.subr.bf16.mxu0 %v1219
    %1568 = vmatpush1.bf16.msra.mxu0 %v1218
    %1569 = vmatprep.subr.bf16.mxu0 %v1223
    %1570 = vmatpush1.bf16.msra.mxu0 %v1222
    %1571 = vmatprep.subr.bf16.mxu0 %v1227
    %1572 = vmatpush1.bf16.msra.mxu0 %v1226
    %1573 = vmatprep.subr.bf16.mxu0 %v1231
    %1574 = vmatpush1.bf16.msra.mxu0 %v1230
    %1575 = vmatprep.mubr.bf16.mxu0 %v329
    %1576 = vmatmul.mubr.bf16.gmra.mrb[0].mxu0 %v328
    %v1577 = vpop.f32.mrb[0].mxu0
    %v1578 = vadd.f32 %v1525, %v1577
    %v1579 = vpop.f32.mrb[0].mxu0
    %v1580 = vadd.f32 %v1527, %v1579
    %v1581 = vpop.f32.mrb[0].mxu0
    %v1582 = vadd.f32 %v1529, %v1581
    %v1583 = vpop.f32.mrb[0].mxu0
    %v1584 = vadd.f32 %v1531, %v1583
    %1585 = vmatprep.mubr.bf16.mxu0 %v335
    %1586 = vmatmul.mubr.bf16.gmra.mrb[0].mxu0 %v334
    %v1587 = vpop.f32.mrb[0].mxu0
    %v1588 = vadd.f32 %v1535, %v1587
    %v1589 = vpop.f32.mrb[0].mxu0
    %v1590 = vadd.f32 %v1537, %v1589
    %v1591 = vpop.f32.mrb[0].mxu0
    %v1592 = vadd.f32 %v1539, %v1591
    %v1593 = vpop.f32.mrb[0].mxu0
    %v1594 = vadd.f32 %v1541, %v1593
    %1595 = vdwg.mxu0
    %1596 = vmatprep.subr.bf16.mxu0 %v1235
    %1597 = vmatpush1.bf16.msra.mxu0 %v1234
    %1598 = vmatprep.subr.bf16.mxu0 %v1239
    %1599 = vmatpush1.bf16.msra.mxu0 %v1238
    %1600 = vmatprep.subr.bf16.mxu0 %v1243
    %1601 = vmatpush1.bf16.msra.mxu0 %v1242
    %1602 = vmatprep.subr.bf16.mxu0 %v1247
    %1603 = vmatpush1.bf16.msra.mxu0 %v1246
    %1604 = vmatprep.subr.bf16.mxu0 %v1251
    %1605 = vmatpush1.bf16.msra.mxu0 %v1250
    %1606 = vmatprep.subr.bf16.mxu0 %v1255
    %1607 = vmatpush1.bf16.msra.mxu0 %v1254
    %1608 = vmatprep.subr.bf16.mxu0 %v1259
    %1609 = vmatpush1.bf16.msra.mxu0 %v1258
    %1610 = vmatprep.subr.bf16.mxu0 %v1263
    %1611 = vmatpush1.bf16.msra.mxu0 %v1262
    %1612 = vmatprep.subr.bf16.mxu0 %v1267
    %1613 = vmatpush1.bf16.msra.mxu0 %v1266
    %1614 = vmatprep.subr.bf16.mxu0 %v1271
    %1615 = vmatpush1.bf16.msra.mxu0 %v1270
    %1616 = vmatprep.subr.bf16.mxu0 %v1275
    %1617 = vmatpush1.bf16.msra.mxu0 %v1274
    %1618 = vmatprep.subr.bf16.mxu0 %v1279
    %1619 = vmatpush1.bf16.msra.mxu0 %v1278
    %1620 = vmatprep.subr.bf16.mxu0 %v1283
    %1621 = vmatpush1.bf16.msra.mxu0 %v1282
    %1622 = vmatprep.subr.bf16.mxu0 %v1287
    %1623 = vmatpush1.bf16.msra.mxu0 %v1286
    %1624 = vmatprep.subr.bf16.mxu0 %v1291
    %1625 = vmatpush1.bf16.msra.mxu0 %v1290
    %1626 = vmatprep.subr.bf16.mxu0 %v1295
    %1627 = vmatpush1.bf16.msra.mxu0 %v1294
    %1628 = vmatprep.mubr.bf16.mxu0 %v331
    %1629 = vmatmul.mubr.bf16.gmra.mrb[0].mxu0 %v330
    %v1630 = vpop.f32.mrb[0].mxu0
    %v1631 = vadd.f32 %v1578, %v1630
    %v1632 = vpop.f32.mrb[0].mxu0
    %v1633 = vadd.f32 %v1580, %v1632
    %v1634 = vpop.f32.mrb[0].mxu0
    %v1635 = vadd.f32 %v1582, %v1634
    %v1636 = vpop.f32.mrb[0].mxu0
    %v1637 = vadd.f32 %v1584, %v1636
    %1638 = vmatprep.mubr.bf16.mxu0 %v337
    %1639 = vmatmul.mubr.bf16.gmra.mrb[0].mxu0 %v336
    %v1640 = vpop.f32.mrb[0].mxu0
    %v1641 = vadd.f32 %v1588, %v1640
    %v1642 = vpop.f32.mrb[0].mxu0
    %v1643 = vadd.f32 %v1590, %v1642
    %v1644 = vpop.f32.mrb[0].mxu0
    %v1645 = vadd.f32 %v1592, %v1644
    %v1646 = vpop.f32.mrb[0].mxu0
    %v1647 = vadd.f32 %v1594, %v1646
    %1648 = vdwg.mxu0
    %1649 = vmatprep.subr.bf16.mxu0 %v1109
    %1650 = vmatpush1.bf16.msra.mxu0 %v1108
    %1651 = vmatprep.subr.bf16.mxu0 %v1113
    %1652 = vmatpush1.bf16.msra.mxu0 %v1112
    %1653 = vmatprep.subr.bf16.mxu0 %v1117
    %1654 = vmatpush1.bf16.msra.mxu0 %v1116
    %1655 = vmatprep.subr.bf16.mxu0 %v1121
    %1656 = vmatpush1.bf16.msra.mxu0 %v1120
    %1657 = vmatprep.subr.bf16.mxu0 %v1125
    %1658 = vmatpush1.bf16.msra.mxu0 %v1124
    %1659 = vmatprep.subr.bf16.mxu0 %v1129
    %1660 = vmatpush1.bf16.msra.mxu0 %v1128
    %1661 = vmatprep.subr.bf16.mxu0 %v1133
    %1662 = vmatpush1.bf16.msra.mxu0 %v1132
    %1663 = vmatprep.subr.bf16.mxu0 %v1137
    %1664 = vmatpush1.bf16.msra.mxu0 %v1136
    %1665 = vmatprep.subr.bf16.mxu0 %v1141
    %1666 = vmatpush1.bf16.msra.mxu0 %v1140
    %1667 = vmatprep.subr.bf16.mxu0 %v1145
    %1668 = vmatpush1.bf16.msra.mxu0 %v1144
    %1669 = vmatprep.subr.bf16.mxu0 %v1149
    %1670 = vmatpush1.bf16.msra.mxu0 %v1148
    %1671 = vmatprep.subr.bf16.mxu0 %v1153
    %1672 = vmatpush1.bf16.msra.mxu0 %v1152
    %1673 = vmatprep.subr.bf16.mxu0 %v1157
    %1674 = vmatpush1.bf16.msra.mxu0 %v1156
    %1675 = vmatprep.subr.bf16.mxu0 %v1161
    %1676 = vmatpush1.bf16.msra.mxu0 %v1160
    %1677 = vmatprep.subr.bf16.mxu0 %v1165
    %1678 = vmatpush1.bf16.msra.mxu0 %v1164
    %1679 = vmatprep.subr.bf16.mxu0 %v1169
    %1680 = vmatpush1.bf16.msra.mxu0 %v1168
    %1681 = vmatprep.mubr.bf16.mxu0 %v327
    %1682 = vmatmul.mubr.bf16.gmra.mrb[0].mxu0 %v326
    %v1683 = vpop.f32.mrb[0].mxu0
    %v1684 = vadd.f32 0.0, %v1683
    %v1685 = vpop.f32.mrb[0].mxu0
    %v1686 = vadd.f32 0.0, %v1685
    %v1687 = vpop.f32.mrb[0].mxu0
    %v1688 = vadd.f32 0.0, %v1687
    %v1689 = vpop.f32.mrb[0].mxu0
    %v1690 = vadd.f32 0.0, %v1689
    %1691 = vmatprep.mubr.bf16.mxu0 %v333
    %1692 = vmatmul.mubr.bf16.gmra.mrb[0].mxu0 %v332
    %v1693 = vpop.f32.mrb[0].mxu0
    %v1694 = vadd.f32 0.0, %v1693
    %v1695 = vpop.f32.mrb[0].mxu0
    %v1696 = vadd.f32 0.0, %v1695
    %v1697 = vpop.f32.mrb[0].mxu0
    %v1698 = vadd.f32 0.0, %v1697
    %v1699 = vpop.f32.mrb[0].mxu0
    %v1700 = vadd.f32 0.0, %v1699
    %1701 = vdwg.mxu0
    %1702 = vmatprep.subr.bf16.mxu0 %v1173
    %1703 = vmatpush1.bf16.msra.mxu0 %v1172
    %1704 = vmatprep.subr.bf16.mxu0 %v1177
    %1705 = vmatpush1.bf16.msra.mxu0 %v1176
    %1706 = vmatprep.subr.bf16.mxu0 %v1181
    %1707 = vmatpush1.bf16.msra.mxu0 %v1180
    %1708 = vmatprep.subr.bf16.mxu0 %v1185
    %1709 = vmatpush1.bf16.msra.mxu0 %v1184
    %1710 = vmatprep.subr.bf16.mxu0 %v1189
    %1711 = vmatpush1.bf16.msra.mxu0 %v1188
    %1712 = vmatprep.subr.bf16.mxu0 %v1193
    %1713 = vmatpush1.bf16.msra.mxu0 %v1192
    %1714 = vmatprep.subr.bf16.mxu0 %v1197
    %1715 = vmatpush1.bf16.msra.mxu0 %v1196
    %1716 = vmatprep.subr.bf16.mxu0 %v1201
    %1717 = vmatpush1.bf16.msra.mxu0 %v1200
    %1718 = vmatprep.subr.bf16.mxu0 %v1205
    %1719 = vmatpush1.bf16.msra.mxu0 %v1204
    %1720 = vmatprep.subr.bf16.mxu0 %v1209
    %1721 = vmatpush1.bf16.msra.mxu0 %v1208
    %1722 = vmatprep.subr.bf16.mxu0 %v1213
    %1723 = vmatpush1.bf16.msra.mxu0 %v1212
    %1724 = vmatprep.subr.bf16.mxu0 %v1217
    %1725 = vmatpush1.bf16.msra.mxu0 %v1216
    %1726 = vmatprep.subr.bf16.mxu0 %v1221
    %1727 = vmatpush1.bf16.msra.mxu0 %v1220
    %1728 = vmatprep.subr.bf16.mxu0 %v1225
    %1729 = vmatpush1.bf16.msra.mxu0 %v1224
    %1730 = vmatprep.subr.bf16.mxu0 %v1229
    %1731 = vmatpush1.bf16.msra.mxu0 %v1228
    %1732 = vmatprep.subr.bf16.mxu0 %v1233
    %1733 = vmatpush1.bf16.msra.mxu0 %v1232
    %1734 = vmatprep.mubr.bf16.mxu0 %v329
    %1735 = vmatmul.mubr.bf16.gmra.mrb[0].mxu0 %v328
    %v1736 = vpop.f32.mrb[0].mxu0
    %v1737 = vadd.f32 %v1684, %v1736
    %v1738 = vpop.f32.mrb[0].mxu0
    %v1739 = vadd.f32 %v1686, %v1738
    %v1740 = vpop.f32.mrb[0].mxu0
    %v1741 = vadd.f32 %v1688, %v1740
    %v1742 = vpop.f32.mrb[0].mxu0
    %v1743 = vadd.f32 %v1690, %v1742
    %1744 = vmatprep.mubr.bf16.mxu0 %v335
    %1745 = vmatmul.mubr.bf16.gmra.mrb[0].mxu0 %v334
    %v1746 = vpop.f32.mrb[0].mxu0
    %v1747 = vadd.f32 %v1694, %v1746
    %v1748 = vpop.f32.mrb[0].mxu0
    %v1749 = vadd.f32 %v1696, %v1748
    %v1750 = vpop.f32.mrb[0].mxu0
    %v1751 = vadd.f32 %v1698, %v1750
    %v1752 = vpop.f32.mrb[0].mxu0
    %v1753 = vadd.f32 %v1700, %v1752
    %1754 = vdwg.mxu0
    %1755 = vmatprep.subr.bf16.mxu0 %v1237
    %1756 = vmatpush1.bf16.msra.mxu0 %v1236
    %1757 = vmatprep.subr.bf16.mxu0 %v1241
    %1758 = vmatpush1.bf16.msra.mxu0 %v1240
    %1759 = vmatprep.subr.bf16.mxu0 %v1245
    %1760 = vmatpush1.bf16.msra.mxu0 %v1244
    %1761 = vmatprep.subr.bf16.mxu0 %v1249
    %1762 = vmatpush1.bf16.msra.mxu0 %v1248
    %1763 = vmatprep.subr.bf16.mxu0 %v1253
    %1764 = vmatpush1.bf16.msra.mxu0 %v1252
    %1765 = vmatprep.subr.bf16.mxu0 %v1257
    %1766 = vmatpush1.bf16.msra.mxu0 %v1256
    %1767 = vmatprep.subr.bf16.mxu0 %v1261
    %1768 = vmatpush1.bf16.msra.mxu0 %v1260
    %1769 = vmatprep.subr.bf16.mxu0 %v1265
    %1770 = vmatpush1.bf16.msra.mxu0 %v1264
    %1771 = vmatprep.subr.bf16.mxu0 %v1269
    %1772 = vmatpush1.bf16.msra.mxu0 %v1268
    %1773 = vmatprep.subr.bf16.mxu0 %v1273
    %1774 = vmatpush1.bf16.msra.mxu0 %v1272
    %1775 = vmatprep.subr.bf16.mxu0 %v1277
    %1776 = vmatpush1.bf16.msra.mxu0 %v1276
    %1777 = vmatprep.subr.bf16.mxu0 %v1281
    %1778 = vmatpush1.bf16.msra.mxu0 %v1280
    %1779 = vmatprep.subr.bf16.mxu0 %v1285
    %1780 = vmatpush1.bf16.msra.mxu0 %v1284
    %1781 = vmatprep.subr.bf16.mxu0 %v1289
    %1782 = vmatpush1.bf16.msra.mxu0 %v1288
    %1783 = vmatprep.subr.bf16.mxu0 %v1293
    %1784 = vmatpush1.bf16.msra.mxu0 %v1292
    %1785 = vmatprep.subr.bf16.mxu0 %v1297
    %1786 = vmatpush1.bf16.msra.mxu0 %v1296
    %1787 = vmatprep.mubr.bf16.mxu0 %v331
    %1788 = vmatmul.mubr.bf16.gmra.mrb[0].mxu0 %v330
    %v1789 = vpop.f32.mrb[0].mxu0
    %v1790 = vadd.f32 %v1737, %v1789
    %v1791 = vpop.f32.mrb[0].mxu0
    %v1792 = vadd.f32 %v1739, %v1791
    %v1793 = vpop.f32.mrb[0].mxu0
    %v1794 = vadd.f32 %v1741, %v1793
    %v1795 = vpop.f32.mrb[0].mxu0
    %v1796 = vadd.f32 %v1743, %v1795
    %1797 = vmatprep.mubr.bf16.mxu0 %v337
    %1798 = vmatmul.mubr.bf16.gmra.mrb[0].mxu0 %v336
    %v1799 = vpop.f32.mrb[0].mxu0
    %v1800 = vadd.f32 %v1747, %v1799
    %v1801 = vpop.f32.mrb[0].mxu0
    %v1802 = vadd.f32 %v1749, %v1801
    %v1803 = vpop.f32.mrb[0].mxu0
    %v1804 = vadd.f32 %v1751, %v1803
    %v1805 = vpop.f32.mrb[0].mxu0
    %v1806 = vadd.f32 %v1753, %v1805
    %1807 = vdwg.mxu0
    %v1808 = vld [vmem:[#allocation2] sm:$0x1]
    %v1809 = vld [vmem:[#allocation4] sm:$0x1]
    %v1810 = vadd.f32 %v1631, %v1635
    %v1811 = vadd.f32 %v1810, %v1641
    %v1812 = vadd.f32 %v1811, %v1645
    %v1813 = vrot.slane %v1812, 4
    %v1814 = vadd.f32 %v1812, %v1813
    %v1815 = vrot.slane %v1814, 2
    %v1816 = vadd.f32 %v1814, %v1815
    %v1817 = vrot.slane %v1816, 1
    %v1818 = vadd.f32 %v1816, %v1817
    %v1819 = vadd.f32 %v1633, %v1637
    %v1820 = vadd.f32 %v1819, %v1643
    %v1821 = vadd.f32 %v1820, %v1647
    %v1822 = vrot.slane %v1821, 4
    %v1823 = vadd.f32 %v1821, %v1822
    %v1824 = vrot.slane %v1823, 2
    %v1825 = vadd.f32 %v1823, %v1824
    %v1826 = vrot.slane %v1825, 1
    %v1827 = vadd.f32 %v1825, %v1826
    %v1828 = vadd.f32 %v1790, %v1794
    %v1829 = vadd.f32 %v1828, %v1800
    %v1830 = vadd.f32 %v1829, %v1804
    %v1831 = vrot.slane %v1830, 4
    %v1832 = vadd.f32 %v1830, %v1831
    %v1833 = vrot.slane %v1832, 2
    %v1834 = vadd.f32 %v1832, %v1833
    %v1835 = vrot.slane %v1834, 1
    %v1836 = vadd.f32 %v1834, %v1835
    %v1837 = vadd.f32 %v1792, %v1796
    %v1838 = vadd.f32 %v1837, %v1802
    %v1839 = vadd.f32 %v1838, %v1806
    %v1840 = vrot.slane %v1839, 4
    %v1841 = vadd.f32 %v1839, %v1840
    %v1842 = vrot.slane %v1841, 2
    %v1843 = vadd.f32 %v1841, %v1842
    %v1844 = vrot.slane %v1843, 1
    %v1845 = vadd.f32 %v1843, %v1844
    %v1846 = vmul.f32 %v1631, %v1631
    %v1847 = vmul.f32 %v1633, %v1633
    %v1848 = vmul.f32 %v1790, %v1790
    %v1849 = vmul.f32 %v1792, %v1792
    %v1850 = vmul.f32 %v1635, %v1635
    %v1851 = vmul.f32 %v1637, %v1637
    %v1852 = vmul.f32 %v1794, %v1794
    %v1853 = vmul.f32 %v1796, %v1796
    %v1854 = vmul.f32 %v1641, %v1641
    %v1855 = vmul.f32 %v1643, %v1643
    %v1856 = vmul.f32 %v1800, %v1800
    %v1857 = vmul.f32 %v1802, %v1802
    %v1858 = vmul.f32 %v1645, %v1645
    %v1859 = vmul.f32 %v1647, %v1647
    %v1860 = vmul.f32 %v1804, %v1804
    %v1861 = vmul.f32 %v1806, %v1806
    %v1862 = vadd.f32 %v1846, %v1850
    %v1863 = vadd.f32 %v1862, %v1854
    %v1864 = vadd.f32 %v1863, %v1858
    %v1865 = vrot.slane %v1864, 4
    %v1866 = vadd.f32 %v1864, %v1865
    %v1867 = vrot.slane %v1866, 2
    %v1868 = vadd.f32 %v1866, %v1867
    %v1869 = vrot.slane %v1868, 1
    %v1870 = vadd.f32 %v1868, %v1869
    %v1871 = vadd.f32 %v1847, %v1851
    %v1872 = vadd.f32 %v1871, %v1855
    %v1873 = vadd.f32 %v1872, %v1859
    %v1874 = vrot.slane %v1873, 4
    %v1875 = vadd.f32 %v1873, %v1874
    %v1876 = vrot.slane %v1875, 2
    %v1877 = vadd.f32 %v1875, %v1876
    %v1878 = vrot.slane %v1877, 1
    %v1879 = vadd.f32 %v1877, %v1878
    %v1880 = vadd.f32 %v1848, %v1852
    %v1881 = vadd.f32 %v1880, %v1856
    %v1882 = vadd.f32 %v1881, %v1860
    %v1883 = vrot.slane %v1882, 4
    %v1884 = vadd.f32 %v1882, %v1883
    %v1885 = vrot.slane %v1884, 2
    %v1886 = vadd.f32 %v1884, %v1885
    %v1887 = vrot.slane %v1886, 1
    %v1888 = vadd.f32 %v1886, %v1887
    %v1889 = vadd.f32 %v1849, %v1853
    %v1890 = vadd.f32 %v1889, %v1857
    %v1891 = vadd.f32 %v1890, %v1861
    %v1892 = vrot.slane %v1891, 4
    %v1893 = vadd.f32 %v1891, %v1892
    %v1894 = vrot.slane %v1893, 2
    %v1895 = vadd.f32 %v1893, %v1894
    %v1896 = vrot.slane %v1895, 1
    %v1897 = vadd.f32 %v1895, %v1896
    %v1898 = vsel %vm276, %v1818, %v1870
    %v1899 = vsel %vm276, %v1827, %v1879
    %v1900 = vsel %vm276, %v1836, %v1888
    %v1901 = vsel %vm276, %v1845, %v1897
    %1902 = vmatprep.subr.mxu0 0.0
    %1903 = vmatpush1.msra.mxu0 %v180
    %1904 = vmatprep.subr.mxu0 0.0
    %1905 = vmatpush1.msra.mxu0 %v181
    %1906 = vmatprep.subr.mxu0 0.0
    %1907 = vmatpush1.msra.mxu0 %v182
    %1908 = vmatprep.subr.mxu0 0.0
    %1909 = vmatpush1.msra.mxu0 %v183
    %1910 = vmatprep.subr.mxu0 0.0
    %1911 = vmatpush1.msra.mxu0 %v184
    %1912 = vmatprep.subr.mxu0 0.0
    %1913 = vmatpush1.msra.mxu0 %v185
    %1914 = vmatprep.subr.mxu0 0.0
    %1915 = vmatpush1.msra.mxu0 %v186
    %1916 = vmatprep.subr.mxu0 0.0
    %1917 = vmatpush1.msra.mxu0 %v187
    %1918 = vmatprep.subr.mxu0 0.0
    %1919 = vmatpush1.msra.mxu0 %v188
    %1920 = vmatprep.subr.mxu0 0.0
    %1921 = vmatpush1.msra.mxu0 %v189
    %1922 = vmatprep.subr.mxu0 0.0
    %1923 = vmatpush1.msra.mxu0 %v190
    %1924 = vmatprep.subr.mxu0 0.0
    %1925 = vmatpush1.msra.mxu0 %v191
    %1926 = vmatprep.subr.mxu0 0.0
    %1927 = vmatpush1.msra.mxu0 %v192
    %1928 = vmatprep.subr.mxu0 0.0
    %1929 = vmatpush1.msra.mxu0 %v193
    %1930 = vmatprep.subr.mxu0 0.0
    %1931 = vmatpush1.msra.mxu0 %v194
    %1932 = vmatprep.subr.mxu0 0.0
    %1933 = vmatpush1.msra.mxu0 %v195
    %1934 = vmatprep.subr.mxu0 0.0
    %1935 = vmatpush1.msra.mxu0 %v196
    %1936 = vmatprep.subr.mxu0 0.0
    %1937 = vmatpush1.msra.mxu0 %v197
    %1938 = vmatprep.subr.mxu0 0.0
    %1939 = vmatpush1.msra.mxu0 %v198
    %1940 = vmatprep.subr.mxu0 0.0
    %1941 = vmatpush1.msra.mxu0 %v199
    %1942 = vmatprep.subr.mxu0 0.0
    %1943 = vmatpush1.msra.mxu0 %v200
    %1944 = vmatprep.subr.mxu0 0.0
    %1945 = vmatpush1.msra.mxu0 %v201
    %1946 = vmatprep.subr.mxu0 0.0
    %1947 = vmatpush1.msra.mxu0 %v202
    %1948 = vmatprep.subr.mxu0 0.0
    %1949 = vmatpush1.msra.mxu0 %v203
    %1950 = vmatprep.subr.mxu0 0.0
    %1951 = vmatpush1.msra.mxu0 %v204
    %1952 = vmatprep.subr.mxu0 0.0
    %1953 = vmatpush1.msra.mxu0 %v205
    %1954 = vmatprep.subr.mxu0 0.0
    %1955 = vmatpush1.msra.mxu0 %v206
    %1956 = vmatprep.subr.mxu0 0.0
    %1957 = vmatpush1.msra.mxu0 %v207
    %1958 = vmatprep.subr.mxu0 0.0
    %1959 = vmatpush1.msra.mxu0 %v208
    %1960 = vmatprep.subr.mxu0 0.0
    %1961 = vmatpush1.msra.mxu0 %v209
    %1962 = vmatprep.subr.mxu0 0.0
    %1963 = vmatpush1.msra.mxu0 %v210
    %1964 = vmatprep.subr.mxu0 0.0
    %1965 = vmatpush1.msra.mxu0 %v211
    %1966 = vmatprep.mubr.f32.mxu0 %v1899
    %1967 = vmatmul.mubr.f32.gmra.mrb[0].mxu0 %v1898
    %v1968 = vpop.f32.mrb[0].mxu0
    %v1969 = vadd.f32 0.0, %v1968
    %v1970 = vpop.f32.mrb[0].mxu0
    %1971 = vdwg.mxu0
    %1972 = vmatprep.subr.mxu0 0.0
    %1973 = vmatpush1.msra.mxu0 %v212
    %1974 = vmatprep.subr.mxu0 0.0
    %1975 = vmatpush1.msra.mxu0 %v213
    %1976 = vmatprep.subr.mxu0 0.0
    %1977 = vmatpush1.msra.mxu0 %v214
    %1978 = vmatprep.subr.mxu0 0.0
    %1979 = vmatpush1.msra.mxu0 %v215
    %1980 = vmatprep.subr.mxu0 0.0
    %1981 = vmatpush1.msra.mxu0 %v216
    %1982 = vmatprep.subr.mxu0 0.0
    %1983 = vmatpush1.msra.mxu0 %v217
    %1984 = vmatprep.subr.mxu0 0.0
    %1985 = vmatpush1.msra.mxu0 %v218
    %1986 = vmatprep.subr.mxu0 0.0
    %1987 = vmatpush1.msra.mxu0 %v219
    %1988 = vmatprep.subr.mxu0 0.0
    %1989 = vmatpush1.msra.mxu0 %v220
    %1990 = vmatprep.subr.mxu0 0.0
    %1991 = vmatpush1.msra.mxu0 %v221
    %1992 = vmatprep.subr.mxu0 0.0
    %1993 = vmatpush1.msra.mxu0 %v222
    %1994 = vmatprep.subr.mxu0 0.0
    %1995 = vmatpush1.msra.mxu0 %v223
    %1996 = vmatprep.subr.mxu0 0.0
    %1997 = vmatpush1.msra.mxu0 %v224
    %1998 = vmatprep.subr.mxu0 0.0
    %1999 = vmatpush1.msra.mxu0 %v225
    %2000 = vmatprep.subr.mxu0 0.0
    %2001 = vmatpush1.msra.mxu0 %v226
    %2002 = vmatprep.subr.mxu0 0.0
    %2003 = vmatpush1.msra.mxu0 %v227
    %2004 = vmatprep.subr.mxu0 0.0
    %2005 = vmatpush1.msra.mxu0 %v228
    %2006 = vmatprep.subr.mxu0 0.0
    %2007 = vmatpush1.msra.mxu0 %v229
    %2008 = vmatprep.subr.mxu0 0.0
    %2009 = vmatpush1.msra.mxu0 %v230
    %2010 = vmatprep.subr.mxu0 0.0
    %2011 = vmatpush1.msra.mxu0 %v231
    %2012 = vmatprep.subr.mxu0 0.0
    %2013 = vmatpush1.msra.mxu0 %v232
    %2014 = vmatprep.subr.mxu0 0.0
    %2015 = vmatpush1.msra.mxu0 %v233
    %2016 = vmatprep.subr.mxu0 0.0
    %2017 = vmatpush1.msra.mxu0 %v234
    %2018 = vmatprep.subr.mxu0 0.0
    %2019 = vmatpush1.msra.mxu0 %v235
    %2020 = vmatprep.subr.mxu0 0.0
    %2021 = vmatpush1.msra.mxu0 %v236
    %2022 = vmatprep.subr.mxu0 0.0
    %2023 = vmatpush1.msra.mxu0 %v237
    %2024 = vmatprep.subr.mxu0 0.0
    %2025 = vmatpush1.msra.mxu0 %v238
    %2026 = vmatprep.subr.mxu0 0.0
    %2027 = vmatpush1.msra.mxu0 %v239
    %2028 = vmatprep.subr.mxu0 0.0
    %2029 = vmatpush1.msra.mxu0 %v240
    %2030 = vmatprep.subr.mxu0 0.0
    %2031 = vmatpush1.msra.mxu0 %v241
    %2032 = vmatprep.subr.mxu0 0.0
    %2033 = vmatpush1.msra.mxu0 %v242
    %2034 = vmatprep.subr.mxu0 0.0
    %2035 = vmatpush1.msra.mxu0 %v243
    %2036 = vmatprep.mubr.f32.mxu0 %v1901
    %2037 = vmatmul.mubr.f32.gmra.mrb[0].mxu0 %v1900
    %v2038 = vpop.f32.mrb[0].mxu0
    %v2039 = vadd.f32 %v1969, %v2038
    %v2040 = vpop.f32.mrb[0].mxu0
    %2041 = vdwg.mxu0
    %v2042 = vmul.f32 %v2039, 0.001953125
    %v2043 = vmul.f32 %v2042, %v2042
    %v2045 = vrot.slane %v2043, 7
    %v2047 = vsub.f32 %v2042, %v2045
    %v2048 = vadd.f32 %v2047, 1e-05
    %v2049 = vrsqrt.pop %v2048
    %v2052 = vunpack.c.l.s4 1966171168
    %v2053 = vunpack.c.0.s8 %v2052
    %v2054 = vlaneseq
    %v2055 = vshrl.u32 %v2054, 7
    %v2056 = vsub.s32 %v2053, %v2055
    %v2057 = vrot.slane %v2049, %v2056
    %v2058 = vcombine.high %v2057, %v2057
    %v2060 = vunpack.c.l.s4 1966171168
    %v2061 = vunpack.c.0.s8 %v2060
    %v2062 = vlaneseq
    %v2063 = vshrl.u32 %v2062, 7
    %v2064 = vsub.s32 %v2061, %v2063
    %v2065 = vrot.slane %v2058, %v2064
    %v2067 = vmul.f32 %v1808, %v2065
    %v2068 = vmul.f32 %v2042, %v2067
    %v2069 = vsub.f32 %v1809, %v2068
    %v2071 = vlaneseq
    %v2072 = vshrl.u32 %v2071, 7
    %v2073 = vsub.s32 0, %v2072
    %v2074 = vrot.slane %v2069, %v2073
    %v2076 = vsel %vm276, %v2067, %v2074
    %vm2077 = vcmask 261120
    %v2079 = vsel %vm2077, %v2076, 0
    %2081 = vmatprep.subr.mxu0 %v245
    %2082 = vmatpush1.msra.mxu0 %v244
    %2083 = vmatprep.subr.mxu0 %v249
    %2084 = vmatpush1.msra.mxu0 %v248
    %2085 = vmatprep.subr.mxu0 %v253
    %2086 = vmatpush1.msra.mxu0 %v252
    %2087 = vmatprep.subr.mxu0 %v257
    %2088 = vmatpush1.msra.mxu0 %v256
    %2089 = vmatprep.subr.mxu0 0.0
    %2090 = vmatpush1.msra.mxu0 0.0
    %2091 = vmatprep.subr.mxu0 0.0
    %2092 = vmatpush1.msra.mxu0 0.0
    %2093 = vmatprep.subr.mxu0 0.0
    %2094 = vmatpush1.msra.mxu0 0.0
    %2095 = vmatprep.subr.mxu0 0.0
    %2096 = vmatpush1.msra.mxu0 0.0
    %2097 = vmatprep.subr.mxu0 0.0
    %2098 = vmatpush1.msra.mxu0 0.0
    %2099 = vmatprep.subr.mxu0 0.0
    %2100 = vmatpush1.msra.mxu0 0.0
    %2101 = vmatprep.subr.mxu0 0.0
    %2102 = vmatpush1.msra.mxu0 0.0
    %2103 = vmatprep.subr.mxu0 0.0
    %2104 = vmatpush1.msra.mxu0 0.0
    %2105 = vmatprep.subr.mxu0 0.0
    %2106 = vmatpush1.msra.mxu0 0.0
    %2107 = vmatprep.subr.mxu0 0.0
    %2108 = vmatpush1.msra.mxu0 0.0
    %2109 = vmatprep.subr.mxu0 0.0
    %2110 = vmatpush1.msra.mxu0 0.0
    %2111 = vmatprep.subr.mxu0 0.0
    %2112 = vmatpush1.msra.mxu0 0.0
    %2113 = vmatprep.subr.mxu0 0.0
    %2114 = vmatpush1.msra.mxu0 0.0
    %2115 = vmatprep.subr.mxu0 0.0
    %2116 = vmatpush1.msra.mxu0 0.0
    %2117 = vmatprep.subr.mxu0 0.0
    %2118 = vmatpush1.msra.mxu0 0.0
    %2119 = vmatprep.subr.mxu0 0.0
    %2120 = vmatpush1.msra.mxu0 0.0
    %2121 = vmatprep.subr.mxu0 0.0
    %2122 = vmatpush1.msra.mxu0 0.0
    %2123 = vmatprep.subr.mxu0 0.0
    %2124 = vmatpush1.msra.mxu0 0.0
    %2125 = vmatprep.subr.mxu0 0.0
    %2126 = vmatpush1.msra.mxu0 0.0
    %2127 = vmatprep.subr.mxu0 0.0
    %2128 = vmatpush1.msra.mxu0 0.0
    %2129 = vmatprep.subr.mxu0 0.0
    %2130 = vmatpush1.msra.mxu0 0.0
    %2131 = vmatprep.subr.mxu0 0.0
    %2132 = vmatpush1.msra.mxu0 0.0
    %2133 = vmatprep.subr.mxu0 0.0
    %2134 = vmatpush1.msra.mxu0 0.0
    %2135 = vmatprep.subr.mxu0 0.0
    %2136 = vmatpush1.msra.mxu0 0.0
    %2137 = vmatprep.subr.mxu0 0.0
    %2138 = vmatpush1.msra.mxu0 0.0
    %2139 = vmatprep.subr.mxu0 0.0
    %2140 = vmatpush1.msra.mxu0 0.0
    %2141 = vmatprep.subr.mxu0 0.0
    %2142 = vmatpush1.msra.mxu0 0.0
    %2143 = vmatprep.subr.mxu0 0.0
    %2144 = vmatpush1.msra.mxu0 0.0
    %2145 = vmatprep.mubr.f32.mxu0 0.0
    %2146 = vmatmul.mubr.f32.gmra.mrb[0].mxu0 %v2079
    %v2147 = vpop.f32.mrb[0].mxu0
    %v2148 = vadd.f32 0.0, %v2147
    %v2149 = vpop.f32.mrb[0].mxu0
    %v2150 = vadd.f32 0.0, %v2149
    %2151 = vdwg.mxu0
    %2152 = vmatprep.subr.mxu0 %v247
    %2153 = vmatpush1.msra.mxu0 %v246
    %2154 = vmatprep.subr.mxu0 %v251
    %2155 = vmatpush1.msra.mxu0 %v250
    %2156 = vmatprep.subr.mxu0 %v255
    %2157 = vmatpush1.msra.mxu0 %v254
    %2158 = vmatprep.subr.mxu0 %v259
    %2159 = vmatpush1.msra.mxu0 %v258
    %2160 = vmatprep.subr.mxu0 0.0
    %2161 = vmatpush1.msra.mxu0 0.0
    %2162 = vmatprep.subr.mxu0 0.0
    %2163 = vmatpush1.msra.mxu0 0.0
    %2164 = vmatprep.subr.mxu0 0.0
    %2165 = vmatpush1.msra.mxu0 0.0
    %2166 = vmatprep.subr.mxu0 0.0
    %2167 = vmatpush1.msra.mxu0 0.0
    %2168 = vmatprep.subr.mxu0 0.0
    %2169 = vmatpush1.msra.mxu0 0.0
    %2170 = vmatprep.subr.mxu0 0.0
    %2171 = vmatpush1.msra.mxu0 0.0
    %2172 = vmatprep.subr.mxu0 0.0
    %2173 = vmatpush1.msra.mxu0 0.0
    %2174 = vmatprep.subr.mxu0 0.0
    %2175 = vmatpush1.msra.mxu0 0.0
    %2176 = vmatprep.subr.mxu0 0.0
    %2177 = vmatpush1.msra.mxu0 0.0
    %2178 = vmatprep.subr.mxu0 0.0
    %2179 = vmatpush1.msra.mxu0 0.0
    %2180 = vmatprep.subr.mxu0 0.0
    %2181 = vmatpush1.msra.mxu0 0.0
    %2182 = vmatprep.subr.mxu0 0.0
    %2183 = vmatpush1.msra.mxu0 0.0
    %2184 = vmatprep.subr.mxu0 0.0
    %2185 = vmatpush1.msra.mxu0 0.0
    %2186 = vmatprep.subr.mxu0 0.0
    %2187 = vmatpush1.msra.mxu0 0.0
    %2188 = vmatprep.subr.mxu0 0.0
    %2189 = vmatpush1.msra.mxu0 0.0
    %2190 = vmatprep.subr.mxu0 0.0
    %2191 = vmatpush1.msra.mxu0 0.0
    %2192 = vmatprep.subr.mxu0 0.0
    %2193 = vmatpush1.msra.mxu0 0.0
    %2194 = vmatprep.subr.mxu0 0.0
    %2195 = vmatpush1.msra.mxu0 0.0
    %2196 = vmatprep.subr.mxu0 0.0
    %2197 = vmatpush1.msra.mxu0 0.0
    %2198 = vmatprep.subr.mxu0 0.0
    %2199 = vmatpush1.msra.mxu0 0.0
    %2200 = vmatprep.subr.mxu0 0.0
    %2201 = vmatpush1.msra.mxu0 0.0
    %2202 = vmatprep.subr.mxu0 0.0
    %2203 = vmatpush1.msra.mxu0 0.0
    %2204 = vmatprep.subr.mxu0 0.0
    %2205 = vmatpush1.msra.mxu0 0.0
    %2206 = vmatprep.subr.mxu0 0.0
    %2207 = vmatpush1.msra.mxu0 0.0
    %2208 = vmatprep.subr.mxu0 0.0
    %2209 = vmatpush1.msra.mxu0 0.0
    %2210 = vmatprep.subr.mxu0 0.0
    %2211 = vmatpush1.msra.mxu0 0.0
    %2212 = vmatprep.subr.mxu0 0.0
    %2213 = vmatpush1.msra.mxu0 0.0
    %2214 = vmatprep.subr.mxu0 0.0
    %2215 = vmatpush1.msra.mxu0 0.0
    %2216 = vmatprep.mubr.f32.mxu0 0.0
    %2217 = vmatmul.mubr.f32.gmra.mrb[0].mxu0 %v2079
    %v2218 = vpop.f32.mrb[0].mxu0
    %v2219 = vadd.f32 0.0, %v2218
    %v2220 = vpop.f32.mrb[0].mxu0
    %v2221 = vadd.f32 0.0, %v2220
    %2222 = vdwg.mxu0
    %v2223 = vlaneseq
    %v2224 = vshrl.u32 %v2223, 7
    %v2225 = vsub.s32 0, %v2224
    %v2226 = vrot.slane %v2148, %v2225
    %v2227 = vlaneseq
    %v2228 = vshrl.u32 %v2227, 7
    %v2229 = vsub.s32 0, %v2228
    %v2230 = vrot.slane %v2150, %v2229
    %v2231 = vlaneseq
    %v2232 = vshrl.u32 %v2231, 7
    %v2233 = vsub.s32 0, %v2232
    %v2234 = vrot.slane %v2219, %v2233
    %v2235 = vlaneseq
    %v2236 = vshrl.u32 %v2235, 7
    %v2237 = vsub.s32 0, %v2236
    %v2238 = vrot.slane %v2221, %v2237
    %v2239 = vmul.f32 %v1631, %v2226
    %v2240 = vmul.f32 %v1633, %v2230
    %v2241 = vmul.f32 %v1790, %v2234
    %v2242 = vmul.f32 %v1792, %v2238
    %v2243 = vmul.f32 %v1635, %v2226
    %v2244 = vmul.f32 %v1637, %v2230
    %v2245 = vmul.f32 %v1794, %v2234
    %v2246 = vmul.f32 %v1796, %v2238
    %v2247 = vmul.f32 %v1641, %v2226
    %v2248 = vmul.f32 %v1643, %v2230
    %v2249 = vmul.f32 %v1800, %v2234
    %v2250 = vmul.f32 %v1802, %v2238
    %v2251 = vmul.f32 %v1645, %v2226
    %v2252 = vmul.f32 %v1647, %v2230
    %v2253 = vmul.f32 %v1804, %v2234
    %v2254 = vmul.f32 %v1806, %v2238
    %v2255 = vlaneseq
    %v2256 = vshrl.u32 %v2255, 7
    %v2257 = vsub.s32 1, %v2256
    %v2258 = vrot.slane %v2148, %v2257
    %v2259 = vlaneseq
    %v2260 = vshrl.u32 %v2259, 7
    %v2261 = vsub.s32 1, %v2260
    %v2262 = vrot.slane %v2150, %v2261
    %v2263 = vlaneseq
    %v2264 = vshrl.u32 %v2263, 7
    %v2265 = vsub.s32 1, %v2264
    %v2266 = vrot.slane %v2219, %v2265
    %v2267 = vlaneseq
    %v2268 = vshrl.u32 %v2267, 7
    %v2269 = vsub.s32 1, %v2268
    %v2270 = vrot.slane %v2221, %v2269
    %v2271 = vadd.f32 %v2239, %v2258
    %v2272 = vadd.f32 %v2240, %v2262
    %v2273 = vadd.f32 %v2241, %v2266
    %v2274 = vadd.f32 %v2242, %v2270
    %v2275 = vadd.f32 %v2243, %v2258
    %v2276 = vadd.f32 %v2244, %v2262
    %v2277 = vadd.f32 %v2245, %v2266
    %v2278 = vadd.f32 %v2246, %v2270
    %v2279 = vadd.f32 %v2247, %v2258
    %v2280 = vadd.f32 %v2248, %v2262
    %v2281 = vadd.f32 %v2249, %v2266
    %v2282 = vadd.f32 %v2250, %v2270
    %v2283 = vadd.f32 %v2251, %v2258
    %v2284 = vadd.f32 %v2252, %v2262
    %v2285 = vadd.f32 %v2253, %v2266
    %v2286 = vadd.f32 %v2254, %v2270
    %v2287 = vmax.f32 %v2271, 0.0
    %v2288 = vmax.f32 %v2272, 0.0
    %v2289 = vmax.f32 %v2273, 0.0
    %v2290 = vmax.f32 %v2274, 0.0
    %v2291 = vmax.f32 %v2275, 0.0
    %v2292 = vmax.f32 %v2276, 0.0
    %v2293 = vmax.f32 %v2277, 0.0
    %v2294 = vmax.f32 %v2278, 0.0
    %v2295 = vmax.f32 %v2279, 0.0
    %v2296 = vmax.f32 %v2280, 0.0
    %v2297 = vmax.f32 %v2281, 0.0
    %v2298 = vmax.f32 %v2282, 0.0
    %v2299 = vmax.f32 %v2283, 0.0
    %v2300 = vmax.f32 %v2284, 0.0
    %v2301 = vmax.f32 %v2285, 0.0
    %v2302 = vmax.f32 %v2286, 0.0
    %v2319 = vrot.slane %v2287, 7
    %v2320 = vrot.slane %v2288, 7
    %v2321 = vrot.slane %v2289, 7
    %v2322 = vrot.slane %v2290, 7
    %v2323 = vrot.slane %v2291, 7
    %v2324 = vsel %vm276, %v2319, %v2323
    %v2325 = vrot.slane %v2292, 7
    %v2326 = vsel %vm276, %v2320, %v2325
    %v2327 = vrot.slane %v2293, 7
    %v2328 = vsel %vm276, %v2321, %v2327
    %v2329 = vrot.slane %v2294, 7
    %v2330 = vsel %vm276, %v2322, %v2329
    %v2331 = vrot.slane %v2295, 7
    %v2332 = vrot.slane %v2296, 7
    %v2333 = vrot.slane %v2297, 7
    %v2334 = vrot.slane %v2298, 7
    %v2335 = vrot.slane %v2299, 7
    %v2336 = vsel %vm276, %v2331, %v2335
    %v2337 = vrot.slane %v2300, 7
    %v2338 = vsel %vm276, %v2332, %v2337
    %v2339 = vrot.slane %v2301, 7
    %v2340 = vsel %vm276, %v2333, %v2339
    %v2341 = vrot.slane %v2302, 7
    %v2342 = vsel %vm276, %v2334, %v2341
    %v2359 = vsel %vm276, 0.0, %v2319
    %v2360 = vsel %vm276, 0.0, %v2320
    %v2361 = vsel %vm276, 0.0, %v2321
    %v2362 = vsel %vm276, 0.0, %v2322
    %v2363 = vsel %vm276, 0.0, %v2331
    %v2364 = vsel %vm276, 0.0, %v2332
    %v2365 = vsel %vm276, 0.0, %v2333
    %v2366 = vsel %vm276, 0.0, %v2334
    %v2367 = vrot.slane %v2287, 1
    %v2368 = vrot.slane %v2291, 1
    %v2369 = vsel %vm301, %v2367, %v2368
    %v2370 = vrot.slane %v2288, 1
    %v2371 = vrot.slane %v2292, 1
    %v2372 = vsel %vm301, %v2370, %v2371
    %v2373 = vrot.slane %v2289, 1
    %v2374 = vrot.slane %v2293, 1
    %v2375 = vsel %vm301, %v2373, %v2374
    %v2376 = vrot.slane %v2290, 1
    %v2377 = vrot.slane %v2294, 1
    %v2378 = vsel %vm301, %v2376, %v2377
    %v2379 = vrot.slane %v2295, 1
    %v2380 = vrot.slane %v2299, 1
    %v2381 = vsel %vm301, %v2379, %v2380
    %v2382 = vrot.slane %v2296, 1
    %v2383 = vrot.slane %v2300, 1
    %v2384 = vsel %vm301, %v2382, %v2383
    %v2385 = vrot.slane %v2297, 1
    %v2386 = vrot.slane %v2301, 1
    %v2387 = vsel %vm301, %v2385, %v2386
    %v2388 = vrot.slane %v2298, 1
    %v2389 = vrot.slane %v2302, 1
    %v2390 = vsel %vm301, %v2388, %v2389
    %v2407 = vsel %vm301, %v2368, 0.0
    %v2408 = vsel %vm301, %v2371, 0.0
    %v2409 = vsel %vm301, %v2374, 0.0
    %v2410 = vsel %vm301, %v2377, 0.0
    %v2411 = vsel %vm301, %v2380, 0.0
    %v2412 = vsel %vm301, %v2383, 0.0
    %v2413 = vsel %vm301, %v2386, 0.0
    %v2414 = vsel %vm301, %v2389, 0.0
    %v2415 = vpack.c.bf16 %v2324, %v2359
    %v2416 = vpack.c.bf16 %v2326, %v2360
    %v2417 = vpack.c.bf16 %v2328, %v2361
    %v2418 = vpack.c.bf16 %v2330, %v2362
    %v2419 = vpack.c.bf16 %v2291, %v2287
    %v2420 = vpack.c.bf16 %v2292, %v2288
    %v2421 = vpack.c.bf16 %v2293, %v2289
    %v2422 = vpack.c.bf16 %v2294, %v2290
    %v2423 = vpack.c.bf16 %v2407, %v2369
    %v2424 = vpack.c.bf16 %v2408, %v2372
    %v2425 = vpack.c.bf16 %v2409, %v2375
    %v2426 = vpack.c.bf16 %v2410, %v2378
    %v2427 = vpack.c.bf16 %v2336, %v2363
    %v2428 = vpack.c.bf16 %v2338, %v2364
    %v2429 = vpack.c.bf16 %v2340, %v2365
    %v2430 = vpack.c.bf16 %v2342, %v2366
    %v2431 = vpack.c.bf16 %v2299, %v2295
    %v2432 = vpack.c.bf16 %v2300, %v2296
    %v2433 = vpack.c.bf16 %v2301, %v2297
    %v2434 = vpack.c.bf16 %v2302, %v2298
    %v2435 = vpack.c.bf16 %v2411, %v2381
    %v2436 = vpack.c.bf16 %v2412, %v2384
    %v2437 = vpack.c.bf16 %v2413, %v2387
    %v2438 = vpack.c.bf16 %v2414, %v2390
    %v2439 = vld [vmem:[#allocation6] sm:$0xff]
    %v2440 = vld [vmem:[#allocation6 + $0x8] sm:$0xff]
    %v2441 = vld [vmem:[#allocation6 + $0x10] sm:$0xff]
    %v2442 = vld [vmem:[#allocation6 + $0x18] sm:$0xff]
    %v2443 = vld [vmem:[#allocation6 + $0x20] sm:$0xff]
    %v2444 = vld [vmem:[#allocation6 + $0x28] sm:$0xff]
    %v2445 = vld [vmem:[#allocation6 + $0x30] sm:$0xff]
    %v2446 = vld [vmem:[#allocation6 + $0x38] sm:$0xff]
    %v2447 = vld [vmem:[#allocation6 + $0x40] sm:$0xff]
    %v2448 = vld [vmem:[#allocation6 + $0x48] sm:$0xff]
    %v2449 = vld [vmem:[#allocation6 + $0x50] sm:$0xff]
    %v2450 = vld [vmem:[#allocation6 + $0x58] sm:$0xff]
    %v2451 = vld [vmem:[#allocation6 + $0x60] sm:$0xff]
    %v2452 = vld [vmem:[#allocation6 + $0x68] sm:$0xff]
    %v2453 = vld [vmem:[#allocation6 + $0x70] sm:$0xff]
    %v2454 = vld [vmem:[#allocation6 + $0x78] sm:$0xff]
    %v2455 = vld [vmem:[#allocation6 + $0x80] sm:$0xff]
    %v2456 = vld [vmem:[#allocation6 + $0x88] sm:$0xff]
    %v2457 = vld [vmem:[#allocation6 + $0x90] sm:$0xff]
    %v2458 = vld [vmem:[#allocation6 + $0x98] sm:$0xff]
    %v2459 = vld [vmem:[#allocation6 + $0xa0] sm:$0xff]
    %v2460 = vld [vmem:[#allocation6 + $0xa8] sm:$0xff]
    %v2461 = vld [vmem:[#allocation6 + $0xb0] sm:$0xff]
    %v2462 = vld [vmem:[#allocation6 + $0xb8] sm:$0xff]
    %v2463 = vld [vmem:[#allocation6 + $0xc0] sm:$0xff]
    %v2464 = vld [vmem:[#allocation6 + $0xc8] sm:$0xff]
    %v2465 = vld [vmem:[#allocation6 + $0xd0] sm:$0xff]
    %v2466 = vld [vmem:[#allocation6 + $0xd8] sm:$0xff]
    %v2467 = vld [vmem:[#allocation6 + $0xe0] sm:$0xff]
    %v2468 = vld [vmem:[#allocation6 + $0xe8] sm:$0xff]
    %v2469 = vld [vmem:[#allocation6 + $0xf0] sm:$0xff]
    %v2470 = vld [vmem:[#allocation6 + $0xf8] sm:$0xff]
    %v2471 = vld [vmem:[#allocation6 + $0x100] sm:$0xff]
    %v2472 = vld [vmem:[#allocation6 + $0x108] sm:$0xff]
    %v2473 = vld [vmem:[#allocation6 + $0x110] sm:$0xff]
    %v2474 = vld [vmem:[#allocation6 + $0x118] sm:$0xff]
    %v2475 = vld [vmem:[#allocation6 + $0x120] sm:$0xff]
    %v2476 = vld [vmem:[#allocation6 + $0x128] sm:$0xff]
    %v2477 = vld [vmem:[#allocation6 + $0x130] sm:$0xff]
    %v2478 = vld [vmem:[#allocation6 + $0x138] sm:$0xff]
    %v2479 = vld [vmem:[#allocation6 + $0x140] sm:$0xff]
    %v2480 = vld [vmem:[#allocation6 + $0x148] sm:$0xff]
    %v2481 = vld [vmem:[#allocation6 + $0x150] sm:$0xff]
    %v2482 = vld [vmem:[#allocation6 + $0x158] sm:$0xff]
    %v2483 = vld [vmem:[#allocation6 + $0x160] sm:$0xff]
    %v2484 = vld [vmem:[#allocation6 + $0x168] sm:$0xff]
    %v2485 = vld [vmem:[#allocation6 + $0x170] sm:$0xff]
    %v2486 = vld [vmem:[#allocation6 + $0x178] sm:$0xff]
    %v2487 = vld [vmem:[#allocation6 + $0x180] sm:$0xff]
    %v2488 = vld [vmem:[#allocation6 + $0x188] sm:$0xff]
    %v2489 = vld [vmem:[#allocation6 + $0x190] sm:$0xff]
    %v2490 = vld [vmem:[#allocation6 + $0x198] sm:$0xff]
    %v2491 = vld [vmem:[#allocation6 + $0x1a0] sm:$0xff]
    %v2492 = vld [vmem:[#allocation6 + $0x1a8] sm:$0xff]
    %v2493 = vld [vmem:[#allocation6 + $0x1b0] sm:$0xff]
    %v2494 = vld [vmem:[#allocation6 + $0x1b8] sm:$0xff]
    %v2495 = vld [vmem:[#allocation6 + $0x1c0] sm:$0xff]
    %v2496 = vld [vmem:[#allocation6 + $0x1c8] sm:$0xff]
    %v2497 = vld [vmem:[#allocation6 + $0x1d0] sm:$0xff]
    %v2498 = vld [vmem:[#allocation6 + $0x1d8] sm:$0xff]
    %v2499 = vld [vmem:[#allocation6 + $0x1e0] sm:$0xff]
    %v2500 = vld [vmem:[#allocation6 + $0x1e8] sm:$0xff]
    %v2501 = vld [vmem:[#allocation6 + $0x1f0] sm:$0xff]
    %v2502 = vld [vmem:[#allocation6 + $0x1f8] sm:$0xff]
    %v2503 = vld [vmem:[#allocation6 + $0x200] sm:$0xff]
    %v2504 = vld [vmem:[#allocation6 + $0x208] sm:$0xff]
    %v2505 = vld [vmem:[#allocation6 + $0x210] sm:$0xff]
    %v2506 = vld [vmem:[#allocation6 + $0x218] sm:$0xff]
    %v2507 = vld [vmem:[#allocation6 + $0x220] sm:$0xff]
    %v2508 = vld [vmem:[#allocation6 + $0x228] sm:$0xff]
    %v2509 = vld [vmem:[#allocation6 + $0x230] sm:$0xff]
    %v2510 = vld [vmem:[#allocation6 + $0x238] sm:$0xff]
    %v2511 = vld [vmem:[#allocation6 + $0x240] sm:$0xff]
    %v2512 = vld [vmem:[#allocation6 + $0x248] sm:$0xff]
    %v2513 = vld [vmem:[#allocation6 + $0x250] sm:$0xff]
    %v2514 = vld [vmem:[#allocation6 + $0x258] sm:$0xff]
    %v2515 = vld [vmem:[#allocation6 + $0x260] sm:$0xff]
    %v2516 = vld [vmem:[#allocation6 + $0x268] sm:$0xff]
    %v2517 = vld [vmem:[#allocation6 + $0x270] sm:$0xff]
    %v2518 = vld [vmem:[#allocation6 + $0x278] sm:$0xff]
    %v2519 = vld [vmem:[#allocation6 + $0x280] sm:$0xff]
    %v2520 = vld [vmem:[#allocation6 + $0x288] sm:$0xff]
    %v2521 = vld [vmem:[#allocation6 + $0x290] sm:$0xff]
    %v2522 = vld [vmem:[#allocation6 + $0x298] sm:$0xff]
    %v2523 = vld [vmem:[#allocation6 + $0x2a0] sm:$0xff]
    %v2524 = vld [vmem:[#allocation6 + $0x2a8] sm:$0xff]
    %v2525 = vld [vmem:[#allocation6 + $0x2b0] sm:$0xff]
    %v2526 = vld [vmem:[#allocation6 + $0x2b8] sm:$0xff]
    %v2527 = vld [vmem:[#allocation6 + $0x2c0] sm:$0xff]
    %v2528 = vld [vmem:[#allocation6 + $0x2c8] sm:$0xff]
    %v2529 = vld [vmem:[#allocation6 + $0x2d0] sm:$0xff]
    %v2530 = vld [vmem:[#allocation6 + $0x2d8] sm:$0xff]
    %v2531 = vld [vmem:[#allocation6 + $0x2e0] sm:$0xff]
    %v2532 = vld [vmem:[#allocation6 + $0x2e8] sm:$0xff]
    %v2533 = vld [vmem:[#allocation6 + $0x2f0] sm:$0xff]
    %v2534 = vld [vmem:[#allocation6 + $0x2f8] sm:$0xff]
    %v2535 = vld [vmem:[#allocation6 + $0x300] sm:$0xff]
    %v2536 = vld [vmem:[#allocation6 + $0x308] sm:$0xff]
    %v2537 = vld [vmem:[#allocation6 + $0x310] sm:$0xff]
    %v2538 = vld [vmem:[#allocation6 + $0x318] sm:$0xff]
    %v2539 = vld [vmem:[#allocation6 + $0x320] sm:$0xff]
    %v2540 = vld [vmem:[#allocation6 + $0x328] sm:$0xff]
    %v2541 = vld [vmem:[#allocation6 + $0x330] sm:$0xff]
    %v2542 = vld [vmem:[#allocation6 + $0x338] sm:$0xff]
    %v2543 = vld [vmem:[#allocation6 + $0x340] sm:$0xff]
    %v2544 = vld [vmem:[#allocation6 + $0x348] sm:$0xff]
    %v2545 = vld [vmem:[#allocation6 + $0x350] sm:$0xff]
    %v2546 = vld [vmem:[#allocation6 + $0x358] sm:$0xff]
    %v2547 = vld [vmem:[#allocation6 + $0x360] sm:$0xff]
    %v2548 = vld [vmem:[#allocation6 + $0x368] sm:$0xff]
    %v2549 = vld [vmem:[#allocation6 + $0x370] sm:$0xff]
    %v2550 = vld [vmem:[#allocation6 + $0x378] sm:$0xff]
    %v2551 = vld [vmem:[#allocation6 + $0x380] sm:$0xff]
    %v2552 = vld [vmem:[#allocation6 + $0x388] sm:$0xff]
    %v2553 = vld [vmem:[#allocation6 + $0x390] sm:$0xff]
    %v2554 = vld [vmem:[#allocation6 + $0x398] sm:$0xff]
    %v2555 = vld [vmem:[#allocation6 + $0x3a0] sm:$0xff]
    %v2556 = vld [vmem:[#allocation6 + $0x3a8] sm:$0xff]
    %v2557 = vld [vmem:[#allocation6 + $0x3b0] sm:$0xff]
    %v2558 = vld [vmem:[#allocation6 + $0x3b8] sm:$0xff]
    %v2559 = vld [vmem:[#allocation6 + $0x3c0] sm:$0xff]
    %v2560 = vld [vmem:[#allocation6 + $0x3c8] sm:$0xff]
    %v2561 = vld [vmem:[#allocation6 + $0x3d0] sm:$0xff]
    %v2562 = vld [vmem:[#allocation6 + $0x3d8] sm:$0xff]
    %v2563 = vld [vmem:[#allocation6 + $0x3e0] sm:$0xff]
    %v2564 = vld [vmem:[#allocation6 + $0x3e8] sm:$0xff]
    %v2565 = vld [vmem:[#allocation6 + $0x3f0] sm:$0xff]
    %v2566 = vld [vmem:[#allocation6 + $0x3f8] sm:$0xff]
    %v2567 = vld [vmem:[#allocation6 + $0x400] sm:$0xff]
    %v2568 = vld [vmem:[#allocation6 + $0x408] sm:$0xff]
    %v2569 = vld [vmem:[#allocation6 + $0x410] sm:$0xff]
    %v2570 = vld [vmem:[#allocation6 + $0x418] sm:$0xff]
    %v2571 = vld [vmem:[#allocation6 + $0x420] sm:$0xff]
    %v2572 = vld [vmem:[#allocation6 + $0x428] sm:$0xff]
    %v2573 = vld [vmem:[#allocation6 + $0x430] sm:$0xff]
    %v2574 = vld [vmem:[#allocation6 + $0x438] sm:$0xff]
    %v2575 = vld [vmem:[#allocation6 + $0x440] sm:$0xff]
    %v2576 = vld [vmem:[#allocation6 + $0x448] sm:$0xff]
    %v2577 = vld [vmem:[#allocation6 + $0x450] sm:$0xff]
    %v2578 = vld [vmem:[#allocation6 + $0x458] sm:$0xff]
    %v2579 = vld [vmem:[#allocation6 + $0x460] sm:$0xff]
    %v2580 = vld [vmem:[#allocation6 + $0x468] sm:$0xff]
    %v2581 = vld [vmem:[#allocation6 + $0x470] sm:$0xff]
    %v2582 = vld [vmem:[#allocation6 + $0x478] sm:$0xff]
    %v2583 = vld [vmem:[#allocation6 + $0x480] sm:$0xff]
    %v2584 = vld [vmem:[#allocation6 + $0x488] sm:$0xff]
    %v2585 = vld [vmem:[#allocation6 + $0x490] sm:$0xff]
    %v2586 = vld [vmem:[#allocation6 + $0x498] sm:$0xff]
    %v2587 = vld [vmem:[#allocation6 + $0x4a0] sm:$0xff]
    %v2588 = vld [vmem:[#allocation6 + $0x4a8] sm:$0xff]
    %v2589 = vld [vmem:[#allocation6 + $0x4b0] sm:$0xff]
    %v2590 = vld [vmem:[#allocation6 + $0x4b8] sm:$0xff]
    %v2591 = vld [vmem:[#allocation6 + $0x4c0] sm:$0xff]
    %v2592 = vld [vmem:[#allocation6 + $0x4c8] sm:$0xff]
    %v2593 = vld [vmem:[#allocation6 + $0x4d0] sm:$0xff]
    %v2594 = vld [vmem:[#allocation6 + $0x4d8] sm:$0xff]
    %v2595 = vld [vmem:[#allocation6 + $0x4e0] sm:$0xff]
    %v2596 = vld [vmem:[#allocation6 + $0x4e8] sm:$0xff]
    %v2597 = vld [vmem:[#allocation6 + $0x4f0] sm:$0xff]
    %v2598 = vld [vmem:[#allocation6 + $0x4f8] sm:$0xff]
    %v2599 = vld [vmem:[#allocation6 + $0x500] sm:$0xff]
    %v2600 = vld [vmem:[#allocation6 + $0x508] sm:$0xff]
    %v2601 = vld [vmem:[#allocation6 + $0x510] sm:$0xff]
    %v2602 = vld [vmem:[#allocation6 + $0x518] sm:$0xff]
    %v2603 = vld [vmem:[#allocation6 + $0x520] sm:$0xff]
    %v2604 = vld [vmem:[#allocation6 + $0x528] sm:$0xff]
    %v2605 = vld [vmem:[#allocation6 + $0x530] sm:$0xff]
    %v2606 = vld [vmem:[#allocation6 + $0x538] sm:$0xff]
    %v2607 = vld [vmem:[#allocation6 + $0x540] sm:$0xff]
    %v2608 = vld [vmem:[#allocation6 + $0x548] sm:$0xff]
    %v2609 = vld [vmem:[#allocation6 + $0x550] sm:$0xff]
    %v2610 = vld [vmem:[#allocation6 + $0x558] sm:$0xff]
    %v2611 = vld [vmem:[#allocation6 + $0x560] sm:$0xff]
    %v2612 = vld [vmem:[#allocation6 + $0x568] sm:$0xff]
    %v2613 = vld [vmem:[#allocation6 + $0x570] sm:$0xff]
    %v2614 = vld [vmem:[#allocation6 + $0x578] sm:$0xff]
    %v2615 = vld [vmem:[#allocation6 + $0x580] sm:$0xff]
    %v2616 = vld [vmem:[#allocation6 + $0x588] sm:$0xff]
    %v2617 = vld [vmem:[#allocation6 + $0x590] sm:$0xff]
    %v2618 = vld [vmem:[#allocation6 + $0x598] sm:$0xff]
    %v2619 = vld [vmem:[#allocation6 + $0x5a0] sm:$0xff]
    %v2620 = vld [vmem:[#allocation6 + $0x5a8] sm:$0xff]
    %v2621 = vld [vmem:[#allocation6 + $0x5b0] sm:$0xff]
    %v2622 = vld [vmem:[#allocation6 + $0x5b8] sm:$0xff]
    %v2623 = vld [vmem:[#allocation6 + $0x5c0] sm:$0xff]
    %v2624 = vld [vmem:[#allocation6 + $0x5c8] sm:$0xff]
    %v2625 = vld [vmem:[#allocation6 + $0x5d0] sm:$0xff]
    %v2626 = vld [vmem:[#allocation6 + $0x5d8] sm:$0xff]
    %v2627 = vld [vmem:[#allocation6 + $0x5e0] sm:$0xff]
    %v2628 = vld [vmem:[#allocation6 + $0x5e8] sm:$0xff]
    %v2629 = vld [vmem:[#allocation6 + $0x5f0] sm:$0xff]
    %v2630 = vld [vmem:[#allocation6 + $0x5f8] sm:$0xff]
    %v2631 = vld [vmem:[#allocation6 + $0x600] sm:$0xff]
    %v2632 = vld [vmem:[#allocation6 + $0x608] sm:$0xff]
    %v2633 = vld [vmem:[#allocation6 + $0x610] sm:$0xff]
    %v2634 = vld [vmem:[#allocation6 + $0x618] sm:$0xff]
    %v2635 = vld [vmem:[#allocation6 + $0x620] sm:$0xff]
    %v2636 = vld [vmem:[#allocation6 + $0x628] sm:$0xff]
    %v2637 = vld [vmem:[#allocation6 + $0x630] sm:$0xff]
    %v2638 = vld [vmem:[#allocation6 + $0x638] sm:$0xff]
    %v2639 = vld [vmem:[#allocation6 + $0x640] sm:$0xff]
    %v2640 = vld [vmem:[#allocation6 + $0x648] sm:$0xff]
    %v2641 = vld [vmem:[#allocation6 + $0x650] sm:$0xff]
    %v2642 = vld [vmem:[#allocation6 + $0x658] sm:$0xff]
    %v2643 = vld [vmem:[#allocation6 + $0x660] sm:$0xff]
    %v2644 = vld [vmem:[#allocation6 + $0x668] sm:$0xff]
    %v2645 = vld [vmem:[#allocation6 + $0x670] sm:$0xff]
    %v2646 = vld [vmem:[#allocation6 + $0x678] sm:$0xff]
    %v2647 = vld [vmem:[#allocation6 + $0x680] sm:$0xff]
    %v2648 = vld [vmem:[#allocation6 + $0x688] sm:$0xff]
    %v2649 = vld [vmem:[#allocation6 + $0x690] sm:$0xff]
    %v2650 = vld [vmem:[#allocation6 + $0x698] sm:$0xff]
    %v2651 = vld [vmem:[#allocation6 + $0x6a0] sm:$0xff]
    %v2652 = vld [vmem:[#allocation6 + $0x6a8] sm:$0xff]
    %v2653 = vld [vmem:[#allocation6 + $0x6b0] sm:$0xff]
    %v2654 = vld [vmem:[#allocation6 + $0x6b8] sm:$0xff]
    %v2655 = vld [vmem:[#allocation6 + $0x6c0] sm:$0xff]
    %v2656 = vld [vmem:[#allocation6 + $0x6c8] sm:$0xff]
    %v2657 = vld [vmem:[#allocation6 + $0x6d0] sm:$0xff]
    %v2658 = vld [vmem:[#allocation6 + $0x6d8] sm:$0xff]
    %v2659 = vld [vmem:[#allocation6 + $0x6e0] sm:$0xff]
    %v2660 = vld [vmem:[#allocation6 + $0x6e8] sm:$0xff]
    %v2661 = vld [vmem:[#allocation6 + $0x6f0] sm:$0xff]
    %v2662 = vld [vmem:[#allocation6 + $0x6f8] sm:$0xff]
    %v2663 = vld [vmem:[#allocation6 + $0x700] sm:$0xff]
    %v2664 = vld [vmem:[#allocation6 + $0x708] sm:$0xff]
    %v2665 = vld [vmem:[#allocation6 + $0x710] sm:$0xff]
    %v2666 = vld [vmem:[#allocation6 + $0x718] sm:$0xff]
    %v2667 = vld [vmem:[#allocation6 + $0x720] sm:$0xff]
    %v2668 = vld [vmem:[#allocation6 + $0x728] sm:$0xff]
    %v2669 = vld [vmem:[#allocation6 + $0x730] sm:$0xff]
    %v2670 = vld [vmem:[#allocation6 + $0x738] sm:$0xff]
    %v2671 = vld [vmem:[#allocation6 + $0x740] sm:$0xff]
    %v2672 = vld [vmem:[#allocation6 + $0x748] sm:$0xff]
    %v2673 = vld [vmem:[#allocation6 + $0x750] sm:$0xff]
    %v2674 = vld [vmem:[#allocation6 + $0x758] sm:$0xff]
    %v2675 = vld [vmem:[#allocation6 + $0x760] sm:$0xff]
    %v2676 = vld [vmem:[#allocation6 + $0x768] sm:$0xff]
    %v2677 = vld [vmem:[#allocation6 + $0x770] sm:$0xff]
    %v2678 = vld [vmem:[#allocation6 + $0x778] sm:$0xff]
    %v2679 = vld [vmem:[#allocation6 + $0x780] sm:$0xff]
    %v2680 = vld [vmem:[#allocation6 + $0x788] sm:$0xff]
    %v2681 = vld [vmem:[#allocation6 + $0x790] sm:$0xff]
    %v2682 = vld [vmem:[#allocation6 + $0x798] sm:$0xff]
    %v2683 = vld [vmem:[#allocation6 + $0x7a0] sm:$0xff]
    %v2684 = vld [vmem:[#allocation6 + $0x7a8] sm:$0xff]
    %v2685 = vld [vmem:[#allocation6 + $0x7b0] sm:$0xff]
    %v2686 = vld [vmem:[#allocation6 + $0x7b8] sm:$0xff]
    %v2687 = vld [vmem:[#allocation6 + $0x7c0] sm:$0xff]
    %v2688 = vld [vmem:[#allocation6 + $0x7c8] sm:$0xff]
    %v2689 = vld [vmem:[#allocation6 + $0x7d0] sm:$0xff]
    %v2690 = vld [vmem:[#allocation6 + $0x7d8] sm:$0xff]
    %v2691 = vld [vmem:[#allocation6 + $0x7e0] sm:$0xff]
    %v2692 = vld [vmem:[#allocation6 + $0x7e8] sm:$0xff]
    %v2693 = vld [vmem:[#allocation6 + $0x7f0] sm:$0xff]
    %v2694 = vld [vmem:[#allocation6 + $0x7f8] sm:$0xff]
    %v2695 = vld [vmem:[#allocation6 + $0x800] sm:$0xff]
    %v2696 = vld [vmem:[#allocation6 + $0x808] sm:$0xff]
    %v2697 = vld [vmem:[#allocation6 + $0x810] sm:$0xff]
    %v2698 = vld [vmem:[#allocation6 + $0x818] sm:$0xff]
    %v2699 = vld [vmem:[#allocation6 + $0x820] sm:$0xff]
    %v2700 = vld [vmem:[#allocation6 + $0x828] sm:$0xff]
    %v2701 = vld [vmem:[#allocation6 + $0x830] sm:$0xff]
    %v2702 = vld [vmem:[#allocation6 + $0x838] sm:$0xff]
    %v2703 = vld [vmem:[#allocation6 + $0x840] sm:$0xff]
    %v2704 = vld [vmem:[#allocation6 + $0x848] sm:$0xff]
    %v2705 = vld [vmem:[#allocation6 + $0x850] sm:$0xff]
    %v2706 = vld [vmem:[#allocation6 + $0x858] sm:$0xff]
    %v2707 = vld [vmem:[#allocation6 + $0x860] sm:$0xff]
    %v2708 = vld [vmem:[#allocation6 + $0x868] sm:$0xff]
    %v2709 = vld [vmem:[#allocation6 + $0x870] sm:$0xff]
    %v2710 = vld [vmem:[#allocation6 + $0x878] sm:$0xff]
    %v2711 = vld [vmem:[#allocation6 + $0x880] sm:$0xff]
    %v2712 = vld [vmem:[#allocation6 + $0x888] sm:$0xff]
    %v2713 = vld [vmem:[#allocation6 + $0x890] sm:$0xff]
    %v2714 = vld [vmem:[#allocation6 + $0x898] sm:$0xff]
    %v2715 = vld [vmem:[#allocation6 + $0x8a0] sm:$0xff]
    %v2716 = vld [vmem:[#allocation6 + $0x8a8] sm:$0xff]
    %v2717 = vld [vmem:[#allocation6 + $0x8b0] sm:$0xff]
    %v2718 = vld [vmem:[#allocation6 + $0x8b8] sm:$0xff]
    %v2719 = vld [vmem:[#allocation6 + $0x8c0] sm:$0xff]
    %v2720 = vld [vmem:[#allocation6 + $0x8c8] sm:$0xff]
    %v2721 = vld [vmem:[#allocation6 + $0x8d0] sm:$0xff]
    %v2722 = vld [vmem:[#allocation6 + $0x8d8] sm:$0xff]
    %v2723 = vld [vmem:[#allocation6 + $0x8e0] sm:$0xff]
    %v2724 = vld [vmem:[#allocation6 + $0x8e8] sm:$0xff]
    %v2725 = vld [vmem:[#allocation6 + $0x8f0] sm:$0xff]
    %v2726 = vld [vmem:[#allocation6 + $0x8f8] sm:$0xff]
    %v2727 = vld [vmem:[#allocation6 + $0x900] sm:$0xff]
    %v2728 = vld [vmem:[#allocation6 + $0x908] sm:$0xff]
    %v2729 = vld [vmem:[#allocation6 + $0x910] sm:$0xff]
    %v2730 = vld [vmem:[#allocation6 + $0x918] sm:$0xff]
    %v2731 = vld [vmem:[#allocation6 + $0x920] sm:$0xff]
    %v2732 = vld [vmem:[#allocation6 + $0x928] sm:$0xff]
    %v2733 = vld [vmem:[#allocation6 + $0x930] sm:$0xff]
    %v2734 = vld [vmem:[#allocation6 + $0x938] sm:$0xff]
    %v2735 = vld [vmem:[#allocation6 + $0x940] sm:$0xff]
    %v2736 = vld [vmem:[#allocation6 + $0x948] sm:$0xff]
    %v2737 = vld [vmem:[#allocation6 + $0x950] sm:$0xff]
    %v2738 = vld [vmem:[#allocation6 + $0x958] sm:$0xff]
    %v2739 = vld [vmem:[#allocation6 + $0x960] sm:$0xff]
    %v2740 = vld [vmem:[#allocation6 + $0x968] sm:$0xff]
    %v2741 = vld [vmem:[#allocation6 + $0x970] sm:$0xff]
    %v2742 = vld [vmem:[#allocation6 + $0x978] sm:$0xff]
    %v2743 = vld [vmem:[#allocation6 + $0x980] sm:$0xff]
    %v2744 = vld [vmem:[#allocation6 + $0x988] sm:$0xff]
    %v2745 = vld [vmem:[#allocation6 + $0x990] sm:$0xff]
    %v2746 = vld [vmem:[#allocation6 + $0x998] sm:$0xff]
    %v2747 = vld [vmem:[#allocation6 + $0x9a0] sm:$0xff]
    %v2748 = vld [vmem:[#allocation6 + $0x9a8] sm:$0xff]
    %v2749 = vld [vmem:[#allocation6 + $0x9b0] sm:$0xff]
    %v2750 = vld [vmem:[#allocation6 + $0x9b8] sm:$0xff]
    %v2751 = vld [vmem:[#allocation6 + $0x9c0] sm:$0xff]
    %v2752 = vld [vmem:[#allocation6 + $0x9c8] sm:$0xff]
    %v2753 = vld [vmem:[#allocation6 + $0x9d0] sm:$0xff]
    %v2754 = vld [vmem:[#allocation6 + $0x9d8] sm:$0xff]
    %v2755 = vld [vmem:[#allocation6 + $0x9e0] sm:$0xff]
    %v2756 = vld [vmem:[#allocation6 + $0x9e8] sm:$0xff]
    %v2757 = vld [vmem:[#allocation6 + $0x9f0] sm:$0xff]
    %v2758 = vld [vmem:[#allocation6 + $0x9f8] sm:$0xff]
    %v2759 = vld [vmem:[#allocation6 + $0xa00] sm:$0xff]
    %v2760 = vld [vmem:[#allocation6 + $0xa08] sm:$0xff]
    %v2761 = vld [vmem:[#allocation6 + $0xa10] sm:$0xff]
    %v2762 = vld [vmem:[#allocation6 + $0xa18] sm:$0xff]
    %v2763 = vld [vmem:[#allocation6 + $0xa20] sm:$0xff]
    %v2764 = vld [vmem:[#allocation6 + $0xa28] sm:$0xff]
    %v2765 = vld [vmem:[#allocation6 + $0xa30] sm:$0xff]
    %v2766 = vld [vmem:[#allocation6 + $0xa38] sm:$0xff]
    %v2767 = vld [vmem:[#allocation6 + $0xa40] sm:$0xff]
    %v2768 = vld [vmem:[#allocation6 + $0xa48] sm:$0xff]
    %v2769 = vld [vmem:[#allocation6 + $0xa50] sm:$0xff]
    %v2770 = vld [vmem:[#allocation6 + $0xa58] sm:$0xff]
    %v2771 = vld [vmem:[#allocation6 + $0xa60] sm:$0xff]
    %v2772 = vld [vmem:[#allocation6 + $0xa68] sm:$0xff]
    %v2773 = vld [vmem:[#allocation6 + $0xa70] sm:$0xff]
    %v2774 = vld [vmem:[#allocation6 + $0xa78] sm:$0xff]
    %v2775 = vld [vmem:[#allocation6 + $0xa80] sm:$0xff]
    %v2776 = vld [vmem:[#allocation6 + $0xa88] sm:$0xff]
    %v2777 = vld [vmem:[#allocation6 + $0xa90] sm:$0xff]
    %v2778 = vld [vmem:[#allocation6 + $0xa98] sm:$0xff]
    %v2779 = vld [vmem:[#allocation6 + $0xaa0] sm:$0xff]
    %v2780 = vld [vmem:[#allocation6 + $0xaa8] sm:$0xff]
    %v2781 = vld [vmem:[#allocation6 + $0xab0] sm:$0xff]
    %v2782 = vld [vmem:[#allocation6 + $0xab8] sm:$0xff]
    %v2783 = vld [vmem:[#allocation6 + $0xac0] sm:$0xff]
    %v2784 = vld [vmem:[#allocation6 + $0xac8] sm:$0xff]
    %v2785 = vld [vmem:[#allocation6 + $0xad0] sm:$0xff]
    %v2786 = vld [vmem:[#allocation6 + $0xad8] sm:$0xff]
    %v2787 = vld [vmem:[#allocation6 + $0xae0] sm:$0xff]
    %v2788 = vld [vmem:[#allocation6 + $0xae8] sm:$0xff]
    %v2789 = vld [vmem:[#allocation6 + $0xaf0] sm:$0xff]
    %v2790 = vld [vmem:[#allocation6 + $0xaf8] sm:$0xff]
    %v2791 = vld [vmem:[#allocation6 + $0xb00] sm:$0xff]
    %v2792 = vld [vmem:[#allocation6 + $0xb08] sm:$0xff]
    %v2793 = vld [vmem:[#allocation6 + $0xb10] sm:$0xff]
    %v2794 = vld [vmem:[#allocation6 + $0xb18] sm:$0xff]
    %v2795 = vld [vmem:[#allocation6 + $0xb20] sm:$0xff]
    %v2796 = vld [vmem:[#allocation6 + $0xb28] sm:$0xff]
    %v2797 = vld [vmem:[#allocation6 + $0xb30] sm:$0xff]
    %v2798 = vld [vmem:[#allocation6 + $0xb38] sm:$0xff]
    %v2799 = vld [vmem:[#allocation6 + $0xb40] sm:$0xff]
    %v2800 = vld [vmem:[#allocation6 + $0xb48] sm:$0xff]
    %v2801 = vld [vmem:[#allocation6 + $0xb50] sm:$0xff]
    %v2802 = vld [vmem:[#allocation6 + $0xb58] sm:$0xff]
    %v2803 = vld [vmem:[#allocation6 + $0xb60] sm:$0xff]
    %v2804 = vld [vmem:[#allocation6 + $0xb68] sm:$0xff]
    %v2805 = vld [vmem:[#allocation6 + $0xb70] sm:$0xff]
    %v2806 = vld [vmem:[#allocation6 + $0xb78] sm:$0xff]
    %v2807 = vld [vmem:[#allocation6 + $0xb80] sm:$0xff]
    %v2808 = vld [vmem:[#allocation6 + $0xb88] sm:$0xff]
    %v2809 = vld [vmem:[#allocation6 + $0xb90] sm:$0xff]
    %v2810 = vld [vmem:[#allocation6 + $0xb98] sm:$0xff]
    %v2811 = vld [vmem:[#allocation6 + $0xba0] sm:$0xff]
    %v2812 = vld [vmem:[#allocation6 + $0xba8] sm:$0xff]
    %v2813 = vld [vmem:[#allocation6 + $0xbb0] sm:$0xff]
    %v2814 = vld [vmem:[#allocation6 + $0xbb8] sm:$0xff]
    %v2815 = vld [vmem:[#allocation6 + $0xbc0] sm:$0xff]
    %v2816 = vld [vmem:[#allocation6 + $0xbc8] sm:$0xff]
    %v2817 = vld [vmem:[#allocation6 + $0xbd0] sm:$0xff]
    %v2818 = vld [vmem:[#allocation6 + $0xbd8] sm:$0xff]
    %v2819 = vld [vmem:[#allocation6 + $0xbe0] sm:$0xff]
    %v2820 = vld [vmem:[#allocation6 + $0xbe8] sm:$0xff]
    %v2821 = vld [vmem:[#allocation6 + $0xbf0] sm:$0xff]
    %v2822 = vld [vmem:[#allocation6 + $0xbf8] sm:$0xff]
    %v3207 = vunpack.c.l.b16 %v2439
    %v3208 = vunpack.c.h.b16 %v2439
    %v3209 = vunpack.c.l.b16 %v2440
    %v3210 = vunpack.c.h.b16 %v2440
    %v3211 = vunpack.c.l.b16 %v2441
    %v3212 = vunpack.c.h.b16 %v2441
    %v3213 = vunpack.c.l.b16 %v2442
    %v3214 = vunpack.c.h.b16 %v2442
    %v3215 = vunpack.c.l.b16 %v2443
    %v3216 = vunpack.c.h.b16 %v2443
    %v3217 = vunpack.c.l.b16 %v2444
    %v3218 = vunpack.c.h.b16 %v2444
    %v3219 = vunpack.c.l.b16 %v2445
    %v3220 = vunpack.c.h.b16 %v2445
    %v3221 = vunpack.c.l.b16 %v2446
    %v3222 = vunpack.c.h.b16 %v2446
    %v3223 = vunpack.c.l.b16 %v2447
    %v3224 = vunpack.c.h.b16 %v2447
    %v3225 = vunpack.c.l.b16 %v2448
    %v3226 = vunpack.c.h.b16 %v2448
    %v3227 = vunpack.c.l.b16 %v2449
    %v3228 = vunpack.c.h.b16 %v2449
    %v3229 = vunpack.c.l.b16 %v2450
    %v3230 = vunpack.c.h.b16 %v2450
    %v3231 = vunpack.c.l.b16 %v2451
    %v3232 = vunpack.c.h.b16 %v2451
    %v3233 = vunpack.c.l.b16 %v2452
    %v3234 = vunpack.c.h.b16 %v2452
    %v3235 = vunpack.c.l.b16 %v2453
    %v3236 = vunpack.c.h.b16 %v2453
    %v3237 = vunpack.c.l.b16 %v2454
    %v3238 = vunpack.c.h.b16 %v2454
    %v3239 = vunpack.c.l.b16 %v2455
    %v3240 = vunpack.c.h.b16 %v2455
    %v3241 = vunpack.c.l.b16 %v2456
    %v3242 = vunpack.c.h.b16 %v2456
    %v3243 = vunpack.c.l.b16 %v2457
    %v3244 = vunpack.c.h.b16 %v2457
    %v3245 = vunpack.c.l.b16 %v2458
    %v3246 = vunpack.c.h.b16 %v2458
    %v3247 = vunpack.c.l.b16 %v2459
    %v3248 = vunpack.c.h.b16 %v2459
    %v3249 = vunpack.c.l.b16 %v2460
    %v3250 = vunpack.c.h.b16 %v2460
    %v3251 = vunpack.c.l.b16 %v2461
    %v3252 = vunpack.c.h.b16 %v2461
    %v3253 = vunpack.c.l.b16 %v2462
    %v3254 = vunpack.c.h.b16 %v2462
    %v3255 = vunpack.c.l.b16 %v2463
    %v3256 = vunpack.c.h.b16 %v2463
    %v3257 = vunpack.c.l.b16 %v2464
    %v3258 = vunpack.c.h.b16 %v2464
    %v3259 = vunpack.c.l.b16 %v2465
    %v3260 = vunpack.c.h.b16 %v2465
    %v3261 = vunpack.c.l.b16 %v2466
    %v3262 = vunpack.c.h.b16 %v2466
    %v3263 = vunpack.c.l.b16 %v2467
    %v3264 = vunpack.c.h.b16 %v2467
    %v3265 = vunpack.c.l.b16 %v2468
    %v3266 = vunpack.c.h.b16 %v2468
    %v3267 = vunpack.c.l.b16 %v2469
    %v3268 = vunpack.c.h.b16 %v2469
    %v3269 = vunpack.c.l.b16 %v2470
    %v3270 = vunpack.c.h.b16 %v2470
    %v3271 = vunpack.c.l.b16 %v2471
    %v3272 = vunpack.c.h.b16 %v2471
    %v3273 = vunpack.c.l.b16 %v2472
    %v3274 = vunpack.c.h.b16 %v2472
    %v3275 = vunpack.c.l.b16 %v2473
    %v3276 = vunpack.c.h.b16 %v2473
    %v3277 = vunpack.c.l.b16 %v2474
    %v3278 = vunpack.c.h.b16 %v2474
    %v3279 = vunpack.c.l.b16 %v2475
    %v3280 = vunpack.c.h.b16 %v2475
    %v3281 = vunpack.c.l.b16 %v2476
    %v3282 = vunpack.c.h.b16 %v2476
    %v3283 = vunpack.c.l.b16 %v2477
    %v3284 = vunpack.c.h.b16 %v2477
    %v3285 = vunpack.c.l.b16 %v2478
    %v3286 = vunpack.c.h.b16 %v2478
    %v3287 = vunpack.c.l.b16 %v2479
    %v3288 = vunpack.c.h.b16 %v2479
    %v3289 = vunpack.c.l.b16 %v2480
    %v3290 = vunpack.c.h.b16 %v2480
    %v3291 = vunpack.c.l.b16 %v2481
    %v3292 = vunpack.c.h.b16 %v2481
    %v3293 = vunpack.c.l.b16 %v2482
    %v3294 = vunpack.c.h.b16 %v2482
    %v3295 = vunpack.c.l.b16 %v2483
    %v3296 = vunpack.c.h.b16 %v2483
    %v3297 = vunpack.c.l.b16 %v2484
    %v3298 = vunpack.c.h.b16 %v2484
    %v3299 = vunpack.c.l.b16 %v2485
    %v3300 = vunpack.c.h.b16 %v2485
    %v3301 = vunpack.c.l.b16 %v2486
    %v3302 = vunpack.c.h.b16 %v2486
    %v3303 = vunpack.c.l.b16 %v2487
    %v3304 = vunpack.c.h.b16 %v2487
    %v3305 = vunpack.c.l.b16 %v2488
    %v3306 = vunpack.c.h.b16 %v2488
    %v3307 = vunpack.c.l.b16 %v2489
    %v3308 = vunpack.c.h.b16 %v2489
    %v3309 = vunpack.c.l.b16 %v2490
    %v3310 = vunpack.c.h.b16 %v2490
    %v3311 = vunpack.c.l.b16 %v2491
    %v3312 = vunpack.c.h.b16 %v2491
    %v3313 = vunpack.c.l.b16 %v2492
    %v3314 = vunpack.c.h.b16 %v2492
    %v3315 = vunpack.c.l.b16 %v2493
    %v3316 = vunpack.c.h.b16 %v2493
    %v3317 = vunpack.c.l.b16 %v2494
    %v3318 = vunpack.c.h.b16 %v2494
    %v3319 = vunpack.c.l.b16 %v2495
    %v3320 = vunpack.c.h.b16 %v2495
    %v3321 = vunpack.c.l.b16 %v2496
    %v3322 = vunpack.c.h.b16 %v2496
    %v3323 = vunpack.c.l.b16 %v2497
    %v3324 = vunpack.c.h.b16 %v2497
    %v3325 = vunpack.c.l.b16 %v2498
    %v3326 = vunpack.c.h.b16 %v2498
    %v3327 = vunpack.c.l.b16 %v2499
    %v3328 = vunpack.c.h.b16 %v2499
    %v3329 = vunpack.c.l.b16 %v2500
    %v3330 = vunpack.c.h.b16 %v2500
    %v3331 = vunpack.c.l.b16 %v2501
    %v3332 = vunpack.c.h.b16 %v2501
    %v3333 = vunpack.c.l.b16 %v2502
    %v3334 = vunpack.c.h.b16 %v2502
    %v3335 = vunpack.c.l.b16 %v2503
    %v3336 = vunpack.c.h.b16 %v2503
    %v3337 = vunpack.c.l.b16 %v2504
    %v3338 = vunpack.c.h.b16 %v2504
    %v3339 = vunpack.c.l.b16 %v2505
    %v3340 = vunpack.c.h.b16 %v2505
    %v3341 = vunpack.c.l.b16 %v2506
    %v3342 = vunpack.c.h.b16 %v2506
    %v3343 = vunpack.c.l.b16 %v2507
    %v3344 = vunpack.c.h.b16 %v2507
    %v3345 = vunpack.c.l.b16 %v2508
    %v3346 = vunpack.c.h.b16 %v2508
    %v3347 = vunpack.c.l.b16 %v2509
    %v3348 = vunpack.c.h.b16 %v2509
    %v3349 = vunpack.c.l.b16 %v2510
    %v3350 = vunpack.c.h.b16 %v2510
    %v3351 = vunpack.c.l.b16 %v2511
    %v3352 = vunpack.c.h.b16 %v2511
    %v3353 = vunpack.c.l.b16 %v2512
    %v3354 = vunpack.c.h.b16 %v2512
    %v3355 = vunpack.c.l.b16 %v2513
    %v3356 = vunpack.c.h.b16 %v2513
    %v3357 = vunpack.c.l.b16 %v2514
    %v3358 = vunpack.c.h.b16 %v2514
    %v3359 = vunpack.c.l.b16 %v2515
    %v3360 = vunpack.c.h.b16 %v2515
    %v3361 = vunpack.c.l.b16 %v2516
    %v3362 = vunpack.c.h.b16 %v2516
    %v3363 = vunpack.c.l.b16 %v2517
    %v3364 = vunpack.c.h.b16 %v2517
    %v3365 = vunpack.c.l.b16 %v2518
    %v3366 = vunpack.c.h.b16 %v2518
    %v3367 = vunpack.c.l.b16 %v2519
    %v3368 = vunpack.c.h.b16 %v2519
    %v3369 = vunpack.c.l.b16 %v2520
    %v3370 = vunpack.c.h.b16 %v2520
    %v3371 = vunpack.c.l.b16 %v2521
    %v3372 = vunpack.c.h.b16 %v2521
    %v3373 = vunpack.c.l.b16 %v2522
    %v3374 = vunpack.c.h.b16 %v2522
    %v3375 = vunpack.c.l.b16 %v2523
    %v3376 = vunpack.c.h.b16 %v2523
    %v3377 = vunpack.c.l.b16 %v2524
    %v3378 = vunpack.c.h.b16 %v2524
    %v3379 = vunpack.c.l.b16 %v2525
    %v3380 = vunpack.c.h.b16 %v2525
    %v3381 = vunpack.c.l.b16 %v2526
    %v3382 = vunpack.c.h.b16 %v2526
    %v3383 = vunpack.c.l.b16 %v2527
    %v3384 = vunpack.c.h.b16 %v2527
    %v3385 = vunpack.c.l.b16 %v2528
    %v3386 = vunpack.c.h.b16 %v2528
    %v3387 = vunpack.c.l.b16 %v2529
    %v3388 = vunpack.c.h.b16 %v2529
    %v3389 = vunpack.c.l.b16 %v2530
    %v3390 = vunpack.c.h.b16 %v2530
    %v3391 = vunpack.c.l.b16 %v2531
    %v3392 = vunpack.c.h.b16 %v2531
    %v3393 = vunpack.c.l.b16 %v2532
    %v3394 = vunpack.c.h.b16 %v2532
    %v3395 = vunpack.c.l.b16 %v2533
    %v3396 = vunpack.c.h.b16 %v2533
    %v3397 = vunpack.c.l.b16 %v2534
    %v3398 = vunpack.c.h.b16 %v2534
    %v3399 = vunpack.c.l.b16 %v2535
    %v3400 = vunpack.c.h.b16 %v2535
    %v3401 = vunpack.c.l.b16 %v2536
    %v3402 = vunpack.c.h.b16 %v2536
    %v3403 = vunpack.c.l.b16 %v2537
    %v3404 = vunpack.c.h.b16 %v2537
    %v3405 = vunpack.c.l.b16 %v2538
    %v3406 = vunpack.c.h.b16 %v2538
    %v3407 = vunpack.c.l.b16 %v2539
    %v3408 = vunpack.c.h.b16 %v2539
    %v3409 = vunpack.c.l.b16 %v2540
    %v3410 = vunpack.c.h.b16 %v2540
    %v3411 = vunpack.c.l.b16 %v2541
    %v3412 = vunpack.c.h.b16 %v2541
    %v3413 = vunpack.c.l.b16 %v2542
    %v3414 = vunpack.c.h.b16 %v2542
    %v3415 = vunpack.c.l.b16 %v2543
    %v3416 = vunpack.c.h.b16 %v2543
    %v3417 = vunpack.c.l.b16 %v2544
    %v3418 = vunpack.c.h.b16 %v2544
    %v3419 = vunpack.c.l.b16 %v2545
    %v3420 = vunpack.c.h.b16 %v2545
    %v3421 = vunpack.c.l.b16 %v2546
    %v3422 = vunpack.c.h.b16 %v2546
    %v3423 = vunpack.c.l.b16 %v2547
    %v3424 = vunpack.c.h.b16 %v2547
    %v3425 = vunpack.c.l.b16 %v2548
    %v3426 = vunpack.c.h.b16 %v2548
    %v3427 = vunpack.c.l.b16 %v2549
    %v3428 = vunpack.c.h.b16 %v2549
    %v3429 = vunpack.c.l.b16 %v2550
    %v3430 = vunpack.c.h.b16 %v2550
    %v3431 = vunpack.c.l.b16 %v2551
    %v3432 = vunpack.c.h.b16 %v2551
    %v3433 = vunpack.c.l.b16 %v2552
    %v3434 = vunpack.c.h.b16 %v2552
    %v3435 = vunpack.c.l.b16 %v2553
    %v3436 = vunpack.c.h.b16 %v2553
    %v3437 = vunpack.c.l.b16 %v2554
    %v3438 = vunpack.c.h.b16 %v2554
    %v3439 = vunpack.c.l.b16 %v2555
    %v3440 = vunpack.c.h.b16 %v2555
    %v3441 = vunpack.c.l.b16 %v2556
    %v3442 = vunpack.c.h.b16 %v2556
    %v3443 = vunpack.c.l.b16 %v2557
    %v3444 = vunpack.c.h.b16 %v2557
    %v3445 = vunpack.c.l.b16 %v2558
    %v3446 = vunpack.c.h.b16 %v2558
    %v3447 = vunpack.c.l.b16 %v2559
    %v3448 = vunpack.c.h.b16 %v2559
    %v3449 = vunpack.c.l.b16 %v2560
    %v3450 = vunpack.c.h.b16 %v2560
    %v3451 = vunpack.c.l.b16 %v2561
    %v3452 = vunpack.c.h.b16 %v2561
    %v3453 = vunpack.c.l.b16 %v2562
    %v3454 = vunpack.c.h.b16 %v2562
    %v3455 = vunpack.c.l.b16 %v2563
    %v3456 = vunpack.c.h.b16 %v2563
    %v3457 = vunpack.c.l.b16 %v2564
    %v3458 = vunpack.c.h.b16 %v2564
    %v3459 = vunpack.c.l.b16 %v2565
    %v3460 = vunpack.c.h.b16 %v2565
    %v3461 = vunpack.c.l.b16 %v2566
    %v3462 = vunpack.c.h.b16 %v2566
    %v3463 = vunpack.c.l.b16 %v2567
    %v3464 = vunpack.c.h.b16 %v2567
    %v3465 = vunpack.c.l.b16 %v2568
    %v3466 = vunpack.c.h.b16 %v2568
    %v3467 = vunpack.c.l.b16 %v2569
    %v3468 = vunpack.c.h.b16 %v2569
    %v3469 = vunpack.c.l.b16 %v2570
    %v3470 = vunpack.c.h.b16 %v2570
    %v3471 = vunpack.c.l.b16 %v2571
    %v3472 = vunpack.c.h.b16 %v2571
    %v3473 = vunpack.c.l.b16 %v2572
    %v3474 = vunpack.c.h.b16 %v2572
    %v3475 = vunpack.c.l.b16 %v2573
    %v3476 = vunpack.c.h.b16 %v2573
    %v3477 = vunpack.c.l.b16 %v2574
    %v3478 = vunpack.c.h.b16 %v2574
    %v3479 = vunpack.c.l.b16 %v2575
    %v3480 = vunpack.c.h.b16 %v2575
    %v3481 = vunpack.c.l.b16 %v2576
    %v3482 = vunpack.c.h.b16 %v2576
    %v3483 = vunpack.c.l.b16 %v2577
    %v3484 = vunpack.c.h.b16 %v2577
    %v3485 = vunpack.c.l.b16 %v2578
    %v3486 = vunpack.c.h.b16 %v2578
    %v3487 = vunpack.c.l.b16 %v2579
    %v3488 = vunpack.c.h.b16 %v2579
    %v3489 = vunpack.c.l.b16 %v2580
    %v3490 = vunpack.c.h.b16 %v2580
    %v3491 = vunpack.c.l.b16 %v2581
    %v3492 = vunpack.c.h.b16 %v2581
    %v3493 = vunpack.c.l.b16 %v2582
    %v3494 = vunpack.c.h.b16 %v2582
    %v3495 = vunpack.c.l.b16 %v2583
    %v3496 = vunpack.c.h.b16 %v2583
    %v3497 = vunpack.c.l.b16 %v2584
    %v3498 = vunpack.c.h.b16 %v2584
    %v3499 = vunpack.c.l.b16 %v2585
    %v3500 = vunpack.c.h.b16 %v2585
    %v3501 = vunpack.c.l.b16 %v2586
    %v3502 = vunpack.c.h.b16 %v2586
    %v3503 = vunpack.c.l.b16 %v2587
    %v3504 = vunpack.c.h.b16 %v2587
    %v3505 = vunpack.c.l.b16 %v2588
    %v3506 = vunpack.c.h.b16 %v2588
    %v3507 = vunpack.c.l.b16 %v2589
    %v3508 = vunpack.c.h.b16 %v2589
    %v3509 = vunpack.c.l.b16 %v2590
    %v3510 = vunpack.c.h.b16 %v2590
    %v3511 = vunpack.c.l.b16 %v2591
    %v3512 = vunpack.c.h.b16 %v2591
    %v3513 = vunpack.c.l.b16 %v2592
    %v3514 = vunpack.c.h.b16 %v2592
    %v3515 = vunpack.c.l.b16 %v2593
    %v3516 = vunpack.c.h.b16 %v2593
    %v3517 = vunpack.c.l.b16 %v2594
    %v3518 = vunpack.c.h.b16 %v2594
    %v3519 = vunpack.c.l.b16 %v2595
    %v3520 = vunpack.c.h.b16 %v2595
    %v3521 = vunpack.c.l.b16 %v2596
    %v3522 = vunpack.c.h.b16 %v2596
    %v3523 = vunpack.c.l.b16 %v2597
    %v3524 = vunpack.c.h.b16 %v2597
    %v3525 = vunpack.c.l.b16 %v2598
    %v3526 = vunpack.c.h.b16 %v2598
    %v3527 = vunpack.c.l.b16 %v2599
    %v3528 = vunpack.c.h.b16 %v2599
    %v3529 = vunpack.c.l.b16 %v2600
    %v3530 = vunpack.c.h.b16 %v2600
    %v3531 = vunpack.c.l.b16 %v2601
    %v3532 = vunpack.c.h.b16 %v2601
    %v3533 = vunpack.c.l.b16 %v2602
    %v3534 = vunpack.c.h.b16 %v2602
    %v3535 = vunpack.c.l.b16 %v2603
    %v3536 = vunpack.c.h.b16 %v2603
    %v3537 = vunpack.c.l.b16 %v2604
    %v3538 = vunpack.c.h.b16 %v2604
    %v3539 = vunpack.c.l.b16 %v2605
    %v3540 = vunpack.c.h.b16 %v2605
    %v3541 = vunpack.c.l.b16 %v2606
    %v3542 = vunpack.c.h.b16 %v2606
    %v3543 = vunpack.c.l.b16 %v2607
    %v3544 = vunpack.c.h.b16 %v2607
    %v3545 = vunpack.c.l.b16 %v2608
    %v3546 = vunpack.c.h.b16 %v2608
    %v3547 = vunpack.c.l.b16 %v2609
    %v3548 = vunpack.c.h.b16 %v2609
    %v3549 = vunpack.c.l.b16 %v2610
    %v3550 = vunpack.c.h.b16 %v2610
    %v3551 = vunpack.c.l.b16 %v2611
    %v3552 = vunpack.c.h.b16 %v2611
    %v3553 = vunpack.c.l.b16 %v2612
    %v3554 = vunpack.c.h.b16 %v2612
    %v3555 = vunpack.c.l.b16 %v2613
    %v3556 = vunpack.c.h.b16 %v2613
    %v3557 = vunpack.c.l.b16 %v2614
    %v3558 = vunpack.c.h.b16 %v2614
    %v3559 = vunpack.c.l.b16 %v2615
    %v3560 = vunpack.c.h.b16 %v2615
    %v3561 = vunpack.c.l.b16 %v2616
    %v3562 = vunpack.c.h.b16 %v2616
    %v3563 = vunpack.c.l.b16 %v2617
    %v3564 = vunpack.c.h.b16 %v2617
    %v3565 = vunpack.c.l.b16 %v2618
    %v3566 = vunpack.c.h.b16 %v2618
    %v3567 = vunpack.c.l.b16 %v2619
    %v3568 = vunpack.c.h.b16 %v2619
    %v3569 = vunpack.c.l.b16 %v2620
    %v3570 = vunpack.c.h.b16 %v2620
    %v3571 = vunpack.c.l.b16 %v2621
    %v3572 = vunpack.c.h.b16 %v2621
    %v3573 = vunpack.c.l.b16 %v2622
    %v3574 = vunpack.c.h.b16 %v2622
    %v3575 = vunpack.c.l.b16 %v2623
    %v3576 = vunpack.c.h.b16 %v2623
    %v3577 = vunpack.c.l.b16 %v2624
    %v3578 = vunpack.c.h.b16 %v2624
    %v3579 = vunpack.c.l.b16 %v2625
    %v3580 = vunpack.c.h.b16 %v2625
    %v3581 = vunpack.c.l.b16 %v2626
    %v3582 = vunpack.c.h.b16 %v2626
    %v3583 = vunpack.c.l.b16 %v2627
    %v3584 = vunpack.c.h.b16 %v2627
    %v3585 = vunpack.c.l.b16 %v2628
    %v3586 = vunpack.c.h.b16 %v2628
    %v3587 = vunpack.c.l.b16 %v2629
    %v3588 = vunpack.c.h.b16 %v2629
    %v3589 = vunpack.c.l.b16 %v2630
    %v3590 = vunpack.c.h.b16 %v2630
    %v3591 = vunpack.c.l.b16 %v2631
    %v3592 = vunpack.c.h.b16 %v2631
    %v3593 = vunpack.c.l.b16 %v2632
    %v3594 = vunpack.c.h.b16 %v2632
    %v3595 = vunpack.c.l.b16 %v2633
    %v3596 = vunpack.c.h.b16 %v2633
    %v3597 = vunpack.c.l.b16 %v2634
    %v3598 = vunpack.c.h.b16 %v2634
    %v3599 = vunpack.c.l.b16 %v2635
    %v3600 = vunpack.c.h.b16 %v2635
    %v3601 = vunpack.c.l.b16 %v2636
    %v3602 = vunpack.c.h.b16 %v2636
    %v3603 = vunpack.c.l.b16 %v2637
    %v3604 = vunpack.c.h.b16 %v2637
    %v3605 = vunpack.c.l.b16 %v2638
    %v3606 = vunpack.c.h.b16 %v2638
    %v3607 = vunpack.c.l.b16 %v2639
    %v3608 = vunpack.c.h.b16 %v2639
    %v3609 = vunpack.c.l.b16 %v2640
    %v3610 = vunpack.c.h.b16 %v2640
    %v3611 = vunpack.c.l.b16 %v2641
    %v3612 = vunpack.c.h.b16 %v2641
    %v3613 = vunpack.c.l.b16 %v2642
    %v3614 = vunpack.c.h.b16 %v2642
    %v3615 = vunpack.c.l.b16 %v2643
    %v3616 = vunpack.c.h.b16 %v2643
    %v3617 = vunpack.c.l.b16 %v2644
    %v3618 = vunpack.c.h.b16 %v2644
    %v3619 = vunpack.c.l.b16 %v2645
    %v3620 = vunpack.c.h.b16 %v2645
    %v3621 = vunpack.c.l.b16 %v2646
    %v3622 = vunpack.c.h.b16 %v2646
    %v3623 = vunpack.c.l.b16 %v2647
    %v3624 = vunpack.c.h.b16 %v2647
    %v3625 = vunpack.c.l.b16 %v2648
    %v3626 = vunpack.c.h.b16 %v2648
    %v3627 = vunpack.c.l.b16 %v2649
    %v3628 = vunpack.c.h.b16 %v2649
    %v3629 = vunpack.c.l.b16 %v2650
    %v3630 = vunpack.c.h.b16 %v2650
    %v3631 = vunpack.c.l.b16 %v2651
    %v3632 = vunpack.c.h.b16 %v2651
    %v3633 = vunpack.c.l.b16 %v2652
    %v3634 = vunpack.c.h.b16 %v2652
    %v3635 = vunpack.c.l.b16 %v2653
    %v3636 = vunpack.c.h.b16 %v2653
    %v3637 = vunpack.c.l.b16 %v2654
    %v3638 = vunpack.c.h.b16 %v2654
    %v3639 = vunpack.c.l.b16 %v2655
    %v3640 = vunpack.c.h.b16 %v2655
    %v3641 = vunpack.c.l.b16 %v2656
    %v3642 = vunpack.c.h.b16 %v2656
    %v3643 = vunpack.c.l.b16 %v2657
    %v3644 = vunpack.c.h.b16 %v2657
    %v3645 = vunpack.c.l.b16 %v2658
    %v3646 = vunpack.c.h.b16 %v2658
    %v3647 = vunpack.c.l.b16 %v2659
    %v3648 = vunpack.c.h.b16 %v2659
    %v3649 = vunpack.c.l.b16 %v2660
    %v3650 = vunpack.c.h.b16 %v2660
    %v3651 = vunpack.c.l.b16 %v2661
    %v3652 = vunpack.c.h.b16 %v2661
    %v3653 = vunpack.c.l.b16 %v2662
    %v3654 = vunpack.c.h.b16 %v2662
    %v3655 = vunpack.c.l.b16 %v2663
    %v3656 = vunpack.c.h.b16 %v2663
    %v3657 = vunpack.c.l.b16 %v2664
    %v3658 = vunpack.c.h.b16 %v2664
    %v3659 = vunpack.c.l.b16 %v2665
    %v3660 = vunpack.c.h.b16 %v2665
    %v3661 = vunpack.c.l.b16 %v2666
    %v3662 = vunpack.c.h.b16 %v2666
    %v3663 = vunpack.c.l.b16 %v2667
    %v3664 = vunpack.c.h.b16 %v2667
    %v3665 = vunpack.c.l.b16 %v2668
    %v3666 = vunpack.c.h.b16 %v2668
    %v3667 = vunpack.c.l.b16 %v2669
    %v3668 = vunpack.c.h.b16 %v2669
    %v3669 = vunpack.c.l.b16 %v2670
    %v3670 = vunpack.c.h.b16 %v2670
    %v3671 = vunpack.c.l.b16 %v2671
    %v3672 = vunpack.c.h.b16 %v2671
    %v3673 = vunpack.c.l.b16 %v2672
    %v3674 = vunpack.c.h.b16 %v2672
    %v3675 = vunpack.c.l.b16 %v2673
    %v3676 = vunpack.c.h.b16 %v2673
    %v3677 = vunpack.c.l.b16 %v2674
    %v3678 = vunpack.c.h.b16 %v2674
    %v3679 = vunpack.c.l.b16 %v2675
    %v3680 = vunpack.c.h.b16 %v2675
    %v3681 = vunpack.c.l.b16 %v2676
    %v3682 = vunpack.c.h.b16 %v2676
    %v3683 = vunpack.c.l.b16 %v2677
    %v3684 = vunpack.c.h.b16 %v2677
    %v3685 = vunpack.c.l.b16 %v2678
    %v3686 = vunpack.c.h.b16 %v2678
    %v3687 = vunpack.c.l.b16 %v2679
    %v3688 = vunpack.c.h.b16 %v2679
    %v3689 = vunpack.c.l.b16 %v2680
    %v3690 = vunpack.c.h.b16 %v2680
    %v3691 = vunpack.c.l.b16 %v2681
    %v3692 = vunpack.c.h.b16 %v2681
    %v3693 = vunpack.c.l.b16 %v2682
    %v3694 = vunpack.c.h.b16 %v2682
    %v3695 = vunpack.c.l.b16 %v2683
    %v3696 = vunpack.c.h.b16 %v2683
    %v3697 = vunpack.c.l.b16 %v2684
    %v3698 = vunpack.c.h.b16 %v2684
    %v3699 = vunpack.c.l.b16 %v2685
    %v3700 = vunpack.c.h.b16 %v2685
    %v3701 = vunpack.c.l.b16 %v2686
    %v3702 = vunpack.c.h.b16 %v2686
    %v3703 = vunpack.c.l.b16 %v2687
    %v3704 = vunpack.c.h.b16 %v2687
    %v3705 = vunpack.c.l.b16 %v2688
    %v3706 = vunpack.c.h.b16 %v2688
    %v3707 = vunpack.c.l.b16 %v2689
    %v3708 = vunpack.c.h.b16 %v2689
    %v3709 = vunpack.c.l.b16 %v2690
    %v3710 = vunpack.c.h.b16 %v2690
    %v3711 = vunpack.c.l.b16 %v2691
    %v3712 = vunpack.c.h.b16 %v2691
    %v3713 = vunpack.c.l.b16 %v2692
    %v3714 = vunpack.c.h.b16 %v2692
    %v3715 = vunpack.c.l.b16 %v2693
    %v3716 = vunpack.c.h.b16 %v2693
    %v3717 = vunpack.c.l.b16 %v2694
    %v3718 = vunpack.c.h.b16 %v2694
    %v3719 = vunpack.c.l.b16 %v2695
    %v3720 = vunpack.c.h.b16 %v2695
    %v3721 = vunpack.c.l.b16 %v2696
    %v3722 = vunpack.c.h.b16 %v2696
    %v3723 = vunpack.c.l.b16 %v2697
    %v3724 = vunpack.c.h.b16 %v2697
    %v3725 = vunpack.c.l.b16 %v2698
    %v3726 = vunpack.c.h.b16 %v2698
    %v3727 = vunpack.c.l.b16 %v2699
    %v3728 = vunpack.c.h.b16 %v2699
    %v3729 = vunpack.c.l.b16 %v2700
    %v3730 = vunpack.c.h.b16 %v2700
    %v3731 = vunpack.c.l.b16 %v2701
    %v3732 = vunpack.c.h.b16 %v2701
    %v3733 = vunpack.c.l.b16 %v2702
    %v3734 = vunpack.c.h.b16 %v2702
    %v3735 = vunpack.c.l.b16 %v2703
    %v3736 = vunpack.c.h.b16 %v2703
    %v3737 = vunpack.c.l.b16 %v2704
    %v3738 = vunpack.c.h.b16 %v2704
    %v3739 = vunpack.c.l.b16 %v2705
    %v3740 = vunpack.c.h.b16 %v2705
    %v3741 = vunpack.c.l.b16 %v2706
    %v3742 = vunpack.c.h.b16 %v2706
    %v3743 = vunpack.c.l.b16 %v2707
    %v3744 = vunpack.c.h.b16 %v2707
    %v3745 = vunpack.c.l.b16 %v2708
    %v3746 = vunpack.c.h.b16 %v2708
    %v3747 = vunpack.c.l.b16 %v2709
    %v3748 = vunpack.c.h.b16 %v2709
    %v3749 = vunpack.c.l.b16 %v2710
    %v3750 = vunpack.c.h.b16 %v2710
    %v3751 = vunpack.c.l.b16 %v2711
    %v3752 = vunpack.c.h.b16 %v2711
    %v3753 = vunpack.c.l.b16 %v2712
    %v3754 = vunpack.c.h.b16 %v2712
    %v3755 = vunpack.c.l.b16 %v2713
    %v3756 = vunpack.c.h.b16 %v2713
    %v3757 = vunpack.c.l.b16 %v2714
    %v3758 = vunpack.c.h.b16 %v2714
    %v3759 = vunpack.c.l.b16 %v2715
    %v3760 = vunpack.c.h.b16 %v2715
    %v3761 = vunpack.c.l.b16 %v2716
    %v3762 = vunpack.c.h.b16 %v2716
    %v3763 = vunpack.c.l.b16 %v2717
    %v3764 = vunpack.c.h.b16 %v2717
    %v3765 = vunpack.c.l.b16 %v2718
    %v3766 = vunpack.c.h.b16 %v2718
    %v3767 = vunpack.c.l.b16 %v2719
    %v3768 = vunpack.c.h.b16 %v2719
    %v3769 = vunpack.c.l.b16 %v2720
    %v3770 = vunpack.c.h.b16 %v2720
    %v3771 = vunpack.c.l.b16 %v2721
    %v3772 = vunpack.c.h.b16 %v2721
    %v3773 = vunpack.c.l.b16 %v2722
    %v3774 = vunpack.c.h.b16 %v2722
    %v3775 = vunpack.c.l.b16 %v2723
    %v3776 = vunpack.c.h.b16 %v2723
    %v3777 = vunpack.c.l.b16 %v2724
    %v3778 = vunpack.c.h.b16 %v2724
    %v3779 = vunpack.c.l.b16 %v2725
    %v3780 = vunpack.c.h.b16 %v2725
    %v3781 = vunpack.c.l.b16 %v2726
    %v3782 = vunpack.c.h.b16 %v2726
    %v3783 = vunpack.c.l.b16 %v2727
    %v3784 = vunpack.c.h.b16 %v2727
    %v3785 = vunpack.c.l.b16 %v2728
    %v3786 = vunpack.c.h.b16 %v2728
    %v3787 = vunpack.c.l.b16 %v2729
    %v3788 = vunpack.c.h.b16 %v2729
    %v3789 = vunpack.c.l.b16 %v2730
    %v3790 = vunpack.c.h.b16 %v2730
    %v3791 = vunpack.c.l.b16 %v2731
    %v3792 = vunpack.c.h.b16 %v2731
    %v3793 = vunpack.c.l.b16 %v2732
    %v3794 = vunpack.c.h.b16 %v2732
    %v3795 = vunpack.c.l.b16 %v2733
    %v3796 = vunpack.c.h.b16 %v2733
    %v3797 = vunpack.c.l.b16 %v2734
    %v3798 = vunpack.c.h.b16 %v2734
    %v3799 = vunpack.c.l.b16 %v2735
    %v3800 = vunpack.c.h.b16 %v2735
    %v3801 = vunpack.c.l.b16 %v2736
    %v3802 = vunpack.c.h.b16 %v2736
    %v3803 = vunpack.c.l.b16 %v2737
    %v3804 = vunpack.c.h.b16 %v2737
    %v3805 = vunpack.c.l.b16 %v2738
    %v3806 = vunpack.c.h.b16 %v2738
    %v3807 = vunpack.c.l.b16 %v2739
    %v3808 = vunpack.c.h.b16 %v2739
    %v3809 = vunpack.c.l.b16 %v2740
    %v3810 = vunpack.c.h.b16 %v2740
    %v3811 = vunpack.c.l.b16 %v2741
    %v3812 = vunpack.c.h.b16 %v2741
    %v3813 = vunpack.c.l.b16 %v2742
    %v3814 = vunpack.c.h.b16 %v2742
    %v3815 = vunpack.c.l.b16 %v2743
    %v3816 = vunpack.c.h.b16 %v2743
    %v3817 = vunpack.c.l.b16 %v2744
    %v3818 = vunpack.c.h.b16 %v2744
    %v3819 = vunpack.c.l.b16 %v2745
    %v3820 = vunpack.c.h.b16 %v2745
    %v3821 = vunpack.c.l.b16 %v2746
    %v3822 = vunpack.c.h.b16 %v2746
    %v3823 = vunpack.c.l.b16 %v2747
    %v3824 = vunpack.c.h.b16 %v2747
    %v3825 = vunpack.c.l.b16 %v2748
    %v3826 = vunpack.c.h.b16 %v2748
    %v3827 = vunpack.c.l.b16 %v2749
    %v3828 = vunpack.c.h.b16 %v2749
    %v3829 = vunpack.c.l.b16 %v2750
    %v3830 = vunpack.c.h.b16 %v2750
    %v3831 = vunpack.c.l.b16 %v2751
    %v3832 = vunpack.c.h.b16 %v2751
    %v3833 = vunpack.c.l.b16 %v2752
    %v3834 = vunpack.c.h.b16 %v2752
    %v3835 = vunpack.c.l.b16 %v2753
    %v3836 = vunpack.c.h.b16 %v2753
    %v3837 = vunpack.c.l.b16 %v2754
    %v3838 = vunpack.c.h.b16 %v2754
    %v3839 = vunpack.c.l.b16 %v2755
    %v3840 = vunpack.c.h.b16 %v2755
    %v3841 = vunpack.c.l.b16 %v2756
    %v3842 = vunpack.c.h.b16 %v2756
    %v3843 = vunpack.c.l.b16 %v2757
    %v3844 = vunpack.c.h.b16 %v2757
    %v3845 = vunpack.c.l.b16 %v2758
    %v3846 = vunpack.c.h.b16 %v2758
    %v3847 = vunpack.c.l.b16 %v2759
    %v3848 = vunpack.c.h.b16 %v2759
    %v3849 = vunpack.c.l.b16 %v2760
    %v3850 = vunpack.c.h.b16 %v2760
    %v3851 = vunpack.c.l.b16 %v2761
    %v3852 = vunpack.c.h.b16 %v2761
    %v3853 = vunpack.c.l.b16 %v2762
    %v3854 = vunpack.c.h.b16 %v2762
    %v3855 = vunpack.c.l.b16 %v2763
    %v3856 = vunpack.c.h.b16 %v2763
    %v3857 = vunpack.c.l.b16 %v2764
    %v3858 = vunpack.c.h.b16 %v2764
    %v3859 = vunpack.c.l.b16 %v2765
    %v3860 = vunpack.c.h.b16 %v2765
    %v3861 = vunpack.c.l.b16 %v2766
    %v3862 = vunpack.c.h.b16 %v2766
    %v3863 = vunpack.c.l.b16 %v2767
    %v3864 = vunpack.c.h.b16 %v2767
    %v3865 = vunpack.c.l.b16 %v2768
    %v3866 = vunpack.c.h.b16 %v2768
    %v3867 = vunpack.c.l.b16 %v2769
    %v3868 = vunpack.c.h.b16 %v2769
    %v3869 = vunpack.c.l.b16 %v2770
    %v3870 = vunpack.c.h.b16 %v2770
    %v3871 = vunpack.c.l.b16 %v2771
    %v3872 = vunpack.c.h.b16 %v2771
    %v3873 = vunpack.c.l.b16 %v2772
    %v3874 = vunpack.c.h.b16 %v2772
    %v3875 = vunpack.c.l.b16 %v2773
    %v3876 = vunpack.c.h.b16 %v2773
    %v3877 = vunpack.c.l.b16 %v2774
    %v3878 = vunpack.c.h.b16 %v2774
    %v3879 = vunpack.c.l.b16 %v2775
    %v3880 = vunpack.c.h.b16 %v2775
    %v3881 = vunpack.c.l.b16 %v2776
    %v3882 = vunpack.c.h.b16 %v2776
    %v3883 = vunpack.c.l.b16 %v2777
    %v3884 = vunpack.c.h.b16 %v2777
    %v3885 = vunpack.c.l.b16 %v2778
    %v3886 = vunpack.c.h.b16 %v2778
    %v3887 = vunpack.c.l.b16 %v2779
    %v3888 = vunpack.c.h.b16 %v2779
    %v3889 = vunpack.c.l.b16 %v2780
    %v3890 = vunpack.c.h.b16 %v2780
    %v3891 = vunpack.c.l.b16 %v2781
    %v3892 = vunpack.c.h.b16 %v2781
    %v3893 = vunpack.c.l.b16 %v2782
    %v3894 = vunpack.c.h.b16 %v2782
    %v3895 = vunpack.c.l.b16 %v2783
    %v3896 = vunpack.c.h.b16 %v2783
    %v3897 = vunpack.c.l.b16 %v2784
    %v3898 = vunpack.c.h.b16 %v2784
    %v3899 = vunpack.c.l.b16 %v2785
    %v3900 = vunpack.c.h.b16 %v2785
    %v3901 = vunpack.c.l.b16 %v2786
    %v3902 = vunpack.c.h.b16 %v2786
    %v3903 = vunpack.c.l.b16 %v2787
    %v3904 = vunpack.c.h.b16 %v2787
    %v3905 = vunpack.c.l.b16 %v2788
    %v3906 = vunpack.c.h.b16 %v2788
    %v3907 = vunpack.c.l.b16 %v2789
    %v3908 = vunpack.c.h.b16 %v2789
    %v3909 = vunpack.c.l.b16 %v2790
    %v3910 = vunpack.c.h.b16 %v2790
    %v3911 = vunpack.c.l.b16 %v2791
    %v3912 = vunpack.c.h.b16 %v2791
    %v3913 = vunpack.c.l.b16 %v2792
    %v3914 = vunpack.c.h.b16 %v2792
    %v3915 = vunpack.c.l.b16 %v2793
    %v3916 = vunpack.c.h.b16 %v2793
    %v3917 = vunpack.c.l.b16 %v2794
    %v3918 = vunpack.c.h.b16 %v2794
    %v3919 = vunpack.c.l.b16 %v2795
    %v3920 = vunpack.c.h.b16 %v2795
    %v3921 = vunpack.c.l.b16 %v2796
    %v3922 = vunpack.c.h.b16 %v2796
    %v3923 = vunpack.c.l.b16 %v2797
    %v3924 = vunpack.c.h.b16 %v2797
    %v3925 = vunpack.c.l.b16 %v2798
    %v3926 = vunpack.c.h.b16 %v2798
    %v3927 = vunpack.c.l.b16 %v2799
    %v3928 = vunpack.c.h.b16 %v2799
    %v3929 = vunpack.c.l.b16 %v2800
    %v3930 = vunpack.c.h.b16 %v2800
    %v3931 = vunpack.c.l.b16 %v2801
    %v3932 = vunpack.c.h.b16 %v2801
    %v3933 = vunpack.c.l.b16 %v2802
    %v3934 = vunpack.c.h.b16 %v2802
    %v3935 = vunpack.c.l.b16 %v2803
    %v3936 = vunpack.c.h.b16 %v2803
    %v3937 = vunpack.c.l.b16 %v2804
    %v3938 = vunpack.c.h.b16 %v2804
    %v3939 = vunpack.c.l.b16 %v2805
    %v3940 = vunpack.c.h.b16 %v2805
    %v3941 = vunpack.c.l.b16 %v2806
    %v3942 = vunpack.c.h.b16 %v2806
    %v3943 = vunpack.c.l.b16 %v2807
    %v3944 = vunpack.c.h.b16 %v2807
    %v3945 = vunpack.c.l.b16 %v2808
    %v3946 = vunpack.c.h.b16 %v2808
    %v3947 = vunpack.c.l.b16 %v2809
    %v3948 = vunpack.c.h.b16 %v2809
    %v3949 = vunpack.c.l.b16 %v2810
    %v3950 = vunpack.c.h.b16 %v2810
    %v3951 = vunpack.c.l.b16 %v2811
    %v3952 = vunpack.c.h.b16 %v2811
    %v3953 = vunpack.c.l.b16 %v2812
    %v3954 = vunpack.c.h.b16 %v2812
    %v3955 = vunpack.c.l.b16 %v2813
    %v3956 = vunpack.c.h.b16 %v2813
    %v3957 = vunpack.c.l.b16 %v2814
    %v3958 = vunpack.c.h.b16 %v2814
    %v3959 = vunpack.c.l.b16 %v2815
    %v3960 = vunpack.c.h.b16 %v2815
    %v3961 = vunpack.c.l.b16 %v2816
    %v3962 = vunpack.c.h.b16 %v2816
    %v3963 = vunpack.c.l.b16 %v2817
    %v3964 = vunpack.c.h.b16 %v2817
    %v3965 = vunpack.c.l.b16 %v2818
    %v3966 = vunpack.c.h.b16 %v2818
    %v3967 = vunpack.c.l.b16 %v2819
    %v3968 = vunpack.c.h.b16 %v2819
    %v3969 = vunpack.c.l.b16 %v2820
    %v3970 = vunpack.c.h.b16 %v2820
    %v3971 = vunpack.c.l.b16 %v2821
    %v3972 = vunpack.c.h.b16 %v2821
    %v3973 = vunpack.c.l.b16 %v2822
    %v3974 = vunpack.c.h.b16 %v2822
    %v3975 = vpack.c.b16 %v3211, %v3207
    %v3976 = vpack.c.b16 %v3212, %v3208
    %v3977 = vpack.c.b16 %v3213, %v3209
    %v3978 = vpack.c.b16 %v3214, %v3210
    %v3979 = vpack.c.b16 %v3219, %v3215
    %v3980 = vpack.c.b16 %v3220, %v3216
    %v3981 = vpack.c.b16 %v3221, %v3217
    %v3982 = vpack.c.b16 %v3222, %v3218
    %v3983 = vpack.c.b16 %v3227, %v3223
    %v3984 = vpack.c.b16 %v3228, %v3224
    %v3985 = vpack.c.b16 %v3229, %v3225
    %v3986 = vpack.c.b16 %v3230, %v3226
    %v3987 = vpack.c.b16 %v3235, %v3231
    %v3988 = vpack.c.b16 %v3236, %v3232
    %v3989 = vpack.c.b16 %v3237, %v3233
    %v3990 = vpack.c.b16 %v3238, %v3234
    %v3991 = vpack.c.b16 %v3243, %v3239
    %v3992 = vpack.c.b16 %v3244, %v3240
    %v3993 = vpack.c.b16 %v3245, %v3241
    %v3994 = vpack.c.b16 %v3246, %v3242
    %v3995 = vpack.c.b16 %v3251, %v3247
    %v3996 = vpack.c.b16 %v3252, %v3248
    %v3997 = vpack.c.b16 %v3253, %v3249
    %v3998 = vpack.c.b16 %v3254, %v3250
    %v3999 = vpack.c.b16 %v3259, %v3255
    %v4000 = vpack.c.b16 %v3260, %v3256
    %v4001 = vpack.c.b16 %v3261, %v3257
    %v4002 = vpack.c.b16 %v3262, %v3258
    %v4003 = vpack.c.b16 %v3267, %v3263
    %v4004 = vpack.c.b16 %v3268, %v3264
    %v4005 = vpack.c.b16 %v3269, %v3265
    %v4006 = vpack.c.b16 %v3270, %v3266
    %v4007 = vpack.c.b16 %v3275, %v3271
    %v4008 = vpack.c.b16 %v3276, %v3272
    %v4009 = vpack.c.b16 %v3277, %v3273
    %v4010 = vpack.c.b16 %v3278, %v3274
    %v4011 = vpack.c.b16 %v3283, %v3279
    %v4012 = vpack.c.b16 %v3284, %v3280
    %v4013 = vpack.c.b16 %v3285, %v3281
    %v4014 = vpack.c.b16 %v3286, %v3282
    %v4015 = vpack.c.b16 %v3291, %v3287
    %v4016 = vpack.c.b16 %v3292, %v3288
    %v4017 = vpack.c.b16 %v3293, %v3289
    %v4018 = vpack.c.b16 %v3294, %v3290
    %v4019 = vpack.c.b16 %v3299, %v3295
    %v4020 = vpack.c.b16 %v3300, %v3296
    %v4021 = vpack.c.b16 %v3301, %v3297
    %v4022 = vpack.c.b16 %v3302, %v3298
    %v4023 = vpack.c.b16 %v3307, %v3303
    %v4024 = vpack.c.b16 %v3308, %v3304
    %v4025 = vpack.c.b16 %v3309, %v3305
    %v4026 = vpack.c.b16 %v3310, %v3306
    %v4027 = vpack.c.b16 %v3315, %v3311
    %v4028 = vpack.c.b16 %v3316, %v3312
    %v4029 = vpack.c.b16 %v3317, %v3313
    %v4030 = vpack.c.b16 %v3318, %v3314
    %v4031 = vpack.c.b16 %v3323, %v3319
    %v4032 = vpack.c.b16 %v3324, %v3320
    %v4033 = vpack.c.b16 %v3325, %v3321
    %v4034 = vpack.c.b16 %v3326, %v3322
    %v4035 = vpack.c.b16 %v3331, %v3327
    %v4036 = vpack.c.b16 %v3332, %v3328
    %v4037 = vpack.c.b16 %v3333, %v3329
    %v4038 = vpack.c.b16 %v3334, %v3330
    %v4039 = vpack.c.b16 %v3339, %v3335
    %v4040 = vpack.c.b16 %v3340, %v3336
    %v4041 = vpack.c.b16 %v3341, %v3337
    %v4042 = vpack.c.b16 %v3342, %v3338
    %v4043 = vpack.c.b16 %v3347, %v3343
    %v4044 = vpack.c.b16 %v3348, %v3344
    %v4045 = vpack.c.b16 %v3349, %v3345
    %v4046 = vpack.c.b16 %v3350, %v3346
    %v4047 = vpack.c.b16 %v3355, %v3351
    %v4048 = vpack.c.b16 %v3356, %v3352
    %v4049 = vpack.c.b16 %v3357, %v3353
    %v4050 = vpack.c.b16 %v3358, %v3354
    %v4051 = vpack.c.b16 %v3363, %v3359
    %v4052 = vpack.c.b16 %v3364, %v3360
    %v4053 = vpack.c.b16 %v3365, %v3361
    %v4054 = vpack.c.b16 %v3366, %v3362
    %v4055 = vpack.c.b16 %v3371, %v3367
    %v4056 = vpack.c.b16 %v3372, %v3368
    %v4057 = vpack.c.b16 %v3373, %v3369
    %v4058 = vpack.c.b16 %v3374, %v3370
    %v4059 = vpack.c.b16 %v3379, %v3375
    %v4060 = vpack.c.b16 %v3380, %v3376
    %v4061 = vpack.c.b16 %v3381, %v3377
    %v4062 = vpack.c.b16 %v3382, %v3378
    %v4063 = vpack.c.b16 %v3387, %v3383
    %v4064 = vpack.c.b16 %v3388, %v3384
    %v4065 = vpack.c.b16 %v3389, %v3385
    %v4066 = vpack.c.b16 %v3390, %v3386
    %v4067 = vpack.c.b16 %v3395, %v3391
    %v4068 = vpack.c.b16 %v3396, %v3392
    %v4069 = vpack.c.b16 %v3397, %v3393
    %v4070 = vpack.c.b16 %v3398, %v3394
    %v4071 = vpack.c.b16 %v3403, %v3399
    %v4072 = vpack.c.b16 %v3404, %v3400
    %v4073 = vpack.c.b16 %v3405, %v3401
    %v4074 = vpack.c.b16 %v3406, %v3402
    %v4075 = vpack.c.b16 %v3411, %v3407
    %v4076 = vpack.c.b16 %v3412, %v3408
    %v4077 = vpack.c.b16 %v3413, %v3409
    %v4078 = vpack.c.b16 %v3414, %v3410
    %v4079 = vpack.c.b16 %v3419, %v3415
    %v4080 = vpack.c.b16 %v3420, %v3416
    %v4081 = vpack.c.b16 %v3421, %v3417
    %v4082 = vpack.c.b16 %v3422, %v3418
    %v4083 = vpack.c.b16 %v3427, %v3423
    %v4084 = vpack.c.b16 %v3428, %v3424
    %v4085 = vpack.c.b16 %v3429, %v3425
    %v4086 = vpack.c.b16 %v3430, %v3426
    %v4087 = vpack.c.b16 %v3435, %v3431
    %v4088 = vpack.c.b16 %v3436, %v3432
    %v4089 = vpack.c.b16 %v3437, %v3433
    %v4090 = vpack.c.b16 %v3438, %v3434
    %v4091 = vpack.c.b16 %v3443, %v3439
    %v4092 = vpack.c.b16 %v3444, %v3440
    %v4093 = vpack.c.b16 %v3445, %v3441
    %v4094 = vpack.c.b16 %v3446, %v3442
    %v4095 = vpack.c.b16 %v3451, %v3447
    %v4096 = vpack.c.b16 %v3452, %v3448
    %v4097 = vpack.c.b16 %v3453, %v3449
    %v4098 = vpack.c.b16 %v3454, %v3450
    %v4099 = vpack.c.b16 %v3459, %v3455
    %v4100 = vpack.c.b16 %v3460, %v3456
    %v4101 = vpack.c.b16 %v3461, %v3457
    %v4102 = vpack.c.b16 %v3462, %v3458
    %v4103 = vpack.c.b16 %v3467, %v3463
    %v4104 = vpack.c.b16 %v3468, %v3464
    %v4105 = vpack.c.b16 %v3469, %v3465
    %v4106 = vpack.c.b16 %v3470, %v3466
    %v4107 = vpack.c.b16 %v3475, %v3471
    %v4108 = vpack.c.b16 %v3476, %v3472
    %v4109 = vpack.c.b16 %v3477, %v3473
    %v4110 = vpack.c.b16 %v3478, %v3474
    %v4111 = vpack.c.b16 %v3483, %v3479
    %v4112 = vpack.c.b16 %v3484, %v3480
    %v4113 = vpack.c.b16 %v3485, %v3481
    %v4114 = vpack.c.b16 %v3486, %v3482
    %v4115 = vpack.c.b16 %v3491, %v3487
    %v4116 = vpack.c.b16 %v3492, %v3488
    %v4117 = vpack.c.b16 %v3493, %v3489
    %v4118 = vpack.c.b16 %v3494, %v3490
    %v4119 = vpack.c.b16 %v3499, %v3495
    %v4120 = vpack.c.b16 %v3500, %v3496
    %v4121 = vpack.c.b16 %v3501, %v3497
    %v4122 = vpack.c.b16 %v3502, %v3498
    %v4123 = vpack.c.b16 %v3507, %v3503
    %v4124 = vpack.c.b16 %v3508, %v3504
    %v4125 = vpack.c.b16 %v3509, %v3505
    %v4126 = vpack.c.b16 %v3510, %v3506
    %v4127 = vpack.c.b16 %v3515, %v3511
    %v4128 = vpack.c.b16 %v3516, %v3512
    %v4129 = vpack.c.b16 %v3517, %v3513
    %v4130 = vpack.c.b16 %v3518, %v3514
    %v4131 = vpack.c.b16 %v3523, %v3519
    %v4132 = vpack.c.b16 %v3524, %v3520
    %v4133 = vpack.c.b16 %v3525, %v3521
    %v4134 = vpack.c.b16 %v3526, %v3522
    %v4135 = vpack.c.b16 %v3531, %v3527
    %v4136 = vpack.c.b16 %v3532, %v3528
    %v4137 = vpack.c.b16 %v3533, %v3529
    %v4138 = vpack.c.b16 %v3534, %v3530
    %v4139 = vpack.c.b16 %v3539, %v3535
    %v4140 = vpack.c.b16 %v3540, %v3536
    %v4141 = vpack.c.b16 %v3541, %v3537
    %v4142 = vpack.c.b16 %v3542, %v3538
    %v4143 = vpack.c.b16 %v3547, %v3543
    %v4144 = vpack.c.b16 %v3548, %v3544
    %v4145 = vpack.c.b16 %v3549, %v3545
    %v4146 = vpack.c.b16 %v3550, %v3546
    %v4147 = vpack.c.b16 %v3555, %v3551
    %v4148 = vpack.c.b16 %v3556, %v3552
    %v4149 = vpack.c.b16 %v3557, %v3553
    %v4150 = vpack.c.b16 %v3558, %v3554
    %v4151 = vpack.c.b16 %v3563, %v3559
    %v4152 = vpack.c.b16 %v3564, %v3560
    %v4153 = vpack.c.b16 %v3565, %v3561
    %v4154 = vpack.c.b16 %v3566, %v3562
    %v4155 = vpack.c.b16 %v3571, %v3567
    %v4156 = vpack.c.b16 %v3572, %v3568
    %v4157 = vpack.c.b16 %v3573, %v3569
    %v4158 = vpack.c.b16 %v3574, %v3570
    %v4159 = vpack.c.b16 %v3579, %v3575
    %v4160 = vpack.c.b16 %v3580, %v3576
    %v4161 = vpack.c.b16 %v3581, %v3577
    %v4162 = vpack.c.b16 %v3582, %v3578
    %v4163 = vpack.c.b16 %v3587, %v3583
    %v4164 = vpack.c.b16 %v3588, %v3584
    %v4165 = vpack.c.b16 %v3589, %v3585
    %v4166 = vpack.c.b16 %v3590, %v3586
    %v4167 = vpack.c.b16 %v3595, %v3591
    %v4168 = vpack.c.b16 %v3596, %v3592
    %v4169 = vpack.c.b16 %v3597, %v3593
    %v4170 = vpack.c.b16 %v3598, %v3594
    %v4171 = vpack.c.b16 %v3603, %v3599
    %v4172 = vpack.c.b16 %v3604, %v3600
    %v4173 = vpack.c.b16 %v3605, %v3601
    %v4174 = vpack.c.b16 %v3606, %v3602
    %v4175 = vpack.c.b16 %v3611, %v3607
    %v4176 = vpack.c.b16 %v3612, %v3608
    %v4177 = vpack.c.b16 %v3613, %v3609
    %v4178 = vpack.c.b16 %v3614, %v3610
    %v4179 = vpack.c.b16 %v3619, %v3615
    %v4180 = vpack.c.b16 %v3620, %v3616
    %v4181 = vpack.c.b16 %v3621, %v3617
    %v4182 = vpack.c.b16 %v3622, %v3618
    %v4183 = vpack.c.b16 %v3627, %v3623
    %v4184 = vpack.c.b16 %v3628, %v3624
    %v4185 = vpack.c.b16 %v3629, %v3625
    %v4186 = vpack.c.b16 %v3630, %v3626
    %v4187 = vpack.c.b16 %v3635, %v3631
    %v4188 = vpack.c.b16 %v3636, %v3632
    %v4189 = vpack.c.b16 %v3637, %v3633
    %v4190 = vpack.c.b16 %v3638, %v3634
    %v4191 = vpack.c.b16 %v3643, %v3639
    %v4192 = vpack.c.b16 %v3644, %v3640
    %v4193 = vpack.c.b16 %v3645, %v3641
    %v4194 = vpack.c.b16 %v3646, %v3642
    %v4195 = vpack.c.b16 %v3651, %v3647
    %v4196 = vpack.c.b16 %v3652, %v3648
    %v4197 = vpack.c.b16 %v3653, %v3649
    %v4198 = vpack.c.b16 %v3654, %v3650
    %v4199 = vpack.c.b16 %v3659, %v3655
    %v4200 = vpack.c.b16 %v3660, %v3656
    %v4201 = vpack.c.b16 %v3661, %v3657
    %v4202 = vpack.c.b16 %v3662, %v3658
    %v4203 = vpack.c.b16 %v3667, %v3663
    %v4204 = vpack.c.b16 %v3668, %v3664
    %v4205 = vpack.c.b16 %v3669, %v3665
    %v4206 = vpack.c.b16 %v3670, %v3666
    %v4207 = vpack.c.b16 %v3675, %v3671
    %v4208 = vpack.c.b16 %v3676, %v3672
    %v4209 = vpack.c.b16 %v3677, %v3673
    %v4210 = vpack.c.b16 %v3678, %v3674
    %v4211 = vpack.c.b16 %v3683, %v3679
    %v4212 = vpack.c.b16 %v3684, %v3680
    %v4213 = vpack.c.b16 %v3685, %v3681
    %v4214 = vpack.c.b16 %v3686, %v3682
    %v4215 = vpack.c.b16 %v3691, %v3687
    %v4216 = vpack.c.b16 %v3692, %v3688
    %v4217 = vpack.c.b16 %v3693, %v3689
    %v4218 = vpack.c.b16 %v3694, %v3690
    %v4219 = vpack.c.b16 %v3699, %v3695
    %v4220 = vpack.c.b16 %v3700, %v3696
    %v4221 = vpack.c.b16 %v3701, %v3697
    %v4222 = vpack.c.b16 %v3702, %v3698
    %v4223 = vpack.c.b16 %v3707, %v3703
    %v4224 = vpack.c.b16 %v3708, %v3704
    %v4225 = vpack.c.b16 %v3709, %v3705
    %v4226 = vpack.c.b16 %v3710, %v3706
    %v4227 = vpack.c.b16 %v3715, %v3711
    %v4228 = vpack.c.b16 %v3716, %v3712
    %v4229 = vpack.c.b16 %v3717, %v3713
    %v4230 = vpack.c.b16 %v3718, %v3714
    %v4231 = vpack.c.b16 %v3723, %v3719
    %v4232 = vpack.c.b16 %v3724, %v3720
    %v4233 = vpack.c.b16 %v3725, %v3721
    %v4234 = vpack.c.b16 %v3726, %v3722
    %v4235 = vpack.c.b16 %v3731, %v3727
    %v4236 = vpack.c.b16 %v3732, %v3728
    %v4237 = vpack.c.b16 %v3733, %v3729
    %v4238 = vpack.c.b16 %v3734, %v3730
    %v4239 = vpack.c.b16 %v3739, %v3735
    %v4240 = vpack.c.b16 %v3740, %v3736
    %v4241 = vpack.c.b16 %v3741, %v3737
    %v4242 = vpack.c.b16 %v3742, %v3738
    %v4243 = vpack.c.b16 %v3747, %v3743
    %v4244 = vpack.c.b16 %v3748, %v3744
    %v4245 = vpack.c.b16 %v3749, %v3745
    %v4246 = vpack.c.b16 %v3750, %v3746
    %v4247 = vpack.c.b16 %v3755, %v3751
    %v4248 = vpack.c.b16 %v3756, %v3752
    %v4249 = vpack.c.b16 %v3757, %v3753
    %v4250 = vpack.c.b16 %v3758, %v3754
    %v4251 = vpack.c.b16 %v3763, %v3759
    %v4252 = vpack.c.b16 %v3764, %v3760
    %v4253 = vpack.c.b16 %v3765, %v3761
    %v4254 = vpack.c.b16 %v3766, %v3762
    %v4255 = vpack.c.b16 %v3771, %v3767
    %v4256 = vpack.c.b16 %v3772, %v3768
    %v4257 = vpack.c.b16 %v3773, %v3769
    %v4258 = vpack.c.b16 %v3774, %v3770
    %v4259 = vpack.c.b16 %v3779, %v3775
    %v4260 = vpack.c.b16 %v3780, %v3776
    %v4261 = vpack.c.b16 %v3781, %v3777
    %v4262 = vpack.c.b16 %v3782, %v3778
    %v4263 = vpack.c.b16 %v3787, %v3783
    %v4264 = vpack.c.b16 %v3788, %v3784
    %v4265 = vpack.c.b16 %v3789, %v3785
    %v4266 = vpack.c.b16 %v3790, %v3786
    %v4267 = vpack.c.b16 %v3795, %v3791
    %v4268 = vpack.c.b16 %v3796, %v3792
    %v4269 = vpack.c.b16 %v3797, %v3793
    %v4270 = vpack.c.b16 %v3798, %v3794
    %v4271 = vpack.c.b16 %v3803, %v3799
    %v4272 = vpack.c.b16 %v3804, %v3800
    %v4273 = vpack.c.b16 %v3805, %v3801
    %v4274 = vpack.c.b16 %v3806, %v3802
    %v4275 = vpack.c.b16 %v3811, %v3807
    %v4276 = vpack.c.b16 %v3812, %v3808
    %v4277 = vpack.c.b16 %v3813, %v3809
    %v4278 = vpack.c.b16 %v3814, %v3810
    %v4279 = vpack.c.b16 %v3819, %v3815
    %v4280 = vpack.c.b16 %v3820, %v3816
    %v4281 = vpack.c.b16 %v3821, %v3817
    %v4282 = vpack.c.b16 %v3822, %v3818
    %v4283 = vpack.c.b16 %v3827, %v3823
    %v4284 = vpack.c.b16 %v3828, %v3824
    %v4285 = vpack.c.b16 %v3829, %v3825
    %v4286 = vpack.c.b16 %v3830, %v3826
    %v4287 = vpack.c.b16 %v3835, %v3831
    %v4288 = vpack.c.b16 %v3836, %v3832
    %v4289 = vpack.c.b16 %v3837, %v3833
    %v4290 = vpack.c.b16 %v3838, %v3834
    %v4291 = vpack.c.b16 %v3843, %v3839
    %v4292 = vpack.c.b16 %v3844, %v3840
    %v4293 = vpack.c.b16 %v3845, %v3841
    %v4294 = vpack.c.b16 %v3846, %v3842
    %v4295 = vpack.c.b16 %v3851, %v3847
    %v4296 = vpack.c.b16 %v3852, %v3848
    %v4297 = vpack.c.b16 %v3853, %v3849
    %v4298 = vpack.c.b16 %v3854, %v3850
    %v4299 = vpack.c.b16 %v3859, %v3855
    %v4300 = vpack.c.b16 %v3860, %v3856
    %v4301 = vpack.c.b16 %v3861, %v3857
    %v4302 = vpack.c.b16 %v3862, %v3858
    %v4303 = vpack.c.b16 %v3867, %v3863
    %v4304 = vpack.c.b16 %v3868, %v3864
    %v4305 = vpack.c.b16 %v3869, %v3865
    %v4306 = vpack.c.b16 %v3870, %v3866
    %v4307 = vpack.c.b16 %v3875, %v3871
    %v4308 = vpack.c.b16 %v3876, %v3872
    %v4309 = vpack.c.b16 %v3877, %v3873
    %v4310 = vpack.c.b16 %v3878, %v3874
    %v4311 = vpack.c.b16 %v3883, %v3879
    %v4312 = vpack.c.b16 %v3884, %v3880
    %v4313 = vpack.c.b16 %v3885, %v3881
    %v4314 = vpack.c.b16 %v3886, %v3882
    %v4315 = vpack.c.b16 %v3891, %v3887
    %v4316 = vpack.c.b16 %v3892, %v3888
    %v4317 = vpack.c.b16 %v3893, %v3889
    %v4318 = vpack.c.b16 %v3894, %v3890
    %v4319 = vpack.c.b16 %v3899, %v3895
    %v4320 = vpack.c.b16 %v3900, %v3896
    %v4321 = vpack.c.b16 %v3901, %v3897
    %v4322 = vpack.c.b16 %v3902, %v3898
    %v4323 = vpack.c.b16 %v3907, %v3903
    %v4324 = vpack.c.b16 %v3908, %v3904
    %v4325 = vpack.c.b16 %v3909, %v3905
    %v4326 = vpack.c.b16 %v3910, %v3906
    %v4327 = vpack.c.b16 %v3915, %v3911
    %v4328 = vpack.c.b16 %v3916, %v3912
    %v4329 = vpack.c.b16 %v3917, %v3913
    %v4330 = vpack.c.b16 %v3918, %v3914
    %v4331 = vpack.c.b16 %v3923, %v3919
    %v4332 = vpack.c.b16 %v3924, %v3920
    %v4333 = vpack.c.b16 %v3925, %v3921
    %v4334 = vpack.c.b16 %v3926, %v3922
    %v4335 = vpack.c.b16 %v3931, %v3927
    %v4336 = vpack.c.b16 %v3932, %v3928
    %v4337 = vpack.c.b16 %v3933, %v3929
    %v4338 = vpack.c.b16 %v3934, %v3930
    %v4339 = vpack.c.b16 %v3939, %v3935
    %v4340 = vpack.c.b16 %v3940, %v3936
    %v4341 = vpack.c.b16 %v3941, %v3937
    %v4342 = vpack.c.b16 %v3942, %v3938
    %v4343 = vpack.c.b16 %v3947, %v3943
    %v4344 = vpack.c.b16 %v3948, %v3944
    %v4345 = vpack.c.b16 %v3949, %v3945
    %v4346 = vpack.c.b16 %v3950, %v3946
    %v4347 = vpack.c.b16 %v3955, %v3951
    %v4348 = vpack.c.b16 %v3956, %v3952
    %v4349 = vpack.c.b16 %v3957, %v3953
    %v4350 = vpack.c.b16 %v3958, %v3954
    %v4351 = vpack.c.b16 %v3963, %v3959
    %v4352 = vpack.c.b16 %v3964, %v3960
    %v4353 = vpack.c.b16 %v3965, %v3961
    %v4354 = vpack.c.b16 %v3966, %v3962
    %v4355 = vpack.c.b16 %v3971, %v3967
    %v4356 = vpack.c.b16 %v3972, %v3968
    %v4357 = vpack.c.b16 %v3973, %v3969
    %v4358 = vpack.c.b16 %v3974, %v3970
    %4743 = vmatprep.subr.bf16.mxu0 %v3976
    %4744 = vmatpush1.bf16.msra.mxu0 %v3975
    %4745 = vmatprep.subr.bf16.mxu0 %v3980
    %4746 = vmatpush1.bf16.msra.mxu0 %v3979
    %4747 = vmatprep.subr.bf16.mxu0 %v3984
    %4748 = vmatpush1.bf16.msra.mxu0 %v3983
    %4749 = vmatprep.subr.bf16.mxu0 %v3988
    %4750 = vmatpush1.bf16.msra.mxu0 %v3987
    %4751 = vmatprep.subr.bf16.mxu0 %v3992
    %4752 = vmatpush1.bf16.msra.mxu0 %v3991
    %4753 = vmatprep.subr.bf16.mxu0 %v3996
    %4754 = vmatpush1.bf16.msra.mxu0 %v3995
    %4755 = vmatprep.subr.bf16.mxu0 %v4000
    %4756 = vmatpush1.bf16.msra.mxu0 %v3999
    %4757 = vmatprep.subr.bf16.mxu0 %v4004
    %4758 = vmatpush1.bf16.msra.mxu0 %v4003
    %4759 = vmatprep.subr.bf16.mxu0 %v4008
    %4760 = vmatpush1.bf16.msra.mxu0 %v4007
    %4761 = vmatprep.subr.bf16.mxu0 %v4012
    %4762 = vmatpush1.bf16.msra.mxu0 %v4011
    %4763 = vmatprep.subr.bf16.mxu0 %v4016
    %4764 = vmatpush1.bf16.msra.mxu0 %v4015
    %4765 = vmatprep.subr.bf16.mxu0 %v4020
    %4766 = vmatpush1.bf16.msra.mxu0 %v4019
    %4767 = vmatprep.subr.bf16.mxu0 %v4024
    %4768 = vmatpush1.bf16.msra.mxu0 %v4023
    %4769 = vmatprep.subr.bf16.mxu0 %v4028
    %4770 = vmatpush1.bf16.msra.mxu0 %v4027
    %4771 = vmatprep.subr.bf16.mxu0 %v4032
    %4772 = vmatpush1.bf16.msra.mxu0 %v4031
    %4773 = vmatprep.subr.bf16.mxu0 %v4036
    %4774 = vmatpush1.bf16.msra.mxu0 %v4035
    %4775 = vmatprep.mubr.bf16.mxu0 %v2416
    %4776 = vmatmul.mubr.bf16.gmra.mrb[0].mxu0 %v2415
    %v4777 = vpop.f32.mrb[0].mxu0
    %v4778 = vadd.f32 0.0, %v4777
    %v4779 = vpop.f32.mrb[0].mxu0
    %v4780 = vadd.f32 0.0, %v4779
    %v4781 = vpop.f32.mrb[0].mxu0
    %v4782 = vadd.f32 0.0, %v4781
    %v4783 = vpop.f32.mrb[0].mxu0
    %v4784 = vadd.f32 0.0, %v4783
    %4785 = vmatprep.mubr.bf16.mxu0 %v2428
    %4786 = vmatmul.mubr.bf16.gmra.mrb[0].mxu0 %v2427
    %v4787 = vpop.f32.mrb[0].mxu0
    %v4788 = vadd.f32 0.0, %v4787
    %v4789 = vpop.f32.mrb[0].mxu0
    %v4790 = vadd.f32 0.0, %v4789
    %v4791 = vpop.f32.mrb[0].mxu0
    %v4792 = vadd.f32 0.0, %v4791
    %v4793 = vpop.f32.mrb[0].mxu0
    %v4794 = vadd.f32 0.0, %v4793
    %4795 = vdwg.mxu0
    %4796 = vmatprep.subr.bf16.mxu0 %v4040
    %4797 = vmatpush1.bf16.msra.mxu0 %v4039
    %4798 = vmatprep.subr.bf16.mxu0 %v4044
    %4799 = vmatpush1.bf16.msra.mxu0 %v4043
    %4800 = vmatprep.subr.bf16.mxu0 %v4048
    %4801 = vmatpush1.bf16.msra.mxu0 %v4047
    %4802 = vmatprep.subr.bf16.mxu0 %v4052
    %4803 = vmatpush1.bf16.msra.mxu0 %v4051
    %4804 = vmatprep.subr.bf16.mxu0 %v4056
    %4805 = vmatpush1.bf16.msra.mxu0 %v4055
    %4806 = vmatprep.subr.bf16.mxu0 %v4060
    %4807 = vmatpush1.bf16.msra.mxu0 %v4059
    %4808 = vmatprep.subr.bf16.mxu0 %v4064
    %4809 = vmatpush1.bf16.msra.mxu0 %v4063
    %4810 = vmatprep.subr.bf16.mxu0 %v4068
    %4811 = vmatpush1.bf16.msra.mxu0 %v4067
    %4812 = vmatprep.subr.bf16.mxu0 %v4072
    %4813 = vmatpush1.bf16.msra.mxu0 %v4071
    %4814 = vmatprep.subr.bf16.mxu0 %v4076
    %4815 = vmatpush1.bf16.msra.mxu0 %v4075
    %4816 = vmatprep.subr.bf16.mxu0 %v4080
    %4817 = vmatpush1.bf16.msra.mxu0 %v4079
    %4818 = vmatprep.subr.bf16.mxu0 %v4084
    %4819 = vmatpush1.bf16.msra.mxu0 %v4083
    %4820 = vmatprep.subr.bf16.mxu0 %v4088
    %4821 = vmatpush1.bf16.msra.mxu0 %v4087
    %4822 = vmatprep.subr.bf16.mxu0 %v4092
    %4823 = vmatpush1.bf16.msra.mxu0 %v4091
    %4824 = vmatprep.subr.bf16.mxu0 %v4096
    %4825 = vmatpush1.bf16.msra.mxu0 %v4095
    %4826 = vmatprep.subr.bf16.mxu0 %v4100
    %4827 = vmatpush1.bf16.msra.mxu0 %v4099
    %4828 = vmatprep.mubr.bf16.mxu0 %v2418
    %4829 = vmatmul.mubr.bf16.gmra.mrb[0].mxu0 %v2417
    %v4830 = vpop.f32.mrb[0].mxu0
    %v4831 = vadd.f32 %v4778, %v4830
    %v4832 = vpop.f32.mrb[0].mxu0
    %v4833 = vadd.f32 %v4780, %v4832
    %v4834 = vpop.f32.mrb[0].mxu0
    %v4835 = vadd.f32 %v4782, %v4834
    %v4836 = vpop.f32.mrb[0].mxu0
    %v4837 = vadd.f32 %v4784, %v4836
    %4838 = vmatprep.mubr.bf16.mxu0 %v2430
    %4839 = vmatmul.mubr.bf16.gmra.mrb[0].mxu0 %v2429
    %v4840 = vpop.f32.mrb[0].mxu0
    %v4841 = vadd.f32 %v4788, %v4840
    %v4842 = vpop.f32.mrb[0].mxu0
    %v4843 = vadd.f32 %v4790, %v4842
    %v4844 = vpop.f32.mrb[0].mxu0
    %v4845 = vadd.f32 %v4792, %v4844
    %v4846 = vpop.f32.mrb[0].mxu0
    %v4847 = vadd.f32 %v4794, %v4846
    %4848 = vdwg.mxu0
    %4849 = vmatprep.subr.bf16.mxu0 %v4104
    %4850 = vmatpush1.bf16.msra.mxu0 %v4103
    %4851 = vmatprep.subr.bf16.mxu0 %v4108
    %4852 = vmatpush1.bf16.msra.mxu0 %v4107
    %4853 = vmatprep.subr.bf16.mxu0 %v4112
    %4854 = vmatpush1.bf16.msra.mxu0 %v4111
    %4855 = vmatprep.subr.bf16.mxu0 %v4116
    %4856 = vmatpush1.bf16.msra.mxu0 %v4115
    %4857 = vmatprep.subr.bf16.mxu0 %v4120
    %4858 = vmatpush1.bf16.msra.mxu0 %v4119
    %4859 = vmatprep.subr.bf16.mxu0 %v4124
    %4860 = vmatpush1.bf16.msra.mxu0 %v4123
    %4861 = vmatprep.subr.bf16.mxu0 %v4128
    %4862 = vmatpush1.bf16.msra.mxu0 %v4127
    %4863 = vmatprep.subr.bf16.mxu0 %v4132
    %4864 = vmatpush1.bf16.msra.mxu0 %v4131
    %4865 = vmatprep.subr.bf16.mxu0 %v4136
    %4866 = vmatpush1.bf16.msra.mxu0 %v4135
    %4867 = vmatprep.subr.bf16.mxu0 %v4140
    %4868 = vmatpush1.bf16.msra.mxu0 %v4139
    %4869 = vmatprep.subr.bf16.mxu0 %v4144
    %4870 = vmatpush1.bf16.msra.mxu0 %v4143
    %4871 = vmatprep.subr.bf16.mxu0 %v4148
    %4872 = vmatpush1.bf16.msra.mxu0 %v4147
    %4873 = vmatprep.subr.bf16.mxu0 %v4152
    %4874 = vmatpush1.bf16.msra.mxu0 %v4151
    %4875 = vmatprep.subr.bf16.mxu0 %v4156
    %4876 = vmatpush1.bf16.msra.mxu0 %v4155
    %4877 = vmatprep.subr.bf16.mxu0 %v4160
    %4878 = vmatpush1.bf16.msra.mxu0 %v4159
    %4879 = vmatprep.subr.bf16.mxu0 %v4164
    %4880 = vmatpush1.bf16.msra.mxu0 %v4163
    %4881 = vmatprep.mubr.bf16.mxu0 %v2420
    %4882 = vmatmul.mubr.bf16.gmra.mrb[0].mxu0 %v2419
    %v4883 = vpop.f32.mrb[0].mxu0
    %v4884 = vadd.f32 %v4831, %v4883
    %v4885 = vpop.f32.mrb[0].mxu0
    %v4886 = vadd.f32 %v4833, %v4885
    %v4887 = vpop.f32.mrb[0].mxu0
    %v4888 = vadd.f32 %v4835, %v4887
    %v4889 = vpop.f32.mrb[0].mxu0
    %v4890 = vadd.f32 %v4837, %v4889
    %4891 = vmatprep.mubr.bf16.mxu0 %v2432
    %4892 = vmatmul.mubr.bf16.gmra.mrb[0].mxu0 %v2431
    %v4893 = vpop.f32.mrb[0].mxu0
    %v4894 = vadd.f32 %v4841, %v4893
    %v4895 = vpop.f32.mrb[0].mxu0
    %v4896 = vadd.f32 %v4843, %v4895
    %v4897 = vpop.f32.mrb[0].mxu0
    %v4898 = vadd.f32 %v4845, %v4897
    %v4899 = vpop.f32.mrb[0].mxu0
    %v4900 = vadd.f32 %v4847, %v4899
    %4901 = vdwg.mxu0
    %4902 = vmatprep.subr.bf16.mxu0 %v4168
    %4903 = vmatpush1.bf16.msra.mxu0 %v4167
    %4904 = vmatprep.subr.bf16.mxu0 %v4172
    %4905 = vmatpush1.bf16.msra.mxu0 %v4171
    %4906 = vmatprep.subr.bf16.mxu0 %v4176
    %4907 = vmatpush1.bf16.msra.mxu0 %v4175
    %4908 = vmatprep.subr.bf16.mxu0 %v4180
    %4909 = vmatpush1.bf16.msra.mxu0 %v4179
    %4910 = vmatprep.subr.bf16.mxu0 %v4184
    %4911 = vmatpush1.bf16.msra.mxu0 %v4183
    %4912 = vmatprep.subr.bf16.mxu0 %v4188
    %4913 = vmatpush1.bf16.msra.mxu0 %v4187
    %4914 = vmatprep.subr.bf16.mxu0 %v4192
    %4915 = vmatpush1.bf16.msra.mxu0 %v4191
    %4916 = vmatprep.subr.bf16.mxu0 %v4196
    %4917 = vmatpush1.bf16.msra.mxu0 %v4195
    %4918 = vmatprep.subr.bf16.mxu0 %v4200
    %4919 = vmatpush1.bf16.msra.mxu0 %v4199
    %4920 = vmatprep.subr.bf16.mxu0 %v4204
    %4921 = vmatpush1.bf16.msra.mxu0 %v4203
    %4922 = vmatprep.subr.bf16.mxu0 %v4208
    %4923 = vmatpush1.bf16.msra.mxu0 %v4207
    %4924 = vmatprep.subr.bf16.mxu0 %v4212
    %4925 = vmatpush1.bf16.msra.mxu0 %v4211
    %4926 = vmatprep.subr.bf16.mxu0 %v4216
    %4927 = vmatpush1.bf16.msra.mxu0 %v4215
    %4928 = vmatprep.subr.bf16.mxu0 %v4220
    %4929 = vmatpush1.bf16.msra.mxu0 %v4219
    %4930 = vmatprep.subr.bf16.mxu0 %v4224
    %4931 = vmatpush1.bf16.msra.mxu0 %v4223
    %4932 = vmatprep.subr.bf16.mxu0 %v4228
    %4933 = vmatpush1.bf16.msra.mxu0 %v4227
    %4934 = vmatprep.mubr.bf16.mxu0 %v2422
    %4935 = vmatmul.mubr.bf16.gmra.mrb[0].mxu0 %v2421
    %v4936 = vpop.f32.mrb[0].mxu0
    %v4937 = vadd.f32 %v4884, %v4936
    %v4938 = vpop.f32.mrb[0].mxu0
    %v4939 = vadd.f32 %v4886, %v4938
    %v4940 = vpop.f32.mrb[0].mxu0
    %v4941 = vadd.f32 %v4888, %v4940
    %v4942 = vpop.f32.mrb[0].mxu0
    %v4943 = vadd.f32 %v4890, %v4942
    %4944 = vmatprep.mubr.bf16.mxu0 %v2434
    %4945 = vmatmul.mubr.bf16.gmra.mrb[0].mxu0 %v2433
    %v4946 = vpop.f32.mrb[0].mxu0
    %v4947 = vadd.f32 %v4894, %v4946
    %v4948 = vpop.f32.mrb[0].mxu0
    %v4949 = vadd.f32 %v4896, %v4948
    %v4950 = vpop.f32.mrb[0].mxu0
    %v4951 = vadd.f32 %v4898, %v4950
    %v4952 = vpop.f32.mrb[0].mxu0
    %v4953 = vadd.f32 %v4900, %v4952
    %4954 = vdwg.mxu0
    %4955 = vmatprep.subr.bf16.mxu0 %v4232
    %4956 = vmatpush1.bf16.msra.mxu0 %v4231
    %4957 = vmatprep.subr.bf16.mxu0 %v4236
    %4958 = vmatpush1.bf16.msra.mxu0 %v4235
    %4959 = vmatprep.subr.bf16.mxu0 %v4240
    %4960 = vmatpush1.bf16.msra.mxu0 %v4239
    %4961 = vmatprep.subr.bf16.mxu0 %v4244
    %4962 = vmatpush1.bf16.msra.mxu0 %v4243
    %4963 = vmatprep.subr.bf16.mxu0 %v4248
    %4964 = vmatpush1.bf16.msra.mxu0 %v4247
    %4965 = vmatprep.subr.bf16.mxu0 %v4252
    %4966 = vmatpush1.bf16.msra.mxu0 %v4251
    %4967 = vmatprep.subr.bf16.mxu0 %v4256
    %4968 = vmatpush1.bf16.msra.mxu0 %v4255
    %4969 = vmatprep.subr.bf16.mxu0 %v4260
    %4970 = vmatpush1.bf16.msra.mxu0 %v4259
    %4971 = vmatprep.subr.bf16.mxu0 %v4264
    %4972 = vmatpush1.bf16.msra.mxu0 %v4263
    %4973 = vmatprep.subr.bf16.mxu0 %v4268
    %4974 = vmatpush1.bf16.msra.mxu0 %v4267
    %4975 = vmatprep.subr.bf16.mxu0 %v4272
    %4976 = vmatpush1.bf16.msra.mxu0 %v4271
    %4977 = vmatprep.subr.bf16.mxu0 %v4276
    %4978 = vmatpush1.bf16.msra.mxu0 %v4275
    %4979 = vmatprep.subr.bf16.mxu0 %v4280
    %4980 = vmatpush1.bf16.msra.mxu0 %v4279
    %4981 = vmatprep.subr.bf16.mxu0 %v4284
    %4982 = vmatpush1.bf16.msra.mxu0 %v4283
    %4983 = vmatprep.subr.bf16.mxu0 %v4288
    %4984 = vmatpush1.bf16.msra.mxu0 %v4287
    %4985 = vmatprep.subr.bf16.mxu0 %v4292
    %4986 = vmatpush1.bf16.msra.mxu0 %v4291
    %4987 = vmatprep.mubr.bf16.mxu0 %v2424
    %4988 = vmatmul.mubr.bf16.gmra.mrb[0].mxu0 %v2423
    %v4989 = vpop.f32.mrb[0].mxu0
    %v4990 = vadd.f32 %v4937, %v4989
    %v4991 = vpop.f32.mrb[0].mxu0
    %v4992 = vadd.f32 %v4939, %v4991
    %v4993 = vpop.f32.mrb[0].mxu0
    %v4994 = vadd.f32 %v4941, %v4993
    %v4995 = vpop.f32.mrb[0].mxu0
    %v4996 = vadd.f32 %v4943, %v4995
    %4997 = vmatprep.mubr.bf16.mxu0 %v2436
    %4998 = vmatmul.mubr.bf16.gmra.mrb[0].mxu0 %v2435
    %v4999 = vpop.f32.mrb[0].mxu0
    %v5000 = vadd.f32 %v4947, %v4999
    %v5001 = vpop.f32.mrb[0].mxu0
    %v5002 = vadd.f32 %v4949, %v5001
    %v5003 = vpop.f32.mrb[0].mxu0
    %v5004 = vadd.f32 %v4951, %v5003
    %v5005 = vpop.f32.mrb[0].mxu0
    %v5006 = vadd.f32 %v4953, %v5005
    %5007 = vdwg.mxu0
    %5008 = vmatprep.subr.bf16.mxu0 %v4296
    %5009 = vmatpush1.bf16.msra.mxu0 %v4295
    %5010 = vmatprep.subr.bf16.mxu0 %v4300
    %5011 = vmatpush1.bf16.msra.mxu0 %v4299
    %5012 = vmatprep.subr.bf16.mxu0 %v4304
    %5013 = vmatpush1.bf16.msra.mxu0 %v4303
    %5014 = vmatprep.subr.bf16.mxu0 %v4308
    %5015 = vmatpush1.bf16.msra.mxu0 %v4307
    %5016 = vmatprep.subr.bf16.mxu0 %v4312
    %5017 = vmatpush1.bf16.msra.mxu0 %v4311
    %5018 = vmatprep.subr.bf16.mxu0 %v4316
    %5019 = vmatpush1.bf16.msra.mxu0 %v4315
    %5020 = vmatprep.subr.bf16.mxu0 %v4320
    %5021 = vmatpush1.bf16.msra.mxu0 %v4319
    %5022 = vmatprep.subr.bf16.mxu0 %v4324
    %5023 = vmatpush1.bf16.msra.mxu0 %v4323
    %5024 = vmatprep.subr.bf16.mxu0 %v4328
    %5025 = vmatpush1.bf16.msra.mxu0 %v4327
    %5026 = vmatprep.subr.bf16.mxu0 %v4332
    %5027 = vmatpush1.bf16.msra.mxu0 %v4331
    %5028 = vmatprep.subr.bf16.mxu0 %v4336
    %5029 = vmatpush1.bf16.msra.mxu0 %v4335
    %5030 = vmatprep.subr.bf16.mxu0 %v4340
    %5031 = vmatpush1.bf16.msra.mxu0 %v4339
    %5032 = vmatprep.subr.bf16.mxu0 %v4344
    %5033 = vmatpush1.bf16.msra.mxu0 %v4343
    %5034 = vmatprep.subr.bf16.mxu0 %v4348
    %5035 = vmatpush1.bf16.msra.mxu0 %v4347
    %5036 = vmatprep.subr.bf16.mxu0 %v4352
    %5037 = vmatpush1.bf16.msra.mxu0 %v4351
    %5038 = vmatprep.subr.bf16.mxu0 %v4356
    %5039 = vmatpush1.bf16.msra.mxu0 %v4355
    %5040 = vmatprep.mubr.bf16.mxu0 %v2426
    %5041 = vmatmul.mubr.bf16.gmra.mrb[0].mxu0 %v2425
    %v5042 = vpop.f32.mrb[0].mxu0
    %v5043 = vadd.f32 %v4990, %v5042
    %v5044 = vpop.f32.mrb[0].mxu0
    %v5045 = vadd.f32 %v4992, %v5044
    %v5046 = vpop.f32.mrb[0].mxu0
    %v5047 = vadd.f32 %v4994, %v5046
    %v5048 = vpop.f32.mrb[0].mxu0
    %v5049 = vadd.f32 %v4996, %v5048
    %5050 = vmatprep.mubr.bf16.mxu0 %v2438
    %5051 = vmatmul.mubr.bf16.gmra.mrb[0].mxu0 %v2437
    %v5052 = vpop.f32.mrb[0].mxu0
    %v5053 = vadd.f32 %v5000, %v5052
    %v5054 = vpop.f32.mrb[0].mxu0
    %v5055 = vadd.f32 %v5002, %v5054
    %v5056 = vpop.f32.mrb[0].mxu0
    %v5057 = vadd.f32 %v5004, %v5056
    %v5058 = vpop.f32.mrb[0].mxu0
    %v5059 = vadd.f32 %v5006, %v5058
    %5060 = vdwg.mxu0
    %5061 = vmatprep.subr.bf16.mxu0 %v3978
    %5062 = vmatpush1.bf16.msra.mxu0 %v3977
    %5063 = vmatprep.subr.bf16.mxu0 %v3982
    %5064 = vmatpush1.bf16.msra.mxu0 %v3981
    %5065 = vmatprep.subr.bf16.mxu0 %v3986
    %5066 = vmatpush1.bf16.msra.mxu0 %v3985
    %5067 = vmatprep.subr.bf16.mxu0 %v3990
    %5068 = vmatpush1.bf16.msra.mxu0 %v3989
    %5069 = vmatprep.subr.bf16.mxu0 %v3994
    %5070 = vmatpush1.bf16.msra.mxu0 %v3993
    %5071 = vmatprep.subr.bf16.mxu0 %v3998
    %5072 = vmatpush1.bf16.msra.mxu0 %v3997
    %5073 = vmatprep.subr.bf16.mxu0 %v4002
    %5074 = vmatpush1.bf16.msra.mxu0 %v4001
    %5075 = vmatprep.subr.bf16.mxu0 %v4006
    %5076 = vmatpush1.bf16.msra.mxu0 %v4005
    %5077 = vmatprep.subr.bf16.mxu0 %v4010
    %5078 = vmatpush1.bf16.msra.mxu0 %v4009
    %5079 = vmatprep.subr.bf16.mxu0 %v4014
    %5080 = vmatpush1.bf16.msra.mxu0 %v4013
    %5081 = vmatprep.subr.bf16.mxu0 %v4018
    %5082 = vmatpush1.bf16.msra.mxu0 %v4017
    %5083 = vmatprep.subr.bf16.mxu0 %v4022
    %5084 = vmatpush1.bf16.msra.mxu0 %v4021
    %5085 = vmatprep.subr.bf16.mxu0 %v4026
    %5086 = vmatpush1.bf16.msra.mxu0 %v4025
    %5087 = vmatprep.subr.bf16.mxu0 %v4030
    %5088 = vmatpush1.bf16.msra.mxu0 %v4029
    %5089 = vmatprep.subr.bf16.mxu0 %v4034
    %5090 = vmatpush1.bf16.msra.mxu0 %v4033
    %5091 = vmatprep.subr.bf16.mxu0 %v4038
    %5092 = vmatpush1.bf16.msra.mxu0 %v4037
    %5093 = vmatprep.mubr.bf16.mxu0 %v2416
    %5094 = vmatmul.mubr.bf16.gmra.mrb[0].mxu0 %v2415
    %v5095 = vpop.f32.mrb[0].mxu0
    %v5096 = vadd.f32 0.0, %v5095
    %v5097 = vpop.f32.mrb[0].mxu0
    %v5098 = vadd.f32 0.0, %v5097
    %v5099 = vpop.f32.mrb[0].mxu0
    %v5100 = vadd.f32 0.0, %v5099
    %v5101 = vpop.f32.mrb[0].mxu0
    %v5102 = vadd.f32 0.0, %v5101
    %5103 = vmatprep.mubr.bf16.mxu0 %v2428
    %5104 = vmatmul.mubr.bf16.gmra.mrb[0].mxu0 %v2427
    %v5105 = vpop.f32.mrb[0].mxu0
    %v5106 = vadd.f32 0.0, %v5105
    %v5107 = vpop.f32.mrb[0].mxu0
    %v5108 = vadd.f32 0.0, %v5107
    %v5109 = vpop.f32.mrb[0].mxu0
    %v5110 = vadd.f32 0.0, %v5109
    %v5111 = vpop.f32.mrb[0].mxu0
    %v5112 = vadd.f32 0.0, %v5111
    %5113 = vdwg.mxu0
    %5114 = vmatprep.subr.bf16.mxu0 %v4042
    %5115 = vmatpush1.bf16.msra.mxu0 %v4041
    %5116 = vmatprep.subr.bf16.mxu0 %v4046
    %5117 = vmatpush1.bf16.msra.mxu0 %v4045
    %5118 = vmatprep.subr.bf16.mxu0 %v4050
    %5119 = vmatpush1.bf16.msra.mxu0 %v4049
    %5120 = vmatprep.subr.bf16.mxu0 %v4054
    %5121 = vmatpush1.bf16.msra.mxu0 %v4053
    %5122 = vmatprep.subr.bf16.mxu0 %v4058
    %5123 = vmatpush1.bf16.msra.mxu0 %v4057
    %5124 = vmatprep.subr.bf16.mxu0 %v4062
    %5125 = vmatpush1.bf16.msra.mxu0 %v4061
    %5126 = vmatprep.subr.bf16.mxu0 %v4066
    %5127 = vmatpush1.bf16.msra.mxu0 %v4065
    %5128 = vmatprep.subr.bf16.mxu0 %v4070
    %5129 = vmatpush1.bf16.msra.mxu0 %v4069
    %5130 = vmatprep.subr.bf16.mxu0 %v4074
    %5131 = vmatpush1.bf16.msra.mxu0 %v4073
    %5132 = vmatprep.subr.bf16.mxu0 %v4078
    %5133 = vmatpush1.bf16.msra.mxu0 %v4077
    %5134 = vmatprep.subr.bf16.mxu0 %v4082
    %5135 = vmatpush1.bf16.msra.mxu0 %v4081
    %5136 = vmatprep.subr.bf16.mxu0 %v4086
    %5137 = vmatpush1.bf16.msra.mxu0 %v4085
    %5138 = vmatprep.subr.bf16.mxu0 %v4090
    %5139 = vmatpush1.bf16.msra.mxu0 %v4089
    %5140 = vmatprep.subr.bf16.mxu0 %v4094
    %5141 = vmatpush1.bf16.msra.mxu0 %v4093
    %5142 = vmatprep.subr.bf16.mxu0 %v4098
    %5143 = vmatpush1.bf16.msra.mxu0 %v4097
    %5144 = vmatprep.subr.bf16.mxu0 %v4102
    %5145 = vmatpush1.bf16.msra.mxu0 %v4101
    %5146 = vmatprep.mubr.bf16.mxu0 %v2418
    %5147 = vmatmul.mubr.bf16.gmra.mrb[0].mxu0 %v2417
    %v5148 = vpop.f32.mrb[0].mxu0
    %v5149 = vadd.f32 %v5096, %v5148
    %v5150 = vpop.f32.mrb[0].mxu0
    %v5151 = vadd.f32 %v5098, %v5150
    %v5152 = vpop.f32.mrb[0].mxu0
    %v5153 = vadd.f32 %v5100, %v5152
    %v5154 = vpop.f32.mrb[0].mxu0
    %v5155 = vadd.f32 %v5102, %v5154
    %5156 = vmatprep.mubr.bf16.mxu0 %v2430
    %5157 = vmatmul.mubr.bf16.gmra.mrb[0].mxu0 %v2429
    %v5158 = vpop.f32.mrb[0].mxu0
    %v5159 = vadd.f32 %v5106, %v5158
    %v5160 = vpop.f32.mrb[0].mxu0
    %v5161 = vadd.f32 %v5108, %v5160
    %v5162 = vpop.f32.mrb[0].mxu0
    %v5163 = vadd.f32 %v5110, %v5162
    %v5164 = vpop.f32.mrb[0].mxu0
    %v5165 = vadd.f32 %v5112, %v5164
    %5166 = vdwg.mxu0
    %5167 = vmatprep.subr.bf16.mxu0 %v4106
    %5168 = vmatpush1.bf16.msra.mxu0 %v4105
    %5169 = vmatprep.subr.bf16.mxu0 %v4110
    %5170 = vmatpush1.bf16.msra.mxu0 %v4109
    %5171 = vmatprep.subr.bf16.mxu0 %v4114
    %5172 = vmatpush1.bf16.msra.mxu0 %v4113
    %5173 = vmatprep.subr.bf16.mxu0 %v4118
    %5174 = vmatpush1.bf16.msra.mxu0 %v4117
    %5175 = vmatprep.subr.bf16.mxu0 %v4122
    %5176 = vmatpush1.bf16.msra.mxu0 %v4121
    %5177 = vmatprep.subr.bf16.mxu0 %v4126
    %5178 = vmatpush1.bf16.msra.mxu0 %v4125
    %5179 = vmatprep.subr.bf16.mxu0 %v4130
    %5180 = vmatpush1.bf16.msra.mxu0 %v4129
    %5181 = vmatprep.subr.bf16.mxu0 %v4134
    %5182 = vmatpush1.bf16.msra.mxu0 %v4133
    %5183 = vmatprep.subr.bf16.mxu0 %v4138
    %5184 = vmatpush1.bf16.msra.mxu0 %v4137
    %5185 = vmatprep.subr.bf16.mxu0 %v4142
    %5186 = vmatpush1.bf16.msra.mxu0 %v4141
    %5187 = vmatprep.subr.bf16.mxu0 %v4146
    %5188 = vmatpush1.bf16.msra.mxu0 %v4145
    %5189 = vmatprep.subr.bf16.mxu0 %v4150
    %5190 = vmatpush1.bf16.msra.mxu0 %v4149
    %5191 = vmatprep.subr.bf16.mxu0 %v4154
    %5192 = vmatpush1.bf16.msra.mxu0 %v4153
    %5193 = vmatprep.subr.bf16.mxu0 %v4158
    %5194 = vmatpush1.bf16.msra.mxu0 %v4157
    %5195 = vmatprep.subr.bf16.mxu0 %v4162
    %5196 = vmatpush1.bf16.msra.mxu0 %v4161
    %5197 = vmatprep.subr.bf16.mxu0 %v4166
    %5198 = vmatpush1.bf16.msra.mxu0 %v4165
    %5199 = vmatprep.mubr.bf16.mxu0 %v2420
    %5200 = vmatmul.mubr.bf16.gmra.mrb[0].mxu0 %v2419
    %v5201 = vpop.f32.mrb[0].mxu0
    %v5202 = vadd.f32 %v5149, %v5201
    %v5203 = vpop.f32.mrb[0].mxu0
    %v5204 = vadd.f32 %v5151, %v5203
    %v5205 = vpop.f32.mrb[0].mxu0
    %v5206 = vadd.f32 %v5153, %v5205
    %v5207 = vpop.f32.mrb[0].mxu0
    %v5208 = vadd.f32 %v5155, %v5207
    %5209 = vmatprep.mubr.bf16.mxu0 %v2432
    %5210 = vmatmul.mubr.bf16.gmra.mrb[0].mxu0 %v2431
    %v5211 = vpop.f32.mrb[0].mxu0
    %v5212 = vadd.f32 %v5159, %v5211
    %v5213 = vpop.f32.mrb[0].mxu0
    %v5214 = vadd.f32 %v5161, %v5213
    %v5215 = vpop.f32.mrb[0].mxu0
    %v5216 = vadd.f32 %v5163, %v5215
    %v5217 = vpop.f32.mrb[0].mxu0
    %v5218 = vadd.f32 %v5165, %v5217
    %5219 = vdwg.mxu0
    %5220 = vmatprep.subr.bf16.mxu0 %v4170
    %5221 = vmatpush1.bf16.msra.mxu0 %v4169
    %5222 = vmatprep.subr.bf16.mxu0 %v4174
    %5223 = vmatpush1.bf16.msra.mxu0 %v4173
    %5224 = vmatprep.subr.bf16.mxu0 %v4178
    %5225 = vmatpush1.bf16.msra.mxu0 %v4177
    %5226 = vmatprep.subr.bf16.mxu0 %v4182
    %5227 = vmatpush1.bf16.msra.mxu0 %v4181
    %5228 = vmatprep.subr.bf16.mxu0 %v4186
    %5229 = vmatpush1.bf16.msra.mxu0 %v4185
    %5230 = vmatprep.subr.bf16.mxu0 %v4190
    %5231 = vmatpush1.bf16.msra.mxu0 %v4189
    %5232 = vmatprep.subr.bf16.mxu0 %v4194
    %5233 = vmatpush1.bf16.msra.mxu0 %v4193
    %5234 = vmatprep.subr.bf16.mxu0 %v4198
    %5235 = vmatpush1.bf16.msra.mxu0 %v4197
    %5236 = vmatprep.subr.bf16.mxu0 %v4202
    %5237 = vmatpush1.bf16.msra.mxu0 %v4201
    %5238 = vmatprep.subr.bf16.mxu0 %v4206
    %5239 = vmatpush1.bf16.msra.mxu0 %v4205
    %5240 = vmatprep.subr.bf16.mxu0 %v4210
    %5241 = vmatpush1.bf16.msra.mxu0 %v4209
    %5242 = vmatprep.subr.bf16.mxu0 %v4214
    %5243 = vmatpush1.bf16.msra.mxu0 %v4213
    %5244 = vmatprep.subr.bf16.mxu0 %v4218
    %5245 = vmatpush1.bf16.msra.mxu0 %v4217
    %5246 = vmatprep.subr.bf16.mxu0 %v4222
    %5247 = vmatpush1.bf16.msra.mxu0 %v4221
    %5248 = vmatprep.subr.bf16.mxu0 %v4226
    %5249 = vmatpush1.bf16.msra.mxu0 %v4225
    %5250 = vmatprep.subr.bf16.mxu0 %v4230
    %5251 = vmatpush1.bf16.msra.mxu0 %v4229
    %5252 = vmatprep.mubr.bf16.mxu0 %v2422
    %5253 = vmatmul.mubr.bf16.gmra.mrb[0].mxu0 %v2421
    %v5254 = vpop.f32.mrb[0].mxu0
    %v5255 = vadd.f32 %v5202, %v5254
    %v5256 = vpop.f32.mrb[0].mxu0
    %v5257 = vadd.f32 %v5204, %v5256
    %v5258 = vpop.f32.mrb[0].mxu0
    %v5259 = vadd.f32 %v5206, %v5258
    %v5260 = vpop.f32.mrb[0].mxu0
    %v5261 = vadd.f32 %v5208, %v5260
    %5262 = vmatprep.mubr.bf16.mxu0 %v2434
    %5263 = vmatmul.mubr.bf16.gmra.mrb[0].mxu0 %v2433
    %v5264 = vpop.f32.mrb[0].mxu0
    %v5265 = vadd.f32 %v5212, %v5264
    %v5266 = vpop.f32.mrb[0].mxu0
    %v5267 = vadd.f32 %v5214, %v5266
    %v5268 = vpop.f32.mrb[0].mxu0
    %v5269 = vadd.f32 %v5216, %v5268
    %v5270 = vpop.f32.mrb[0].mxu0
    %v5271 = vadd.f32 %v5218, %v5270
    %5272 = vdwg.mxu0
    %5273 = vmatprep.subr.bf16.mxu0 %v4234
    %5274 = vmatpush1.bf16.msra.mxu0 %v4233
    %5275 = vmatprep.subr.bf16.mxu0 %v4238
    %5276 = vmatpush1.bf16.msra.mxu0 %v4237
    %5277 = vmatprep.subr.bf16.mxu0 %v4242
    %5278 = vmatpush1.bf16.msra.mxu0 %v4241
    %5279 = vmatprep.subr.bf16.mxu0 %v4246
    %5280 = vmatpush1.bf16.msra.mxu0 %v4245
    %5281 = vmatprep.subr.bf16.mxu0 %v4250
    %5282 = vmatpush1.bf16.msra.mxu0 %v4249
    %5283 = vmatprep.subr.bf16.mxu0 %v4254
    %5284 = vmatpush1.bf16.msra.mxu0 %v4253
    %5285 = vmatprep.subr.bf16.mxu0 %v4258
    %5286 = vmatpush1.bf16.msra.mxu0 %v4257
    %5287 = vmatprep.subr.bf16.mxu0 %v4262
    %5288 = vmatpush1.bf16.msra.mxu0 %v4261
    %5289 = vmatprep.subr.bf16.mxu0 %v4266
    %5290 = vmatpush1.bf16.msra.mxu0 %v4265
    %5291 = vmatprep.subr.bf16.mxu0 %v4270
    %5292 = vmatpush1.bf16.msra.mxu0 %v4269
    %5293 = vmatprep.subr.bf16.mxu0 %v4274
    %5294 = vmatpush1.bf16.msra.mxu0 %v4273
    %5295 = vmatprep.subr.bf16.mxu0 %v4278
    %5296 = vmatpush1.bf16.msra.mxu0 %v4277
    %5297 = vmatprep.subr.bf16.mxu0 %v4282
    %5298 = vmatpush1.bf16.msra.mxu0 %v4281
    %5299 = vmatprep.subr.bf16.mxu0 %v4286
    %5300 = vmatpush1.bf16.msra.mxu0 %v4285
    %5301 = vmatprep.subr.bf16.mxu0 %v4290
    %5302 = vmatpush1.bf16.msra.mxu0 %v4289
    %5303 = vmatprep.subr.bf16.mxu0 %v4294
    %5304 = vmatpush1.bf16.msra.mxu0 %v4293
    %5305 = vmatprep.mubr.bf16.mxu0 %v2424
    %5306 = vmatmul.mubr.bf16.gmra.mrb[0].mxu0 %v2423
    %v5307 = vpop.f32.mrb[0].mxu0
    %v5308 = vadd.f32 %v5255, %v5307
    %v5309 = vpop.f32.mrb[0].mxu0
    %v5310 = vadd.f32 %v5257, %v5309
    %v5311 = vpop.f32.mrb[0].mxu0
    %v5312 = vadd.f32 %v5259, %v5311
    %v5313 = vpop.f32.mrb[0].mxu0
    %v5314 = vadd.f32 %v5261, %v5313
    %5315 = vmatprep.mubr.bf16.mxu0 %v2436
    %5316 = vmatmul.mubr.bf16.gmra.mrb[0].mxu0 %v2435
    %v5317 = vpop.f32.mrb[0].mxu0
    %v5318 = vadd.f32 %v5265, %v5317
    %v5319 = vpop.f32.mrb[0].mxu0
    %v5320 = vadd.f32 %v5267, %v5319
    %v5321 = vpop.f32.mrb[0].mxu0
    %v5322 = vadd.f32 %v5269, %v5321
    %v5323 = vpop.f32.mrb[0].mxu0
    %v5324 = vadd.f32 %v5271, %v5323
    %5325 = vdwg.mxu0
    %5326 = vmatprep.subr.bf16.mxu0 %v4298
    %5327 = vmatpush1.bf16.msra.mxu0 %v4297
    %5328 = vmatprep.subr.bf16.mxu0 %v4302
    %5329 = vmatpush1.bf16.msra.mxu0 %v4301
    %5330 = vmatprep.subr.bf16.mxu0 %v4306
    %5331 = vmatpush1.bf16.msra.mxu0 %v4305
    %5332 = vmatprep.subr.bf16.mxu0 %v4310
    %5333 = vmatpush1.bf16.msra.mxu0 %v4309
    %5334 = vmatprep.subr.bf16.mxu0 %v4314
    %5335 = vmatpush1.bf16.msra.mxu0 %v4313
    %5336 = vmatprep.subr.bf16.mxu0 %v4318
    %5337 = vmatpush1.bf16.msra.mxu0 %v4317
    %5338 = vmatprep.subr.bf16.mxu0 %v4322
    %5339 = vmatpush1.bf16.msra.mxu0 %v4321
    %5340 = vmatprep.subr.bf16.mxu0 %v4326
    %5341 = vmatpush1.bf16.msra.mxu0 %v4325
    %5342 = vmatprep.subr.bf16.mxu0 %v4330
    %5343 = vmatpush1.bf16.msra.mxu0 %v4329
    %5344 = vmatprep.subr.bf16.mxu0 %v4334
    %5345 = vmatpush1.bf16.msra.mxu0 %v4333
    %5346 = vmatprep.subr.bf16.mxu0 %v4338
    %5347 = vmatpush1.bf16.msra.mxu0 %v4337
    %5348 = vmatprep.subr.bf16.mxu0 %v4342
    %5349 = vmatpush1.bf16.msra.mxu0 %v4341
    %5350 = vmatprep.subr.bf16.mxu0 %v4346
    %5351 = vmatpush1.bf16.msra.mxu0 %v4345
    %5352 = vmatprep.subr.bf16.mxu0 %v4350
    %5353 = vmatpush1.bf16.msra.mxu0 %v4349
    %5354 = vmatprep.subr.bf16.mxu0 %v4354
    %5355 = vmatpush1.bf16.msra.mxu0 %v4353
    %5356 = vmatprep.subr.bf16.mxu0 %v4358
    %5357 = vmatpush1.bf16.msra.mxu0 %v4357
    %5358 = vmatprep.mubr.bf16.mxu0 %v2426
    %5359 = vmatmul.mubr.bf16.gmra.mrb[0].mxu0 %v2425
    %v5360 = vpop.f32.mrb[0].mxu0
    %v5361 = vadd.f32 %v5308, %v5360
    %v5362 = vpop.f32.mrb[0].mxu0
    %v5363 = vadd.f32 %v5310, %v5362
    %v5364 = vpop.f32.mrb[0].mxu0
    %v5365 = vadd.f32 %v5312, %v5364
    %v5366 = vpop.f32.mrb[0].mxu0
    %v5367 = vadd.f32 %v5314, %v5366
    %5368 = vmatprep.mubr.bf16.mxu0 %v2438
    %5369 = vmatmul.mubr.bf16.gmra.mrb[0].mxu0 %v2437
    %v5370 = vpop.f32.mrb[0].mxu0
    %v5371 = vadd.f32 %v5318, %v5370
    %v5372 = vpop.f32.mrb[0].mxu0
    %v5373 = vadd.f32 %v5320, %v5372
    %v5374 = vpop.f32.mrb[0].mxu0
    %v5375 = vadd.f32 %v5322, %v5374
    %v5376 = vpop.f32.mrb[0].mxu0
    %v5377 = vadd.f32 %v5324, %v5376
    %5378 = vdwg.mxu0
    %v5379 = vld [vmem:[#allocation7] sm:$0x1]
    %v5380 = vld [vmem:[#allocation9] sm:$0x1]
    %v5381 = vadd.f32 %v5043, %v5047
    %v5382 = vadd.f32 %v5381, %v5053
    %v5383 = vadd.f32 %v5382, %v5057
    %v5384 = vrot.slane %v5383, 4
    %v5385 = vadd.f32 %v5383, %v5384
    %v5386 = vrot.slane %v5385, 2
    %v5387 = vadd.f32 %v5385, %v5386
    %v5388 = vrot.slane %v5387, 1
    %v5389 = vadd.f32 %v5387, %v5388
    %v5390 = vadd.f32 %v5045, %v5049
    %v5391 = vadd.f32 %v5390, %v5055
    %v5392 = vadd.f32 %v5391, %v5059
    %v5393 = vrot.slane %v5392, 4
    %v5394 = vadd.f32 %v5392, %v5393
    %v5395 = vrot.slane %v5394, 2
    %v5396 = vadd.f32 %v5394, %v5395
    %v5397 = vrot.slane %v5396, 1
    %v5398 = vadd.f32 %v5396, %v5397
    %v5399 = vadd.f32 %v5361, %v5365
    %v5400 = vadd.f32 %v5399, %v5371
    %v5401 = vadd.f32 %v5400, %v5375
    %v5402 = vrot.slane %v5401, 4
    %v5403 = vadd.f32 %v5401, %v5402
    %v5404 = vrot.slane %v5403, 2
    %v5405 = vadd.f32 %v5403, %v5404
    %v5406 = vrot.slane %v5405, 1
    %v5407 = vadd.f32 %v5405, %v5406
    %v5408 = vadd.f32 %v5363, %v5367
    %v5409 = vadd.f32 %v5408, %v5373
    %v5410 = vadd.f32 %v5409, %v5377
    %v5411 = vrot.slane %v5410, 4
    %v5412 = vadd.f32 %v5410, %v5411
    %v5413 = vrot.slane %v5412, 2
    %v5414 = vadd.f32 %v5412, %v5413
    %v5415 = vrot.slane %v5414, 1
    %v5416 = vadd.f32 %v5414, %v5415
    %v5417 = vmul.f32 %v5043, %v5043
    %v5418 = vmul.f32 %v5045, %v5045
    %v5419 = vmul.f32 %v5361, %v5361
    %v5420 = vmul.f32 %v5363, %v5363
    %v5421 = vmul.f32 %v5047, %v5047
    %v5422 = vmul.f32 %v5049, %v5049
    %v5423 = vmul.f32 %v5365, %v5365
    %v5424 = vmul.f32 %v5367, %v5367
    %v5425 = vmul.f32 %v5053, %v5053
    %v5426 = vmul.f32 %v5055, %v5055
    %v5427 = vmul.f32 %v5371, %v5371
    %v5428 = vmul.f32 %v5373, %v5373
    %v5429 = vmul.f32 %v5057, %v5057
    %v5430 = vmul.f32 %v5059, %v5059
    %v5431 = vmul.f32 %v5375, %v5375
    %v5432 = vmul.f32 %v5377, %v5377
    %v5433 = vadd.f32 %v5417, %v5421
    %v5434 = vadd.f32 %v5433, %v5425
    %v5435 = vadd.f32 %v5434, %v5429
    %v5436 = vrot.slane %v5435, 4
    %v5437 = vadd.f32 %v5435, %v5436
    %v5438 = vrot.slane %v5437, 2
    %v5439 = vadd.f32 %v5437, %v5438
    %v5440 = vrot.slane %v5439, 1
    %v5441 = vadd.f32 %v5439, %v5440
    %v5442 = vadd.f32 %v5418, %v5422
    %v5443 = vadd.f32 %v5442, %v5426
    %v5444 = vadd.f32 %v5443, %v5430
    %v5445 = vrot.slane %v5444, 4
    %v5446 = vadd.f32 %v5444, %v5445
    %v5447 = vrot.slane %v5446, 2
    %v5448 = vadd.f32 %v5446, %v5447
    %v5449 = vrot.slane %v5448, 1
    %v5450 = vadd.f32 %v5448, %v5449
    %v5451 = vadd.f32 %v5419, %v5423
    %v5452 = vadd.f32 %v5451, %v5427
    %v5453 = vadd.f32 %v5452, %v5431
    %v5454 = vrot.slane %v5453, 4
    %v5455 = vadd.f32 %v5453, %v5454
    %v5456 = vrot.slane %v5455, 2
    %v5457 = vadd.f32 %v5455, %v5456
    %v5458 = vrot.slane %v5457, 1
    %v5459 = vadd.f32 %v5457, %v5458
    %v5460 = vadd.f32 %v5420, %v5424
    %v5461 = vadd.f32 %v5460, %v5428
    %v5462 = vadd.f32 %v5461, %v5432
    %v5463 = vrot.slane %v5462, 4
    %v5464 = vadd.f32 %v5462, %v5463
    %v5465 = vrot.slane %v5464, 2
    %v5466 = vadd.f32 %v5464, %v5465
    %v5467 = vrot.slane %v5466, 1
    %v5468 = vadd.f32 %v5466, %v5467
    %v5469 = vsel %vm276, %v5389, %v5441
    %v5470 = vsel %vm276, %v5398, %v5450
    %v5471 = vsel %vm276, %v5407, %v5459
    %v5472 = vsel %vm276, %v5416, %v5468
    %5473 = vmatprep.subr.mxu0 0.0
    %5474 = vmatpush1.msra.mxu0 %v180
    %5475 = vmatprep.subr.mxu0 0.0
    %5476 = vmatpush1.msra.mxu0 %v181
    %5477 = vmatprep.subr.mxu0 0.0
    %5478 = vmatpush1.msra.mxu0 %v182
    %5479 = vmatprep.subr.mxu0 0.0
    %5480 = vmatpush1.msra.mxu0 %v183
    %5481 = vmatprep.subr.mxu0 0.0
    %5482 = vmatpush1.msra.mxu0 %v184
    %5483 = vmatprep.subr.mxu0 0.0
    %5484 = vmatpush1.msra.mxu0 %v185
    %5485 = vmatprep.subr.mxu0 0.0
    %5486 = vmatpush1.msra.mxu0 %v186
    %5487 = vmatprep.subr.mxu0 0.0
    %5488 = vmatpush1.msra.mxu0 %v187
    %5489 = vmatprep.subr.mxu0 0.0
    %5490 = vmatpush1.msra.mxu0 %v188
    %5491 = vmatprep.subr.mxu0 0.0
    %5492 = vmatpush1.msra.mxu0 %v189
    %5493 = vmatprep.subr.mxu0 0.0
    %5494 = vmatpush1.msra.mxu0 %v190
    %5495 = vmatprep.subr.mxu0 0.0
    %5496 = vmatpush1.msra.mxu0 %v191
    %5497 = vmatprep.subr.mxu0 0.0
    %5498 = vmatpush1.msra.mxu0 %v192
    %5499 = vmatprep.subr.mxu0 0.0
    %5500 = vmatpush1.msra.mxu0 %v193
    %5501 = vmatprep.subr.mxu0 0.0
    %5502 = vmatpush1.msra.mxu0 %v194
    %5503 = vmatprep.subr.mxu0 0.0
    %5504 = vmatpush1.msra.mxu0 %v195
    %5505 = vmatprep.subr.mxu0 0.0
    %5506 = vmatpush1.msra.mxu0 %v196
    %5507 = vmatprep.subr.mxu0 0.0
    %5508 = vmatpush1.msra.mxu0 %v197
    %5509 = vmatprep.subr.mxu0 0.0
    %5510 = vmatpush1.msra.mxu0 %v198
    %5511 = vmatprep.subr.mxu0 0.0
    %5512 = vmatpush1.msra.mxu0 %v199
    %5513 = vmatprep.subr.mxu0 0.0
    %5514 = vmatpush1.msra.mxu0 %v200
    %5515 = vmatprep.subr.mxu0 0.0
    %5516 = vmatpush1.msra.mxu0 %v201
    %5517 = vmatprep.subr.mxu0 0.0
    %5518 = vmatpush1.msra.mxu0 %v202
    %5519 = vmatprep.subr.mxu0 0.0
    %5520 = vmatpush1.msra.mxu0 %v203
    %5521 = vmatprep.subr.mxu0 0.0
    %5522 = vmatpush1.msra.mxu0 %v204
    %5523 = vmatprep.subr.mxu0 0.0
    %5524 = vmatpush1.msra.mxu0 %v205
    %5525 = vmatprep.subr.mxu0 0.0
    %5526 = vmatpush1.msra.mxu0 %v206
    %5527 = vmatprep.subr.mxu0 0.0
    %5528 = vmatpush1.msra.mxu0 %v207
    %5529 = vmatprep.subr.mxu0 0.0
    %5530 = vmatpush1.msra.mxu0 %v208
    %5531 = vmatprep.subr.mxu0 0.0
    %5532 = vmatpush1.msra.mxu0 %v209
    %5533 = vmatprep.subr.mxu0 0.0
    %5534 = vmatpush1.msra.mxu0 %v210
    %5535 = vmatprep.subr.mxu0 0.0
    %5536 = vmatpush1.msra.mxu0 %v211
    %5537 = vmatprep.mubr.f32.mxu0 %v5470
    %5538 = vmatmul.mubr.f32.gmra.mrb[0].mxu0 %v5469
    %v5539 = vpop.f32.mrb[0].mxu0
    %v5540 = vadd.f32 0.0, %v5539
    %v5541 = vpop.f32.mrb[0].mxu0
    %5542 = vdwg.mxu0
    %5543 = vmatprep.subr.mxu0 0.0
    %5544 = vmatpush1.msra.mxu0 %v212
    %5545 = vmatprep.subr.mxu0 0.0
    %5546 = vmatpush1.msra.mxu0 %v213
    %5547 = vmatprep.subr.mxu0 0.0
    %5548 = vmatpush1.msra.mxu0 %v214
    %5549 = vmatprep.subr.mxu0 0.0
    %5550 = vmatpush1.msra.mxu0 %v215
    %5551 = vmatprep.subr.mxu0 0.0
    %5552 = vmatpush1.msra.mxu0 %v216
    %5553 = vmatprep.subr.mxu0 0.0
    %5554 = vmatpush1.msra.mxu0 %v217
    %5555 = vmatprep.subr.mxu0 0.0
    %5556 = vmatpush1.msra.mxu0 %v218
    %5557 = vmatprep.subr.mxu0 0.0
    %5558 = vmatpush1.msra.mxu0 %v219
    %5559 = vmatprep.subr.mxu0 0.0
    %5560 = vmatpush1.msra.mxu0 %v220
    %5561 = vmatprep.subr.mxu0 0.0
    %5562 = vmatpush1.msra.mxu0 %v221
    %5563 = vmatprep.subr.mxu0 0.0
    %5564 = vmatpush1.msra.mxu0 %v222
    %5565 = vmatprep.subr.mxu0 0.0
    %5566 = vmatpush1.msra.mxu0 %v223
    %5567 = vmatprep.subr.mxu0 0.0
    %5568 = vmatpush1.msra.mxu0 %v224
    %5569 = vmatprep.subr.mxu0 0.0
    %5570 = vmatpush1.msra.mxu0 %v225
    %5571 = vmatprep.subr.mxu0 0.0
    %5572 = vmatpush1.msra.mxu0 %v226
    %5573 = vmatprep.subr.mxu0 0.0
    %5574 = vmatpush1.msra.mxu0 %v227
    %5575 = vmatprep.subr.mxu0 0.0
    %5576 = vmatpush1.msra.mxu0 %v228
    %5577 = vmatprep.subr.mxu0 0.0
    %5578 = vmatpush1.msra.mxu0 %v229
    %5579 = vmatprep.subr.mxu0 0.0
    %5580 = vmatpush1.msra.mxu0 %v230
    %5581 = vmatprep.subr.mxu0 0.0
    %5582 = vmatpush1.msra.mxu0 %v231
    %5583 = vmatprep.subr.mxu0 0.0
    %5584 = vmatpush1.msra.mxu0 %v232
    %5585 = vmatprep.subr.mxu0 0.0
    %5586 = vmatpush1.msra.mxu0 %v233
    %5587 = vmatprep.subr.mxu0 0.0
    %5588 = vmatpush1.msra.mxu0 %v234
    %5589 = vmatprep.subr.mxu0 0.0
    %5590 = vmatpush1.msra.mxu0 %v235
    %5591 = vmatprep.subr.mxu0 0.0
    %5592 = vmatpush1.msra.mxu0 %v236
    %5593 = vmatprep.subr.mxu0 0.0
    %5594 = vmatpush1.msra.mxu0 %v237
    %5595 = vmatprep.subr.mxu0 0.0
    %5596 = vmatpush1.msra.mxu0 %v238
    %5597 = vmatprep.subr.mxu0 0.0
    %5598 = vmatpush1.msra.mxu0 %v239
    %5599 = vmatprep.subr.mxu0 0.0
    %5600 = vmatpush1.msra.mxu0 %v240
    %5601 = vmatprep.subr.mxu0 0.0
    %5602 = vmatpush1.msra.mxu0 %v241
    %5603 = vmatprep.subr.mxu0 0.0
    %5604 = vmatpush1.msra.mxu0 %v242
    %5605 = vmatprep.subr.mxu0 0.0
    %5606 = vmatpush1.msra.mxu0 %v243
    %5607 = vmatprep.mubr.f32.mxu0 %v5472
    %5608 = vmatmul.mubr.f32.gmra.mrb[0].mxu0 %v5471
    %v5609 = vpop.f32.mrb[0].mxu0
    %v5610 = vadd.f32 %v5540, %v5609
    %v5611 = vpop.f32.mrb[0].mxu0
    %5612 = vdwg.mxu0
    %v5613 = vmul.f32 %v5610, 0.001953125
    %v5614 = vmul.f32 %v5613, %v5613
    %v5616 = vrot.slane %v5614, 7
    %v5618 = vsub.f32 %v5613, %v5616
    %v5619 = vadd.f32 %v5618, 1e-05
    %v5620 = vrsqrt.pop %v5619
    %v5623 = vunpack.c.l.s4 1966171168
    %v5624 = vunpack.c.0.s8 %v5623
    %v5625 = vlaneseq
    %v5626 = vshrl.u32 %v5625, 7
    %v5627 = vsub.s32 %v5624, %v5626
    %v5628 = vrot.slane %v5620, %v5627
    %v5629 = vcombine.high %v5628, %v5628
    %v5631 = vunpack.c.l.s4 1966171168
    %v5632 = vunpack.c.0.s8 %v5631
    %v5633 = vlaneseq
    %v5634 = vshrl.u32 %v5633, 7
    %v5635 = vsub.s32 %v5632, %v5634
    %v5636 = vrot.slane %v5629, %v5635
    %v5638 = vmul.f32 %v5379, %v5636
    %v5639 = vmul.f32 %v5613, %v5638
    %v5640 = vsub.f32 %v5380, %v5639
    %v5642 = vlaneseq
    %v5643 = vshrl.u32 %v5642, 7
    %v5644 = vsub.s32 0, %v5643
    %v5645 = vrot.slane %v5640, %v5644
    %v5647 = vsel %vm276, %v5638, %v5645
    %v5649 = vsel %vm2077, %v5647, 0
    %5651 = vmatprep.subr.mxu0 %v245
    %5652 = vmatpush1.msra.mxu0 %v244
    %5653 = vmatprep.subr.mxu0 %v249
    %5654 = vmatpush1.msra.mxu0 %v248
    %5655 = vmatprep.subr.mxu0 %v253
    %5656 = vmatpush1.msra.mxu0 %v252
    %5657 = vmatprep.subr.mxu0 %v257
    %5658 = vmatpush1.msra.mxu0 %v256
    %5659 = vmatprep.subr.mxu0 0.0
    %5660 = vmatpush1.msra.mxu0 0.0
    %5661 = vmatprep.subr.mxu0 0.0
    %5662 = vmatpush1.msra.mxu0 0.0
    %5663 = vmatprep.subr.mxu0 0.0
    %5664 = vmatpush1.msra.mxu0 0.0
    %5665 = vmatprep.subr.mxu0 0.0
    %5666 = vmatpush1.msra.mxu0 0.0
    %5667 = vmatprep.subr.mxu0 0.0
    %5668 = vmatpush1.msra.mxu0 0.0
    %5669 = vmatprep.subr.mxu0 0.0
    %5670 = vmatpush1.msra.mxu0 0.0
    %5671 = vmatprep.subr.mxu0 0.0
    %5672 = vmatpush1.msra.mxu0 0.0
    %5673 = vmatprep.subr.mxu0 0.0
    %5674 = vmatpush1.msra.mxu0 0.0
    %5675 = vmatprep.subr.mxu0 0.0
    %5676 = vmatpush1.msra.mxu0 0.0
    %5677 = vmatprep.subr.mxu0 0.0
    %5678 = vmatpush1.msra.mxu0 0.0
    %5679 = vmatprep.subr.mxu0 0.0
    %5680 = vmatpush1.msra.mxu0 0.0
    %5681 = vmatprep.subr.mxu0 0.0
    %5682 = vmatpush1.msra.mxu0 0.0
    %5683 = vmatprep.subr.mxu0 0.0
    %5684 = vmatpush1.msra.mxu0 0.0
    %5685 = vmatprep.subr.mxu0 0.0
    %5686 = vmatpush1.msra.mxu0 0.0
    %5687 = vmatprep.subr.mxu0 0.0
    %5688 = vmatpush1.msra.mxu0 0.0
    %5689 = vmatprep.subr.mxu0 0.0
    %5690 = vmatpush1.msra.mxu0 0.0
    %5691 = vmatprep.subr.mxu0 0.0
    %5692 = vmatpush1.msra.mxu0 0.0
    %5693 = vmatprep.subr.mxu0 0.0
    %5694 = vmatpush1.msra.mxu0 0.0
    %5695 = vmatprep.subr.mxu0 0.0
    %5696 = vmatpush1.msra.mxu0 0.0
    %5697 = vmatprep.subr.mxu0 0.0
    %5698 = vmatpush1.msra.mxu0 0.0
    %5699 = vmatprep.subr.mxu0 0.0
    %5700 = vmatpush1.msra.mxu0 0.0
    %5701 = vmatprep.subr.mxu0 0.0
    %5702 = vmatpush1.msra.mxu0 0.0
    %5703 = vmatprep.subr.mxu0 0.0
    %5704 = vmatpush1.msra.mxu0 0.0
    %5705 = vmatprep.subr.mxu0 0.0
    %5706 = vmatpush1.msra.mxu0 0.0
    %5707 = vmatprep.subr.mxu0 0.0
    %5708 = vmatpush1.msra.mxu0 0.0
    %5709 = vmatprep.subr.mxu0 0.0
    %5710 = vmatpush1.msra.mxu0 0.0
    %5711 = vmatprep.subr.mxu0 0.0
    %5712 = vmatpush1.msra.mxu0 0.0
    %5713 = vmatprep.subr.mxu0 0.0
    %5714 = vmatpush1.msra.mxu0 0.0
    %5715 = vmatprep.mubr.f32.mxu0 0.0
    %5716 = vmatmul.mubr.f32.gmra.mrb[0].mxu0 %v5649
    %v5717 = vpop.f32.mrb[0].mxu0
    %v5718 = vadd.f32 0.0, %v5717
    %v5719 = vpop.f32.mrb[0].mxu0
    %v5720 = vadd.f32 0.0, %v5719
    %5721 = vdwg.mxu0
    %5722 = vmatprep.subr.mxu0 %v247
    %5723 = vmatpush1.msra.mxu0 %v246
    %5724 = vmatprep.subr.mxu0 %v251
    %5725 = vmatpush1.msra.mxu0 %v250
    %5726 = vmatprep.subr.mxu0 %v255
    %5727 = vmatpush1.msra.mxu0 %v254
    %5728 = vmatprep.subr.mxu0 %v259
    %5729 = vmatpush1.msra.mxu0 %v258
    %5730 = vmatprep.subr.mxu0 0.0
    %5731 = vmatpush1.msra.mxu0 0.0
    %5732 = vmatprep.subr.mxu0 0.0
    %5733 = vmatpush1.msra.mxu0 0.0
    %5734 = vmatprep.subr.mxu0 0.0
    %5735 = vmatpush1.msra.mxu0 0.0
    %5736 = vmatprep.subr.mxu0 0.0
    %5737 = vmatpush1.msra.mxu0 0.0
    %5738 = vmatprep.subr.mxu0 0.0
    %5739 = vmatpush1.msra.mxu0 0.0
    %5740 = vmatprep.subr.mxu0 0.0
    %5741 = vmatpush1.msra.mxu0 0.0
    %5742 = vmatprep.subr.mxu0 0.0
    %5743 = vmatpush1.msra.mxu0 0.0
    %5744 = vmatprep.subr.mxu0 0.0
    %5745 = vmatpush1.msra.mxu0 0.0
    %5746 = vmatprep.subr.mxu0 0.0
    %5747 = vmatpush1.msra.mxu0 0.0
    %5748 = vmatprep.subr.mxu0 0.0
    %5749 = vmatpush1.msra.mxu0 0.0
    %5750 = vmatprep.subr.mxu0 0.0
    %5751 = vmatpush1.msra.mxu0 0.0
    %5752 = vmatprep.subr.mxu0 0.0
    %5753 = vmatpush1.msra.mxu0 0.0
    %5754 = vmatprep.subr.mxu0 0.0
    %5755 = vmatpush1.msra.mxu0 0.0
    %5756 = vmatprep.subr.mxu0 0.0
    %5757 = vmatpush1.msra.mxu0 0.0
    %5758 = vmatprep.subr.mxu0 0.0
    %5759 = vmatpush1.msra.mxu0 0.0
    %5760 = vmatprep.subr.mxu0 0.0
    %5761 = vmatpush1.msra.mxu0 0.0
    %5762 = vmatprep.subr.mxu0 0.0
    %5763 = vmatpush1.msra.mxu0 0.0
    %5764 = vmatprep.subr.mxu0 0.0
    %5765 = vmatpush1.msra.mxu0 0.0
    %5766 = vmatprep.subr.mxu0 0.0
    %5767 = vmatpush1.msra.mxu0 0.0
    %5768 = vmatprep.subr.mxu0 0.0
    %5769 = vmatpush1.msra.mxu0 0.0
    %5770 = vmatprep.subr.mxu0 0.0
    %5771 = vmatpush1.msra.mxu0 0.0
    %5772 = vmatprep.subr.mxu0 0.0
    %5773 = vmatpush1.msra.mxu0 0.0
    %5774 = vmatprep.subr.mxu0 0.0
    %5775 = vmatpush1.msra.mxu0 0.0
    %5776 = vmatprep.subr.mxu0 0.0
    %5777 = vmatpush1.msra.mxu0 0.0
    %5778 = vmatprep.subr.mxu0 0.0
    %5779 = vmatpush1.msra.mxu0 0.0
    %5780 = vmatprep.subr.mxu0 0.0
    %5781 = vmatpush1.msra.mxu0 0.0
    %5782 = vmatprep.subr.mxu0 0.0
    %5783 = vmatpush1.msra.mxu0 0.0
    %5784 = vmatprep.subr.mxu0 0.0
    %5785 = vmatpush1.msra.mxu0 0.0
    %5786 = vmatprep.mubr.f32.mxu0 0.0
    %5787 = vmatmul.mubr.f32.gmra.mrb[0].mxu0 %v5649
    %v5788 = vpop.f32.mrb[0].mxu0
    %v5789 = vadd.f32 0.0, %v5788
    %v5790 = vpop.f32.mrb[0].mxu0
    %v5791 = vadd.f32 0.0, %v5790
    %5792 = vdwg.mxu0
    %v5793 = vlaneseq
    %v5794 = vshrl.u32 %v5793, 7
    %v5795 = vsub.s32 0, %v5794
    %v5796 = vrot.slane %v5718, %v5795
    %v5797 = vlaneseq
    %v5798 = vshrl.u32 %v5797, 7
    %v5799 = vsub.s32 0, %v5798
    %v5800 = vrot.slane %v5720, %v5799
    %v5801 = vlaneseq
    %v5802 = vshrl.u32 %v5801, 7
    %v5803 = vsub.s32 0, %v5802
    %v5804 = vrot.slane %v5789, %v5803
    %v5805 = vlaneseq
    %v5806 = vshrl.u32 %v5805, 7
    %v5807 = vsub.s32 0, %v5806
    %v5808 = vrot.slane %v5791, %v5807
    %v5809 = vmul.f32 %v5043, %v5796
    %v5810 = vmul.f32 %v5045, %v5800
    %v5811 = vmul.f32 %v5361, %v5804
    %v5812 = vmul.f32 %v5363, %v5808
    %v5813 = vmul.f32 %v5047, %v5796
    %v5814 = vmul.f32 %v5049, %v5800
    %v5815 = vmul.f32 %v5365, %v5804
    %v5816 = vmul.f32 %v5367, %v5808
    %v5817 = vmul.f32 %v5053, %v5796
    %v5818 = vmul.f32 %v5055, %v5800
    %v5819 = vmul.f32 %v5371, %v5804
    %v5820 = vmul.f32 %v5373, %v5808
    %v5821 = vmul.f32 %v5057, %v5796
    %v5822 = vmul.f32 %v5059, %v5800
    %v5823 = vmul.f32 %v5375, %v5804
    %v5824 = vmul.f32 %v5377, %v5808
    %v5825 = vlaneseq
    %v5826 = vshrl.u32 %v5825, 7
    %v5827 = vsub.s32 1, %v5826
    %v5828 = vrot.slane %v5718, %v5827
    %v5829 = vlaneseq
    %v5830 = vshrl.u32 %v5829, 7
    %v5831 = vsub.s32 1, %v5830
    %v5832 = vrot.slane %v5720, %v5831
    %v5833 = vlaneseq
    %v5834 = vshrl.u32 %v5833, 7
    %v5835 = vsub.s32 1, %v5834
    %v5836 = vrot.slane %v5789, %v5835
    %v5837 = vlaneseq
    %v5838 = vshrl.u32 %v5837, 7
    %v5839 = vsub.s32 1, %v5838
    %v5840 = vrot.slane %v5791, %v5839
    %v5841 = vadd.f32 %v5809, %v5828
    %v5842 = vadd.f32 %v5810, %v5832
    %v5843 = vadd.f32 %v5811, %v5836
    %v5844 = vadd.f32 %v5812, %v5840
    %v5845 = vadd.f32 %v5813, %v5828
    %v5846 = vadd.f32 %v5814, %v5832
    %v5847 = vadd.f32 %v5815, %v5836
    %v5848 = vadd.f32 %v5816, %v5840
    %v5849 = vadd.f32 %v5817, %v5828
    %v5850 = vadd.f32 %v5818, %v5832
    %v5851 = vadd.f32 %v5819, %v5836
    %v5852 = vadd.f32 %v5820, %v5840
    %v5853 = vadd.f32 %v5821, %v5828
    %v5854 = vadd.f32 %v5822, %v5832
    %v5855 = vadd.f32 %v5823, %v5836
    %v5856 = vadd.f32 %v5824, %v5840
    %v5857 = vadd.f32 %v5841, %v5845
    %v5858 = vrot.slane %v5857, 4
    %v5859 = vadd.f32 %v5857, %v5858
    %v5860 = vrot.slane %v5859, 2
    %v5861 = vadd.f32 %v5859, %v5860
    %v5862 = vrot.slane %v5861, 1
    %v5863 = vadd.f32 %v5861, %v5862
    %v5864 = vadd.f32 %v5842, %v5846
    %v5865 = vrot.slane %v5864, 4
    %v5866 = vadd.f32 %v5864, %v5865
    %v5867 = vrot.slane %v5866, 2
    %v5868 = vadd.f32 %v5866, %v5867
    %v5869 = vrot.slane %v5868, 1
    %v5870 = vadd.f32 %v5868, %v5869
    %v5871 = vadd.f32 %v5843, %v5847
    %v5872 = vrot.slane %v5871, 4
    %v5873 = vadd.f32 %v5871, %v5872
    %v5874 = vrot.slane %v5873, 2
    %v5875 = vadd.f32 %v5873, %v5874
    %v5876 = vrot.slane %v5875, 1
    %v5877 = vadd.f32 %v5875, %v5876
    %v5878 = vadd.f32 %v5844, %v5848
    %v5879 = vrot.slane %v5878, 4
    %v5880 = vadd.f32 %v5878, %v5879
    %v5881 = vrot.slane %v5880, 2
    %v5882 = vadd.f32 %v5880, %v5881
    %v5883 = vrot.slane %v5882, 1
    %v5884 = vadd.f32 %v5882, %v5883
    %v5885 = vadd.f32 %v5849, %v5853
    %v5886 = vrot.slane %v5885, 4
    %v5887 = vadd.f32 %v5885, %v5886
    %v5888 = vrot.slane %v5887, 2
    %v5889 = vadd.f32 %v5887, %v5888
    %v5890 = vrot.slane %v5889, 1
    %v5891 = vadd.f32 %v5889, %v5890
    %v5892 = vadd.f32 %v5850, %v5854
    %v5893 = vrot.slane %v5892, 4
    %v5894 = vadd.f32 %v5892, %v5893
    %v5895 = vrot.slane %v5894, 2
    %v5896 = vadd.f32 %v5894, %v5895
    %v5897 = vrot.slane %v5896, 1
    %v5898 = vadd.f32 %v5896, %v5897
    %v5899 = vadd.f32 %v5851, %v5855
    %v5900 = vrot.slane %v5899, 4
    %v5901 = vadd.f32 %v5899, %v5900
    %v5902 = vrot.slane %v5901, 2
    %v5903 = vadd.f32 %v5901, %v5902
    %v5904 = vrot.slane %v5903, 1
    %v5905 = vadd.f32 %v5903, %v5904
    %v5906 = vadd.f32 %v5852, %v5856
    %v5907 = vrot.slane %v5906, 4
    %v5908 = vadd.f32 %v5906, %v5907
    %v5909 = vrot.slane %v5908, 2
    %v5910 = vadd.f32 %v5908, %v5909
    %v5911 = vrot.slane %v5910, 1
    %v5912 = vadd.f32 %v5910, %v5911
    %vm5921 = vcmask 1041409
    %v5922 = vsel %vm5921, %v5891, %v5863
    %v5923 = vsel %vm5921, %v5898, %v5870
    %v5924 = vsel %vm5921, %v5905, %v5877
    %v5925 = vsel %vm5921, %v5912, %v5884
    %5930 = vmatprep.subr.mxu0 0.0
    %5931 = vmatpush1.msra.mxu0 %v180
    %5932 = vmatprep.subr.mxu0 0.0
    %5933 = vmatpush1.msra.mxu0 %v181
    %5934 = vmatprep.subr.mxu0 0.0
    %5935 = vmatpush1.msra.mxu0 %v182
    %5936 = vmatprep.subr.mxu0 0.0
    %5937 = vmatpush1.msra.mxu0 %v183
    %5938 = vmatprep.subr.mxu0 0.0
    %5939 = vmatpush1.msra.mxu0 %v184
    %5940 = vmatprep.subr.mxu0 0.0
    %5941 = vmatpush1.msra.mxu0 %v185
    %5942 = vmatprep.subr.mxu0 0.0
    %5943 = vmatpush1.msra.mxu0 %v186
    %5944 = vmatprep.subr.mxu0 0.0
    %5945 = vmatpush1.msra.mxu0 %v187
    %5946 = vmatprep.subr.mxu0 0.0
    %5947 = vmatpush1.msra.mxu0 %v188
    %5948 = vmatprep.subr.mxu0 0.0
    %5949 = vmatpush1.msra.mxu0 %v189
    %5950 = vmatprep.subr.mxu0 0.0
    %5951 = vmatpush1.msra.mxu0 %v190
    %5952 = vmatprep.subr.mxu0 0.0
    %5953 = vmatpush1.msra.mxu0 %v191
    %5954 = vmatprep.subr.mxu0 0.0
    %5955 = vmatpush1.msra.mxu0 %v192
    %5956 = vmatprep.subr.mxu0 0.0
    %5957 = vmatpush1.msra.mxu0 %v193
    %5958 = vmatprep.subr.mxu0 0.0
    %5959 = vmatpush1.msra.mxu0 %v194
    %5960 = vmatprep.subr.mxu0 0.0
    %5961 = vmatpush1.msra.mxu0 %v195
    %5962 = vmatprep.subr.mxu0 0.0
    %5963 = vmatpush1.msra.mxu0 %v196
    %5964 = vmatprep.subr.mxu0 0.0
    %5965 = vmatpush1.msra.mxu0 %v197
    %5966 = vmatprep.subr.mxu0 0.0
    %5967 = vmatpush1.msra.mxu0 %v198
    %5968 = vmatprep.subr.mxu0 0.0
    %5969 = vmatpush1.msra.mxu0 %v199
    %5970 = vmatprep.subr.mxu0 0.0
    %5971 = vmatpush1.msra.mxu0 %v200
    %5972 = vmatprep.subr.mxu0 0.0
    %5973 = vmatpush1.msra.mxu0 %v201
    %5974 = vmatprep.subr.mxu0 0.0
    %5975 = vmatpush1.msra.mxu0 %v202
    %5976 = vmatprep.subr.mxu0 0.0
    %5977 = vmatpush1.msra.mxu0 %v203
    %5978 = vmatprep.subr.mxu0 0.0
    %5979 = vmatpush1.msra.mxu0 %v204
    %5980 = vmatprep.subr.mxu0 0.0
    %5981 = vmatpush1.msra.mxu0 %v205
    %5982 = vmatprep.subr.mxu0 0.0
    %5983 = vmatpush1.msra.mxu0 %v206
    %5984 = vmatprep.subr.mxu0 0.0
    %5985 = vmatpush1.msra.mxu0 %v207
    %5986 = vmatprep.subr.mxu0 0.0
    %5987 = vmatpush1.msra.mxu0 %v208
    %5988 = vmatprep.subr.mxu0 0.0
    %5989 = vmatpush1.msra.mxu0 %v209
    %5990 = vmatprep.subr.mxu0 0.0
    %5991 = vmatpush1.msra.mxu0 %v210
    %5992 = vmatprep.subr.mxu0 0.0
    %5993 = vmatpush1.msra.mxu0 %v211
    %5994 = vmatprep.mubr.f32.mxu0 %v5923
    %5995 = vmatmul.mubr.f32.gmra.mrb[0].mxu0 %v5922
    %v5996 = vpop.f32.mrb[0].mxu0
    %v5997 = vadd.f32 0.0, %v5996
    %v5998 = vpop.f32.mrb[0].mxu0
    %5999 = vdwg.mxu0
    %6000 = vmatprep.subr.mxu0 0.0
    %6001 = vmatpush1.msra.mxu0 %v212
    %6002 = vmatprep.subr.mxu0 0.0
    %6003 = vmatpush1.msra.mxu0 %v213
    %6004 = vmatprep.subr.mxu0 0.0
    %6005 = vmatpush1.msra.mxu0 %v214
    %6006 = vmatprep.subr.mxu0 0.0
    %6007 = vmatpush1.msra.mxu0 %v215
    %6008 = vmatprep.subr.mxu0 0.0
    %6009 = vmatpush1.msra.mxu0 %v216
    %6010 = vmatprep.subr.mxu0 0.0
    %6011 = vmatpush1.msra.mxu0 %v217
    %6012 = vmatprep.subr.mxu0 0.0
    %6013 = vmatpush1.msra.mxu0 %v218
    %6014 = vmatprep.subr.mxu0 0.0
    %6015 = vmatpush1.msra.mxu0 %v219
    %6016 = vmatprep.subr.mxu0 0.0
    %6017 = vmatpush1.msra.mxu0 %v220
    %6018 = vmatprep.subr.mxu0 0.0
    %6019 = vmatpush1.msra.mxu0 %v221
    %6020 = vmatprep.subr.mxu0 0.0
    %6021 = vmatpush1.msra.mxu0 %v222
    %6022 = vmatprep.subr.mxu0 0.0
    %6023 = vmatpush1.msra.mxu0 %v223
    %6024 = vmatprep.subr.mxu0 0.0
    %6025 = vmatpush1.msra.mxu0 %v224
    %6026 = vmatprep.subr.mxu0 0.0
    %6027 = vmatpush1.msra.mxu0 %v225
    %6028 = vmatprep.subr.mxu0 0.0
    %6029 = vmatpush1.msra.mxu0 %v226
    %6030 = vmatprep.subr.mxu0 0.0
    %6031 = vmatpush1.msra.mxu0 %v227
    %6032 = vmatprep.subr.mxu0 0.0
    %6033 = vmatpush1.msra.mxu0 %v228
    %6034 = vmatprep.subr.mxu0 0.0
    %6035 = vmatpush1.msra.mxu0 %v229
    %6036 = vmatprep.subr.mxu0 0.0
    %6037 = vmatpush1.msra.mxu0 %v230
    %6038 = vmatprep.subr.mxu0 0.0
    %6039 = vmatpush1.msra.mxu0 %v231
    %6040 = vmatprep.subr.mxu0 0.0
    %6041 = vmatpush1.msra.mxu0 %v232
    %6042 = vmatprep.subr.mxu0 0.0
    %6043 = vmatpush1.msra.mxu0 %v233
    %6044 = vmatprep.subr.mxu0 0.0
    %6045 = vmatpush1.msra.mxu0 %v234
    %6046 = vmatprep.subr.mxu0 0.0
    %6047 = vmatpush1.msra.mxu0 %v235
    %6048 = vmatprep.subr.mxu0 0.0
    %6049 = vmatpush1.msra.mxu0 %v236
    %6050 = vmatprep.subr.mxu0 0.0
    %6051 = vmatpush1.msra.mxu0 %v237
    %6052 = vmatprep.subr.mxu0 0.0
    %6053 = vmatpush1.msra.mxu0 %v238
    %6054 = vmatprep.subr.mxu0 0.0
    %6055 = vmatpush1.msra.mxu0 %v239
    %6056 = vmatprep.subr.mxu0 0.0
    %6057 = vmatpush1.msra.mxu0 %v240
    %6058 = vmatprep.subr.mxu0 0.0
    %6059 = vmatpush1.msra.mxu0 %v241
    %6060 = vmatprep.subr.mxu0 0.0
    %6061 = vmatpush1.msra.mxu0 %v242
    %6062 = vmatprep.subr.mxu0 0.0
    %6063 = vmatpush1.msra.mxu0 %v243
    %6064 = vmatprep.mubr.f32.mxu0 %v5925
    %6065 = vmatmul.mubr.f32.gmra.mrb[0].mxu0 %v5924
    %v6066 = vpop.f32.mrb[0].mxu0
    %v6067 = vadd.f32 %v5997, %v6066
    %v6068 = vpop.f32.mrb[0].mxu0
    %6069 = vdwg.mxu0
    %v6070 = vmul.f32 %v6067, 0.00390625
    %v6071 = vld [vmem:[#allocation10] sm:$0x1]
    %v6072 = vlaneseq
    %v6073 = vshrl.u32 %v6072, 7
    %v6074 = vsub.s32 0, %v6073
    %v6075 = vrot.slane %v6071, %v6074
    %v6076 = vmul.f32 %v6070, %v6075
    %vm6077 = vcmask 254976
    %v6078 = vsel %vm6077, %v6076, 0.0
    %6079 = vadd.xlane.f32.xlu0 %v6078
    %v6080 = vpop.xlane.xlu0 %6079
    %v6081 = vmax.f32 %v6080, 0.0
    %v6082 = vld [vmem:[#allocation12] sm:$0x1]
    %v6083 = vlaneseq
    %v6084 = vshrl.u32 %v6083, 7
    %v6085 = vsub.s32 0, %v6084
    %v6086 = vrot.slane %v6082, %v6085
    %v6087 = vmul.f32 %v6081, %v6086
    %v6088 = vadd.f32 %v6087, 0.0
    %v6089 = vld [vmem:[#allocation10 + $0x1] sm:$0x1]
    %v6090 = vlaneseq
    %v6091 = vshrl.u32 %v6090, 7
    %v6092 = vsub.s32 0, %v6091
    %v6093 = vrot.slane %v6089, %v6092
    %v6094 = vmul.f32 %v6070, %v6093
    %v6095 = vsel %vm6077, %v6094, 0.0
    %6096 = vadd.xlane.f32.xlu0 %v6095
    %v6097 = vpop.xlane.xlu0 %6096
    %v6098 = vmax.f32 %v6097, 0.0
    %v6099 = vld [vmem:[#allocation12 + $0x1] sm:$0x1]
    %v6100 = vlaneseq
    %v6101 = vshrl.u32 %v6100, 7
    %v6102 = vsub.s32 0, %v6101
    %v6103 = vrot.slane %v6099, %v6102
    %v6104 = vmul.f32 %v6098, %v6103
    %v6105 = vadd.f32 %v6088, %v6104
    %v6106 = vxor.u32 %v6105, 2147483648
    %v6107 = vmul.f32 %v6106, 1.442695
    %v6108 = vpow.pop %v6107
    %v6109 = vadd.f32 %v6108, 1.0
    %v6110 = vrcp.pop %v6109
    %v6111 = vmul.f32 1.0, %v6110
    %v6113 = vsel %vm2077, %v6111, 0
    %6115 = vmatprep.subr.mxu0 %v245
    %6116 = vmatpush1.msra.mxu0 %v244
    %6117 = vmatprep.subr.mxu0 %v249
    %6118 = vmatpush1.msra.mxu0 %v248
    %6119 = vmatprep.subr.mxu0 %v253
    %6120 = vmatpush1.msra.mxu0 %v252
    %6121 = vmatprep.subr.mxu0 %v257
    %6122 = vmatpush1.msra.mxu0 %v256
    %6123 = vmatprep.subr.mxu0 0.0
    %6124 = vmatpush1.msra.mxu0 0.0
    %6125 = vmatprep.subr.mxu0 0.0
    %6126 = vmatpush1.msra.mxu0 0.0
    %6127 = vmatprep.subr.mxu0 0.0
    %6128 = vmatpush1.msra.mxu0 0.0
    %6129 = vmatprep.subr.mxu0 0.0
    %6130 = vmatpush1.msra.mxu0 0.0
    %6131 = vmatprep.subr.mxu0 0.0
    %6132 = vmatpush1.msra.mxu0 0.0
    %6133 = vmatprep.subr.mxu0 0.0
    %6134 = vmatpush1.msra.mxu0 0.0
    %6135 = vmatprep.subr.mxu0 0.0
    %6136 = vmatpush1.msra.mxu0 0.0
    %6137 = vmatprep.subr.mxu0 0.0
    %6138 = vmatpush1.msra.mxu0 0.0
    %6139 = vmatprep.subr.mxu0 0.0
    %6140 = vmatpush1.msra.mxu0 0.0
    %6141 = vmatprep.subr.mxu0 0.0
    %6142 = vmatpush1.msra.mxu0 0.0
    %6143 = vmatprep.subr.mxu0 0.0
    %6144 = vmatpush1.msra.mxu0 0.0
    %6145 = vmatprep.subr.mxu0 0.0
    %6146 = vmatpush1.msra.mxu0 0.0
    %6147 = vmatprep.subr.mxu0 0.0
    %6148 = vmatpush1.msra.mxu0 0.0
    %6149 = vmatprep.subr.mxu0 0.0
    %6150 = vmatpush1.msra.mxu0 0.0
    %6151 = vmatprep.subr.mxu0 0.0
    %6152 = vmatpush1.msra.mxu0 0.0
    %6153 = vmatprep.subr.mxu0 0.0
    %6154 = vmatpush1.msra.mxu0 0.0
    %6155 = vmatprep.subr.mxu0 0.0
    %6156 = vmatpush1.msra.mxu0 0.0
    %6157 = vmatprep.subr.mxu0 0.0
    %6158 = vmatpush1.msra.mxu0 0.0
    %6159 = vmatprep.subr.mxu0 0.0
    %6160 = vmatpush1.msra.mxu0 0.0
    %6161 = vmatprep.subr.mxu0 0.0
    %6162 = vmatpush1.msra.mxu0 0.0
    %6163 = vmatprep.subr.mxu0 0.0
    %6164 = vmatpush1.msra.mxu0 0.0
    %6165 = vmatprep.subr.mxu0 0.0
    %6166 = vmatpush1.msra.mxu0 0.0
    %6167 = vmatprep.subr.mxu0 0.0
    %6168 = vmatpush1.msra.mxu0 0.0
    %6169 = vmatprep.subr.mxu0 0.0
    %6170 = vmatpush1.msra.mxu0 0.0
    %6171 = vmatprep.subr.mxu0 0.0
    %6172 = vmatpush1.msra.mxu0 0.0
    %6173 = vmatprep.subr.mxu0 0.0
    %6174 = vmatpush1.msra.mxu0 0.0
    %6175 = vmatprep.subr.mxu0 0.0
    %6176 = vmatpush1.msra.mxu0 0.0
    %6177 = vmatprep.subr.mxu0 0.0
    %6178 = vmatpush1.msra.mxu0 0.0
    %6179 = vmatprep.mubr.f32.mxu0 0.0
    %6180 = vmatmul.mubr.f32.gmra.mrb[0].mxu0 %v6113
    %v6181 = vpop.f32.mrb[0].mxu0
    %v6182 = vadd.f32 0.0, %v6181
    %v6183 = vpop.f32.mrb[0].mxu0
    %v6184 = vadd.f32 0.0, %v6183
    %6185 = vdwg.mxu0
    %6186 = vmatprep.subr.mxu0 %v247
    %6187 = vmatpush1.msra.mxu0 %v246
    %6188 = vmatprep.subr.mxu0 %v251
    %6189 = vmatpush1.msra.mxu0 %v250
    %6190 = vmatprep.subr.mxu0 %v255
    %6191 = vmatpush1.msra.mxu0 %v254
    %6192 = vmatprep.subr.mxu0 %v259
    %6193 = vmatpush1.msra.mxu0 %v258
    %6194 = vmatprep.subr.mxu0 0.0
    %6195 = vmatpush1.msra.mxu0 0.0
    %6196 = vmatprep.subr.mxu0 0.0
    %6197 = vmatpush1.msra.mxu0 0.0
    %6198 = vmatprep.subr.mxu0 0.0
    %6199 = vmatpush1.msra.mxu0 0.0
    %6200 = vmatprep.subr.mxu0 0.0
    %6201 = vmatpush1.msra.mxu0 0.0
    %6202 = vmatprep.subr.mxu0 0.0
    %6203 = vmatpush1.msra.mxu0 0.0
    %6204 = vmatprep.subr.mxu0 0.0
    %6205 = vmatpush1.msra.mxu0 0.0
    %6206 = vmatprep.subr.mxu0 0.0
    %6207 = vmatpush1.msra.mxu0 0.0
    %6208 = vmatprep.subr.mxu0 0.0
    %6209 = vmatpush1.msra.mxu0 0.0
    %6210 = vmatprep.subr.mxu0 0.0
    %6211 = vmatpush1.msra.mxu0 0.0
    %6212 = vmatprep.subr.mxu0 0.0
    %6213 = vmatpush1.msra.mxu0 0.0
    %6214 = vmatprep.subr.mxu0 0.0
    %6215 = vmatpush1.msra.mxu0 0.0
    %6216 = vmatprep.subr.mxu0 0.0
    %6217 = vmatpush1.msra.mxu0 0.0
    %6218 = vmatprep.subr.mxu0 0.0
    %6219 = vmatpush1.msra.mxu0 0.0
    %6220 = vmatprep.subr.mxu0 0.0
    %6221 = vmatpush1.msra.mxu0 0.0
    %6222 = vmatprep.subr.mxu0 0.0
    %6223 = vmatpush1.msra.mxu0 0.0
    %6224 = vmatprep.subr.mxu0 0.0
    %6225 = vmatpush1.msra.mxu0 0.0
    %6226 = vmatprep.subr.mxu0 0.0
    %6227 = vmatpush1.msra.mxu0 0.0
    %6228 = vmatprep.subr.mxu0 0.0
    %6229 = vmatpush1.msra.mxu0 0.0
    %6230 = vmatprep.subr.mxu0 0.0
    %6231 = vmatpush1.msra.mxu0 0.0
    %6232 = vmatprep.subr.mxu0 0.0
    %6233 = vmatpush1.msra.mxu0 0.0
    %6234 = vmatprep.subr.mxu0 0.0
    %6235 = vmatpush1.msra.mxu0 0.0
    %6236 = vmatprep.subr.mxu0 0.0
    %6237 = vmatpush1.msra.mxu0 0.0
    %6238 = vmatprep.subr.mxu0 0.0
    %6239 = vmatpush1.msra.mxu0 0.0
    %6240 = vmatprep.subr.mxu0 0.0
    %6241 = vmatpush1.msra.mxu0 0.0
    %6242 = vmatprep.subr.mxu0 0.0
    %6243 = vmatpush1.msra.mxu0 0.0
    %6244 = vmatprep.subr.mxu0 0.0
    %6245 = vmatpush1.msra.mxu0 0.0
    %6246 = vmatprep.subr.mxu0 0.0
    %6247 = vmatpush1.msra.mxu0 0.0
    %6248 = vmatprep.subr.mxu0 0.0
    %6249 = vmatpush1.msra.mxu0 0.0
    %6250 = vmatprep.mubr.f32.mxu0 0.0
    %6251 = vmatmul.mubr.f32.gmra.mrb[0].mxu0 %v6113
    %v6252 = vpop.f32.mrb[0].mxu0
    %v6253 = vadd.f32 0.0, %v6252
    %v6254 = vpop.f32.mrb[0].mxu0
    %v6255 = vadd.f32 0.0, %v6254
    %6256 = vdwg.mxu0
    %v6261 = vcombine.low %v6182, %v6184
    %v6262 = vcombine.low %v6253, %v6255
    %v6264 = vunpack.c.l.s4 1966171168
    %v6265 = vunpack.c.0.s8 %v6264
    %v6266 = vlaneseq
    %v6267 = vshrl.u32 %v6266, 7
    %v6268 = vsub.s32 %v6265, %v6267
    %v6269 = vrot.slane %v6261, %v6268
    %v6271 = vunpack.c.l.s4 1966171168
    %v6272 = vunpack.c.0.s8 %v6271
    %v6273 = vlaneseq
    %v6274 = vshrl.u32 %v6273, 7
    %v6275 = vsub.s32 %v6272, %v6274
    %v6276 = vrot.slane %v6262, %v6275
    %v6277 = vcombine.low %v6269, %v6276
    %v6278 = vcombine.high %v6269, %v6276
    %v6280 = vunpack.c.l.s4 1966171168
    %v6281 = vunpack.c.0.s8 %v6280
    %v6282 = vlaneseq
    %v6283 = vshrl.u32 %v6282, 7
    %v6284 = vsub.s32 %v6281, %v6283
    %v6285 = vrot.slane %v6277, %v6284
    %v6287 = vunpack.c.l.s4 1966171168
    %v6288 = vunpack.c.0.s8 %v6287
    %v6289 = vlaneseq
    %v6290 = vshrl.u32 %v6289, 7
    %v6291 = vsub.s32 %v6288, %v6290
    %v6292 = vrot.slane %v6278, %v6291
    %v6293 = vlaneseq
    %v6294 = vshrl.u32 %v6293, 7
    %v6295 = vsub.s32 0, %v6294
    %v6296 = vrot.slane %v6285, %v6295
    %v6297 = vlaneseq
    %v6298 = vshrl.u32 %v6297, 7
    %v6299 = vsub.s32 1, %v6298
    %v6300 = vrot.slane %v6285, %v6299
    %v6301 = vlaneseq
    %v6302 = vshrl.u32 %v6301, 7
    %v6303 = vsub.s32 2, %v6302
    %v6304 = vrot.slane %v6285, %v6303
    %v6305 = vlaneseq
    %v6306 = vshrl.u32 %v6305, 7
    %v6307 = vsub.s32 3, %v6306
    %v6308 = vrot.slane %v6285, %v6307
    %v6309 = vlaneseq
    %v6310 = vshrl.u32 %v6309, 7
    %v6311 = vsub.s32 0, %v6310
    %v6312 = vrot.slane %v6292, %v6311
    %v6313 = vlaneseq
    %v6314 = vshrl.u32 %v6313, 7
    %v6315 = vsub.s32 1, %v6314
    %v6316 = vrot.slane %v6292, %v6315
    %v6317 = vlaneseq
    %v6318 = vshrl.u32 %v6317, 7
    %v6319 = vsub.s32 2, %v6318
    %v6320 = vrot.slane %v6292, %v6319
    %v6321 = vlaneseq
    %v6322 = vshrl.u32 %v6321, 7
    %v6323 = vsub.s32 3, %v6322
    %v6324 = vrot.slane %v6292, %v6323
    %v6333 = vmul.f32 %v5841, %v6296
    %v6334 = vmul.f32 %v5842, %v6300
    %v6335 = vmul.f32 %v5843, %v6304
    %v6336 = vmul.f32 %v5844, %v6308
    %v6337 = vmul.f32 %v5845, %v6296
    %v6338 = vmul.f32 %v5846, %v6300
    %v6339 = vmul.f32 %v5847, %v6304
    %v6340 = vmul.f32 %v5848, %v6308
    %v6341 = vmul.f32 %v5849, %v6312
    %v6342 = vmul.f32 %v5850, %v6316
    %v6343 = vmul.f32 %v5851, %v6320
    %v6344 = vmul.f32 %v5852, %v6324
    %v6345 = vmul.f32 %v5853, %v6312
    %v6346 = vmul.f32 %v5854, %v6316
    %v6347 = vmul.f32 %v5855, %v6320
    %v6348 = vmul.f32 %v5856, %v6324
    %v6349 = vld [vmem:[#allocation13] sm:$0xff]
    %v6350 = vld [vmem:[#allocation13 + $0x8] sm:$0xff]
    %v6351 = vld [vmem:[#allocation13 + $0x10] sm:$0xff]
    %v6352 = vld [vmem:[#allocation13 + $0x18] sm:$0xff]
    %v6353 = vld [vmem:[#allocation13 + $0x20] sm:$0xff]
    %v6354 = vld [vmem:[#allocation13 + $0x28] sm:$0xff]
    %v6355 = vld [vmem:[#allocation13 + $0x30] sm:$0xff]
    %v6356 = vld [vmem:[#allocation13 + $0x38] sm:$0xff]
    %v6357 = vld [vmem:[#allocation13 + $0x40] sm:$0xff]
    %v6358 = vld [vmem:[#allocation13 + $0x48] sm:$0xff]
    %v6359 = vld [vmem:[#allocation13 + $0x50] sm:$0xff]
    %v6360 = vld [vmem:[#allocation13 + $0x58] sm:$0xff]
    %v6361 = vld [vmem:[#allocation13 + $0x60] sm:$0xff]
    %v6362 = vld [vmem:[#allocation13 + $0x68] sm:$0xff]
    %v6363 = vld [vmem:[#allocation13 + $0x70] sm:$0xff]
    %v6364 = vld [vmem:[#allocation13 + $0x78] sm:$0xff]
    %v6365 = vld [vmem:[#allocation13 + $0x80] sm:$0xff]
    %v6366 = vld [vmem:[#allocation13 + $0x88] sm:$0xff]
    %v6367 = vld [vmem:[#allocation13 + $0x90] sm:$0xff]
    %v6368 = vld [vmem:[#allocation13 + $0x98] sm:$0xff]
    %v6369 = vld [vmem:[#allocation13 + $0xa0] sm:$0xff]
    %v6370 = vld [vmem:[#allocation13 + $0xa8] sm:$0xff]
    %v6371 = vld [vmem:[#allocation13 + $0xb0] sm:$0xff]
    %v6372 = vld [vmem:[#allocation13 + $0xb8] sm:$0xff]
    %v6373 = vld [vmem:[#allocation13 + $0xc0] sm:$0xff]
    %v6374 = vld [vmem:[#allocation13 + $0xc8] sm:$0xff]
    %v6375 = vld [vmem:[#allocation13 + $0xd0] sm:$0xff]
    %v6376 = vld [vmem:[#allocation13 + $0xd8] sm:$0xff]
    %v6377 = vld [vmem:[#allocation13 + $0xe0] sm:$0xff]
    %v6378 = vld [vmem:[#allocation13 + $0xe8] sm:$0xff]
    %v6379 = vld [vmem:[#allocation13 + $0xf0] sm:$0xff]
    %v6380 = vld [vmem:[#allocation13 + $0xf8] sm:$0xff]
    %v6381 = vld [vmem:[#allocation13 + $0x100] sm:$0xff]
    %v6382 = vld [vmem:[#allocation13 + $0x108] sm:$0xff]
    %v6383 = vld [vmem:[#allocation13 + $0x110] sm:$0xff]
    %v6384 = vld [vmem:[#allocation13 + $0x118] sm:$0xff]
    %v6385 = vld [vmem:[#allocation13 + $0x120] sm:$0xff]
    %v6386 = vld [vmem:[#allocation13 + $0x128] sm:$0xff]
    %v6387 = vld [vmem:[#allocation13 + $0x130] sm:$0xff]
    %v6388 = vld [vmem:[#allocation13 + $0x138] sm:$0xff]
    %v6389 = vld [vmem:[#allocation13 + $0x140] sm:$0xff]
    %v6390 = vld [vmem:[#allocation13 + $0x148] sm:$0xff]
    %v6391 = vld [vmem:[#allocation13 + $0x150] sm:$0xff]
    %v6392 = vld [vmem:[#allocation13 + $0x158] sm:$0xff]
    %v6393 = vld [vmem:[#allocation13 + $0x160] sm:$0xff]
    %v6394 = vld [vmem:[#allocation13 + $0x168] sm:$0xff]
    %v6395 = vld [vmem:[#allocation13 + $0x170] sm:$0xff]
    %v6396 = vld [vmem:[#allocation13 + $0x178] sm:$0xff]
    %v6397 = vld [vmem:[#allocation13 + $0x180] sm:$0xff]
    %v6398 = vld [vmem:[#allocation13 + $0x188] sm:$0xff]
    %v6399 = vld [vmem:[#allocation13 + $0x190] sm:$0xff]
    %v6400 = vld [vmem:[#allocation13 + $0x198] sm:$0xff]
    %v6401 = vld [vmem:[#allocation13 + $0x1a0] sm:$0xff]
    %v6402 = vld [vmem:[#allocation13 + $0x1a8] sm:$0xff]
    %v6403 = vld [vmem:[#allocation13 + $0x1b0] sm:$0xff]
    %v6404 = vld [vmem:[#allocation13 + $0x1b8] sm:$0xff]
    %v6405 = vld [vmem:[#allocation13 + $0x1c0] sm:$0xff]
    %v6406 = vld [vmem:[#allocation13 + $0x1c8] sm:$0xff]
    %v6407 = vld [vmem:[#allocation13 + $0x1d0] sm:$0xff]
    %v6408 = vld [vmem:[#allocation13 + $0x1d8] sm:$0xff]
    %v6409 = vld [vmem:[#allocation13 + $0x1e0] sm:$0xff]
    %v6410 = vld [vmem:[#allocation13 + $0x1e8] sm:$0xff]
    %v6411 = vld [vmem:[#allocation13 + $0x1f0] sm:$0xff]
    %v6412 = vld [vmem:[#allocation13 + $0x1f8] sm:$0xff]
    %v6477 = vunpack.c.l.b16 %v6349
    %v6478 = vunpack.c.h.b16 %v6349
    %v6479 = vunpack.c.l.b16 %v6350
    %v6480 = vunpack.c.h.b16 %v6350
    %v6481 = vunpack.c.l.b16 %v6351
    %v6482 = vunpack.c.h.b16 %v6351
    %v6483 = vunpack.c.l.b16 %v6352
    %v6484 = vunpack.c.h.b16 %v6352
    %v6485 = vunpack.c.l.b16 %v6353
    %v6486 = vunpack.c.h.b16 %v6353
    %v6487 = vunpack.c.l.b16 %v6354
    %v6488 = vunpack.c.h.b16 %v6354
    %v6489 = vunpack.c.l.b16 %v6355
    %v6490 = vunpack.c.h.b16 %v6355
    %v6491 = vunpack.c.l.b16 %v6356
    %v6492 = vunpack.c.h.b16 %v6356
    %v6493 = vunpack.c.l.b16 %v6357
    %v6494 = vunpack.c.h.b16 %v6357
    %v6495 = vunpack.c.l.b16 %v6358
    %v6496 = vunpack.c.h.b16 %v6358
    %v6497 = vunpack.c.l.b16 %v6359
    %v6498 = vunpack.c.h.b16 %v6359
    %v6499 = vunpack.c.l.b16 %v6360
    %v6500 = vunpack.c.h.b16 %v6360
    %v6501 = vunpack.c.l.b16 %v6361
    %v6502 = vunpack.c.h.b16 %v6361
    %v6503 = vunpack.c.l.b16 %v6362
    %v6504 = vunpack.c.h.b16 %v6362
    %v6505 = vunpack.c.l.b16 %v6363
    %v6506 = vunpack.c.h.b16 %v6363
    %v6507 = vunpack.c.l.b16 %v6364
    %v6508 = vunpack.c.h.b16 %v6364
    %v6509 = vunpack.c.l.b16 %v6365
    %v6510 = vunpack.c.h.b16 %v6365
    %v6511 = vunpack.c.l.b16 %v6366
    %v6512 = vunpack.c.h.b16 %v6366
    %v6513 = vunpack.c.l.b16 %v6367
    %v6514 = vunpack.c.h.b16 %v6367
    %v6515 = vunpack.c.l.b16 %v6368
    %v6516 = vunpack.c.h.b16 %v6368
    %v6517 = vunpack.c.l.b16 %v6369
    %v6518 = vunpack.c.h.b16 %v6369
    %v6519 = vunpack.c.l.b16 %v6370
    %v6520 = vunpack.c.h.b16 %v6370
    %v6521 = vunpack.c.l.b16 %v6371
    %v6522 = vunpack.c.h.b16 %v6371
    %v6523 = vunpack.c.l.b16 %v6372
    %v6524 = vunpack.c.h.b16 %v6372
    %v6525 = vunpack.c.l.b16 %v6373
    %v6526 = vunpack.c.h.b16 %v6373
    %v6527 = vunpack.c.l.b16 %v6374
    %v6528 = vunpack.c.h.b16 %v6374
    %v6529 = vunpack.c.l.b16 %v6375
    %v6530 = vunpack.c.h.b16 %v6375
    %v6531 = vunpack.c.l.b16 %v6376
    %v6532 = vunpack.c.h.b16 %v6376
    %v6533 = vunpack.c.l.b16 %v6377
    %v6534 = vunpack.c.h.b16 %v6377
    %v6535 = vunpack.c.l.b16 %v6378
    %v6536 = vunpack.c.h.b16 %v6378
    %v6537 = vunpack.c.l.b16 %v6379
    %v6538 = vunpack.c.h.b16 %v6379
    %v6539 = vunpack.c.l.b16 %v6380
    %v6540 = vunpack.c.h.b16 %v6380
    %v6541 = vunpack.c.l.b16 %v6381
    %v6542 = vunpack.c.h.b16 %v6381
    %v6543 = vunpack.c.l.b16 %v6382
    %v6544 = vunpack.c.h.b16 %v6382
    %v6545 = vunpack.c.l.b16 %v6383
    %v6546 = vunpack.c.h.b16 %v6383
    %v6547 = vunpack.c.l.b16 %v6384
    %v6548 = vunpack.c.h.b16 %v6384
    %v6549 = vunpack.c.l.b16 %v6385
    %v6550 = vunpack.c.h.b16 %v6385
    %v6551 = vunpack.c.l.b16 %v6386
    %v6552 = vunpack.c.h.b16 %v6386
    %v6553 = vunpack.c.l.b16 %v6387
    %v6554 = vunpack.c.h.b16 %v6387
    %v6555 = vunpack.c.l.b16 %v6388
    %v6556 = vunpack.c.h.b16 %v6388
    %v6557 = vunpack.c.l.b16 %v6389
    %v6558 = vunpack.c.h.b16 %v6389
    %v6559 = vunpack.c.l.b16 %v6390
    %v6560 = vunpack.c.h.b16 %v6390
    %v6561 = vunpack.c.l.b16 %v6391
    %v6562 = vunpack.c.h.b16 %v6391
    %v6563 = vunpack.c.l.b16 %v6392
    %v6564 = vunpack.c.h.b16 %v6392
    %v6565 = vunpack.c.l.b16 %v6393
    %v6566 = vunpack.c.h.b16 %v6393
    %v6567 = vunpack.c.l.b16 %v6394
    %v6568 = vunpack.c.h.b16 %v6394
    %v6569 = vunpack.c.l.b16 %v6395
    %v6570 = vunpack.c.h.b16 %v6395
    %v6571 = vunpack.c.l.b16 %v6396
    %v6572 = vunpack.c.h.b16 %v6396
    %v6573 = vunpack.c.l.b16 %v6397
    %v6574 = vunpack.c.h.b16 %v6397
    %v6575 = vunpack.c.l.b16 %v6398
    %v6576 = vunpack.c.h.b16 %v6398
    %v6577 = vunpack.c.l.b16 %v6399
    %v6578 = vunpack.c.h.b16 %v6399
    %v6579 = vunpack.c.l.b16 %v6400
    %v6580 = vunpack.c.h.b16 %v6400
    %v6581 = vunpack.c.l.b16 %v6401
    %v6582 = vunpack.c.h.b16 %v6401
    %v6583 = vunpack.c.l.b16 %v6402
    %v6584 = vunpack.c.h.b16 %v6402
    %v6585 = vunpack.c.l.b16 %v6403
    %v6586 = vunpack.c.h.b16 %v6403
    %v6587 = vunpack.c.l.b16 %v6404
    %v6588 = vunpack.c.h.b16 %v6404
    %v6589 = vunpack.c.l.b16 %v6405
    %v6590 = vunpack.c.h.b16 %v6405
    %v6591 = vunpack.c.l.b16 %v6406
    %v6592 = vunpack.c.h.b16 %v6406
    %v6593 = vunpack.c.l.b16 %v6407
    %v6594 = vunpack.c.h.b16 %v6407
    %v6595 = vunpack.c.l.b16 %v6408
    %v6596 = vunpack.c.h.b16 %v6408
    %v6597 = vunpack.c.l.b16 %v6409
    %v6598 = vunpack.c.h.b16 %v6409
    %v6599 = vunpack.c.l.b16 %v6410
    %v6600 = vunpack.c.h.b16 %v6410
    %v6601 = vunpack.c.l.b16 %v6411
    %v6602 = vunpack.c.h.b16 %v6411
    %v6603 = vunpack.c.l.b16 %v6412
    %v6604 = vunpack.c.h.b16 %v6412
    %v6605 = vpack.c.b16 %v6481, %v6477
    %v6606 = vpack.c.b16 %v6482, %v6478
    %v6607 = vpack.c.b16 %v6483, %v6479
    %v6608 = vpack.c.b16 %v6484, %v6480
    %v6609 = vpack.c.b16 %v6489, %v6485
    %v6610 = vpack.c.b16 %v6490, %v6486
    %v6611 = vpack.c.b16 %v6491, %v6487
    %v6612 = vpack.c.b16 %v6492, %v6488
    %v6613 = vpack.c.b16 %v6497, %v6493
    %v6614 = vpack.c.b16 %v6498, %v6494
    %v6615 = vpack.c.b16 %v6499, %v6495
    %v6616 = vpack.c.b16 %v6500, %v6496
    %v6617 = vpack.c.b16 %v6505, %v6501
    %v6618 = vpack.c.b16 %v6506, %v6502
    %v6619 = vpack.c.b16 %v6507, %v6503
    %v6620 = vpack.c.b16 %v6508, %v6504
    %v6621 = vpack.c.b16 %v6513, %v6509
    %v6622 = vpack.c.b16 %v6514, %v6510
    %v6623 = vpack.c.b16 %v6515, %v6511
    %v6624 = vpack.c.b16 %v6516, %v6512
    %v6625 = vpack.c.b16 %v6521, %v6517
    %v6626 = vpack.c.b16 %v6522, %v6518
    %v6627 = vpack.c.b16 %v6523, %v6519
    %v6628 = vpack.c.b16 %v6524, %v6520
    %v6629 = vpack.c.b16 %v6529, %v6525
    %v6630 = vpack.c.b16 %v6530, %v6526
    %v6631 = vpack.c.b16 %v6531, %v6527
    %v6632 = vpack.c.b16 %v6532, %v6528
    %v6633 = vpack.c.b16 %v6537, %v6533
    %v6634 = vpack.c.b16 %v6538, %v6534
    %v6635 = vpack.c.b16 %v6539, %v6535
    %v6636 = vpack.c.b16 %v6540, %v6536
    %v6637 = vpack.c.b16 %v6545, %v6541
    %v6638 = vpack.c.b16 %v6546, %v6542
    %v6639 = vpack.c.b16 %v6547, %v6543
    %v6640 = vpack.c.b16 %v6548, %v6544
    %v6641 = vpack.c.b16 %v6553, %v6549
    %v6642 = vpack.c.b16 %v6554, %v6550
    %v6643 = vpack.c.b16 %v6555, %v6551
    %v6644 = vpack.c.b16 %v6556, %v6552
    %v6645 = vpack.c.b16 %v6561, %v6557
    %v6646 = vpack.c.b16 %v6562, %v6558
    %v6647 = vpack.c.b16 %v6563, %v6559
    %v6648 = vpack.c.b16 %v6564, %v6560
    %v6649 = vpack.c.b16 %v6569, %v6565
    %v6650 = vpack.c.b16 %v6570, %v6566
    %v6651 = vpack.c.b16 %v6571, %v6567
    %v6652 = vpack.c.b16 %v6572, %v6568
    %v6653 = vpack.c.b16 %v6577, %v6573
    %v6654 = vpack.c.b16 %v6578, %v6574
    %v6655 = vpack.c.b16 %v6579, %v6575
    %v6656 = vpack.c.b16 %v6580, %v6576
    %v6657 = vpack.c.b16 %v6585, %v6581
    %v6658 = vpack.c.b16 %v6586, %v6582
    %v6659 = vpack.c.b16 %v6587, %v6583
    %v6660 = vpack.c.b16 %v6588, %v6584
    %v6661 = vpack.c.b16 %v6593, %v6589
    %v6662 = vpack.c.b16 %v6594, %v6590
    %v6663 = vpack.c.b16 %v6595, %v6591
    %v6664 = vpack.c.b16 %v6596, %v6592
    %v6665 = vpack.c.b16 %v6601, %v6597
    %v6666 = vpack.c.b16 %v6602, %v6598
    %v6667 = vpack.c.b16 %v6603, %v6599
    %v6668 = vpack.c.b16 %v6604, %v6600
    %6733 = vmatprep.subr.bf16.mxu0 %v6606
    %6734 = vmatpush1.bf16.msra.mxu0 %v6605
    %6735 = vmatprep.subr.bf16.mxu0 %v6610
    %6736 = vmatpush1.bf16.msra.mxu0 %v6609
    %6737 = vmatprep.subr.bf16.mxu0 %v6614
    %6738 = vmatpush1.bf16.msra.mxu0 %v6613
    %6739 = vmatprep.subr.bf16.mxu0 %v6618
    %6740 = vmatpush1.bf16.msra.mxu0 %v6617
    %6741 = vmatprep.subr.bf16.mxu0 %v6622
    %6742 = vmatpush1.bf16.msra.mxu0 %v6621
    %6743 = vmatprep.subr.bf16.mxu0 %v6626
    %6744 = vmatpush1.bf16.msra.mxu0 %v6625
    %6745 = vmatprep.subr.bf16.mxu0 %v6630
    %6746 = vmatpush1.bf16.msra.mxu0 %v6629
    %6747 = vmatprep.subr.bf16.mxu0 %v6634
    %6748 = vmatpush1.bf16.msra.mxu0 %v6633
    %6749 = vmatprep.subr.bf16.mxu0 %v6638
    %6750 = vmatpush1.bf16.msra.mxu0 %v6637
    %6751 = vmatprep.subr.bf16.mxu0 %v6642
    %6752 = vmatpush1.bf16.msra.mxu0 %v6641
    %6753 = vmatprep.subr.bf16.mxu0 %v6646
    %6754 = vmatpush1.bf16.msra.mxu0 %v6645
    %6755 = vmatprep.subr.bf16.mxu0 %v6650
    %6756 = vmatpush1.bf16.msra.mxu0 %v6649
    %6757 = vmatprep.subr.bf16.mxu0 %v6654
    %6758 = vmatpush1.bf16.msra.mxu0 %v6653
    %6759 = vmatprep.subr.bf16.mxu0 %v6658
    %6760 = vmatpush1.bf16.msra.mxu0 %v6657
    %6761 = vmatprep.subr.bf16.mxu0 %v6662
    %6762 = vmatpush1.bf16.msra.mxu0 %v6661
    %6763 = vmatprep.subr.bf16.mxu0 %v6666
    %6764 = vmatpush1.bf16.msra.mxu0 %v6665
    %6765 = vmatprep.mubr.bf16.mxu0 %v329
    %6766 = vmatmul.mubr.bf16.gmra.mrb[0].mxu0 %v328
    %v6767 = vpop.f32.mrb[0].mxu0
    %v6768 = vadd.f32 0.0, %v6767
    %v6769 = vpop.f32.mrb[0].mxu0
    %v6770 = vadd.f32 0.0, %v6769
    %v6771 = vpop.f32.mrb[0].mxu0
    %v6772 = vadd.f32 0.0, %v6771
    %v6773 = vpop.f32.mrb[0].mxu0
    %v6774 = vadd.f32 0.0, %v6773
    %6775 = vmatprep.mubr.bf16.mxu0 %v335
    %6776 = vmatmul.mubr.bf16.gmra.mrb[0].mxu0 %v334
    %v6777 = vpop.f32.mrb[0].mxu0
    %v6778 = vadd.f32 0.0, %v6777
    %v6779 = vpop.f32.mrb[0].mxu0
    %v6780 = vadd.f32 0.0, %v6779
    %v6781 = vpop.f32.mrb[0].mxu0
    %v6782 = vadd.f32 0.0, %v6781
    %v6783 = vpop.f32.mrb[0].mxu0
    %v6784 = vadd.f32 0.0, %v6783
    %6785 = vdwg.mxu0
    %6786 = vmatprep.subr.bf16.mxu0 %v6608
    %6787 = vmatpush1.bf16.msra.mxu0 %v6607
    %6788 = vmatprep.subr.bf16.mxu0 %v6612
    %6789 = vmatpush1.bf16.msra.mxu0 %v6611
    %6790 = vmatprep.subr.bf16.mxu0 %v6616
    %6791 = vmatpush1.bf16.msra.mxu0 %v6615
    %6792 = vmatprep.subr.bf16.mxu0 %v6620
    %6793 = vmatpush1.bf16.msra.mxu0 %v6619
    %6794 = vmatprep.subr.bf16.mxu0 %v6624
    %6795 = vmatpush1.bf16.msra.mxu0 %v6623
    %6796 = vmatprep.subr.bf16.mxu0 %v6628
    %6797 = vmatpush1.bf16.msra.mxu0 %v6627
    %6798 = vmatprep.subr.bf16.mxu0 %v6632
    %6799 = vmatpush1.bf16.msra.mxu0 %v6631
    %6800 = vmatprep.subr.bf16.mxu0 %v6636
    %6801 = vmatpush1.bf16.msra.mxu0 %v6635
    %6802 = vmatprep.subr.bf16.mxu0 %v6640
    %6803 = vmatpush1.bf16.msra.mxu0 %v6639
    %6804 = vmatprep.subr.bf16.mxu0 %v6644
    %6805 = vmatpush1.bf16.msra.mxu0 %v6643
    %6806 = vmatprep.subr.bf16.mxu0 %v6648
    %6807 = vmatpush1.bf16.msra.mxu0 %v6647
    %6808 = vmatprep.subr.bf16.mxu0 %v6652
    %6809 = vmatpush1.bf16.msra.mxu0 %v6651
    %6810 = vmatprep.subr.bf16.mxu0 %v6656
    %6811 = vmatpush1.bf16.msra.mxu0 %v6655
    %6812 = vmatprep.subr.bf16.mxu0 %v6660
    %6813 = vmatpush1.bf16.msra.mxu0 %v6659
    %6814 = vmatprep.subr.bf16.mxu0 %v6664
    %6815 = vmatpush1.bf16.msra.mxu0 %v6663
    %6816 = vmatprep.subr.bf16.mxu0 %v6668
    %6817 = vmatpush1.bf16.msra.mxu0 %v6667
    %6818 = vmatprep.mubr.bf16.mxu0 %v329
    %6819 = vmatmul.mubr.bf16.gmra.mrb[0].mxu0 %v328
    %v6820 = vpop.f32.mrb[0].mxu0
    %v6821 = vadd.f32 0.0, %v6820
    %v6822 = vpop.f32.mrb[0].mxu0
    %v6823 = vadd.f32 0.0, %v6822
    %v6824 = vpop.f32.mrb[0].mxu0
    %v6825 = vadd.f32 0.0, %v6824
    %v6826 = vpop.f32.mrb[0].mxu0
    %v6827 = vadd.f32 0.0, %v6826
    %6828 = vmatprep.mubr.bf16.mxu0 %v335
    %6829 = vmatmul.mubr.bf16.gmra.mrb[0].mxu0 %v334
    %v6830 = vpop.f32.mrb[0].mxu0
    %v6831 = vadd.f32 0.0, %v6830
    %v6832 = vpop.f32.mrb[0].mxu0
    %v6833 = vadd.f32 0.0, %v6832
    %v6834 = vpop.f32.mrb[0].mxu0
    %v6835 = vadd.f32 0.0, %v6834
    %v6836 = vpop.f32.mrb[0].mxu0
    %v6837 = vadd.f32 0.0, %v6836
    %6838 = vdwg.mxu0
    %v6839 = vld [vmem:[#allocation15] sm:$0x1]
    %v6840 = vld [vmem:[#allocation16] sm:$0x1]
    %v6841 = vadd.f32 %v6768, %v6772
    %v6842 = vadd.f32 %v6841, %v6778
    %v6843 = vadd.f32 %v6842, %v6782
    %v6844 = vrot.slane %v6843, 4
    %v6845 = vadd.f32 %v6843, %v6844
    %v6846 = vrot.slane %v6845, 2
    %v6847 = vadd.f32 %v6845, %v6846
    %v6848 = vrot.slane %v6847, 1
    %v6849 = vadd.f32 %v6847, %v6848
    %v6850 = vadd.f32 %v6770, %v6774
    %v6851 = vadd.f32 %v6850, %v6780
    %v6852 = vadd.f32 %v6851, %v6784
    %v6853 = vrot.slane %v6852, 4
    %v6854 = vadd.f32 %v6852, %v6853
    %v6855 = vrot.slane %v6854, 2
    %v6856 = vadd.f32 %v6854, %v6855
    %v6857 = vrot.slane %v6856, 1
    %v6858 = vadd.f32 %v6856, %v6857
    %v6859 = vadd.f32 %v6821, %v6825
    %v6860 = vadd.f32 %v6859, %v6831
    %v6861 = vadd.f32 %v6860, %v6835
    %v6862 = vrot.slane %v6861, 4
    %v6863 = vadd.f32 %v6861, %v6862
    %v6864 = vrot.slane %v6863, 2
    %v6865 = vadd.f32 %v6863, %v6864
    %v6866 = vrot.slane %v6865, 1
    %v6867 = vadd.f32 %v6865, %v6866
    %v6868 = vadd.f32 %v6823, %v6827
    %v6869 = vadd.f32 %v6868, %v6833
    %v6870 = vadd.f32 %v6869, %v6837
    %v6871 = vrot.slane %v6870, 4
    %v6872 = vadd.f32 %v6870, %v6871
    %v6873 = vrot.slane %v6872, 2
    %v6874 = vadd.f32 %v6872, %v6873
    %v6875 = vrot.slane %v6874, 1
    %v6876 = vadd.f32 %v6874, %v6875
    %v6877 = vmul.f32 %v6768, %v6768
    %v6878 = vmul.f32 %v6770, %v6770
    %v6879 = vmul.f32 %v6821, %v6821
    %v6880 = vmul.f32 %v6823, %v6823
    %v6881 = vmul.f32 %v6772, %v6772
    %v6882 = vmul.f32 %v6774, %v6774
    %v6883 = vmul.f32 %v6825, %v6825
    %v6884 = vmul.f32 %v6827, %v6827
    %v6885 = vmul.f32 %v6778, %v6778
    %v6886 = vmul.f32 %v6780, %v6780
    %v6887 = vmul.f32 %v6831, %v6831
    %v6888 = vmul.f32 %v6833, %v6833
    %v6889 = vmul.f32 %v6782, %v6782
    %v6890 = vmul.f32 %v6784, %v6784
    %v6891 = vmul.f32 %v6835, %v6835
    %v6892 = vmul.f32 %v6837, %v6837
    %v6893 = vadd.f32 %v6877, %v6881
    %v6894 = vadd.f32 %v6893, %v6885
    %v6895 = vadd.f32 %v6894, %v6889
    %v6896 = vrot.slane %v6895, 4
    %v6897 = vadd.f32 %v6895, %v6896
    %v6898 = vrot.slane %v6897, 2
    %v6899 = vadd.f32 %v6897, %v6898
    %v6900 = vrot.slane %v6899, 1
    %v6901 = vadd.f32 %v6899, %v6900
    %v6902 = vadd.f32 %v6878, %v6882
    %v6903 = vadd.f32 %v6902, %v6886
    %v6904 = vadd.f32 %v6903, %v6890
    %v6905 = vrot.slane %v6904, 4
    %v6906 = vadd.f32 %v6904, %v6905
    %v6907 = vrot.slane %v6906, 2
    %v6908 = vadd.f32 %v6906, %v6907
    %v6909 = vrot.slane %v6908, 1
    %v6910 = vadd.f32 %v6908, %v6909
    %v6911 = vadd.f32 %v6879, %v6883
    %v6912 = vadd.f32 %v6911, %v6887
    %v6913 = vadd.f32 %v6912, %v6891
    %v6914 = vrot.slane %v6913, 4
    %v6915 = vadd.f32 %v6913, %v6914
    %v6916 = vrot.slane %v6915, 2
    %v6917 = vadd.f32 %v6915, %v6916
    %v6918 = vrot.slane %v6917, 1
    %v6919 = vadd.f32 %v6917, %v6918
    %v6920 = vadd.f32 %v6880, %v6884
    %v6921 = vadd.f32 %v6920, %v6888
    %v6922 = vadd.f32 %v6921, %v6892
    %v6923 = vrot.slane %v6922, 4
    %v6924 = vadd.f32 %v6922, %v6923
    %v6925 = vrot.slane %v6924, 2
    %v6926 = vadd.f32 %v6924, %v6925
    %v6927 = vrot.slane %v6926, 1
    %v6928 = vadd.f32 %v6926, %v6927
    %v6929 = vsel %vm276, %v6849, %v6901
    %v6930 = vsel %vm276, %v6858, %v6910
    %v6931 = vsel %vm276, %v6867, %v6919
    %v6932 = vsel %vm276, %v6876, %v6928
    %6933 = vmatprep.subr.mxu0 0.0
    %6934 = vmatpush1.msra.mxu0 %v180
    %6935 = vmatprep.subr.mxu0 0.0
    %6936 = vmatpush1.msra.mxu0 %v181
    %6937 = vmatprep.subr.mxu0 0.0
    %6938 = vmatpush1.msra.mxu0 %v182
    %6939 = vmatprep.subr.mxu0 0.0
    %6940 = vmatpush1.msra.mxu0 %v183
    %6941 = vmatprep.subr.mxu0 0.0
    %6942 = vmatpush1.msra.mxu0 %v184
    %6943 = vmatprep.subr.mxu0 0.0
    %6944 = vmatpush1.msra.mxu0 %v185
    %6945 = vmatprep.subr.mxu0 0.0
    %6946 = vmatpush1.msra.mxu0 %v186
    %6947 = vmatprep.subr.mxu0 0.0
    %6948 = vmatpush1.msra.mxu0 %v187
    %6949 = vmatprep.subr.mxu0 0.0
    %6950 = vmatpush1.msra.mxu0 %v188
    %6951 = vmatprep.subr.mxu0 0.0
    %6952 = vmatpush1.msra.mxu0 %v189
    %6953 = vmatprep.subr.mxu0 0.0
    %6954 = vmatpush1.msra.mxu0 %v190
    %6955 = vmatprep.subr.mxu0 0.0
    %6956 = vmatpush1.msra.mxu0 %v191
    %6957 = vmatprep.subr.mxu0 0.0
    %6958 = vmatpush1.msra.mxu0 %v192
    %6959 = vmatprep.subr.mxu0 0.0
    %6960 = vmatpush1.msra.mxu0 %v193
    %6961 = vmatprep.subr.mxu0 0.0
    %6962 = vmatpush1.msra.mxu0 %v194
    %6963 = vmatprep.subr.mxu0 0.0
    %6964 = vmatpush1.msra.mxu0 %v195
    %6965 = vmatprep.subr.mxu0 0.0
    %6966 = vmatpush1.msra.mxu0 %v196
    %6967 = vmatprep.subr.mxu0 0.0
    %6968 = vmatpush1.msra.mxu0 %v197
    %6969 = vmatprep.subr.mxu0 0.0
    %6970 = vmatpush1.msra.mxu0 %v198
    %6971 = vmatprep.subr.mxu0 0.0
    %6972 = vmatpush1.msra.mxu0 %v199
    %6973 = vmatprep.subr.mxu0 0.0
    %6974 = vmatpush1.msra.mxu0 %v200
    %6975 = vmatprep.subr.mxu0 0.0
    %6976 = vmatpush1.msra.mxu0 %v201
    %6977 = vmatprep.subr.mxu0 0.0
    %6978 = vmatpush1.msra.mxu0 %v202
    %6979 = vmatprep.subr.mxu0 0.0
    %6980 = vmatpush1.msra.mxu0 %v203
    %6981 = vmatprep.subr.mxu0 0.0
    %6982 = vmatpush1.msra.mxu0 %v204
    %6983 = vmatprep.subr.mxu0 0.0
    %6984 = vmatpush1.msra.mxu0 %v205
    %6985 = vmatprep.subr.mxu0 0.0
    %6986 = vmatpush1.msra.mxu0 %v206
    %6987 = vmatprep.subr.mxu0 0.0
    %6988 = vmatpush1.msra.mxu0 %v207
    %6989 = vmatprep.subr.mxu0 0.0
    %6990 = vmatpush1.msra.mxu0 %v208
    %6991 = vmatprep.subr.mxu0 0.0
    %6992 = vmatpush1.msra.mxu0 %v209
    %6993 = vmatprep.subr.mxu0 0.0
    %6994 = vmatpush1.msra.mxu0 %v210
    %6995 = vmatprep.subr.mxu0 0.0
    %6996 = vmatpush1.msra.mxu0 %v211
    %6997 = vmatprep.mubr.f32.mxu0 %v6930
    %6998 = vmatmul.mubr.f32.gmra.mrb[0].mxu0 %v6929
    %v6999 = vpop.f32.mrb[0].mxu0
    %v7000 = vadd.f32 0.0, %v6999
    %v7001 = vpop.f32.mrb[0].mxu0
    %7002 = vdwg.mxu0
    %7003 = vmatprep.subr.mxu0 0.0
    %7004 = vmatpush1.msra.mxu0 %v212
    %7005 = vmatprep.subr.mxu0 0.0
    %7006 = vmatpush1.msra.mxu0 %v213
    %7007 = vmatprep.subr.mxu0 0.0
    %7008 = vmatpush1.msra.mxu0 %v214
    %7009 = vmatprep.subr.mxu0 0.0
    %7010 = vmatpush1.msra.mxu0 %v215
    %7011 = vmatprep.subr.mxu0 0.0
    %7012 = vmatpush1.msra.mxu0 %v216
    %7013 = vmatprep.subr.mxu0 0.0
    %7014 = vmatpush1.msra.mxu0 %v217
    %7015 = vmatprep.subr.mxu0 0.0
    %7016 = vmatpush1.msra.mxu0 %v218
    %7017 = vmatprep.subr.mxu0 0.0
    %7018 = vmatpush1.msra.mxu0 %v219
    %7019 = vmatprep.subr.mxu0 0.0
    %7020 = vmatpush1.msra.mxu0 %v220
    %7021 = vmatprep.subr.mxu0 0.0
    %7022 = vmatpush1.msra.mxu0 %v221
    %7023 = vmatprep.subr.mxu0 0.0
    %7024 = vmatpush1.msra.mxu0 %v222
    %7025 = vmatprep.subr.mxu0 0.0
    %7026 = vmatpush1.msra.mxu0 %v223
    %7027 = vmatprep.subr.mxu0 0.0
    %7028 = vmatpush1.msra.mxu0 %v224
    %7029 = vmatprep.subr.mxu0 0.0
    %7030 = vmatpush1.msra.mxu0 %v225
    %7031 = vmatprep.subr.mxu0 0.0
    %7032 = vmatpush1.msra.mxu0 %v226
    %7033 = vmatprep.subr.mxu0 0.0
    %7034 = vmatpush1.msra.mxu0 %v227
    %7035 = vmatprep.subr.mxu0 0.0
    %7036 = vmatpush1.msra.mxu0 %v228
    %7037 = vmatprep.subr.mxu0 0.0
    %7038 = vmatpush1.msra.mxu0 %v229
    %7039 = vmatprep.subr.mxu0 0.0
    %7040 = vmatpush1.msra.mxu0 %v230
    %7041 = vmatprep.subr.mxu0 0.0
    %7042 = vmatpush1.msra.mxu0 %v231
    %7043 = vmatprep.subr.mxu0 0.0
    %7044 = vmatpush1.msra.mxu0 %v232
    %7045 = vmatprep.subr.mxu0 0.0
    %7046 = vmatpush1.msra.mxu0 %v233
    %7047 = vmatprep.subr.mxu0 0.0
    %7048 = vmatpush1.msra.mxu0 %v234
    %7049 = vmatprep.subr.mxu0 0.0
    %7050 = vmatpush1.msra.mxu0 %v235
    %7051 = vmatprep.subr.mxu0 0.0
    %7052 = vmatpush1.msra.mxu0 %v236
    %7053 = vmatprep.subr.mxu0 0.0
    %7054 = vmatpush1.msra.mxu0 %v237
    %7055 = vmatprep.subr.mxu0 0.0
    %7056 = vmatpush1.msra.mxu0 %v238
    %7057 = vmatprep.subr.mxu0 0.0
    %7058 = vmatpush1.msra.mxu0 %v239
    %7059 = vmatprep.subr.mxu0 0.0
    %7060 = vmatpush1.msra.mxu0 %v240
    %7061 = vmatprep.subr.mxu0 0.0
    %7062 = vmatpush1.msra.mxu0 %v241
    %7063 = vmatprep.subr.mxu0 0.0
    %7064 = vmatpush1.msra.mxu0 %v242
    %7065 = vmatprep.subr.mxu0 0.0
    %7066 = vmatpush1.msra.mxu0 %v243
    %7067 = vmatprep.mubr.f32.mxu0 %v6932
    %7068 = vmatmul.mubr.f32.gmra.mrb[0].mxu0 %v6931
    %v7069 = vpop.f32.mrb[0].mxu0
    %v7070 = vadd.f32 %v7000, %v7069
    %v7071 = vpop.f32.mrb[0].mxu0
    %7072 = vdwg.mxu0
    %v7073 = vmul.f32 %v7070, 0.001953125
    %v7074 = vmul.f32 %v7073, %v7073
    %v7076 = vrot.slane %v7074, 7
    %v7078 = vsub.f32 %v7073, %v7076
    %v7079 = vadd.f32 %v7078, 1e-05
    %v7080 = vrsqrt.pop %v7079
    %v7083 = vunpack.c.l.s4 1966171168
    %v7084 = vunpack.c.0.s8 %v7083
    %v7085 = vlaneseq
    %v7086 = vshrl.u32 %v7085, 7
    %v7087 = vsub.s32 %v7084, %v7086
    %v7088 = vrot.slane %v7080, %v7087
    %v7089 = vcombine.high %v7088, %v7088
    %v7091 = vunpack.c.l.s4 1966171168
    %v7092 = vunpack.c.0.s8 %v7091
    %v7093 = vlaneseq
    %v7094 = vshrl.u32 %v7093, 7
    %v7095 = vsub.s32 %v7092, %v7094
    %v7096 = vrot.slane %v7089, %v7095
    %v7098 = vmul.f32 %v6839, %v7096
    %v7099 = vmul.f32 %v7073, %v7098
    %v7100 = vsub.f32 %v6840, %v7099
    %v7102 = vlaneseq
    %v7103 = vshrl.u32 %v7102, 7
    %v7104 = vsub.s32 0, %v7103
    %v7105 = vrot.slane %v7100, %v7104
    %v7107 = vsel %vm276, %v7098, %v7105
    %v7109 = vsel %vm2077, %v7107, 0
    %7111 = vmatprep.subr.mxu0 %v245
    %7112 = vmatpush1.msra.mxu0 %v244
    %7113 = vmatprep.subr.mxu0 %v249
    %7114 = vmatpush1.msra.mxu0 %v248
    %7115 = vmatprep.subr.mxu0 %v253
    %7116 = vmatpush1.msra.mxu0 %v252
    %7117 = vmatprep.subr.mxu0 %v257
    %7118 = vmatpush1.msra.mxu0 %v256
    %7119 = vmatprep.subr.mxu0 0.0
    %7120 = vmatpush1.msra.mxu0 0.0
    %7121 = vmatprep.subr.mxu0 0.0
    %7122 = vmatpush1.msra.mxu0 0.0
    %7123 = vmatprep.subr.mxu0 0.0
    %7124 = vmatpush1.msra.mxu0 0.0
    %7125 = vmatprep.subr.mxu0 0.0
    %7126 = vmatpush1.msra.mxu0 0.0
    %7127 = vmatprep.subr.mxu0 0.0
    %7128 = vmatpush1.msra.mxu0 0.0
    %7129 = vmatprep.subr.mxu0 0.0
    %7130 = vmatpush1.msra.mxu0 0.0
    %7131 = vmatprep.subr.mxu0 0.0
    %7132 = vmatpush1.msra.mxu0 0.0
    %7133 = vmatprep.subr.mxu0 0.0
    %7134 = vmatpush1.msra.mxu0 0.0
    %7135 = vmatprep.subr.mxu0 0.0
    %7136 = vmatpush1.msra.mxu0 0.0
    %7137 = vmatprep.subr.mxu0 0.0
    %7138 = vmatpush1.msra.mxu0 0.0
    %7139 = vmatprep.subr.mxu0 0.0
    %7140 = vmatpush1.msra.mxu0 0.0
    %7141 = vmatprep.subr.mxu0 0.0
    %7142 = vmatpush1.msra.mxu0 0.0
    %7143 = vmatprep.subr.mxu0 0.0
    %7144 = vmatpush1.msra.mxu0 0.0
    %7145 = vmatprep.subr.mxu0 0.0
    %7146 = vmatpush1.msra.mxu0 0.0
    %7147 = vmatprep.subr.mxu0 0.0
    %7148 = vmatpush1.msra.mxu0 0.0
    %7149 = vmatprep.subr.mxu0 0.0
    %7150 = vmatpush1.msra.mxu0 0.0
    %7151 = vmatprep.subr.mxu0 0.0
    %7152 = vmatpush1.msra.mxu0 0.0
    %7153 = vmatprep.subr.mxu0 0.0
    %7154 = vmatpush1.msra.mxu0 0.0
    %7155 = vmatprep.subr.mxu0 0.0
    %7156 = vmatpush1.msra.mxu0 0.0
    %7157 = vmatprep.subr.mxu0 0.0
    %7158 = vmatpush1.msra.mxu0 0.0
    %7159 = vmatprep.subr.mxu0 0.0
    %7160 = vmatpush1.msra.mxu0 0.0
    %7161 = vmatprep.subr.mxu0 0.0
    %7162 = vmatpush1.msra.mxu0 0.0
    %7163 = vmatprep.subr.mxu0 0.0
    %7164 = vmatpush1.msra.mxu0 0.0
    %7165 = vmatprep.subr.mxu0 0.0
    %7166 = vmatpush1.msra.mxu0 0.0
    %7167 = vmatprep.subr.mxu0 0.0
    %7168 = vmatpush1.msra.mxu0 0.0
    %7169 = vmatprep.subr.mxu0 0.0
    %7170 = vmatpush1.msra.mxu0 0.0
    %7171 = vmatprep.subr.mxu0 0.0
    %7172 = vmatpush1.msra.mxu0 0.0
    %7173 = vmatprep.subr.mxu0 0.0
    %7174 = vmatpush1.msra.mxu0 0.0
    %7175 = vmatprep.mubr.f32.mxu0 0.0
    %7176 = vmatmul.mubr.f32.gmra.mrb[0].mxu0 %v7109
    %v7177 = vpop.f32.mrb[0].mxu0
    %v7178 = vadd.f32 0.0, %v7177
    %v7179 = vpop.f32.mrb[0].mxu0
    %v7180 = vadd.f32 0.0, %v7179
    %7181 = vdwg.mxu0
    %7182 = vmatprep.subr.mxu0 %v247
    %7183 = vmatpush1.msra.mxu0 %v246
    %7184 = vmatprep.subr.mxu0 %v251
    %7185 = vmatpush1.msra.mxu0 %v250
    %7186 = vmatprep.subr.mxu0 %v255
    %7187 = vmatpush1.msra.mxu0 %v254
    %7188 = vmatprep.subr.mxu0 %v259
    %7189 = vmatpush1.msra.mxu0 %v258
    %7190 = vmatprep.subr.mxu0 0.0
    %7191 = vmatpush1.msra.mxu0 0.0
    %7192 = vmatprep.subr.mxu0 0.0
    %7193 = vmatpush1.msra.mxu0 0.0
    %7194 = vmatprep.subr.mxu0 0.0
    %7195 = vmatpush1.msra.mxu0 0.0
    %7196 = vmatprep.subr.mxu0 0.0
    %7197 = vmatpush1.msra.mxu0 0.0
    %7198 = vmatprep.subr.mxu0 0.0
    %7199 = vmatpush1.msra.mxu0 0.0
    %7200 = vmatprep.subr.mxu0 0.0
    %7201 = vmatpush1.msra.mxu0 0.0
    %7202 = vmatprep.subr.mxu0 0.0
    %7203 = vmatpush1.msra.mxu0 0.0
    %7204 = vmatprep.subr.mxu0 0.0
    %7205 = vmatpush1.msra.mxu0 0.0
    %7206 = vmatprep.subr.mxu0 0.0
    %7207 = vmatpush1.msra.mxu0 0.0
    %7208 = vmatprep.subr.mxu0 0.0
    %7209 = vmatpush1.msra.mxu0 0.0
    %7210 = vmatprep.subr.mxu0 0.0
    %7211 = vmatpush1.msra.mxu0 0.0
    %7212 = vmatprep.subr.mxu0 0.0
    %7213 = vmatpush1.msra.mxu0 0.0
    %7214 = vmatprep.subr.mxu0 0.0
    %7215 = vmatpush1.msra.mxu0 0.0
    %7216 = vmatprep.subr.mxu0 0.0
    %7217 = vmatpush1.msra.mxu0 0.0
    %7218 = vmatprep.subr.mxu0 0.0
    %7219 = vmatpush1.msra.mxu0 0.0
    %7220 = vmatprep.subr.mxu0 0.0
    %7221 = vmatpush1.msra.mxu0 0.0
    %7222 = vmatprep.subr.mxu0 0.0
    %7223 = vmatpush1.msra.mxu0 0.0
    %7224 = vmatprep.subr.mxu0 0.0
    %7225 = vmatpush1.msra.mxu0 0.0
    %7226 = vmatprep.subr.mxu0 0.0
    %7227 = vmatpush1.msra.mxu0 0.0
    %7228 = vmatprep.subr.mxu0 0.0
    %7229 = vmatpush1.msra.mxu0 0.0
    %7230 = vmatprep.subr.mxu0 0.0
    %7231 = vmatpush1.msra.mxu0 0.0
    %7232 = vmatprep.subr.mxu0 0.0
    %7233 = vmatpush1.msra.mxu0 0.0
    %7234 = vmatprep.subr.mxu0 0.0
    %7235 = vmatpush1.msra.mxu0 0.0
    %7236 = vmatprep.subr.mxu0 0.0
    %7237 = vmatpush1.msra.mxu0 0.0
    %7238 = vmatprep.subr.mxu0 0.0
    %7239 = vmatpush1.msra.mxu0 0.0
    %7240 = vmatprep.subr.mxu0 0.0
    %7241 = vmatpush1.msra.mxu0 0.0
    %7242 = vmatprep.subr.mxu0 0.0
    %7243 = vmatpush1.msra.mxu0 0.0
    %7244 = vmatprep.subr.mxu0 0.0
    %7245 = vmatpush1.msra.mxu0 0.0
    %7246 = vmatprep.mubr.f32.mxu0 0.0
    %7247 = vmatmul.mubr.f32.gmra.mrb[0].mxu0 %v7109
    %v7248 = vpop.f32.mrb[0].mxu0
    %v7249 = vadd.f32 0.0, %v7248
    %v7250 = vpop.f32.mrb[0].mxu0
    %v7251 = vadd.f32 0.0, %v7250
    %7252 = vdwg.mxu0
    %v7253 = vlaneseq
    %v7254 = vshrl.u32 %v7253, 7
    %v7255 = vsub.s32 0, %v7254
    %v7256 = vrot.slane %v7178, %v7255
    %v7257 = vlaneseq
    %v7258 = vshrl.u32 %v7257, 7
    %v7259 = vsub.s32 0, %v7258
    %v7260 = vrot.slane %v7180, %v7259
    %v7261 = vlaneseq
    %v7262 = vshrl.u32 %v7261, 7
    %v7263 = vsub.s32 0, %v7262
    %v7264 = vrot.slane %v7249, %v7263
    %v7265 = vlaneseq
    %v7266 = vshrl.u32 %v7265, 7
    %v7267 = vsub.s32 0, %v7266
    %v7268 = vrot.slane %v7251, %v7267
    %v7269 = vmul.f32 %v6768, %v7256
    %v7270 = vmul.f32 %v6770, %v7260
    %v7271 = vmul.f32 %v6821, %v7264
    %v7272 = vmul.f32 %v6823, %v7268
    %v7273 = vmul.f32 %v6772, %v7256
    %v7274 = vmul.f32 %v6774, %v7260
    %v7275 = vmul.f32 %v6825, %v7264
    %v7276 = vmul.f32 %v6827, %v7268
    %v7277 = vmul.f32 %v6778, %v7256
    %v7278 = vmul.f32 %v6780, %v7260
    %v7279 = vmul.f32 %v6831, %v7264
    %v7280 = vmul.f32 %v6833, %v7268
    %v7281 = vmul.f32 %v6782, %v7256
    %v7282 = vmul.f32 %v6784, %v7260
    %v7283 = vmul.f32 %v6835, %v7264
    %v7284 = vmul.f32 %v6837, %v7268
    %v7285 = vlaneseq
    %v7286 = vshrl.u32 %v7285, 7
    %v7287 = vsub.s32 1, %v7286
    %v7288 = vrot.slane %v7178, %v7287
    %v7289 = vlaneseq
    %v7290 = vshrl.u32 %v7289, 7
    %v7291 = vsub.s32 1, %v7290
    %v7292 = vrot.slane %v7180, %v7291
    %v7293 = vlaneseq
    %v7294 = vshrl.u32 %v7293, 7
    %v7295 = vsub.s32 1, %v7294
    %v7296 = vrot.slane %v7249, %v7295
    %v7297 = vlaneseq
    %v7298 = vshrl.u32 %v7297, 7
    %v7299 = vsub.s32 1, %v7298
    %v7300 = vrot.slane %v7251, %v7299
    %v7301 = vadd.f32 %v7269, %v7288
    %v7302 = vadd.f32 %v7270, %v7292
    %v7303 = vadd.f32 %v7271, %v7296
    %v7304 = vadd.f32 %v7272, %v7300
    %v7305 = vadd.f32 %v7273, %v7288
    %v7306 = vadd.f32 %v7274, %v7292
    %v7307 = vadd.f32 %v7275, %v7296
    %v7308 = vadd.f32 %v7276, %v7300
    %v7309 = vadd.f32 %v7277, %v7288
    %v7310 = vadd.f32 %v7278, %v7292
    %v7311 = vadd.f32 %v7279, %v7296
    %v7312 = vadd.f32 %v7280, %v7300
    %v7313 = vadd.f32 %v7281, %v7288
    %v7314 = vadd.f32 %v7282, %v7292
    %v7315 = vadd.f32 %v7283, %v7296
    %v7316 = vadd.f32 %v7284, %v7300
    %v7317 = vadd.f32 %v6333, %v7301
    %v7318 = vadd.f32 %v6334, %v7302
    %v7319 = vadd.f32 %v6335, %v7303
    %v7320 = vadd.f32 %v6336, %v7304
    %v7321 = vadd.f32 %v6337, %v7305
    %v7322 = vadd.f32 %v6338, %v7306
    %v7323 = vadd.f32 %v6339, %v7307
    %v7324 = vadd.f32 %v6340, %v7308
    %v7325 = vadd.f32 %v6341, %v7309
    %v7326 = vadd.f32 %v6342, %v7310
    %v7327 = vadd.f32 %v6343, %v7311
    %v7328 = vadd.f32 %v6344, %v7312
    %v7329 = vadd.f32 %v6345, %v7313
    %v7330 = vadd.f32 %v6346, %v7314
    %v7331 = vadd.f32 %v6347, %v7315
    %v7332 = vadd.f32 %v6348, %v7316
    %v7333 = vmax.f32 %v7317, 0.0
    %v7334 = vmax.f32 %v7318, 0.0
    %v7335 = vmax.f32 %v7319, 0.0
    %v7336 = vmax.f32 %v7320, 0.0
    %v7337 = vmax.f32 %v7321, 0.0
    %v7338 = vmax.f32 %v7322, 0.0
    %v7339 = vmax.f32 %v7323, 0.0
    %v7340 = vmax.f32 %v7324, 0.0
    %v7341 = vmax.f32 %v7325, 0.0
    %v7342 = vmax.f32 %v7326, 0.0
    %v7343 = vmax.f32 %v7327, 0.0
    %v7344 = vmax.f32 %v7328, 0.0
    %v7345 = vmax.f32 %v7329, 0.0
    %v7346 = vmax.f32 %v7330, 0.0
    %v7347 = vmax.f32 %v7331, 0.0
    %v7348 = vmax.f32 %v7332, 0.0
    %7349 = vst [vmem:[%s14] sm:$0xff] %v7333
    %7350 = vst [vmem:[%s14 + $0x8] sm:$0xff] %v7334
    %7351 = vst [vmem:[%s14 + $0x10] sm:$0xff] %v7335
    %7352 = vst [vmem:[%s14 + $0x18] sm:$0xff] %v7336
    %7353 = vst [vmem:[%s14 + $0x20] sm:$0xff] %v7337
    %7354 = vst [vmem:[%s14 + $0x28] sm:$0xff] %v7338
    %7355 = vst [vmem:[%s14 + $0x30] sm:$0xff] %v7339
    %7356 = vst [vmem:[%s14 + $0x38] sm:$0xff] %v7340
    %7357 = vst [vmem:[%s14 + $0x40] sm:$0xff] %v7341
    %7358 = vst [vmem:[%s14 + $0x48] sm:$0xff] %v7342
    %7359 = vst [vmem:[%s14 + $0x50] sm:$0xff] %v7343
    %7360 = vst [vmem:[%s14 + $0x58] sm:$0xff] %v7344
    %7361 = vst [vmem:[%s14 + $0x60] sm:$0xff] %v7345
    %7362 = vst [vmem:[%s14 + $0x68] sm:$0xff] %v7346
    %7363 = vst [vmem:[%s14 + $0x70] sm:$0xff] %v7347
    %7364 = vst [vmem:[%s14 + $0x78] sm:$0xff] %v7348
    // Predicated region
    $region102: #{residual_block_forward.1} parent=1 // pred_check
      _
    $region103: #{residual_block_forward.1} parent=1 // pred_check_branch
      %7366 = sbr.rel (0) target = $region105
    $region104: #{residual_block_forward.1} parent=1 // pred_region
      _
    $region105: #{residual_block_forward.1} parent=1 // pred_fallthru
      _
    // Predicated region
    $region106: #{residual_block_forward.1} parent=1 // pred_check
      _
    $region107: #{residual_block_forward.1} parent=1 // pred_check_branch
      %7368 = sbr.rel (0) target = $region109
    $region108: #{residual_block_forward.1} parent=1 // pred_region
      _
    $region109: #{residual_block_forward.1} parent=1 // pred_fallthru
      _
    %7369 = vsyncpa [#allocation3], 1
    %7370 = vsyncpa [#allocation5], 1
    %7371 = vsyncpa [#allocation8], 1
    %7372 = vsyncpa [#allocation11], 1
    %7373 = vsyncpa [#allocation14], 1
    %7374 = vsyncpa [#allocation17], 1

</llo_original>
